<compile_context>
chip_gen: v5e
topology: v5e:2x2
jax: 0.10.0
libtpu: 0.0.40
codegen_flags: <defaults>
</compile_context>

<pallas_src>
import functools
import math

import jax
import jax.numpy as jnp
from jax.experimental import pallas as pl
from jax.experimental.pallas import tpu as pltpu

LN_EPS = 1e-5
ROW_TILE = 256                      # row tile for N-axis pipelining (linears & attention)
VMEM_LIMIT = 48 * 1024 * 1024       # fits v7x (64 MiB physical), raises v6e 32 MiB default
NEG_BIG = -1e9                      # finite mask bias -> NaN-free softmax


def _round_up(x, m):
    return ((x + m - 1) // m) * m


def _cp(sem):
    return pltpu.CompilerParams(dimension_semantics=sem,
                                vmem_limit_bytes=VMEM_LIMIT)


def _row_spec(tile, d):
    return pl.BlockSpec((tile, d), lambda i: (i, 0))


def _resident(shape):
    return pl.BlockSpec(shape, lambda i: (0, 0))


# ------------------------------------------------------------------
# Kernel bodies
# ------------------------------------------------------------------

def _layernorm_f32(x, g, b):
    mu = jnp.mean(x, axis=-1, keepdims=True)
    xc = x - mu
    var = jnp.mean(xc * xc, axis=-1, keepdims=True)
    return xc * jax.lax.rsqrt(var + LN_EPS) * g + b


def _linear_kernel(x_ref, w_ref, b_ref, o_ref):
    x = x_ref[...]
    w = w_ref[...]
    if x.shape[1] == 1:  # Cin == 1: broadcast-mul beats a K=1 MXU matmul
        y = x.astype(jnp.float32) * w.astype(jnp.float32)
    else:
        y = jnp.dot(x, w, preferred_element_type=jnp.float32)
    o_ref[...] = (y + b_ref[...]).astype(o_ref.dtype)


def _ln_qkv_kernel(x_ref, g_ref, b_ref, wq_ref, bq_ref, wk_ref, bk_ref,
                   wv_ref, bv_ref, q_ref, k_ref, v_ref):
    x = x_ref[...].astype(jnp.float32)
    h = _layernorm_f32(x, g_ref[...], b_ref[...]).astype(jnp.bfloat16)
    q_ref[...] = (jnp.dot(h, wq_ref[...], preferred_element_type=jnp.float32)
                  + bq_ref[...]).astype(q_ref.dtype)
    k_ref[...] = (jnp.dot(h, wk_ref[...], preferred_element_type=jnp.float32)
                  + bk_ref[...]).astype(k_ref.dtype)
    v_ref[...] = (jnp.dot(h, wv_ref[...], preferred_element_type=jnp.float32)
                  + bv_ref[...]).astype(v_ref.dtype)


def _flash_attn_kernel(biq_ref, bik_ref, q_ref, k_ref, v_ref, o_ref,
                       m_sc, l_sc, acc_sc, *, num_heads, scale):
    ki = pl.program_id(1)

    @pl.when(ki == 0)
    def _():
        m_sc[...] = jnp.full_like(m_sc, -1e30)
        l_sc[...] = jnp.zeros_like(l_sc)
        acc_sc[...] = jnp.zeros_like(acc_sc)

    # per-sample mask computed on the fly (attention only within same batch idx)
    mask = jnp.where(biq_ref[...] == bik_ref[...], 0.0, NEG_BIG).astype(jnp.float32)

    c = q_ref.shape[-1]
    dh = c // num_heads
    for h in range(num_heads):
        sl = slice(h * dh, (h + 1) * dh)
        qh = q_ref[:, sl]
        kh = k_ref[:, sl]
        vh = v_ref[:, sl]
        s = jax.lax.dot_general(qh, kh, (((1,), (1,)), ((), ())),
                                preferred_element_type=jnp.float32)
        s = s * scale + mask
        m_prev = m_sc[h]
        m_new = jnp.maximum(m_prev, jnp.max(s, axis=-1, keepdims=True))
        alpha = jnp.exp(m_prev - m_new)
        p = jnp.exp(s - m_new)
        l_sc[h] = alpha * l_sc[h] + jnp.sum(p, axis=-1, keepdims=True)
        acc_sc[:, sl] = alpha * acc_sc[:, sl] + jnp.dot(
            p.astype(vh.dtype), vh, preferred_element_type=jnp.float32)
        m_sc[h] = m_new

    @pl.when(ki == pl.num_programs(1) - 1)
    def _():
        for h in range(num_heads):
            sl = slice(h * dh, (h + 1) * dh)
            acc_sc[:, sl] = acc_sc[:, sl] * pl.reciprocal(l_sc[h], approx=True)
        o_ref[...] = acc_sc[...].astype(o_ref.dtype)


def _proj_residual_kernel(a_ref, res_ref, w_ref, b_ref, o_ref):
    y = jnp.dot(a_ref[...], w_ref[...], preferred_element_type=jnp.float32) + b_ref[...]
    o_ref[...] = (res_ref[...].astype(jnp.float32) + y).astype(o_ref.dtype)


def _ln_mlp_residual_kernel(x_ref, g_ref, b_ref, w1_ref, b1_ref, w2_ref, b2_ref, o_ref):
    x = x_ref[...].astype(jnp.float32)
    h = _layernorm_f32(x, g_ref[...], b_ref[...]).astype(jnp.bfloat16)
    h1 = jnp.dot(h, w1_ref[...], preferred_element_type=jnp.float32) + b1_ref[...]
    h1 = jax.nn.gelu(h1, approximate=True).astype(jnp.bfloat16)
    y = jnp.dot(h1, w2_ref[...], preferred_element_type=jnp.float32) + b2_ref[...]
    o_ref[...] = (x + y).astype(o_ref.dtype)


def _ln_linear_kernel(x_ref, g_ref, b_ref, w_ref, bias_ref, o_ref):
    x = x_ref[...].astype(jnp.float32)
    h = _layernorm_f32(x, g_ref[...], b_ref[...]).astype(jnp.bfloat16)
    y = jnp.dot(h, w_ref[...], preferred_element_type=jnp.float32) + bias_ref[...]
    o_ref[...] = y.astype(o_ref.dtype)


def _ln_proj_reparam_kernel(x_ref, g_ref, b_ref, w_ref, bias_ref, eps_ref,
                            mean_ref, logvar_ref, z_ref, *, embed_dim):
    x = x_ref[...].astype(jnp.float32)
    h = _layernorm_f32(x, g_ref[...], b_ref[...]).astype(jnp.bfloat16)
    y = jnp.dot(h, w_ref[...], preferred_element_type=jnp.float32) + bias_ref[...]
    mean = y[:, :embed_dim]
    logvar = jnp.clip(y[:, embed_dim:], -30.0, 20.0)  # DiagonalGaussianDistribution clamp
    z = mean + jnp.exp(0.5 * logvar) * eps_ref[...]
    mean_ref[...] = mean
    logvar_ref[...] = logvar
    z_ref[...] = z.astype(z_ref.dtype)


# ------------------------------------------------------------------
# pallas_call wrappers (row-tiled, weights resident)
# ------------------------------------------------------------------

def linear(x, w, b, tile, out_dtype):
    n, cin = x.shape
    cout = w.shape[1]
    return pl.pallas_call(
        _linear_kernel,
        out_shape=jax.ShapeDtypeStruct((n, cout), out_dtype),
        grid=(n // tile,),
        in_specs=[_row_spec(tile, cin), _resident((cin, cout)), _resident((1, cout))],
        out_specs=_row_spec(tile, cout),
        compiler_params=_cp(("parallel",)),
    )(x, w, b)


def ln_qkv(x, g, bln, wq, bq, wk, bk, wv, bv, tile):
    n, c = x.shape
    out = jax.ShapeDtypeStruct((n, c), jnp.bfloat16)
    return pl.pallas_call(
        _ln_qkv_kernel,
        out_shape=(out, out, out),
        grid=(n // tile,),
        in_specs=[_row_spec(tile, c), _resident((1, c)), _resident((1, c)),
                  _resident((c, c)), _resident((1, c)),
                  _resident((c, c)), _resident((1, c)),
                  _resident((c, c)), _resident((1, c))],
        out_specs=(_row_spec(tile, c), _row_spec(tile, c), _row_spec(tile, c)),
        compiler_params=_cp(("parallel",)),
    )(x, g, bln, wq, bq, wk, bk, wv, bv)


def flash_attention(q, k, v, bi_col, bi_row, num_heads, tile):
    n, c = q.shape
    dh = c // num_heads
    scale = 1.0 / math.sqrt(dh)
    nt = n // tile
    return pl.pallas_call(
        functools.partial(_flash_attn_kernel, num_heads=num_heads, scale=scale),
        out_shape=jax.ShapeDtypeStruct((n, c), q.dtype),
        grid=(nt, nt),
        in_specs=[
            pl.BlockSpec((tile, 1), lambda qi, ki: (qi, 0)),   # batch idx of q rows
            pl.BlockSpec((1, tile), lambda qi, ki: (0, ki)),   # batch idx of k rows
            pl.BlockSpec((tile, c), lambda qi, ki: (qi, 0)),   # q
            pl.BlockSpec((tile, c), lambda qi, ki: (ki, 0)),   # k
            pl.BlockSpec((tile, c), lambda qi, ki: (ki, 0)),   # v
        ],
        out_specs=pl.BlockSpec((tile, c), lambda qi, ki: (qi, 0)),
        scratch_shapes=[
            pltpu.VMEM((num_heads, tile, 1), jnp.float32),     # running max
            pltpu.VMEM((num_heads, tile, 1), jnp.float32),     # running sum
            pltpu.VMEM((tile, c), jnp.float32),                # output accumulator
        ],
        compiler_params=_cp(("parallel", "arbitrary")),
    )(bi_col, bi_row, q, k, v)


def proj_residual(a, res, w, b, tile):
    n, c = a.shape
    return pl.pallas_call(
        _proj_residual_kernel,
        out_shape=jax.ShapeDtypeStruct((n, c), res.dtype),
        grid=(n // tile,),
        in_specs=[_row_spec(tile, c), _row_spec(tile, c),
                  _resident((c, c)), _resident((1, c))],
        out_specs=_row_spec(tile, c),
        compiler_params=_cp(("parallel",)),
    )(a, res, w, b)


def ln_mlp_residual(x, g, bln, w1, b1, w2, b2, tile):
    n, c = x.shape
    m = w1.shape[1]
    return pl.pallas_call(
        _ln_mlp_residual_kernel,
        out_shape=jax.ShapeDtypeStruct((n, c), x.dtype),
        grid=(n // tile,),
        in_specs=[_row_spec(tile, c), _resident((1, c)), _resident((1, c)),
                  _resident((c, m)), _resident((1, m)),
                  _resident((m, c)), _resident((1, c))],
        out_specs=_row_spec(tile, c),
        compiler_params=_cp(("parallel",)),
    )(x, g, bln, w1, b1, w2, b2)


def ln_linear(x, g, bln, w, b, tile, out_dtype):
    n, c = x.shape
    cout = w.shape[1]
    return pl.pallas_call(
        _ln_linear_kernel,
        out_shape=jax.ShapeDtypeStruct((n, cout), out_dtype),
        grid=(n // tile,),
        in_specs=[_row_spec(tile, c), _resident((1, c)), _resident((1, c)),
                  _resident((c, cout)), _resident((1, cout))],
        out_specs=_row_spec(tile, cout),
        compiler_params=_cp(("parallel",)),
    )(x, g, bln, w, b)


def ln_proj_reparam(x, g, bln, w, b, eps_noise, embed_dim, tile):
    n, c = x.shape
    e = embed_dim
    return pl.pallas_call(
        functools.partial(_ln_proj_reparam_kernel, embed_dim=e),
        out_shape=(jax.ShapeDtypeStruct((n, e), jnp.float32),
                   jax.ShapeDtypeStruct((n, e), jnp.float32),
                   jax.ShapeDtypeStruct((n, e), jnp.bfloat16)),
        grid=(n // tile,),
        in_specs=[_row_spec(tile, c), _resident((1, c)), _resident((1, c)),
                  _resident((c, 2 * e)), _resident((1, 2 * e)), _row_spec(tile, e)],
        out_specs=(_row_spec(tile, e), _row_spec(tile, e), _row_spec(tile, e)),
        compiler_params=_cp(("parallel",)),
    )(x, g, bln, w, b, eps_noise)


# ------------------------------------------------------------------
# Model (glue in plain JAX, compute in Pallas kernels above)
# ------------------------------------------------------------------

def _init_linear(key, cin, cout):
    return dict(
        w=(0.02 * jax.random.normal(key, (cin, cout), jnp.float32)).astype(jnp.bfloat16),
        b=jnp.zeros((1, cout), jnp.float32))


def _init_ln(c):
    return jnp.ones((1, c), jnp.float32), jnp.zeros((1, c), jnp.float32)


def _init_block(key, c, mlp):
    ks = jax.random.split(key, 6)
    ln1_g, ln1_b = _init_ln(c)
    ln2_g, ln2_b = _init_ln(c)
    return dict(
        ln1_g=ln1_g, ln1_b=ln1_b,
        q=_init_linear(ks[0], c, c), k=_init_linear(ks[1], c, c),
        v=_init_linear(ks[2], c, c), o=_init_linear(ks[3], c, c),
        ln2_g=ln2_g, ln2_b=ln2_b,
        fc1=_init_linear(ks[4], c, mlp), fc2=_init_linear(ks[5], mlp, c),
    )


def init_params(key, cfg):
    ke, kd = jax.random.split(key)
    ce = cfg["model_channels_encoder"]
    cd = cfg["model_channels_decoder"]
    e = cfg["embed_dim"]
    r = cfg["mlp_ratio"]

    kes = jax.random.split(ke, cfg["num_blocks_encoder"] + 2)
    og, ob = _init_ln(ce)
    enc = dict(
        in_proj=_init_linear(kes[0], 1, ce),
        blocks=[_init_block(kes[2 + i], ce, r * ce)
                for i in range(cfg["num_blocks_encoder"])],
        out_ln_g=og, out_ln_b=ob,
        out_proj=_init_linear(kes[1], ce, 2 * e),
    )
    kds = jax.random.split(kd, cfg["num_blocks_decoder"] + 2)
    og, ob = _init_ln(cd)
    dec = dict(
        in_proj=_init_linear(kds[0], e, cd),
        blocks=[_init_block(kds[2 + i], cd, r * cd)
                for i in range(cfg["num_blocks_decoder"])],
        out_ln_g=og, out_ln_b=ob,
        out_proj=_init_linear(kds[1], cd, cfg["out_channels"]),
    )
    return dict(encoder=enc, decoder=dec)


def transformer_block(x, p, bi_col, bi_row, num_heads, tile):
    q, k, v = ln_qkv(x, p["ln1_g"], p["ln1_b"],
                     p["q"]["w"], p["q"]["b"], p["k"]["w"], p["k"]["b"],
                     p["v"]["w"], p["v"]["b"], tile)
    a = flash_attention(q, k, v, bi_col, bi_row, num_heads, tile)
    x = proj_residual(a, x, p["o"]["w"], p["o"]["b"], tile)
    x = ln_mlp_residual(x, p["ln2_g"], p["ln2_b"],
                        p["fc1"]["w"], p["fc1"]["b"],
                        p["fc2"]["w"], p["fc2"]["b"], tile)
    return x


def sparse_sdf_vae_forward(params, batch, rng, cfg):
    feat = batch["sparse_sdf"]
    if feat.ndim == 1:
        feat = feat[:, None]
    coords = jnp.concatenate(
        [batch["batch_idx"][:, None], batch["sparse_index"]], axis=-1
    ).astype(jnp.int32)                                      # [N, 4]

    n = feat.shape[0]
    e = cfg["embed_dim"]
    tile = min(ROW_TILE, _round_up(n, 8))
    n_pad = _round_up(n, tile)
    pad = n_pad - n

    feat_p = jnp.pad(feat.astype(jnp.bfloat16), ((0, pad), (0, 0)))
    bi = jnp.pad(batch["batch_idx"].astype(jnp.float32), (0, pad),
                 constant_values=-1.0)                       # padded rows isolated
    bi_col = bi[:, None]                                     # [Np, 1]
    bi_row = bi[None, :]                                     # [1, Np]

    # ---- encode ----
    enc = params["encoder"]
    x = linear(feat_p, enc["in_proj"]["w"], enc["in_proj"]["b"], tile, jnp.bfloat16)
    for blk in enc["blocks"]:
        x = transformer_block(x, blk, bi_col, bi_row, cfg["num_heads_encoder"], tile)
    eps_noise = jax.random.normal(rng, (n_pad, e), jnp.float32)
    mean, logvar, z = ln_proj_reparam(x, enc["out_ln_g"], enc["out_ln_b"],
                                      enc["out_proj"]["w"], enc["out_proj"]["b"],
                                      eps_noise, e, tile)    # sample_posterior=True

    # ---- decode ----
    dec = params["decoder"]
    x = linear(z, dec["in_proj"]["w"], dec["in_proj"]["b"], tile, jnp.bfloat16)
    for blk in dec["blocks"]:
        x = transformer_block(x, blk, bi_col, bi_row, cfg["num_heads_decoder"], tile)
    reconst = ln_linear(x, dec["out_ln_g"], dec["out_ln_b"],
                        dec["out_proj"]["w"], dec["out_proj"]["b"], tile, jnp.float32)

    return {
        "reconst_x": {"feats": reconst[:n], "coords": coords},
        "posterior": {"mean": mean[:n], "logvar": logvar[:n]},
    }


# ------------------------------------------------------------------
# Demo
# ------------------------------------------------------------------

if __name__ == "__main__":
    cfg = dict(
        embed_dim=8,
        model_channels_encoder=64, num_blocks_encoder=2, num_heads_encoder=2,
        model_channels_decoder=64, num_blocks_decoder=2, num_heads_decoder=2,
        out_channels=1, mlp_ratio=4, resolution=16,
    )

    key = jax.random.PRNGKey(0)
    kp, kf, kc, kn = jax.random.split(key, 4)
    params = init_params(kp, cfg)

    N, B = 128, 2                                            # 64 sparse voxels / sample
    batch = {
        "sparse_sdf": 0.1 * jax.random.normal(kf, (N,), jnp.float32),
        "sparse_index": jax.random.randint(kc, (N, 3), 0, cfg["resolution"],
                                           dtype=jnp.int32),
        "batch_idx": jnp.repeat(jnp.arange(B, dtype=jnp.int32), N // B),
    }

    fwd = jax.jit(functools.partial(sparse_sdf_vae_forward, cfg=cfg))
    out = fwd(params, batch, kn)
    jax.block_until_ready(out)

    assert out["reconst_x"]["feats"].shape == (N, cfg["out_channels"])
    assert out["reconst_x"]["coords"].shape == (N, 4)
    assert out["posterior"]["mean"].shape == (N, cfg["embed_dim"])
    assert bool(jnp.all(jnp.isfinite(out["reconst_x"]["feats"])))
    print("KERNEL_OK")
</pallas_src>

<mosaic_0001>
module attributes {stable_mosaic.version = 11 : i64} {
  func.func @_linear_kernel(%arg0: i32, %arg1: memref<128x1xbf16, #tpu.memory_space<vmem>>, %arg2: memref<1x64xbf16, #tpu.memory_space<vmem>>, %arg3: memref<1x64xf32, #tpu.memory_space<vmem>>, %arg4: memref<128x64xbf16, #tpu.memory_space<vmem>>) attributes {dimension_semantics = [#tpu.dimension_semantics<parallel>], iteration_bounds = array<i64: 1>, scalar_prefetch = 0 : i64, scratch_operands = 0 : i64, tpu.core_type = #tpu.core_type<tc>, window_params = [{transform_indices = @transform_0, window_bounds = array<i64: 128, 1>}, {pipeline_mode = #tpu.pipeline_mode<synchronous>, transform_indices = @transform_1, window_bounds = array<i64: 1, 64>}, {pipeline_mode = #tpu.pipeline_mode<synchronous>, transform_indices = @transform_2, window_bounds = array<i64: 1, 64>}, {transform_indices = @transform_3, window_bounds = array<i64: 128, 64>}]} {
    %c0 = arith.constant 0 : index
    %c0_0 = arith.constant 0 : index
    %0 = vector.load %arg1[%c0, %c0_0] : memref<128x1xbf16, #tpu.memory_space<vmem>>, vector<128x1xbf16>
    %c0_1 = arith.constant 0 : index
    %c0_2 = arith.constant 0 : index
    %1 = vector.load %arg2[%c0_1, %c0_2] : memref<1x64xbf16, #tpu.memory_space<vmem>>, vector<1x64xbf16>
    %2 = arith.extf %0 : vector<128x1xbf16> to vector<128x1xf32>
    %3 = arith.extf %1 : vector<1x64xbf16> to vector<1x64xf32>
    %4 = vector.broadcast %2 : vector<128x1xf32> to vector<128x64xf32>
    %5 = vector.broadcast %3 : vector<1x64xf32> to vector<128x64xf32>
    %6 = arith.mulf %4, %5 : vector<128x64xf32>
    %c0_3 = arith.constant 0 : index
    %c0_4 = arith.constant 0 : index
    %7 = vector.load %arg3[%c0_3, %c0_4] : memref<1x64xf32, #tpu.memory_space<vmem>>, vector<1x64xf32>
    %8 = vector.broadcast %7 : vector<1x64xf32> to vector<128x64xf32>
    %9 = arith.addf %6, %8 : vector<128x64xf32>
    %10 = arith.truncf %9 : vector<128x64xf32> to vector<128x64xbf16>
    %c0_5 = arith.constant 0 : index
    %c0_6 = arith.constant 0 : index
    %11 = vector.load %arg4[%c0_5, %c0_6] : memref<128x64xbf16, #tpu.memory_space<vmem>>, vector<128x64xbf16>
    tpu.vector_store %arg4[%c0_5, %c0_6], %10 {strides = array<i32>} : memref<128x64xbf16, #tpu.memory_space<vmem>>, vector<128x64xbf16>,
    return
  }
  func.func @transform_0(%arg0: i32) -> (i32, i32) {
    %c0_i32 = arith.constant 0 : i32
    %c0_i32_0 = arith.constant 0 : i32
    return %arg0, %c0_i32 : i32, i32
  }
  func.func @transform_1(%arg0: i32) -> (i32, i32) {
    %c0_i32 = arith.constant 0 : i32
    %c0_i32_0 = arith.constant 0 : i32
    %c0_i32_1 = arith.constant 0 : i32
    return %c0_i32, %c0_i32_0 : i32, i32
  }
  func.func @transform_2(%arg0: i32) -> (i32, i32) {
    %c0_i32 = arith.constant 0 : i32
    %c0_i32_0 = arith.constant 0 : i32
    %c0_i32_1 = arith.constant 0 : i32
    return %c0_i32, %c0_i32_0 : i32, i32
  }
  func.func @transform_3(%arg0: i32) -> (i32, i32) {
    %c0_i32 = arith.constant 0 : i32
    %c0_i32_0 = arith.constant 0 : i32
    return %arg0, %c0_i32 : i32, i32
  }
}

module attributes {stable_mosaic.version = 11 : i64} {
  func.func @_proj_residual_kernel(%arg0: i32, %arg1: memref<128x64xbf16, #tpu.memory_space<vmem>>, %arg2: memref<128x64xbf16, #tpu.memory_space<vmem>>, %arg3: memref<64x64xbf16, #tpu.memory_space<vmem>>, %arg4: memref<1x64xf32, #tpu.memory_space<vmem>>, %arg5: memref<128x64xbf16, #tpu.memory_space<vmem>>) attributes {dimension_semantics = [#tpu.dimension_semantics<parallel>], iteration_bounds = array<i64: 1>, scalar_prefetch = 0 : i64, scratch_operands = 0 : i64, tpu.core_type = #tpu.core_type<tc>, window_params = [{transform_indices = @transform_0, window_bounds = array<i64: 128, 64>}, {transform_indices = @transform_1, window_bounds = array<i64: 128, 64>}, {pipeline_mode = #tpu.pipeline_mode<synchronous>, transform_indices = @transform_2, window_bounds = array<i64: 64, 64>}, {pipeline_mode = #tpu.pipeline_mode<synchronous>, transform_indices = @transform_3, window_bounds = array<i64: 1, 64>}, {transform_indices = @transform_4, window_bounds = array<i64: 128, 64>}]} {
    %c0 = arith.constant 0 : index
    %c0_0 = arith.constant 0 : index
    %0 = vector.load %arg1[%c0, %c0_0] : memref<128x64xbf16, #tpu.memory_space<vmem>>, vector<128x64xbf16>
    %c0_1 = arith.constant 0 : index
    %c0_2 = arith.constant 0 : index
    %1 = vector.load %arg3[%c0_1, %c0_2] : memref<64x64xbf16, #tpu.memory_space<vmem>>, vector<64x64xbf16>
    %cst = arith.constant dense<0.000000e+00> : vector<128x64xf32>
    %2 = tpu.matmul %0, %1, %cst {dimension_numbers = #tpu.dot_dimension_numbers<[1], [0], [0], [1], [0, 0, 1, 1], [], []>} : vector<128x64xbf16>, vector<64x64xbf16>, vector<128x64xf32> -> vector<128x64xf32>
    %c0_3 = arith.constant 0 : index
    %c0_4 = arith.constant 0 : index
    %3 = vector.load %arg4[%c0_3, %c0_4] : memref<1x64xf32, #tpu.memory_space<vmem>>, vector<1x64xf32>
    %4 = vector.broadcast %3 : vector<1x64xf32> to vector<128x64xf32>
    %5 = arith.addf %2, %4 : vector<128x64xf32>
    %c0_5 = arith.constant 0 : index
    %c0_6 = arith.constant 0 : index
    %6 = vector.load %arg2[%c0_5, %c0_6] : memref<128x64xbf16, #tpu.memory_space<vmem>>, vector<128x64xbf16>
    %7 = arith.extf %6 : vector<128x64xbf16> to vector<128x64xf32>
    %8 = arith.addf %7, %5 : vector<128x64xf32>
    %9 = arith.truncf %8 : vector<128x64xf32> to vector<128x64xbf16>
    %c0_7 = arith.constant 0 : index
    %c0_8 = arith.constant 0 : index
    %10 = vector.load %arg5[%c0_7, %c0_8] : memref<128x64xbf16, #tpu.memory_space<vmem>>, vector<128x64xbf16>
    tpu.vector_store %arg5[%c0_7, %c0_8], %9 {strides = array<i32>} : memref<128x64xbf16, #tpu.memory_space<vmem>>, vector<128x64xbf16>,
    return
  }
  func.func @transform_0(%arg0: i32) -> (i32, i32) {
    %c0_i32 = arith.constant 0 : i32
    %c0_i32_0 = arith.constant 0 : i32
    return %arg0, %c0_i32 : i32, i32
  }
  func.func @transform_1(%arg0: i32) -> (i32, i32) {
    %c0_i32 = arith.constant 0 : i32
    %c0_i32_0 = arith.constant 0 : i32
    return %arg0, %c0_i32 : i32, i32
  }
  func.func @transform_2(%arg0: i32) -> (i32, i32) {
    %c0_i32 = arith.constant 0 : i32
    %c0_i32_0 = arith.constant 0 : i32
    %c0_i32_1 = arith.constant 0 : i32
    return %c0_i32, %c0_i32_0 : i32, i32
  }
  func.func @transform_3(%arg0: i32) -> (i32, i32) {
    %c0_i32 = arith.constant 0 : i32
    %c0_i32_0 = arith.constant 0 : i32
    %c0_i32_1 = arith.constant 0 : i32
    return %c0_i32, %c0_i32_0 : i32, i32
  }
  func.func @transform_4(%arg0: i32) -> (i32, i32) {
    %c0_i32 = arith.constant 0 : i32
    %c0_i32_0 = arith.constant 0 : i32
    return %arg0, %c0_i32 : i32, i32
  }
}

module attributes {stable_mosaic.version = 11 : i64} {
  func.func @_ln_qkv_kernel(%arg0: i32, %arg1: memref<128x64xbf16, #tpu.memory_space<vmem>>, %arg2: memref<1x64xf32, #tpu.memory_space<vmem>>, %arg3: memref<1x64xf32, #tpu.memory_space<vmem>>, %arg4: memref<64x64xbf16, #tpu.memory_space<vmem>>, %arg5: memref<1x64xf32, #tpu.memory_space<vmem>>, %arg6: memref<64x64xbf16, #tpu.memory_space<vmem>>, %arg7: memref<1x64xf32, #tpu.memory_space<vmem>>, %arg8: memref<64x64xbf16, #tpu.memory_space<vmem>>, %arg9: memref<1x64xf32, #tpu.memory_space<vmem>>, %arg10: memref<128x64xbf16, #tpu.memory_space<vmem>>, %arg11: memref<128x64xbf16, #tpu.memory_space<vmem>>, %arg12: memref<128x64xbf16, #tpu.memory_space<vmem>>) attributes {dimension_semantics = [#tpu.dimension_semantics<parallel>], iteration_bounds = array<i64: 1>, scalar_prefetch = 0 : i64, scratch_operands = 0 : i64, tpu.core_type = #tpu.core_type<tc>, window_params = [{transform_indices = @transform_0, window_bounds = array<i64: 128, 64>}, {pipeline_mode = #tpu.pipeline_mode<synchronous>, transform_indices = @transform_1, window_bounds = array<i64: 1, 64>}, {pipeline_mode = #tpu.pipeline_mode<synchronous>, transform_indices = @transform_2, window_bounds = array<i64: 1, 64>}, {pipeline_mode = #tpu.pipeline_mode<synchronous>, transform_indices = @transform_3, window_bounds = array<i64: 64, 64>}, {pipeline_mode = #tpu.pipeline_mode<synchronous>, transform_indices = @transform_4, window_bounds = array<i64: 1, 64>}, {pipeline_mode = #tpu.pipeline_mode<synchronous>, transform_indices = @transform_5, window_bounds = array<i64: 64, 64>}, {pipeline_mode = #tpu.pipeline_mode<synchronous>, transform_indices = @transform_6, window_bounds = array<i64: 1, 64>}, {pipeline_mode = #tpu.pipeline_mode<synchronous>, transform_indices = @transform_7, window_bounds = array<i64: 64, 64>}, {pipeline_mode = #tpu.pipeline_mode<synchronous>, transform_indices = @transform_8, window_bounds = array<i64: 1, 64>}, {transform_indices = @transform_9, window_bounds = array<i64: 128, 64>}, {transform_indices = @transform_10, window_bounds = array<i64: 128, 64>}, {transform_indices = @transform_11, window_bounds = array<i64: 128, 64>}]} {
    %c0 = arith.constant 0 : index
    %c0_0 = arith.constant 0 : index
    %0 = vector.load %arg1[%c0, %c0_0] : memref<128x64xbf16, #tpu.memory_space<vmem>>, vector<128x64xbf16>
    %1 = arith.extf %0 : vector<128x64xbf16> to vector<128x64xf32>
    %c0_1 = arith.constant 0 : index
    %c0_2 = arith.constant 0 : index
    %2 = vector.load %arg2[%c0_1, %c0_2] : memref<1x64xf32, #tpu.memory_space<vmem>>, vector<1x64xf32>
    %c0_3 = arith.constant 0 : index
    %c0_4 = arith.constant 0 : index
    %3 = vector.load %arg3[%c0_3, %c0_4] : memref<1x64xf32, #tpu.memory_space<vmem>>, vector<1x64xf32>
    %cst = arith.constant dense<0.000000e+00> : vector<128xf32>
    %4 = vector.multi_reduction <add>, %1, %cst [1] : vector<128x64xf32> to vector<128xf32>
    %5 = vector.shape_cast %4 : vector<128xf32> to vector<128x1xf32>
    %cst_5 = arith.constant 6.400000e+01 : f32
    %6 = vector.broadcast %cst_5 : f32 to vector<128x1xf32>
    %7 = arith.divf %5, %6 : vector<128x1xf32>
    %8 = vector.broadcast %7 : vector<128x1xf32> to vector<128x64xf32>
    %9 = arith.subf %1, %8 : vector<128x64xf32>
    %10 = arith.mulf %9, %9 : vector<128x64xf32>
    %cst_6 = arith.constant dense<0.000000e+00> : vector<128xf32>
    %11 = vector.multi_reduction <add>, %10, %cst_6 [1] : vector<128x64xf32> to vector<128xf32>
    %12 = vector.shape_cast %11 : vector<128xf32> to vector<128x1xf32>
    %cst_7 = arith.constant 6.400000e+01 : f32
    %13 = vector.broadcast %cst_7 : f32 to vector<128x1xf32>
    %14 = arith.divf %12, %13 : vector<128x1xf32>
    %cst_8 = arith.constant 9.99999974E-6 : f32
    %15 = vector.broadcast %cst_8 : f32 to vector<128x1xf32>
    %16 = arith.addf %14, %15 : vector<128x1xf32>
    %17 = math.rsqrt %16 : vector<128x1xf32>
    %18 = vector.broadcast %17 : vector<128x1xf32> to vector<128x64xf32>
    %19 = arith.mulf %9, %18 : vector<128x64xf32>
    %20 = vector.broadcast %2 : vector<1x64xf32> to vector<128x64xf32>
    %21 = arith.mulf %19, %20 : vector<128x64xf32>
    %22 = vector.broadcast %3 : vector<1x64xf32> to vector<128x64xf32>
    %23 = arith.addf %21, %22 : vector<128x64xf32>
    %24 = arith.truncf %23 : vector<128x64xf32> to vector<128x64xbf16>
    %c0_9 = arith.constant 0 : index
    %c0_10 = arith.constant 0 : index
    %25 = vector.load %arg4[%c0_9, %c0_10] : memref<64x64xbf16, #tpu.memory_space<vmem>>, vector<64x64xbf16>
    %cst_11 = arith.constant dense<0.000000e+00> : vector<128x64xf32>
    %26 = tpu.matmul %24, %25, %cst_11 {dimension_numbers = #tpu.dot_dimension_numbers<[1], [0], [0], [1], [0, 0, 1, 1], [], []>} : vector<128x64xbf16>, vector<64x64xbf16>, vector<128x64xf32> -> vector<128x64xf32>
    %c0_12 = arith.constant 0 : index
    %c0_13 = arith.constant 0 : index
    %27 = vector.load %arg5[%c0_12, %c0_13] : memref<1x64xf32, #tpu.memory_space<vmem>>, vector<1x64xf32>
    %28 = vector.broadcast %27 : vector<1x64xf32> to vector<128x64xf32>
    %29 = arith.addf %26, %28 : vector<128x64xf32>
    %30 = arith.truncf %29 : vector<128x64xf32> to vector<128x64xbf16>
    %c0_14 = arith.constant 0 : index
    %c0_15 = arith.constant 0 : index
    %31 = vector.load %arg10[%c0_14, %c0_15] : memref<128x64xbf16, #tpu.memory_space<vmem>>, vector<128x64xbf16>
    tpu.vector_store %arg10[%c0_14, %c0_15], %30 {strides = array<i32>} : memref<128x64xbf16, #tpu.memory_space<vmem>>, vector<128x64xbf16>,
    %c0_16 = arith.constant 0 : index
    %c0_17 = arith.constant 0 : index
    %32 = vector.load %arg6[%c0_16, %c0_17] : memref<64x64xbf16, #tpu.memory_space<vmem>>, vector<64x64xbf16>
    %cst_18 = arith.constant dense<0.000000e+00> : vector<128x64xf32>
    %33 = tpu.matmul %24, %32, %cst_18 {dimension_numbers = #tpu.dot_dimension_numbers<[1], [0], [0], [1], [0, 0, 1, 1], [], []>} : vector<128x64xbf16>, vector<64x64xbf16>, vector<128x64xf32> -> vector<128x64xf32>
    %c0_19 = arith.constant 0 : index
    %c0_20 = arith.constant 0 : index
    %34 = vector.load %arg7[%c0_19, %c0_20] : memref<1x64xf32, #tpu.memory_space<vmem>>, vector<1x64xf32>
    %35 = vector.broadcast %34 : vector<1x64xf32> to vector<128x64xf32>
    %36 = arith.addf %33, %35 : vector<128x64xf32>
    %37 = arith.truncf %36 : vector<128x64xf32> to vector<128x64xbf16>
    %c0_21 = arith.constant 0 : index
    %c0_22 = arith.constant 0 : index
    %38 = vector.load %arg11[%c0_21, %c0_22] : memref<128x64xbf16, #tpu.memory_space<vmem>>, vector<128x64xbf16>
    tpu.vector_store %arg11[%c0_21, %c0_22], %37 {strides = array<i32>} : memref<128x64xbf16, #tpu.memory_space<vmem>>, vector<128x64xbf16>,
    %c0_23 = arith.constant 0 : index
    %c0_24 = arith.constant 0 : index
    %39 = vector.load %arg8[%c0_23, %c0_24] : memref<64x64xbf16, #tpu.memory_space<vmem>>, vector<64x64xbf16>
    %cst_25 = arith.constant dense<0.000000e+00> : vector<128x64xf32>
    %40 = tpu.matmul %24, %39, %cst_25 {dimension_numbers = #tpu.dot_dimension_numbers<[1], [0], [0], [1], [0, 0, 1, 1], [], []>} : vector<128x64xbf16>, vector<64x64xbf16>, vector<128x64xf32> -> vector<128x64xf32>
    %c0_26 = arith.constant 0 : index
    %c0_27 = arith.constant 0 : index
    %41 = vector.load %arg9[%c0_26, %c0_27] : memref<1x64xf32, #tpu.memory_space<vmem>>, vector<1x64xf32>
    %42 = vector.broadcast %41 : vector<1x64xf32> to vector<128x64xf32>
    %43 = arith.addf %40, %42 : vector<128x64xf32>
    %44 = arith.truncf %43 : vector<128x64xf32> to vector<128x64xbf16>
    %c0_28 = arith.constant 0 : index
    %c0_29 = arith.constant 0 : index
    %45 = vector.load %arg12[%c0_28, %c0_29] : memref<128x64xbf16, #tpu.memory_space<vmem>>, vector<128x64xbf16>
    tpu.vector_store %arg12[%c0_28, %c0_29], %44 {strides = array<i32>} : memref<128x64xbf16, #tpu.memory_space<vmem>>, vector<128x64xbf16>,
    return
  }
  func.func @transform_0(%arg0: i32) -> (i32, i32) {
    %c0_i32 = arith.constant 0 : i32
    %c0_i32_0 = arith.constant 0 : i32
    return %arg0, %c0_i32 : i32, i32
  }
  func.func @transform_1(%arg0: i32) -> (i32, i32) {
    %c0_i32 = arith.constant 0 : i32
    %c0_i32_0 = arith.constant 0 : i32
    %c0_i32_1 = arith.constant 0 : i32
    return %c0_i32, %c0_i32_0 : i32, i32
  }
  func.func @transform_2(%arg0: i32) -> (i32, i32) {
    %c0_i32 = arith.constant 0 : i32
    %c0_i32_0 = arith.constant 0 : i32
    %c0_i32_1 = arith.constant 0 : i32
    return %c0_i32, %c0_i32_0 : i32, i32
  }
  func.func @transform_3(%arg0: i32) -> (i32, i32) {
    %c0_i32 = arith.constant 0 : i32
    %c0_i32_0 = arith.constant 0 : i32
    %c0_i32_1 = arith.constant 0 : i32
    return %c0_i32, %c0_i32_0 : i32, i32
  }
  func.func @transform_4(%arg0: i32) -> (i32, i32) {
    %c0_i32 = arith.constant 0 : i32
    %c0_i32_0 = arith.constant 0 : i32
    %c0_i32_1 = arith.constant 0 : i32
    return %c0_i32, %c0_i32_0 : i32, i32
  }
  func.func @transform_5(%arg0: i32) -> (i32, i32) {
    %c0_i32 = arith.constant 0 : i32
    %c0_i32_0 = arith.constant 0 : i32
    %c0_i32_1 = arith.constant 0 : i32
    return %c0_i32, %c0_i32_0 : i32, i32
  }
  func.func @transform_6(%arg0: i32) -> (i32, i32) {
    %c0_i32 = arith.constant 0 : i32
    %c0_i32_0 = arith.constant 0 : i32
    %c0_i32_1 = arith.constant 0 : i32
    return %c0_i32, %c0_i32_0 : i32, i32
  }
  func.func @transform_7(%arg0: i32) -> (i32, i32) {
    %c0_i32 = arith.constant 0 : i32
    %c0_i32_0 = arith.constant 0 : i32
    %c0_i32_1 = arith.constant 0 : i32
    return %c0_i32, %c0_i32_0 : i32, i32
  }
  func.func @transform_8(%arg0: i32) -> (i32, i32) {
    %c0_i32 = arith.constant 0 : i32
    %c0_i32_0 = arith.constant 0 : i32
    %c0_i32_1 = arith.constant 0 : i32
    return %c0_i32, %c0_i32_0 : i32, i32
  }
  func.func @transform_9(%arg0: i32) -> (i32, i32) {
    %c0_i32 = arith.constant 0 : i32
    %c0_i32_0 = arith.constant 0 : i32
    return %arg0, %c0_i32 : i32, i32
  }
  func.func @transform_10(%arg0: i32) -> (i32, i32) {
    %c0_i32 = arith.constant 0 : i32
    %c0_i32_0 = arith.constant 0 : i32
    return %arg0, %c0_i32 : i32, i32
  }
  func.func @transform_11(%arg0: i32) -> (i32, i32) {
    %c0_i32 = arith.constant 0 : i32
    %c0_i32_0 = arith.constant 0 : i32
    return %arg0, %c0_i32 : i32, i32
  }
}

module attributes {stable_mosaic.version = 11 : i64} {
  func.func @_flash_attn_kernel(%arg0: i32, %arg1: i32, %arg2: memref<128x1xf32, #tpu.memory_space<vmem>>, %arg3: memref<1x128xf32, #tpu.memory_space<vmem>>, %arg4: memref<128x64xbf16, #tpu.memory_space<vmem>>, %arg5: memref<128x64xbf16, #tpu.memory_space<vmem>>, %arg6: memref<128x64xbf16, #tpu.memory_space<vmem>>, %arg7: memref<128x64xbf16, #tpu.memory_space<vmem>>, %arg8: memref<2x128x1xf32, #tpu.memory_space<vmem>>, %arg9: memref<2x128x1xf32, #tpu.memory_space<vmem>>, %arg10: memref<128x64xf32, #tpu.memory_space<vmem>>) attributes {dimension_semantics = [#tpu.dimension_semantics<parallel>, #tpu.dimension_semantics<arbitrary>], iteration_bounds = array<i64: 1, 1>, scalar_prefetch = 0 : i64, scratch_operands = 3 : i64, tpu.core_type = #tpu.core_type<tc>, window_params = [{transform_indices = @transform_0, window_bounds = array<i64: 128, 1>}, {transform_indices = @transform_1, window_bounds = array<i64: 1, 128>}, {transform_indices = @transform_2, window_bounds = array<i64: 128, 64>}, {transform_indices = @transform_3, window_bounds = array<i64: 128, 64>}, {transform_indices = @transform_4, window_bounds = array<i64: 128, 64>}, {transform_indices = @transform_5, window_bounds = array<i64: 128, 64>}]} {
    %c0_i32 = arith.constant 0 : i32
    %0 = arith.cmpi eq, %arg1, %c0_i32 : i32
    %1 = arith.extui %0 : i1 to i32
    %c0_i32_0 = arith.constant 0 : i32
    %2 = arith.cmpi ne, %1, %c0_i32_0 : i32
    scf.if %2 {
      %cst_59 = arith.constant -1.000000e+30 : f32
      %86 = vector.broadcast %cst_59 : f32 to vector<2x128x1xf32>
      %c0_60 = arith.constant 0 : index
      %c0_61 = arith.constant 0 : index
      %c0_62 = arith.constant 0 : index
      %87 = vector.load %arg8[%c0_60, %c0_61, %c0_62] : memref<2x128x1xf32, #tpu.memory_space<vmem>>, vector<2x128x1xf32>
      tpu.vector_store %arg8[%c0_60, %c0_61, %c0_62], %86 {strides = array<i32>} : memref<2x128x1xf32, #tpu.memory_space<vmem>>, vector<2x128x1xf32>,
      %cst_63 = arith.constant 0.000000e+00 : f32
      %88 = vector.broadcast %cst_63 : f32 to vector<2x128x1xf32>
      %c0_64 = arith.constant 0 : index
      %c0_65 = arith.constant 0 : index
      %c0_66 = arith.constant 0 : index
      %89 = vector.load %arg9[%c0_64, %c0_65, %c0_66] : memref<2x128x1xf32, #tpu.memory_space<vmem>>, vector<2x128x1xf32>
      tpu.vector_store %arg9[%c0_64, %c0_65, %c0_66], %88 {strides = array<i32>} : memref<2x128x1xf32, #tpu.memory_space<vmem>>, vector<2x128x1xf32>,
      %cst_67 = arith.constant 0.000000e+00 : f32
      %90 = vector.broadcast %cst_67 : f32 to vector<128x64xf32>
      %c0_68 = arith.constant 0 : index
      %c0_69 = arith.constant 0 : index
      %91 = vector.load %arg10[%c0_68, %c0_69] : memref<128x64xf32, #tpu.memory_space<vmem>>, vector<128x64xf32>
      tpu.vector_store %arg10[%c0_68, %c0_69], %90 {strides = array<i32>} : memref<128x64xf32, #tpu.memory_space<vmem>>, vector<128x64xf32>,
    } else {
    }
    %c0 = arith.constant 0 : index
    %c0_1 = arith.constant 0 : index
    %3 = vector.load %arg2[%c0, %c0_1] : memref<128x1xf32, #tpu.memory_space<vmem>>, vector<128x1xf32>
    %c0_2 = arith.constant 0 : index
    %c0_3 = arith.constant 0 : index
    %4 = vector.load %arg3[%c0_2, %c0_3] : memref<1x128xf32, #tpu.memory_space<vmem>>, vector<1x128xf32>
    %5 = vector.broadcast %3 : vector<128x1xf32> to vector<128x128xf32>
    %6 = vector.broadcast %4 : vector<1x128xf32> to vector<128x128xf32>
    %7 = arith.cmpf oeq, %5, %6 : vector<128x128xf32>
    %cst = arith.constant 0.000000e+00 : f32
    %cst_4 = arith.constant -1.000000e+09 : f32
    %8 = vector.broadcast %cst : f32 to vector<128x128xf32>
    %9 = vector.broadcast %cst_4 : f32 to vector<128x128xf32>
    %10 = arith.select %7, %8, %9 : vector<128x128xi1>, vector<128x128xf32>
    %c0_5 = arith.constant 0 : index
    %c0_6 = arith.constant 0 : index
    %11 = vector.load %arg4[%c0_5, %c0_6] : memref<128x64xbf16, #tpu.memory_space<vmem>>, vector<128x32xbf16>
    %c0_7 = arith.constant 0 : index
    %c0_8 = arith.constant 0 : index
    %12 = vector.load %arg5[%c0_7, %c0_8] : memref<128x64xbf16, #tpu.memory_space<vmem>>, vector<128x32xbf16>
    %c0_9 = arith.constant 0 : index
    %c0_10 = arith.constant 0 : index
    %13 = vector.load %arg6[%c0_9, %c0_10] : memref<128x64xbf16, #tpu.memory_space<vmem>>, vector<128x32xbf16>
    %cst_11 = arith.constant dense<0.000000e+00> : vector<128x128xf32>
    %14 = tpu.matmul %11, %12, %cst_11 {dimension_numbers = #tpu.dot_dimension_numbers<[1], [1], [0], [0], [0, 0, 1, 0], [], []>} : vector<128x32xbf16>, vector<128x32xbf16>, vector<128x128xf32> -> vector<128x128xf32>
    %cst_12 = arith.constant 0.176776692 : f32
    %15 = vector.broadcast %cst_12 : f32 to vector<128x128xf32>
    %16 = arith.mulf %14, %15 : vector<128x128xf32>
    %17 = arith.addf %16, %10 : vector<128x128xf32>
    %c0_13 = arith.constant 0 : index
    %c0_14 = arith.constant 0 : index
    %c0_15 = arith.constant 0 : index
    %18 = vector.load %arg8[%c0_13, %c0_14, %c0_15] : memref<2x128x1xf32, #tpu.memory_space<vmem>>, vector<1x128x1xf32>
    %19 = vector.shape_cast %18 : vector<1x128x1xf32> to vector<128x1xf32>
    %cst_16 = arith.constant dense<0xFF800000> : vector<128xf32>
    %20 = vector.multi_reduction <maximumf>, %17, %cst_16 [1] : vector<128x128xf32> to vector<128xf32>
    %21 = vector.shape_cast %20 : vector<128xf32> to vector<128x1xf32>
    %22 = arith.maximumf %19, %21 : vector<128x1xf32>
    %23 = arith.subf %19, %22 : vector<128x1xf32>
    %24 = math.exp %23 : vector<128x1xf32>
    %25 = vector.broadcast %22 : vector<128x1xf32> to vector<128x128xf32>
    %26 = arith.subf %17, %25 : vector<128x128xf32>
    %27 = math.exp %26 : vector<128x128xf32>
    %c0_17 = arith.constant 0 : index
    %c0_18 = arith.constant 0 : index
    %c0_19 = arith.constant 0 : index
    %28 = vector.load %arg9[%c0_17, %c0_18, %c0_19] : memref<2x128x1xf32, #tpu.memory_space<vmem>>, vector<1x128x1xf32>
    %29 = vector.shape_cast %28 : vector<1x128x1xf32> to vector<128x1xf32>
    %30 = arith.mulf %24, %29 : vector<128x1xf32>
    %cst_20 = arith.constant dense<0.000000e+00> : vector<128xf32>
    %31 = vector.multi_reduction <add>, %27, %cst_20 [1] : vector<128x128xf32> to vector<128xf32>
    %32 = vector.shape_cast %31 : vector<128xf32> to vector<128x1xf32>
    %33 = arith.addf %30, %32 : vector<128x1xf32>
    %c0_21 = arith.constant 0 : index
    %c0_22 = arith.constant 0 : index
    %c0_23 = arith.constant 0 : index
    %34 = vector.load %arg9[%c0_21, %c0_22, %c0_23] : memref<2x128x1xf32, #tpu.memory_space<vmem>>, vector<1x128x1xf32>
    %35 = vector.shape_cast %34 : vector<1x128x1xf32> to vector<128x1xf32>
    %36 = vector.shape_cast %33 : vector<128x1xf32> to vector<1x128x1xf32>
    tpu.vector_store %arg9[%c0_21, %c0_22, %c0_23], %36 {strides = array<i32>} : memref<2x128x1xf32, #tpu.memory_space<vmem>>, vector<1x128x1xf32>,
    %c0_24 = arith.constant 0 : index
    %c0_25 = arith.constant 0 : index
    %37 = vector.load %arg10[%c0_24, %c0_25] : memref<128x64xf32, #tpu.memory_space<vmem>>, vector<128x32xf32>
    %38 = vector.broadcast %24 : vector<128x1xf32> to vector<128x32xf32>
    %39 = arith.mulf %38, %37 : vector<128x32xf32>
    %40 = arith.truncf %27 : vector<128x128xf32> to vector<128x128xbf16>
    %cst_26 = arith.constant dense<0.000000e+00> : vector<128x32xf32>
    %41 = tpu.matmul %40, %13, %cst_26 {dimension_numbers = #tpu.dot_dimension_numbers<[1], [0], [0], [1], [0, 0, 1, 1], [], []>} : vector<128x128xbf16>, vector<128x32xbf16>, vector<128x32xf32> -> vector<128x32xf32>
    %42 = arith.addf %39, %41 : vector<128x32xf32>
    %c0_27 = arith.constant 0 : index
    %c0_28 = arith.constant 0 : index
    %43 = vector.load %arg10[%c0_27, %c0_28] : memref<128x64xf32, #tpu.memory_space<vmem>>, vector<128x32xf32>
    tpu.vector_store %arg10[%c0_27, %c0_28], %42 {strides = array<i32>} : memref<128x64xf32, #tpu.memory_space<vmem>>, vector<128x32xf32>,
    %c0_29 = arith.constant 0 : index
    %c0_30 = arith.constant 0 : index
    %c0_31 = arith.constant 0 : index
    %44 = vector.load %arg8[%c0_29, %c0_30, %c0_31] : memref<2x128x1xf32, #tpu.memory_space<vmem>>, vector<1x128x1xf32>
    %45 = vector.shape_cast %44 : vector<1x128x1xf32> to vector<128x1xf32>
    %46 = vector.shape_cast %22 : vector<128x1xf32> to vector<1x128x1xf32>
    tpu.vector_store %arg8[%c0_29, %c0_30, %c0_31], %46 {strides = array<i32>} : memref<2x128x1xf32, #tpu.memory_space<vmem>>, vector<1x128x1xf32>,
    %c0_32 = arith.constant 0 : index
    %c32 = arith.constant 32 : index
    %47 = vector.load %arg4[%c0_32, %c32] : memref<128x64xbf16, #tpu.memory_space<vmem>>, vector<128x32xbf16>
    %c0_33 = arith.constant 0 : index
    %c32_34 = arith.constant 32 : index
    %48 = vector.load %arg5[%c0_33, %c32_34] : memref<128x64xbf16, #tpu.memory_space<vmem>>, vector<128x32xbf16>
    %c0_35 = arith.constant 0 : index
    %c32_36 = arith.constant 32 : index
    %49 = vector.load %arg6[%c0_35, %c32_36] : memref<128x64xbf16, #tpu.memory_space<vmem>>, vector<128x32xbf16>
    %cst_37 = arith.constant dense<0.000000e+00> : vector<128x128xf32>
    %50 = tpu.matmul %47, %48, %cst_37 {dimension_numbers = #tpu.dot_dimension_numbers<[1], [1], [0], [0], [0, 0, 1, 0], [], []>} : vector<128x32xbf16>, vector<128x32xbf16>, vector<128x128xf32> -> vector<128x128xf32>
    %cst_38 = arith.constant 0.176776692 : f32
    %51 = vector.broadcast %cst_38 : f32 to vector<128x128xf32>
    %52 = arith.mulf %50, %51 : vector<128x128xf32>
    %53 = arith.addf %52, %10 : vector<128x128xf32>
    %c1 = arith.constant 1 : index
    %c0_39 = arith.constant 0 : index
    %c0_40 = arith.constant 0 : index
    %54 = vector.load %arg8[%c1, %c0_39, %c0_40] : memref<2x128x1xf32, #tpu.memory_space<vmem>>, vector<1x128x1xf32>
    %55 = vector.shape_cast %54 : vector<1x128x1xf32> to vector<128x1xf32>
    %cst_41 = arith.constant dense<0xFF800000> : vector<128xf32>
    %56 = vector.multi_reduction <maximumf>, %53, %cst_41 [1] : vector<128x128xf32> to vector<128xf32>
    %57 = vector.shape_cast %56 : vector<128xf32> to vector<128x1xf32>
    %58 = arith.maximumf %55, %57 : vector<128x1xf32>
    %59 = arith.subf %55, %58 : vector<128x1xf32>
    %60 = math.exp %59 : vector<128x1xf32>
    %61 = vector.broadcast %58 : vector<128x1xf32> to vector<128x128xf32>
    %62 = arith.subf %53, %61 : vector<128x128xf32>
    %63 = math.exp %62 : vector<128x128xf32>
    %c1_42 = arith.constant 1 : index
    %c0_43 = arith.constant 0 : index
    %c0_44 = arith.constant 0 : index
    %64 = vector.load %arg9[%c1_42, %c0_43, %c0_44] : memref<2x128x1xf32, #tpu.memory_space<vmem>>, vector<1x128x1xf32>
    %65 = vector.shape_cast %64 : vector<1x128x1xf32> to vector<128x1xf32>
    %66 = arith.mulf %60, %65 : vector<128x1xf32>
    %cst_45 = arith.constant dense<0.000000e+00> : vector<128xf32>
    %67 = vector.multi_reduction <add>, %63, %cst_45 [1] : vector<128x128xf32> to vector<128xf32>
    %68 = vector.shape_cast %67 : vector<128xf32> to vector<128x1xf32>
    %69 = arith.addf %66, %68 : vector<128x1xf32>
    %c1_46 = arith.constant 1 : index
    %c0_47 = arith.constant 0 : index
    %c0_48 = arith.constant 0 : index
    %70 = vector.load %arg9[%c1_46, %c0_47, %c0_48] : memref<2x128x1xf32, #tpu.memory_space<vmem>>, vector<1x128x1xf32>
    %71 = vector.shape_cast %70 : vector<1x128x1xf32> to vector<128x1xf32>
    %72 = vector.shape_cast %69 : vector<128x1xf32> to vector<1x128x1xf32>
    tpu.vector_store %arg9[%c1_46, %c0_47, %c0_48], %72 {strides = array<i32>} : memref<2x128x1xf32, #tpu.memory_space<vmem>>, vector<1x128x1xf32>,
    %c0_49 = arith.constant 0 : index
    %c32_50 = arith.constant 32 : index
    %73 = vector.load %arg10[%c0_49, %c32_50] : memref<128x64xf32, #tpu.memory_space<vmem>>, vector<128x32xf32>
    %74 = vector.broadcast %60 : vector<128x1xf32> to vector<128x32xf32>
    %75 = arith.mulf %74, %73 : vector<128x32xf32>
    %76 = arith.truncf %63 : vector<128x128xf32> to vector<128x128xbf16>
    %cst_51 = arith.constant dense<0.000000e+00> : vector<128x32xf32>
    %77 = tpu.matmul %76, %49, %cst_51 {dimension_numbers = #tpu.dot_dimension_numbers<[1], [0], [0], [1], [0, 0, 1, 1], [], []>} : vector<128x128xbf16>, vector<128x32xbf16>, vector<128x32xf32> -> vector<128x32xf32>
    %78 = arith.addf %75, %77 : vector<128x32xf32>
    %c0_52 = arith.constant 0 : index
    %c32_53 = arith.constant 32 : index
    %79 = vector.load %arg10[%c0_52, %c32_53] : memref<128x64xf32, #tpu.memory_space<vmem>>, vector<128x32xf32>
    tpu.vector_store %arg10[%c0_52, %c32_53], %78 {strides = array<i32>} : memref<128x64xf32, #tpu.memory_space<vmem>>, vector<128x32xf32>,
    %c1_54 = arith.constant 1 : index
    %c0_55 = arith.constant 0 : index
    %c0_56 = arith.constant 0 : index
    %80 = vector.load %arg8[%c1_54, %c0_55, %c0_56] : memref<2x128x1xf32, #tpu.memory_space<vmem>>, vector<1x128x1xf32>
    %81 = vector.shape_cast %80 : vector<1x128x1xf32> to vector<128x1xf32>
    %82 = vector.shape_cast %58 : vector<128x1xf32> to vector<1x128x1xf32>
    tpu.vector_store %arg8[%c1_54, %c0_55, %c0_56], %82 {strides = array<i32>} : memref<2x128x1xf32, #tpu.memory_space<vmem>>, vector<1x128x1xf32>,
    %c0_i32_57 = arith.constant 0 : i32
    %83 = arith.cmpi eq, %arg1, %c0_i32_57 : i32
    %84 = arith.extui %83 : i1 to i32
    %c0_i32_58 = arith.constant 0 : i32
    %85 = arith.cmpi ne, %84, %c0_i32_58 : i32
    scf.if %85 {
      %c0_59 = arith.constant 0 : index
      %c0_60 = arith.constant 0 : index
      %86 = vector.load %arg10[%c0_59, %c0_60] : memref<128x64xf32, #tpu.memory_space<vmem>>, vector<128x32xf32>
      %c0_61 = arith.constant 0 : index
      %c0_62 = arith.constant 0 : index
      %c0_63 = arith.constant 0 : index
      %87 = vector.load %arg9[%c0_61, %c0_62, %c0_63] : memref<2x128x1xf32, #tpu.memory_space<vmem>>, vector<1x128x1xf32>
      %88 = vector.shape_cast %87 : vector<1x128x1xf32> to vector<128x1xf32>
      %89 = tpu.reciprocal %88 {approx = true} : vector<128x1xf32> -> vector<128x1xf32>
      %90 = vector.broadcast %89 : vector<128x1xf32> to vector<128x32xf32>
      %91 = arith.mulf %86, %90 : vector<128x32xf32>
      %c0_64 = arith.constant 0 : index
      %c0_65 = arith.constant 0 : index
      %92 = vector.load %arg10[%c0_64, %c0_65] : memref<128x64xf32, #tpu.memory_space<vmem>>, vector<128x32xf32>
      tpu.vector_store %arg10[%c0_64, %c0_65], %91 {strides = array<i32>} : memref<128x64xf32, #tpu.memory_space<vmem>>, vector<128x32xf32>,
      %c0_66 = arith.constant 0 : index
      %c32_67 = arith.constant 32 : index
      %93 = vector.load %arg10[%c0_66, %c32_67] : memref<128x64xf32, #tpu.memory_space<vmem>>, vector<128x32xf32>
      %c1_68 = arith.constant 1 : index
      %c0_69 = arith.constant 0 : index
      %c0_70 = arith.constant 0 : index
      %94 = vector.load %arg9[%c1_68, %c0_69, %c0_70] : memref<2x128x1xf32, #tpu.memory_space<vmem>>, vector<1x128x1xf32>
      %95 = vector.shape_cast %94 : vector<1x128x1xf32> to vector<128x1xf32>
      %96 = tpu.reciprocal %95 {approx = true} : vector<128x1xf32> -> vector<128x1xf32>
      %97 = vector.broadcast %96 : vector<128x1xf32> to vector<128x32xf32>
      %98 = arith.mulf %93, %97 : vector<128x32xf32>
      %c0_71 = arith.constant 0 : index
      %c32_72 = arith.constant 32 : index
      %99 = vector.load %arg10[%c0_71, %c32_72] : memref<128x64xf32, #tpu.memory_space<vmem>>, vector<128x32xf32>
      tpu.vector_store %arg10[%c0_71, %c32_72], %98 {strides = array<i32>} : memref<128x64xf32, #tpu.memory_space<vmem>>, vector<128x32xf32>,
      %c0_73 = arith.constant 0 : index
      %c0_74 = arith.constant 0 : index
      %100 = vector.load %arg10[%c0_73, %c0_74] : memref<128x64xf32, #tpu.memory_space<vmem>>, vector<128x64xf32>
      %101 = arith.truncf %100 : vector<128x64xf32> to vector<128x64xbf16>
      %c0_75 = arith.constant 0 : index
      %c0_76 = arith.constant 0 : index
      %102 = vector.load %arg7[%c0_75, %c0_76] : memref<128x64xbf16, #tpu.memory_space<vmem>>, vector<128x64xbf16>
      tpu.vector_store %arg7[%c0_75, %c0_76], %101 {strides = array<i32>} : memref<128x64xbf16, #tpu.memory_space<vmem>>, vector<128x64xbf16>,
    } else {
    }
    return
  }
  func.func @transform_0(%arg0: i32, %arg1: i32) -> (i32, i32) {
    %c0_i32 = arith.constant 0 : i32
    %c0_i32_0 = arith.constant 0 : i32
    return %arg0, %c0_i32 : i32, i32
  }
  func.func @transform_1(%arg0: i32, %arg1: i32) -> (i32, i32) {
    %c0_i32 = arith.constant 0 : i32
    %c0_i32_0 = arith.constant 0 : i32
    return %c0_i32, %arg1 : i32, i32
  }
  func.func @transform_2(%arg0: i32, %arg1: i32) -> (i32, i32) {
    %c0_i32 = arith.constant 0 : i32
    %c0_i32_0 = arith.constant 0 : i32
    return %arg0, %c0_i32 : i32, i32
  }
  func.func @transform_3(%arg0: i32, %arg1: i32) -> (i32, i32) {
    %c0_i32 = arith.constant 0 : i32
    %c0_i32_0 = arith.constant 0 : i32
    return %arg1, %c0_i32 : i32, i32
  }
  func.func @transform_4(%arg0: i32, %arg1: i32) -> (i32, i32) {
    %c0_i32 = arith.constant 0 : i32
    %c0_i32_0 = arith.constant 0 : i32
    return %arg1, %c0_i32 : i32, i32
  }
  func.func @transform_5(%arg0: i32, %arg1: i32) -> (i32, i32) {
    %c0_i32 = arith.constant 0 : i32
    %c0_i32_0 = arith.constant 0 : i32
    return %arg0, %c0_i32 : i32, i32
  }
}

module attributes {stable_mosaic.version = 11 : i64} {
  func.func @_ln_mlp_residual_kernel(%arg0: i32, %arg1: memref<128x64xbf16, #tpu.memory_space<vmem>>, %arg2: memref<1x64xf32, #tpu.memory_space<vmem>>, %arg3: memref<1x64xf32, #tpu.memory_space<vmem>>, %arg4: memref<64x256xbf16, #tpu.memory_space<vmem>>, %arg5: memref<1x256xf32, #tpu.memory_space<vmem>>, %arg6: memref<256x64xbf16, #tpu.memory_space<vmem>>, %arg7: memref<1x64xf32, #tpu.memory_space<vmem>>, %arg8: memref<128x64xbf16, #tpu.memory_space<vmem>>) attributes {dimension_semantics = [#tpu.dimension_semantics<parallel>], iteration_bounds = array<i64: 1>, scalar_prefetch = 0 : i64, scratch_operands = 0 : i64, tpu.core_type = #tpu.core_type<tc>, window_params = [{transform_indices = @transform_0, window_bounds = array<i64: 128, 64>}, {pipeline_mode = #tpu.pipeline_mode<synchronous>, transform_indices = @transform_1, window_bounds = array<i64: 1, 64>}, {pipeline_mode = #tpu.pipeline_mode<synchronous>, transform_indices = @transform_2, window_bounds = array<i64: 1, 64>}, {pipeline_mode = #tpu.pipeline_mode<synchronous>, transform_indices = @transform_3, window_bounds = array<i64: 64, 256>}, {pipeline_mode = #tpu.pipeline_mode<synchronous>, transform_indices = @transform_4, window_bounds = array<i64: 1, 256>}, {pipeline_mode = #tpu.pipeline_mode<synchronous>, transform_indices = @transform_5, window_bounds = array<i64: 256, 64>}, {pipeline_mode = #tpu.pipeline_mode<synchronous>, transform_indices = @transform_6, window_bounds = array<i64: 1, 64>}, {transform_indices = @transform_7, window_bounds = array<i64: 128, 64>}]} {
    %c0 = arith.constant 0 : index
    %c0_0 = arith.constant 0 : index
    %0 = vector.load %arg1[%c0, %c0_0] : memref<128x64xbf16, #tpu.memory_space<vmem>>, vector<128x64xbf16>
    %1 = arith.extf %0 : vector<128x64xbf16> to vector<128x64xf32>
    %c0_1 = arith.constant 0 : index
    %c0_2 = arith.constant 0 : index
    %2 = vector.load %arg2[%c0_1, %c0_2] : memref<1x64xf32, #tpu.memory_space<vmem>>, vector<1x64xf32>
    %c0_3 = arith.constant 0 : index
    %c0_4 = arith.constant 0 : index
    %3 = vector.load %arg3[%c0_3, %c0_4] : memref<1x64xf32, #tpu.memory_space<vmem>>, vector<1x64xf32>
    %cst = arith.constant dense<0.000000e+00> : vector<128xf32>
    %4 = vector.multi_reduction <add>, %1, %cst [1] : vector<128x64xf32> to vector<128xf32>
    %5 = vector.shape_cast %4 : vector<128xf32> to vector<128x1xf32>
    %cst_5 = arith.constant 6.400000e+01 : f32
    %6 = vector.broadcast %cst_5 : f32 to vector<128x1xf32>
    %7 = arith.divf %5, %6 : vector<128x1xf32>
    %8 = vector.broadcast %7 : vector<128x1xf32> to vector<128x64xf32>
    %9 = arith.subf %1, %8 : vector<128x64xf32>
    %10 = arith.mulf %9, %9 : vector<128x64xf32>
    %cst_6 = arith.constant dense<0.000000e+00> : vector<128xf32>
    %11 = vector.multi_reduction <add>, %10, %cst_6 [1] : vector<128x64xf32> to vector<128xf32>
    %12 = vector.shape_cast %11 : vector<128xf32> to vector<128x1xf32>
    %cst_7 = arith.constant 6.400000e+01 : f32
    %13 = vector.broadcast %cst_7 : f32 to vector<128x1xf32>
    %14 = arith.divf %12, %13 : vector<128x1xf32>
    %cst_8 = arith.constant 9.99999974E-6 : f32
    %15 = vector.broadcast %cst_8 : f32 to vector<128x1xf32>
    %16 = arith.addf %14, %15 : vector<128x1xf32>
    %17 = math.rsqrt %16 : vector<128x1xf32>
    %18 = vector.broadcast %17 : vector<128x1xf32> to vector<128x64xf32>
    %19 = arith.mulf %9, %18 : vector<128x64xf32>
    %20 = vector.broadcast %2 : vector<1x64xf32> to vector<128x64xf32>
    %21 = arith.mulf %19, %20 : vector<128x64xf32>
    %22 = vector.broadcast %3 : vector<1x64xf32> to vector<128x64xf32>
    %23 = arith.addf %21, %22 : vector<128x64xf32>
    %24 = arith.truncf %23 : vector<128x64xf32> to vector<128x64xbf16>
    %c0_9 = arith.constant 0 : index
    %c0_10 = arith.constant 0 : index
    %25 = vector.load %arg4[%c0_9, %c0_10] : memref<64x256xbf16, #tpu.memory_space<vmem>>, vector<64x256xbf16>
    %cst_11 = arith.constant dense<0.000000e+00> : vector<128x256xf32>
    %26 = tpu.matmul %24, %25, %cst_11 {dimension_numbers = #tpu.dot_dimension_numbers<[1], [0], [0], [1], [0, 0, 1, 1], [], []>} : vector<128x64xbf16>, vector<64x256xbf16>, vector<128x256xf32> -> vector<128x256xf32>
    %c0_12 = arith.constant 0 : index
    %c0_13 = arith.constant 0 : index
    %27 = vector.load %arg5[%c0_12, %c0_13] : memref<1x256xf32, #tpu.memory_space<vmem>>, vector<1x256xf32>
    %28 = vector.broadcast %27 : vector<1x256xf32> to vector<128x256xf32>
    %29 = arith.addf %26, %28 : vector<128x256xf32>
    %30 = arith.mulf %29, %29 : vector<128x256xf32>
    %31 = arith.mulf %29, %30 : vector<128x256xf32>
    %cst_14 = arith.constant 4.471500e-02 : f32
    %32 = vector.broadcast %cst_14 : f32 to vector<128x256xf32>
    %33 = arith.mulf %32, %31 : vector<128x256xf32>
    %34 = arith.addf %29, %33 : vector<128x256xf32>
    %cst_15 = arith.constant 0.797884583 : f32
    %35 = vector.broadcast %cst_15 : f32 to vector<128x256xf32>
    %36 = arith.mulf %35, %34 : vector<128x256xf32>
    %37 = math.tanh %36 : vector<128x256xf32>
    %cst_16 = arith.constant 1.000000e+00 : f32
    %38 = vector.broadcast %cst_16 : f32 to vector<128x256xf32>
    %39 = arith.addf %38, %37 : vector<128x256xf32>
    %cst_17 = arith.constant 5.000000e-01 : f32
    %40 = vector.broadcast %cst_17 : f32 to vector<128x256xf32>
    %41 = arith.mulf %40, %39 : vector<128x256xf32>
    %42 = arith.mulf %29, %41 : vector<128x256xf32>
    %43 = arith.truncf %42 : vector<128x256xf32> to vector<128x256xbf16>
    %c0_18 = arith.constant 0 : index
    %c0_19 = arith.constant 0 : index
    %44 = vector.load %arg6[%c0_18, %c0_19] : memref<256x64xbf16, #tpu.memory_space<vmem>>, vector<256x64xbf16>
    %cst_20 = arith.constant dense<0.000000e+00> : vector<128x64xf32>
    %45 = tpu.matmul %43, %44, %cst_20 {dimension_numbers = #tpu.dot_dimension_numbers<[1], [0], [0], [1], [0, 0, 1, 1], [], []>} : vector<128x256xbf16>, vector<256x64xbf16>, vector<128x64xf32> -> vector<128x64xf32>
    %c0_21 = arith.constant 0 : index
    %c0_22 = arith.constant 0 : index
    %46 = vector.load %arg7[%c0_21, %c0_22] : memref<1x64xf32, #tpu.memory_space<vmem>>, vector<1x64xf32>
    %47 = vector.broadcast %46 : vector<1x64xf32> to vector<128x64xf32>
    %48 = arith.addf %45, %47 : vector<128x64xf32>
    %49 = arith.addf %1, %48 : vector<128x64xf32>
    %50 = arith.truncf %49 : vector<128x64xf32> to vector<128x64xbf16>
    %c0_23 = arith.constant 0 : index
    %c0_24 = arith.constant 0 : index
    %51 = vector.load %arg8[%c0_23, %c0_24] : memref<128x64xbf16, #tpu.memory_space<vmem>>, vector<128x64xbf16>
    tpu.vector_store %arg8[%c0_23, %c0_24], %50 {strides = array<i32>} : memref<128x64xbf16, #tpu.memory_space<vmem>>, vector<128x64xbf16>,
    return
  }
  func.func @transform_0(%arg0: i32) -> (i32, i32) {
    %c0_i32 = arith.constant 0 : i32
    %c0_i32_0 = arith.constant 0 : i32
    return %arg0, %c0_i32 : i32, i32
  }
  func.func @transform_1(%arg0: i32) -> (i32, i32) {
    %c0_i32 = arith.constant 0 : i32
    %c0_i32_0 = arith.constant 0 : i32
    %c0_i32_1 = arith.constant 0 : i32
    return %c0_i32, %c0_i32_0 : i32, i32
  }
  func.func @transform_2(%arg0: i32) -> (i32, i32) {
    %c0_i32 = arith.constant 0 : i32
    %c0_i32_0 = arith.constant 0 : i32
    %c0_i32_1 = arith.constant 0 : i32
    return %c0_i32, %c0_i32_0 : i32, i32
  }
  func.func @transform_3(%arg0: i32) -> (i32, i32) {
    %c0_i32 = arith.constant 0 : i32
    %c0_i32_0 = arith.constant 0 : i32
    %c0_i32_1 = arith.constant 0 : i32
    return %c0_i32, %c0_i32_0 : i32, i32
  }
  func.func @transform_4(%arg0: i32) -> (i32, i32) {
    %c0_i32 = arith.constant 0 : i32
    %c0_i32_0 = arith.constant 0 : i32
    %c0_i32_1 = arith.constant 0 : i32
    return %c0_i32, %c0_i32_0 : i32, i32
  }
  func.func @transform_5(%arg0: i32) -> (i32, i32) {
    %c0_i32 = arith.constant 0 : i32
    %c0_i32_0 = arith.constant 0 : i32
    %c0_i32_1 = arith.constant 0 : i32
    return %c0_i32, %c0_i32_0 : i32, i32
  }
  func.func @transform_6(%arg0: i32) -> (i32, i32) {
    %c0_i32 = arith.constant 0 : i32
    %c0_i32_0 = arith.constant 0 : i32
    %c0_i32_1 = arith.constant 0 : i32
    return %c0_i32, %c0_i32_0 : i32, i32
  }
  func.func @transform_7(%arg0: i32) -> (i32, i32) {
    %c0_i32 = arith.constant 0 : i32
    %c0_i32_0 = arith.constant 0 : i32
    return %arg0, %c0_i32 : i32, i32
  }
}

module attributes {stable_mosaic.version = 11 : i64} {
  func.func @_proj_residual_kernel(%arg0: i32, %arg1: memref<128x64xbf16, #tpu.memory_space<vmem>>, %arg2: memref<128x64xbf16, #tpu.memory_space<vmem>>, %arg3: memref<64x64xbf16, #tpu.memory_space<vmem>>, %arg4: memref<1x64xf32, #tpu.memory_space<vmem>>, %arg5: memref<128x64xbf16, #tpu.memory_space<vmem>>) attributes {dimension_semantics = [#tpu.dimension_semantics<parallel>], iteration_bounds = array<i64: 1>, scalar_prefetch = 0 : i64, scratch_operands = 0 : i64, tpu.core_type = #tpu.core_type<tc>, window_params = [{transform_indices = @transform_0, window_bounds = array<i64: 128, 64>}, {transform_indices = @transform_1, window_bounds = array<i64: 128, 64>}, {pipeline_mode = #tpu.pipeline_mode<synchronous>, transform_indices = @transform_2, window_bounds = array<i64: 64, 64>}, {pipeline_mode = #tpu.pipeline_mode<synchronous>, transform_indices = @transform_3, window_bounds = array<i64: 1, 64>}, {transform_indices = @transform_4, window_bounds = array<i64: 128, 64>}]} {
    %c0 = arith.constant 0 : index
    %c0_0 = arith.constant 0 : index
    %0 = vector.load %arg1[%c0, %c0_0] : memref<128x64xbf16, #tpu.memory_space<vmem>>, vector<128x64xbf16>
    %c0_1 = arith.constant 0 : index
    %c0_2 = arith.constant 0 : index
    %1 = vector.load %arg3[%c0_1, %c0_2] : memref<64x64xbf16, #tpu.memory_space<vmem>>, vector<64x64xbf16>
    %cst = arith.constant dense<0.000000e+00> : vector<128x64xf32>
    %2 = tpu.matmul %0, %1, %cst {dimension_numbers = #tpu.dot_dimension_numbers<[1], [0], [0], [1], [0, 0, 1, 1], [], []>} : vector<128x64xbf16>, vector<64x64xbf16>, vector<128x64xf32> -> vector<128x64xf32>
    %c0_3 = arith.constant 0 : index
    %c0_4 = arith.constant 0 : index
    %3 = vector.load %arg4[%c0_3, %c0_4] : memref<1x64xf32, #tpu.memory_space<vmem>>, vector<1x64xf32>
    %4 = vector.broadcast %3 : vector<1x64xf32> to vector<128x64xf32>
    %5 = arith.addf %2, %4 : vector<128x64xf32>
    %c0_5 = arith.constant 0 : index
    %c0_6 = arith.constant 0 : index
    %6 = vector.load %arg2[%c0_5, %c0_6] : memref<128x64xbf16, #tpu.memory_space<vmem>>, vector<128x64xbf16>
    %7 = arith.extf %6 : vector<128x64xbf16> to vector<128x64xf32>
    %8 = arith.addf %7, %5 : vector<128x64xf32>
    %9 = arith.truncf %8 : vector<128x64xf32> to vector<128x64xbf16>
    %c0_7 = arith.constant 0 : index
    %c0_8 = arith.constant 0 : index
    %10 = vector.load %arg5[%c0_7, %c0_8] : memref<128x64xbf16, #tpu.memory_space<vmem>>, vector<128x64xbf16>
    tpu.vector_store %arg5[%c0_7, %c0_8], %9 {strides = array<i32>} : memref<128x64xbf16, #tpu.memory_space<vmem>>, vector<128x64xbf16>,
    return
  }
  func.func @transform_0(%arg0: i32) -> (i32, i32) {
    %c0_i32 = arith.constant 0 : i32
    %c0_i32_0 = arith.constant 0 : i32
    return %arg0, %c0_i32 : i32, i32
  }
  func.func @transform_1(%arg0: i32) -> (i32, i32) {
    %c0_i32 = arith.constant 0 : i32
    %c0_i32_0 = arith.constant 0 : i32
    return %arg0, %c0_i32 : i32, i32
  }
  func.func @transform_2(%arg0: i32) -> (i32, i32) {
    %c0_i32 = arith.constant 0 : i32
    %c0_i32_0 = arith.constant 0 : i32
    %c0_i32_1 = arith.constant 0 : i32
    return %c0_i32, %c0_i32_0 : i32, i32
  }
  func.func @transform_3(%arg0: i32) -> (i32, i32) {
    %c0_i32 = arith.constant 0 : i32
    %c0_i32_0 = arith.constant 0 : i32
    %c0_i32_1 = arith.constant 0 : i32
    return %c0_i32, %c0_i32_0 : i32, i32
  }
  func.func @transform_4(%arg0: i32) -> (i32, i32) {
    %c0_i32 = arith.constant 0 : i32
    %c0_i32_0 = arith.constant 0 : i32
    return %arg0, %c0_i32 : i32, i32
  }
}

module attributes {stable_mosaic.version = 11 : i64} {
  func.func @_ln_proj_reparam_kernel(%arg0: i32, %arg1: memref<128x64xbf16, #tpu.memory_space<vmem>>, %arg2: memref<1x64xf32, #tpu.memory_space<vmem>>, %arg3: memref<1x64xf32, #tpu.memory_space<vmem>>, %arg4: memref<64x16xbf16, #tpu.memory_space<vmem>>, %arg5: memref<1x16xf32, #tpu.memory_space<vmem>>, %arg6: memref<128x8xf32, #tpu.memory_space<vmem>>, %arg7: memref<128x8xf32, #tpu.memory_space<vmem>>, %arg8: memref<128x8xf32, #tpu.memory_space<vmem>>, %arg9: memref<128x8xbf16, #tpu.memory_space<vmem>>) attributes {dimension_semantics = [#tpu.dimension_semantics<parallel>], iteration_bounds = array<i64: 1>, scalar_prefetch = 0 : i64, scratch_operands = 0 : i64, tpu.core_type = #tpu.core_type<tc>, window_params = [{transform_indices = @transform_0, window_bounds = array<i64: 128, 64>}, {pipeline_mode = #tpu.pipeline_mode<synchronous>, transform_indices = @transform_1, window_bounds = array<i64: 1, 64>}, {pipeline_mode = #tpu.pipeline_mode<synchronous>, transform_indices = @transform_2, window_bounds = array<i64: 1, 64>}, {pipeline_mode = #tpu.pipeline_mode<synchronous>, transform_indices = @transform_3, window_bounds = array<i64: 64, 16>}, {pipeline_mode = #tpu.pipeline_mode<synchronous>, transform_indices = @transform_4, window_bounds = array<i64: 1, 16>}, {transform_indices = @transform_5, window_bounds = array<i64: 128, 8>}, {transform_indices = @transform_6, window_bounds = array<i64: 128, 8>}, {transform_indices = @transform_7, window_bounds = array<i64: 128, 8>}, {transform_indices = @transform_8, window_bounds = array<i64: 128, 8>}]} {
    %c0 = arith.constant 0 : index
    %c0_0 = arith.constant 0 : index
    %0 = vector.load %arg1[%c0, %c0_0] : memref<128x64xbf16, #tpu.memory_space<vmem>>, vector<128x64xbf16>
    %1 = arith.extf %0 : vector<128x64xbf16> to vector<128x64xf32>
    %c0_1 = arith.constant 0 : index
    %c0_2 = arith.constant 0 : index
    %2 = vector.load %arg2[%c0_1, %c0_2] : memref<1x64xf32, #tpu.memory_space<vmem>>, vector<1x64xf32>
    %c0_3 = arith.constant 0 : index
    %c0_4 = arith.constant 0 : index
    %3 = vector.load %arg3[%c0_3, %c0_4] : memref<1x64xf32, #tpu.memory_space<vmem>>, vector<1x64xf32>
    %cst = arith.constant dense<0.000000e+00> : vector<128xf32>
    %4 = vector.multi_reduction <add>, %1, %cst [1] : vector<128x64xf32> to vector<128xf32>
    %5 = vector.shape_cast %4 : vector<128xf32> to vector<128x1xf32>
    %cst_5 = arith.constant 6.400000e+01 : f32
    %6 = vector.broadcast %cst_5 : f32 to vector<128x1xf32>
    %7 = arith.divf %5, %6 : vector<128x1xf32>
    %8 = vector.broadcast %7 : vector<128x1xf32> to vector<128x64xf32>
    %9 = arith.subf %1, %8 : vector<128x64xf32>
    %10 = arith.mulf %9, %9 : vector<128x64xf32>
    %cst_6 = arith.constant dense<0.000000e+00> : vector<128xf32>
    %11 = vector.multi_reduction <add>, %10, %cst_6 [1] : vector<128x64xf32> to vector<128xf32>
    %12 = vector.shape_cast %11 : vector<128xf32> to vector<128x1xf32>
    %cst_7 = arith.constant 6.400000e+01 : f32
    %13 = vector.broadcast %cst_7 : f32 to vector<128x1xf32>
    %14 = arith.divf %12, %13 : vector<128x1xf32>
    %cst_8 = arith.constant 9.99999974E-6 : f32
    %15 = vector.broadcast %cst_8 : f32 to vector<128x1xf32>
    %16 = arith.addf %14, %15 : vector<128x1xf32>
    %17 = math.rsqrt %16 : vector<128x1xf32>
    %18 = vector.broadcast %17 : vector<128x1xf32> to vector<128x64xf32>
    %19 = arith.mulf %9, %18 : vector<128x64xf32>
    %20 = vector.broadcast %2 : vector<1x64xf32> to vector<128x64xf32>
    %21 = arith.mulf %19, %20 : vector<128x64xf32>
    %22 = vector.broadcast %3 : vector<1x64xf32> to vector<128x64xf32>
    %23 = arith.addf %21, %22 : vector<128x64xf32>
    %24 = arith.truncf %23 : vector<128x64xf32> to vector<128x64xbf16>
    %c0_9 = arith.constant 0 : index
    %c0_10 = arith.constant 0 : index
    %25 = vector.load %arg4[%c0_9, %c0_10] : memref<64x16xbf16, #tpu.memory_space<vmem>>, vector<64x16xbf16>
    %cst_11 = arith.constant dense<0.000000e+00> : vector<128x16xf32>
    %26 = tpu.matmul %24, %25, %cst_11 {dimension_numbers = #tpu.dot_dimension_numbers<[1], [0], [0], [1], [0, 0, 1, 1], [], []>} : vector<128x64xbf16>, vector<64x16xbf16>, vector<128x16xf32> -> vector<128x16xf32>
    %c0_12 = arith.constant 0 : index
    %c0_13 = arith.constant 0 : index
    %27 = vector.load %arg5[%c0_12, %c0_13] : memref<1x16xf32, #tpu.memory_space<vmem>>, vector<1x16xf32>
    %28 = vector.broadcast %27 : vector<1x16xf32> to vector<128x16xf32>
    %29 = arith.addf %26, %28 : vector<128x16xf32>
    %30 = vector.extract_strided_slice %29 {offsets = [0, 0], sizes = [128, 8], strides = [1, 1]} : vector<128x16xf32> to vector<128x8xf32>
    %31 = vector.extract_strided_slice %29 {offsets = [0, 8], sizes = [128, 8], strides = [1, 1]} : vector<128x16xf32> to vector<128x8xf32>
    %cst_14 = arith.constant -3.000000e+01 : f32
    %cst_15 = arith.constant 2.000000e+01 : f32
    %32 = vector.broadcast %cst_14 : f32 to vector<128x8xf32>
    %33 = arith.maximumf %32, %31 : vector<128x8xf32>
    %34 = vector.broadcast %cst_15 : f32 to vector<128x8xf32>
    %35 = arith.minimumf %34, %33 : vector<128x8xf32>
    %cst_16 = arith.constant 5.000000e-01 : f32
    %36 = vector.broadcast %cst_16 : f32 to vector<128x8xf32>
    %37 = arith.mulf %36, %35 : vector<128x8xf32>
    %38 = math.exp %37 : vector<128x8xf32>
    %c0_17 = arith.constant 0 : index
    %c0_18 = arith.constant 0 : index
    %39 = vector.load %arg6[%c0_17, %c0_18] : memref<128x8xf32, #tpu.memory_space<vmem>>, vector<128x8xf32>
    %40 = arith.mulf %38, %39 : vector<128x8xf32>
    %41 = arith.addf %30, %40 : vector<128x8xf32>
    %c0_19 = arith.constant 0 : index
    %c0_20 = arith.constant 0 : index
    %42 = vector.load %arg7[%c0_19, %c0_20] : memref<128x8xf32, #tpu.memory_space<vmem>>, vector<128x8xf32>
    tpu.vector_store %arg7[%c0_19, %c0_20], %30 {strides = array<i32>} : memref<128x8xf32, #tpu.memory_space<vmem>>, vector<128x8xf32>,
    %c0_21 = arith.constant 0 : index
    %c0_22 = arith.constant 0 : index
    %43 = vector.load %arg8[%c0_21, %c0_22] : memref<128x8xf32, #tpu.memory_space<vmem>>, vector<128x8xf32>
    tpu.vector_store %arg8[%c0_21, %c0_22], %35 {strides = array<i32>} : memref<128x8xf32, #tpu.memory_space<vmem>>, vector<128x8xf32>,
    %44 = arith.truncf %41 : vector<128x8xf32> to vector<128x8xbf16>
    %c0_23 = arith.constant 0 : index
    %c0_24 = arith.constant 0 : index
    %45 = vector.load %arg9[%c0_23, %c0_24] : memref<128x8xbf16, #tpu.memory_space<vmem>>, vector<128x8xbf16>
    tpu.vector_store %arg9[%c0_23, %c0_24], %44 {strides = array<i32>} : memref<128x8xbf16, #tpu.memory_space<vmem>>, vector<128x8xbf16>,
    return
  }
  func.func @transform_0(%arg0: i32) -> (i32, i32) {
    %c0_i32 = arith.constant 0 : i32
    %c0_i32_0 = arith.constant 0 : i32
    return %arg0, %c0_i32 : i32, i32
  }
  func.func @transform_1(%arg0: i32) -> (i32, i32) {
    %c0_i32 = arith.constant 0 : i32
    %c0_i32_0 = arith.constant 0 : i32
    %c0_i32_1 = arith.constant 0 : i32
    return %c0_i32, %c0_i32_0 : i32, i32
  }
  func.func @transform_2(%arg0: i32) -> (i32, i32) {
    %c0_i32 = arith.constant 0 : i32
    %c0_i32_0 = arith.constant 0 : i32
    %c0_i32_1 = arith.constant 0 : i32
    return %c0_i32, %c0_i32_0 : i32, i32
  }
  func.func @transform_3(%arg0: i32) -> (i32, i32) {
    %c0_i32 = arith.constant 0 : i32
    %c0_i32_0 = arith.constant 0 : i32
    %c0_i32_1 = arith.constant 0 : i32
    return %c0_i32, %c0_i32_0 : i32, i32
  }
  func.func @transform_4(%arg0: i32) -> (i32, i32) {
    %c0_i32 = arith.constant 0 : i32
    %c0_i32_0 = arith.constant 0 : i32
    %c0_i32_1 = arith.constant 0 : i32
    return %c0_i32, %c0_i32_0 : i32, i32
  }
  func.func @transform_5(%arg0: i32) -> (i32, i32) {
    %c0_i32 = arith.constant 0 : i32
    %c0_i32_0 = arith.constant 0 : i32
    return %arg0, %c0_i32 : i32, i32
  }
  func.func @transform_6(%arg0: i32) -> (i32, i32) {
    %c0_i32 = arith.constant 0 : i32
    %c0_i32_0 = arith.constant 0 : i32
    return %arg0, %c0_i32 : i32, i32
  }
  func.func @transform_7(%arg0: i32) -> (i32, i32) {
    %c0_i32 = arith.constant 0 : i32
    %c0_i32_0 = arith.constant 0 : i32
    return %arg0, %c0_i32 : i32, i32
  }
  func.func @transform_8(%arg0: i32) -> (i32, i32) {
    %c0_i32 = arith.constant 0 : i32
    %c0_i32_0 = arith.constant 0 : i32
    return %arg0, %c0_i32 : i32, i32
  }
}

module attributes {stable_mosaic.version = 11 : i64} {
  func.func @_linear_kernel(%arg0: i32, %arg1: memref<128x8xbf16, #tpu.memory_space<vmem>>, %arg2: memref<8x64xbf16, #tpu.memory_space<vmem>>, %arg3: memref<1x64xf32, #tpu.memory_space<vmem>>, %arg4: memref<128x64xbf16, #tpu.memory_space<vmem>>) attributes {dimension_semantics = [#tpu.dimension_semantics<parallel>], iteration_bounds = array<i64: 1>, scalar_prefetch = 0 : i64, scratch_operands = 0 : i64, tpu.core_type = #tpu.core_type<tc>, window_params = [{transform_indices = @transform_0, window_bounds = array<i64: 128, 8>}, {pipeline_mode = #tpu.pipeline_mode<synchronous>, transform_indices = @transform_1, window_bounds = array<i64: 8, 64>}, {pipeline_mode = #tpu.pipeline_mode<synchronous>, transform_indices = @transform_2, window_bounds = array<i64: 1, 64>}, {transform_indices = @transform_3, window_bounds = array<i64: 128, 64>}]} {
    %c0 = arith.constant 0 : index
    %c0_0 = arith.constant 0 : index
    %0 = vector.load %arg1[%c0, %c0_0] : memref<128x8xbf16, #tpu.memory_space<vmem>>, vector<128x8xbf16>
    %c0_1 = arith.constant 0 : index
    %c0_2 = arith.constant 0 : index
    %1 = vector.load %arg2[%c0_1, %c0_2] : memref<8x64xbf16, #tpu.memory_space<vmem>>, vector<8x64xbf16>
    %cst = arith.constant dense<0.000000e+00> : vector<128x64xf32>
    %2 = tpu.matmul %0, %1, %cst {dimension_numbers = #tpu.dot_dimension_numbers<[1], [0], [0], [1], [0, 0, 1, 1], [], []>} : vector<128x8xbf16>, vector<8x64xbf16>, vector<128x64xf32> -> vector<128x64xf32>
    %c0_3 = arith.constant 0 : index
    %c0_4 = arith.constant 0 : index
    %3 = vector.load %arg3[%c0_3, %c0_4] : memref<1x64xf32, #tpu.memory_space<vmem>>, vector<1x64xf32>
    %4 = vector.broadcast %3 : vector<1x64xf32> to vector<128x64xf32>
    %5 = arith.addf %2, %4 : vector<128x64xf32>
    %6 = arith.truncf %5 : vector<128x64xf32> to vector<128x64xbf16>
    %c0_5 = arith.constant 0 : index
    %c0_6 = arith.constant 0 : index
    %7 = vector.load %arg4[%c0_5, %c0_6] : memref<128x64xbf16, #tpu.memory_space<vmem>>, vector<128x64xbf16>
    tpu.vector_store %arg4[%c0_5, %c0_6], %6 {strides = array<i32>} : memref<128x64xbf16, #tpu.memory_space<vmem>>, vector<128x64xbf16>,
    return
  }
  func.func @transform_0(%arg0: i32) -> (i32, i32) {
    %c0_i32 = arith.constant 0 : i32
    %c0_i32_0 = arith.constant 0 : i32
    return %arg0, %c0_i32 : i32, i32
  }
  func.func @transform_1(%arg0: i32) -> (i32, i32) {
    %c0_i32 = arith.constant 0 : i32
    %c0_i32_0 = arith.constant 0 : i32
    %c0_i32_1 = arith.constant 0 : i32
    return %c0_i32, %c0_i32_0 : i32, i32
  }
  func.func @transform_2(%arg0: i32) -> (i32, i32) {
    %c0_i32 = arith.constant 0 : i32
    %c0_i32_0 = arith.constant 0 : i32
    %c0_i32_1 = arith.constant 0 : i32
    return %c0_i32, %c0_i32_0 : i32, i32
  }
  func.func @transform_3(%arg0: i32) -> (i32, i32) {
    %c0_i32 = arith.constant 0 : i32
    %c0_i32_0 = arith.constant 0 : i32
    return %arg0, %c0_i32 : i32, i32
  }
}

module attributes {stable_mosaic.version = 11 : i64} {
  func.func @_ln_linear_kernel(%arg0: i32, %arg1: memref<128x64xbf16, #tpu.memory_space<vmem>>, %arg2: memref<1x64xf32, #tpu.memory_space<vmem>>, %arg3: memref<1x64xf32, #tpu.memory_space<vmem>>, %arg4: memref<64x1xbf16, #tpu.memory_space<vmem>>, %arg5: memref<1x1xf32, #tpu.memory_space<vmem>>, %arg6: memref<128x1xf32, #tpu.memory_space<vmem>>) attributes {dimension_semantics = [#tpu.dimension_semantics<parallel>], iteration_bounds = array<i64: 1>, scalar_prefetch = 0 : i64, scratch_operands = 0 : i64, tpu.core_type = #tpu.core_type<tc>, window_params = [{transform_indices = @transform_0, window_bounds = array<i64: 128, 64>}, {pipeline_mode = #tpu.pipeline_mode<synchronous>, transform_indices = @transform_1, window_bounds = array<i64: 1, 64>}, {pipeline_mode = #tpu.pipeline_mode<synchronous>, transform_indices = @transform_2, window_bounds = array<i64: 1, 64>}, {pipeline_mode = #tpu.pipeline_mode<synchronous>, transform_indices = @transform_3, window_bounds = array<i64: 64, 1>}, {pipeline_mode = #tpu.pipeline_mode<synchronous>, transform_indices = @transform_4, window_bounds = array<i64: 1, 1>}, {transform_indices = @transform_5, window_bounds = array<i64: 128, 1>}]} {
    %c0 = arith.constant 0 : index
    %c0_0 = arith.constant 0 : index
    %0 = vector.load %arg1[%c0, %c0_0] : memref<128x64xbf16, #tpu.memory_space<vmem>>, vector<128x64xbf16>
    %1 = arith.extf %0 : vector<128x64xbf16> to vector<128x64xf32>
    %c0_1 = arith.constant 0 : index
    %c0_2 = arith.constant 0 : index
    %2 = vector.load %arg2[%c0_1, %c0_2] : memref<1x64xf32, #tpu.memory_space<vmem>>, vector<1x64xf32>
    %c0_3 = arith.constant 0 : index
    %c0_4 = arith.constant 0 : index
    %3 = vector.load %arg3[%c0_3, %c0_4] : memref<1x64xf32, #tpu.memory_space<vmem>>, vector<1x64xf32>
    %cst = arith.constant dense<0.000000e+00> : vector<128xf32>
    %4 = vector.multi_reduction <add>, %1, %cst [1] : vector<128x64xf32> to vector<128xf32>
    %5 = vector.shape_cast %4 : vector<128xf32> to vector<128x1xf32>
    %cst_5 = arith.constant 6.400000e+01 : f32
    %6 = vector.broadcast %cst_5 : f32 to vector<128x1xf32>
    %7 = arith.divf %5, %6 : vector<128x1xf32>
    %8 = vector.broadcast %7 : vector<128x1xf32> to vector<128x64xf32>
    %9 = arith.subf %1, %8 : vector<128x64xf32>
    %10 = arith.mulf %9, %9 : vector<128x64xf32>
    %cst_6 = arith.constant dense<0.000000e+00> : vector<128xf32>
    %11 = vector.multi_reduction <add>, %10, %cst_6 [1] : vector<128x64xf32> to vector<128xf32>
    %12 = vector.shape_cast %11 : vector<128xf32> to vector<128x1xf32>
    %cst_7 = arith.constant 6.400000e+01 : f32
    %13 = vector.broadcast %cst_7 : f32 to vector<128x1xf32>
    %14 = arith.divf %12, %13 : vector<128x1xf32>
    %cst_8 = arith.constant 9.99999974E-6 : f32
    %15 = vector.broadcast %cst_8 : f32 to vector<128x1xf32>
    %16 = arith.addf %14, %15 : vector<128x1xf32>
    %17 = math.rsqrt %16 : vector<128x1xf32>
    %18 = vector.broadcast %17 : vector<128x1xf32> to vector<128x64xf32>
    %19 = arith.mulf %9, %18 : vector<128x64xf32>
    %20 = vector.broadcast %2 : vector<1x64xf32> to vector<128x64xf32>
    %21 = arith.mulf %19, %20 : vector<128x64xf32>
    %22 = vector.broadcast %3 : vector<1x64xf32> to vector<128x64xf32>
    %23 = arith.addf %21, %22 : vector<128x64xf32>
    %24 = arith.truncf %23 : vector<128x64xf32> to vector<128x64xbf16>
    %c0_9 = arith.constant 0 : index
    %c0_10 = arith.constant 0 : index
    %25 = vector.load %arg4[%c0_9, %c0_10] : memref<64x1xbf16, #tpu.memory_space<vmem>>, vector<64x1xbf16>
    %cst_11 = arith.constant dense<0.000000e+00> : vector<128x1xf32>
    %26 = tpu.matmul %24, %25, %cst_11 {dimension_numbers = #tpu.dot_dimension_numbers<[1], [0], [0], [1], [0, 0, 1, 1], [], []>} : vector<128x64xbf16>, vector<64x1xbf16>, vector<128x1xf32> -> vector<128x1xf32>
    %c0_12 = arith.constant 0 : index
    %c0_13 = arith.constant 0 : index
    %27 = vector.load %arg5[%c0_12, %c0_13] : memref<1x1xf32, #tpu.memory_space<vmem>>, vector<1x1xf32>
    %28 = vector.broadcast %27 : vector<1x1xf32> to vector<128x1xf32>
    %29 = arith.addf %26, %28 : vector<128x1xf32>
    %c0_14 = arith.constant 0 : index
    %c0_15 = arith.constant 0 : index
    %30 = vector.load %arg6[%c0_14, %c0_15] : memref<128x1xf32, #tpu.memory_space<vmem>>, vector<128x1xf32>
    tpu.vector_store %arg6[%c0_14, %c0_15], %29 {strides = array<i32>} : memref<128x1xf32, #tpu.memory_space<vmem>>, vector<128x1xf32>,
    return
  }
  func.func @transform_0(%arg0: i32) -> (i32, i32) {
    %c0_i32 = arith.constant 0 : i32
    %c0_i32_0 = arith.constant 0 : i32
    return %arg0, %c0_i32 : i32, i32
  }
  func.func @transform_1(%arg0: i32) -> (i32, i32) {
    %c0_i32 = arith.constant 0 : i32
    %c0_i32_0 = arith.constant 0 : i32
    %c0_i32_1 = arith.constant 0 : i32
    return %c0_i32, %c0_i32_0 : i32, i32
  }
  func.func @transform_2(%arg0: i32) -> (i32, i32) {
    %c0_i32 = arith.constant 0 : i32
    %c0_i32_0 = arith.constant 0 : i32
    %c0_i32_1 = arith.constant 0 : i32
    return %c0_i32, %c0_i32_0 : i32, i32
  }
  func.func @transform_3(%arg0: i32) -> (i32, i32) {
    %c0_i32 = arith.constant 0 : i32
    %c0_i32_0 = arith.constant 0 : i32
    %c0_i32_1 = arith.constant 0 : i32
    return %c0_i32, %c0_i32_0 : i32, i32
  }
  func.func @transform_4(%arg0: i32) -> (i32, i32) {
    %c0_i32 = arith.constant 0 : i32
    %c0_i32_0 = arith.constant 0 : i32
    %c0_i32_1 = arith.constant 0 : i32
    return %c0_i32, %c0_i32_0 : i32, i32
  }
  func.func @transform_5(%arg0: i32) -> (i32, i32) {
    %c0_i32 = arith.constant 0 : i32
    %c0_i32_0 = arith.constant 0 : i32
    return %arg0, %c0_i32 : i32, i32
  }
}

</mosaic_0001>

<llo_original>
// kernel: sparse_sdf_vae_forward.20
$region0: #{sparse_sdf_vae_forward.20}
  #allocation0 [shape = 'u32[]', space=smem, size = 0x4, offset = 0x4, fixed_abs, tag = 'smem constant byte address 0x4 - core index']
  #allocation1 [shape = 'u32[72,128]{1,0:T(1,128)}', space=vmem, size = 0x9000, scoped, tag = 'internal scratch']
  %s0 = inlined_call_operand.vmem [shape: bf16[128,1], index: 0, kind: input, shape index: {}]
  %s1 = inlined_call_operand.vmem [shape: bf16[1,64], index: 1, kind: input, shape index: {}]
  %s2 = inlined_call_operand.vmem [shape: f32[1,64], index: 2, kind: input, shape index: {}]
  %s3 = inlined_call_operand.vmem [shape: bf16[128,64], index: 3, kind: output, shape index: {}]
  %s4 = sld [smem:[#allocation0]]
  $region22: #{sparse_sdf_vae_forward.20} parent=0
    _
  %s6 = ssub.s32 1, %s4
  %s7 = scalar_select 0, %s6, %s4
  // Predicated region
  $region2: #{sparse_sdf_vae_forward.20} parent=0 // pred_check
    _
  $region3: #{sparse_sdf_vae_forward.20} parent=0 // pred_check_branch
    %9 = sbr.rel (0) target = $region5
  $region4: #{sparse_sdf_vae_forward.20} parent=0 // pred_region
    _
  $region5: #{sparse_sdf_vae_forward.20} parent=0 // pred_fallthru
    _
  // Predicated region
  $region6: #{sparse_sdf_vae_forward.20} parent=0 // pred_check
    _
  $region7: #{sparse_sdf_vae_forward.20} parent=0 // pred_check_branch
    %11 = sbr.rel (0) target = $region9
  $region8: #{sparse_sdf_vae_forward.20} parent=0 // pred_region
    _
  $region9: #{sparse_sdf_vae_forward.20} parent=0 // pred_fallthru
    _
  // Predicated region
  $region10: #{sparse_sdf_vae_forward.20} parent=0 // pred_check
    _
  $region11: #{sparse_sdf_vae_forward.20} parent=0 // pred_check_branch
    %13 = sbr.rel (0) target = $region13
  $region12: #{sparse_sdf_vae_forward.20} parent=0 // pred_region
    _
  $region13: #{sparse_sdf_vae_forward.20} parent=0 // pred_fallthru
    _
  %v14 = vld [vmem:[%s0] sm:$0xf]
  %v15 = vld [vmem:[%s0 + $0x4] sm:$0xf]
  %v16 = vld [vmem:[%s0 + $0x8] sm:$0xf]
  %v17 = vld [vmem:[%s0 + $0xc] sm:$0xf]
  %v18 = vld [vmem:[%s0 + $0x10] sm:$0xf]
  %v19 = vld [vmem:[%s0 + $0x14] sm:$0xf]
  %v20 = vld [vmem:[%s0 + $0x18] sm:$0xf]
  %v21 = vld [vmem:[%s0 + $0x1c] sm:$0xf]
  %v22 = vld [vmem:[%s0 + $0x20] sm:$0xf]
  %v23 = vld [vmem:[%s0 + $0x24] sm:$0xf]
  %v24 = vld [vmem:[%s0 + $0x28] sm:$0xf]
  %v25 = vld [vmem:[%s0 + $0x2c] sm:$0xf]
  %v26 = vld [vmem:[%s0 + $0x30] sm:$0xf]
  %v27 = vld [vmem:[%s0 + $0x34] sm:$0xf]
  %v28 = vld [vmem:[%s0 + $0x38] sm:$0xf]
  %v29 = vld [vmem:[%s0 + $0x3c] sm:$0xf]
  %v30 = vld [vmem:[%s1] sm:$0x1]
  %v31 = vunpack.c.l.bf16 %v14
  %v32 = vunpack.c.l.bf16 %v15
  %v33 = vunpack.c.l.bf16 %v16
  %v34 = vunpack.c.l.bf16 %v17
  %v35 = vunpack.c.l.bf16 %v18
  %v36 = vunpack.c.l.bf16 %v19
  %v37 = vunpack.c.l.bf16 %v20
  %v38 = vunpack.c.l.bf16 %v21
  %v39 = vunpack.c.l.bf16 %v22
  %v40 = vunpack.c.l.bf16 %v23
  %v41 = vunpack.c.l.bf16 %v24
  %v42 = vunpack.c.l.bf16 %v25
  %v43 = vunpack.c.l.bf16 %v26
  %v44 = vunpack.c.l.bf16 %v27
  %v45 = vunpack.c.l.bf16 %v28
  %v46 = vunpack.c.l.bf16 %v29
  %v47 = vunpack.c.l.bf16 %v30
  %49 = vset.pattern.permute.xlu0 0
  %50 = vperm.xlu0 %49, %v31
  %v51 = vpop.permute.xlu0 %50
  %54 = vset.pattern.permute.xlu0 0
  %55 = vperm.xlu0 %54, %v32
  %v56 = vpop.permute.xlu0 %55
  %59 = vset.pattern.permute.xlu0 0
  %60 = vperm.xlu0 %59, %v33
  %v61 = vpop.permute.xlu0 %60
  %64 = vset.pattern.permute.xlu0 0
  %65 = vperm.xlu0 %64, %v34
  %v66 = vpop.permute.xlu0 %65
  %69 = vset.pattern.permute.xlu0 0
  %70 = vperm.xlu0 %69, %v35
  %v71 = vpop.permute.xlu0 %70
  %74 = vset.pattern.permute.xlu0 0
  %75 = vperm.xlu0 %74, %v36
  %v76 = vpop.permute.xlu0 %75
  %79 = vset.pattern.permute.xlu0 0
  %80 = vperm.xlu0 %79, %v37
  %v81 = vpop.permute.xlu0 %80
  %84 = vset.pattern.permute.xlu0 0
  %85 = vperm.xlu0 %84, %v38
  %v86 = vpop.permute.xlu0 %85
  %89 = vset.pattern.permute.xlu0 0
  %90 = vperm.xlu0 %89, %v39
  %v91 = vpop.permute.xlu0 %90
  %94 = vset.pattern.permute.xlu0 0
  %95 = vperm.xlu0 %94, %v40
  %v96 = vpop.permute.xlu0 %95
  %99 = vset.pattern.permute.xlu0 0
  %100 = vperm.xlu0 %99, %v41
  %v101 = vpop.permute.xlu0 %100
  %104 = vset.pattern.permute.xlu0 0
  %105 = vperm.xlu0 %104, %v42
  %v106 = vpop.permute.xlu0 %105
  %109 = vset.pattern.permute.xlu0 0
  %110 = vperm.xlu0 %109, %v43
  %v111 = vpop.permute.xlu0 %110
  %114 = vset.pattern.permute.xlu0 0
  %115 = vperm.xlu0 %114, %v44
  %v116 = vpop.permute.xlu0 %115
  %119 = vset.pattern.permute.xlu0 0
  %120 = vperm.xlu0 %119, %v45
  %v121 = vpop.permute.xlu0 %120
  %124 = vset.pattern.permute.xlu0 0
  %125 = vperm.xlu0 %124, %v46
  %v126 = vpop.permute.xlu0 %125
  %v128 = vperm.slane %v47, 0
  %v129 = vmul.f32 %v51, %v128
  %v130 = vmul.f32 %v56, %v128
  %v131 = vmul.f32 %v61, %v128
  %v132 = vmul.f32 %v66, %v128
  %v133 = vmul.f32 %v71, %v128
  %v134 = vmul.f32 %v76, %v128
  %v135 = vmul.f32 %v81, %v128
  %v136 = vmul.f32 %v86, %v128
  %v137 = vmul.f32 %v91, %v128
  %v138 = vmul.f32 %v96, %v128
  %v139 = vmul.f32 %v101, %v128
  %v140 = vmul.f32 %v106, %v128
  %v141 = vmul.f32 %v111, %v128
  %v142 = vmul.f32 %v116, %v128
  %v143 = vmul.f32 %v121, %v128
  %v144 = vmul.f32 %v126, %v128
  %v145 = vld [vmem:[%s2] sm:$0x1]
  %v147 = vperm.slane %v145, 0
  %v149 = vadd.f32 %v129, %v147
  %v150 = vadd.f32 %v130, %v147
  %v151 = vadd.f32 %v131, %v147
  %v152 = vadd.f32 %v132, %v147
  %v153 = vadd.f32 %v133, %v147
  %v154 = vadd.f32 %v134, %v147
  %v155 = vadd.f32 %v135, %v147
  %v156 = vadd.f32 %v136, %v147
  %v157 = vadd.f32 %v137, %v147
  %v158 = vadd.f32 %v138, %v147
  %v159 = vadd.f32 %v139, %v147
  %v160 = vadd.f32 %v140, %v147
  %v161 = vadd.f32 %v141, %v147
  %v162 = vadd.f32 %v142, %v147
  %v163 = vadd.f32 %v143, %v147
  %v164 = vadd.f32 %v144, %v147
  %v165 = vpack.c.bf16 %v149, %v149
  %v166 = vpack.c.bf16 %v150, %v150
  %v167 = vpack.c.bf16 %v151, %v151
  %v168 = vpack.c.bf16 %v152, %v152
  %v169 = vpack.c.bf16 %v153, %v153
  %v170 = vpack.c.bf16 %v154, %v154
  %v171 = vpack.c.bf16 %v155, %v155
  %v172 = vpack.c.bf16 %v156, %v156
  %v173 = vpack.c.bf16 %v157, %v157
  %v174 = vpack.c.bf16 %v158, %v158
  %v175 = vpack.c.bf16 %v159, %v159
  %v176 = vpack.c.bf16 %v160, %v160
  %v177 = vpack.c.bf16 %v161, %v161
  %v178 = vpack.c.bf16 %v162, %v162
  %v179 = vpack.c.bf16 %v163, %v163
  %v180 = vpack.c.bf16 %v164, %v164
  %vm181 = vcmask 519168
  %182 = vst.msk [vmem:[%s3] sm:$0xf] %vm181, %v165
  %183 = vst.msk [vmem:[%s3 + $0x4] sm:$0xf] %vm181, %v166
  %184 = vst.msk [vmem:[%s3 + $0x8] sm:$0xf] %vm181, %v167
  %185 = vst.msk [vmem:[%s3 + $0xc] sm:$0xf] %vm181, %v168
  %186 = vst.msk [vmem:[%s3 + $0x10] sm:$0xf] %vm181, %v169
  %187 = vst.msk [vmem:[%s3 + $0x14] sm:$0xf] %vm181, %v170
  %188 = vst.msk [vmem:[%s3 + $0x18] sm:$0xf] %vm181, %v171
  %189 = vst.msk [vmem:[%s3 + $0x1c] sm:$0xf] %vm181, %v172
  %190 = vst.msk [vmem:[%s3 + $0x20] sm:$0xf] %vm181, %v173
  %191 = vst.msk [vmem:[%s3 + $0x24] sm:$0xf] %vm181, %v174
  %192 = vst.msk [vmem:[%s3 + $0x28] sm:$0xf] %vm181, %v175
  %193 = vst.msk [vmem:[%s3 + $0x2c] sm:$0xf] %vm181, %v176
  %194 = vst.msk [vmem:[%s3 + $0x30] sm:$0xf] %vm181, %v177
  %195 = vst.msk [vmem:[%s3 + $0x34] sm:$0xf] %vm181, %v178
  %196 = vst.msk [vmem:[%s3 + $0x38] sm:$0xf] %vm181, %v179
  %197 = vst.msk [vmem:[%s3 + $0x3c] sm:$0xf] %vm181, %v180
  // Predicated region
  $region14: #{sparse_sdf_vae_forward.20} parent=0 // pred_check
    _
  $region15: #{sparse_sdf_vae_forward.20} parent=0 // pred_check_branch
    %199 = sbr.rel (0) target = $region17
  $region16: #{sparse_sdf_vae_forward.20} parent=0 // pred_region
    _
  $region17: #{sparse_sdf_vae_forward.20} parent=0 // pred_fallthru
    _
  // Predicated region
  $region18: #{sparse_sdf_vae_forward.20} parent=0 // pred_check
    _
  $region19: #{sparse_sdf_vae_forward.20} parent=0 // pred_check_branch
    %201 = sbr.rel (0) target = $region21
  $region20: #{sparse_sdf_vae_forward.20} parent=0 // pred_region
    _
  $region21: #{sparse_sdf_vae_forward.20} parent=0 // pred_fallthru
    _

// kernel: sparse_sdf_vae_forward.23
$region0: #{sparse_sdf_vae_forward.23}
  #allocation0 [shape = 'u32[]', space=smem, size = 0x4, offset = 0x4, fixed_abs, tag = 'smem constant byte address 0x4 - core index']
  #allocation1 [shape = 'u32[72,128]{1,0:T(1,128)}', space=vmem, size = 0x9000, scoped, tag = 'internal scratch']
  %s0 = inlined_call_operand.vmem [shape: bf16[128,64], index: 0, kind: input, shape index: {}]
  %s1 = inlined_call_operand.vmem [shape: bf16[128,64], index: 1, kind: input, shape index: {}]
  %s2 = inlined_call_operand.vmem [shape: bf16[64,64], index: 2, kind: input, shape index: {}]
  %s3 = inlined_call_operand.vmem [shape: f32[1,64], index: 3, kind: input, shape index: {}]
  %s4 = inlined_call_operand.vmem [shape: bf16[128,64], index: 4, kind: output, shape index: {}]
  %s5 = sld [smem:[#allocation0]]
  $region26: #{sparse_sdf_vae_forward.23} parent=0
    _
  %s7 = ssub.s32 1, %s5
  %s8 = scalar_select 0, %s7, %s5
  // Predicated region
  $region2: #{sparse_sdf_vae_forward.23} parent=0 // pred_check
    _
  $region3: #{sparse_sdf_vae_forward.23} parent=0 // pred_check_branch
    %10 = sbr.rel (0) target = $region5
  $region4: #{sparse_sdf_vae_forward.23} parent=0 // pred_region
    _
  $region5: #{sparse_sdf_vae_forward.23} parent=0 // pred_fallthru
    _
  // Predicated region
  $region6: #{sparse_sdf_vae_forward.23} parent=0 // pred_check
    _
  $region7: #{sparse_sdf_vae_forward.23} parent=0 // pred_check_branch
    %12 = sbr.rel (0) target = $region9
  $region8: #{sparse_sdf_vae_forward.23} parent=0 // pred_region
    _
  $region9: #{sparse_sdf_vae_forward.23} parent=0 // pred_fallthru
    _
  // Predicated region
  $region10: #{sparse_sdf_vae_forward.23} parent=0 // pred_check
    _
  $region11: #{sparse_sdf_vae_forward.23} parent=0 // pred_check_branch
    %14 = sbr.rel (0) target = $region13
  $region12: #{sparse_sdf_vae_forward.23} parent=0 // pred_region
    _
  $region13: #{sparse_sdf_vae_forward.23} parent=0 // pred_fallthru
    _
  // Predicated region
  $region14: #{sparse_sdf_vae_forward.23} parent=0 // pred_check
    _
  $region15: #{sparse_sdf_vae_forward.23} parent=0 // pred_check_branch
    %16 = sbr.rel (0) target = $region17
  $region16: #{sparse_sdf_vae_forward.23} parent=0 // pred_region
    _
  $region17: #{sparse_sdf_vae_forward.23} parent=0 // pred_fallthru
    _
  %v18 = vld [vmem:[%s0] sm:$0xf]
  %v19 = vld [vmem:[%s0 + $0x4] sm:$0xf]
  %v20 = vld [vmem:[%s0 + $0x8] sm:$0xf]
  %v21 = vld [vmem:[%s0 + $0xc] sm:$0xf]
  %v22 = vld [vmem:[%s0 + $0x10] sm:$0xf]
  %v23 = vld [vmem:[%s0 + $0x14] sm:$0xf]
  %v24 = vld [vmem:[%s0 + $0x18] sm:$0xf]
  %v25 = vld [vmem:[%s0 + $0x1c] sm:$0xf]
  %v26 = vld [vmem:[%s0 + $0x20] sm:$0xf]
  %v27 = vld [vmem:[%s0 + $0x24] sm:$0xf]
  %v28 = vld [vmem:[%s0 + $0x28] sm:$0xf]
  %v29 = vld [vmem:[%s0 + $0x2c] sm:$0xf]
  %v30 = vld [vmem:[%s0 + $0x30] sm:$0xf]
  %v31 = vld [vmem:[%s0 + $0x34] sm:$0xf]
  %v32 = vld [vmem:[%s0 + $0x38] sm:$0xf]
  %v33 = vld [vmem:[%s0 + $0x3c] sm:$0xf]
  %v34 = vld [vmem:[%s2] sm:$0xf]
  %v35 = vld [vmem:[%s2 + $0x4] sm:$0xf]
  %v36 = vld [vmem:[%s2 + $0x8] sm:$0xf]
  %v37 = vld [vmem:[%s2 + $0xc] sm:$0xf]
  %v38 = vld [vmem:[%s2 + $0x10] sm:$0xf]
  %v39 = vld [vmem:[%s2 + $0x14] sm:$0xf]
  %v40 = vld [vmem:[%s2 + $0x18] sm:$0xf]
  %v41 = vld [vmem:[%s2 + $0x1c] sm:$0xf]
  %v42 = vld [vmem:[%s3] sm:$0x1]
  %v44 = vperm.slane %v42, 0
  %v62 = vunpack.c.l.b16 %v18
  %v63 = vunpack.c.l.b16 %v19
  %v64 = vunpack.c.l.b16 %v20
  %v65 = vunpack.c.l.b16 %v21
  %v66 = vunpack.c.l.b16 %v22
  %v67 = vunpack.c.l.b16 %v23
  %v68 = vunpack.c.l.b16 %v24
  %v69 = vunpack.c.l.b16 %v25
  %v70 = vunpack.c.l.b16 %v26
  %v71 = vunpack.c.l.b16 %v27
  %v72 = vunpack.c.l.b16 %v28
  %v73 = vunpack.c.l.b16 %v29
  %v74 = vunpack.c.l.b16 %v30
  %v75 = vunpack.c.l.b16 %v31
  %v76 = vunpack.c.l.b16 %v32
  %v77 = vunpack.c.l.b16 %v33
  %v78 = vpack.c.b16 %v63, %v62
  %v79 = vpack.c.b16 %v65, %v64
  %v80 = vpack.c.b16 %v67, %v66
  %v81 = vpack.c.b16 %v69, %v68
  %v82 = vpack.c.b16 %v71, %v70
  %v83 = vpack.c.b16 %v73, %v72
  %v84 = vpack.c.b16 %v75, %v74
  %v85 = vpack.c.b16 %v77, %v76
  %v94 = vunpack.c.l.b16 %v34
  %v95 = vunpack.c.l.b16 %v35
  %v96 = vunpack.c.l.b16 %v36
  %v97 = vunpack.c.l.b16 %v37
  %v98 = vunpack.c.l.b16 %v38
  %v99 = vunpack.c.l.b16 %v39
  %v100 = vunpack.c.l.b16 %v40
  %v101 = vunpack.c.l.b16 %v41
  %v102 = vpack.c.b16 %v95, %v94
  %v103 = vpack.c.b16 %v97, %v96
  %v104 = vpack.c.b16 %v99, %v98
  %v105 = vpack.c.b16 %v101, %v100
  %vm110 = vcmask 523264
  %v112 = vsel %vm110, %v78, 0
  %v115 = vsel %vm110, %v79, 0
  %v118 = vsel %vm110, %v80, 0
  %v121 = vsel %vm110, %v81, 0
  %v124 = vsel %vm110, %v82, 0
  %v127 = vsel %vm110, %v83, 0
  %v130 = vsel %vm110, %v84, 0
  %v133 = vsel %vm110, %v85, 0
  %135 = vmatpush.bf16.msra.mxu0 0
  %136 = vmatpush.bf16.msra.mxu0 0
  %137 = vmatpush.bf16.msra.mxu0 0
  %138 = vmatpush.bf16.msra.mxu0 0
  %139 = vmatpush.bf16.msra.mxu0 %v105
  %140 = vmatpush.bf16.msra.mxu0 %v104
  %141 = vmatpush.bf16.msra.mxu0 %v103
  %142 = vmatpush.bf16.msra.mxu0 %v102
  %143 = vmatmul.bf16.gmra.mxu0 %v112
  %v144 = vpop.f32.mrf.mxu0
  %v145 = vadd.f32 %v44, %v144
  %v146 = vpop.f32.mrf.mxu0
  %v147 = vadd.f32 %v44, %v146
  %148 = vmatmul.bf16.gmra.mxu0 %v115
  %v149 = vpop.f32.mrf.mxu0
  %v150 = vadd.f32 %v44, %v149
  %v151 = vpop.f32.mrf.mxu0
  %v152 = vadd.f32 %v44, %v151
  %153 = vmatmul.bf16.gmra.mxu0 %v118
  %v154 = vpop.f32.mrf.mxu0
  %v155 = vadd.f32 %v44, %v154
  %v156 = vpop.f32.mrf.mxu0
  %v157 = vadd.f32 %v44, %v156
  %158 = vmatmul.bf16.gmra.mxu0 %v121
  %v159 = vpop.f32.mrf.mxu0
  %v160 = vadd.f32 %v44, %v159
  %v161 = vpop.f32.mrf.mxu0
  %v162 = vadd.f32 %v44, %v161
  %163 = vmatmul.bf16.gmra.mxu0 %v124
  %v164 = vpop.f32.mrf.mxu0
  %v165 = vadd.f32 %v44, %v164
  %v166 = vpop.f32.mrf.mxu0
  %v167 = vadd.f32 %v44, %v166
  %168 = vmatmul.bf16.gmra.mxu0 %v127
  %v169 = vpop.f32.mrf.mxu0
  %v170 = vadd.f32 %v44, %v169
  %v171 = vpop.f32.mrf.mxu0
  %v172 = vadd.f32 %v44, %v171
  %173 = vmatmul.bf16.gmra.mxu0 %v130
  %v174 = vpop.f32.mrf.mxu0
  %v175 = vadd.f32 %v44, %v174
  %v176 = vpop.f32.mrf.mxu0
  %v177 = vadd.f32 %v44, %v176
  %178 = vmatmul.bf16.gmra.mxu0 %v133
  %v179 = vpop.f32.mrf.mxu0
  %v180 = vadd.f32 %v44, %v179
  %v181 = vpop.f32.mrf.mxu0
  %v182 = vadd.f32 %v44, %v181
  %183 = vdwg.mxu0
  %v184 = vld [vmem:[%s1] sm:$0xf]
  %v185 = vld [vmem:[%s1 + $0x4] sm:$0xf]
  %v186 = vld [vmem:[%s1 + $0x8] sm:$0xf]
  %v187 = vld [vmem:[%s1 + $0xc] sm:$0xf]
  %v188 = vld [vmem:[%s1 + $0x10] sm:$0xf]
  %v189 = vld [vmem:[%s1 + $0x14] sm:$0xf]
  %v190 = vld [vmem:[%s1 + $0x18] sm:$0xf]
  %v191 = vld [vmem:[%s1 + $0x1c] sm:$0xf]
  %v192 = vld [vmem:[%s1 + $0x20] sm:$0xf]
  %v193 = vld [vmem:[%s1 + $0x24] sm:$0xf]
  %v194 = vld [vmem:[%s1 + $0x28] sm:$0xf]
  %v195 = vld [vmem:[%s1 + $0x2c] sm:$0xf]
  %v196 = vld [vmem:[%s1 + $0x30] sm:$0xf]
  %v197 = vld [vmem:[%s1 + $0x34] sm:$0xf]
  %v198 = vld [vmem:[%s1 + $0x38] sm:$0xf]
  %v199 = vld [vmem:[%s1 + $0x3c] sm:$0xf]
  %v200 = vunpack.c.l.bf16 %v184
  %v201 = vunpack.c.l.bf16 %v185
  %v202 = vunpack.c.l.bf16 %v186
  %v203 = vunpack.c.l.bf16 %v187
  %v204 = vunpack.c.l.bf16 %v188
  %v205 = vunpack.c.l.bf16 %v189
  %v206 = vunpack.c.l.bf16 %v190
  %v207 = vunpack.c.l.bf16 %v191
  %v208 = vunpack.c.l.bf16 %v192
  %v209 = vunpack.c.l.bf16 %v193
  %v210 = vunpack.c.l.bf16 %v194
  %v211 = vunpack.c.l.bf16 %v195
  %v212 = vunpack.c.l.bf16 %v196
  %v213 = vunpack.c.l.bf16 %v197
  %v214 = vunpack.c.l.bf16 %v198
  %v215 = vunpack.c.l.bf16 %v199
  %v216 = vadd.f32 %v200, %v145
  %v217 = vadd.f32 %v201, %v147
  %v218 = vadd.f32 %v202, %v150
  %v219 = vadd.f32 %v203, %v152
  %v220 = vadd.f32 %v204, %v155
  %v221 = vadd.f32 %v205, %v157
  %v222 = vadd.f32 %v206, %v160
  %v223 = vadd.f32 %v207, %v162
  %v224 = vadd.f32 %v208, %v165
  %v225 = vadd.f32 %v209, %v167
  %v226 = vadd.f32 %v210, %v170
  %v227 = vadd.f32 %v211, %v172
  %v228 = vadd.f32 %v212, %v175
  %v229 = vadd.f32 %v213, %v177
  %v230 = vadd.f32 %v214, %v180
  %v231 = vadd.f32 %v215, %v182
  %v232 = vpack.c.bf16 %v216, %v216
  %v233 = vpack.c.bf16 %v217, %v217
  %v234 = vpack.c.bf16 %v218, %v218
  %v235 = vpack.c.bf16 %v219, %v219
  %v236 = vpack.c.bf16 %v220, %v220
  %v237 = vpack.c.bf16 %v221, %v221
  %v238 = vpack.c.bf16 %v222, %v222
  %v239 = vpack.c.bf16 %v223, %v223
  %v240 = vpack.c.bf16 %v224, %v224
  %v241 = vpack.c.bf16 %v225, %v225
  %v242 = vpack.c.bf16 %v226, %v226
  %v243 = vpack.c.bf16 %v227, %v227
  %v244 = vpack.c.bf16 %v228, %v228
  %v245 = vpack.c.bf16 %v229, %v229
  %v246 = vpack.c.bf16 %v230, %v230
  %v247 = vpack.c.bf16 %v231, %v231
  %vm248 = vcmask 519168
  %249 = vst.msk [vmem:[%s4] sm:$0xf] %vm248, %v232
  %250 = vst.msk [vmem:[%s4 + $0x4] sm:$0xf] %vm248, %v233
  %251 = vst.msk [vmem:[%s4 + $0x8] sm:$0xf] %vm248, %v234
  %252 = vst.msk [vmem:[%s4 + $0xc] sm:$0xf] %vm248, %v235
  %253 = vst.msk [vmem:[%s4 + $0x10] sm:$0xf] %vm248, %v236
  %254 = vst.msk [vmem:[%s4 + $0x14] sm:$0xf] %vm248, %v237
  %255 = vst.msk [vmem:[%s4 + $0x18] sm:$0xf] %vm248, %v238
  %256 = vst.msk [vmem:[%s4 + $0x1c] sm:$0xf] %vm248, %v239
  %257 = vst.msk [vmem:[%s4 + $0x20] sm:$0xf] %vm248, %v240
  %258 = vst.msk [vmem:[%s4 + $0x24] sm:$0xf] %vm248, %v241
  %259 = vst.msk [vmem:[%s4 + $0x28] sm:$0xf] %vm248, %v242
  %260 = vst.msk [vmem:[%s4 + $0x2c] sm:$0xf] %vm248, %v243
  %261 = vst.msk [vmem:[%s4 + $0x30] sm:$0xf] %vm248, %v244
  %262 = vst.msk [vmem:[%s4 + $0x34] sm:$0xf] %vm248, %v245
  %263 = vst.msk [vmem:[%s4 + $0x38] sm:$0xf] %vm248, %v246
  %264 = vst.msk [vmem:[%s4 + $0x3c] sm:$0xf] %vm248, %v247
  // Predicated region
  $region18: #{sparse_sdf_vae_forward.23} parent=0 // pred_check
    _
  $region19: #{sparse_sdf_vae_forward.23} parent=0 // pred_check_branch
    %266 = sbr.rel (0) target = $region21
  $region20: #{sparse_sdf_vae_forward.23} parent=0 // pred_region
    _
  $region21: #{sparse_sdf_vae_forward.23} parent=0 // pred_fallthru
    _
  // Predicated region
  $region22: #{sparse_sdf_vae_forward.23} parent=0 // pred_check
    _
  $region23: #{sparse_sdf_vae_forward.23} parent=0 // pred_check_branch
    %268 = sbr.rel (0) target = $region25
  $region24: #{sparse_sdf_vae_forward.23} parent=0 // pred_region
    _
  $region25: #{sparse_sdf_vae_forward.23} parent=0 // pred_fallthru
    _

// kernel: sparse_sdf_vae_forward.21
$region0: #{sparse_sdf_vae_forward.21}
  #allocation0 [shape = 'u32[]', space=smem, size = 0x4, offset = 0x4, fixed_abs, tag = 'smem constant byte address 0x4 - core index']
  #allocation1 [shape = 'u32[72,128]{1,0:T(1,128)}', space=vmem, size = 0x9000, scoped, tag = 'internal scratch']
  %s0 = inlined_call_operand.vmem [shape: bf16[128,64], index: 0, kind: input, shape index: {}]
  %s1 = inlined_call_operand.vmem [shape: f32[1,64], index: 1, kind: input, shape index: {}]
  %s2 = inlined_call_operand.vmem [shape: f32[1,64], index: 2, kind: input, shape index: {}]
  %s3 = inlined_call_operand.vmem [shape: bf16[64,64], index: 3, kind: input, shape index: {}]
  %s4 = inlined_call_operand.vmem [shape: f32[1,64], index: 4, kind: input, shape index: {}]
  %s5 = inlined_call_operand.vmem [shape: bf16[64,64], index: 5, kind: input, shape index: {}]
  %s6 = inlined_call_operand.vmem [shape: f32[1,64], index: 6, kind: input, shape index: {}]
  %s7 = inlined_call_operand.vmem [shape: bf16[64,64], index: 7, kind: input, shape index: {}]
  %s8 = inlined_call_operand.vmem [shape: f32[1,64], index: 8, kind: input, shape index: {}]
  %s9 = inlined_call_operand.vmem [shape: bf16[128,64], index: 9, kind: output, shape index: {0}]
  %s10 = inlined_call_operand.vmem [shape: bf16[128,64], index: 10, kind: output, shape index: {1}]
  %s11 = inlined_call_operand.vmem [shape: bf16[128,64], index: 11, kind: output, shape index: {2}]
  %12 = xla_tuple %s9, %s10, %s11
  %s13 = sld [smem:[#allocation0]]
  $region62: #{sparse_sdf_vae_forward.21} parent=0
    _
  %s15 = ssub.s32 1, %s13
  %s16 = scalar_select 0, %s15, %s13
  // Predicated region
  $region2: #{sparse_sdf_vae_forward.21} parent=0 // pred_check
    _
  $region3: #{sparse_sdf_vae_forward.21} parent=0 // pred_check_branch
    %18 = sbr.rel (0) target = $region5
  $region4: #{sparse_sdf_vae_forward.21} parent=0 // pred_region
    _
  $region5: #{sparse_sdf_vae_forward.21} parent=0 // pred_fallthru
    _
  // Predicated region
  $region6: #{sparse_sdf_vae_forward.21} parent=0 // pred_check
    _
  $region7: #{sparse_sdf_vae_forward.21} parent=0 // pred_check_branch
    %20 = sbr.rel (0) target = $region9
  $region8: #{sparse_sdf_vae_forward.21} parent=0 // pred_region
    _
  $region9: #{sparse_sdf_vae_forward.21} parent=0 // pred_fallthru
    _
  // Predicated region
  $region10: #{sparse_sdf_vae_forward.21} parent=0 // pred_check
    _
  $region11: #{sparse_sdf_vae_forward.21} parent=0 // pred_check_branch
    %22 = sbr.rel (0) target = $region13
  $region12: #{sparse_sdf_vae_forward.21} parent=0 // pred_region
    _
  $region13: #{sparse_sdf_vae_forward.21} parent=0 // pred_fallthru
    _
  // Predicated region
  $region14: #{sparse_sdf_vae_forward.21} parent=0 // pred_check
    _
  $region15: #{sparse_sdf_vae_forward.21} parent=0 // pred_check_branch
    %24 = sbr.rel (0) target = $region17
  $region16: #{sparse_sdf_vae_forward.21} parent=0 // pred_region
    _
  $region17: #{sparse_sdf_vae_forward.21} parent=0 // pred_fallthru
    _
  // Predicated region
  $region18: #{sparse_sdf_vae_forward.21} parent=0 // pred_check
    _
  $region19: #{sparse_sdf_vae_forward.21} parent=0 // pred_check_branch
    %26 = sbr.rel (0) target = $region21
  $region20: #{sparse_sdf_vae_forward.21} parent=0 // pred_region
    _
  $region21: #{sparse_sdf_vae_forward.21} parent=0 // pred_fallthru
    _
  // Predicated region
  $region22: #{sparse_sdf_vae_forward.21} parent=0 // pred_check
    _
  $region23: #{sparse_sdf_vae_forward.21} parent=0 // pred_check_branch
    %28 = sbr.rel (0) target = $region25
  $region24: #{sparse_sdf_vae_forward.21} parent=0 // pred_region
    _
  $region25: #{sparse_sdf_vae_forward.21} parent=0 // pred_fallthru
    _
  // Predicated region
  $region26: #{sparse_sdf_vae_forward.21} parent=0 // pred_check
    _
  $region27: #{sparse_sdf_vae_forward.21} parent=0 // pred_check_branch
    %30 = sbr.rel (0) target = $region29
  $region28: #{sparse_sdf_vae_forward.21} parent=0 // pred_region
    _
  $region29: #{sparse_sdf_vae_forward.21} parent=0 // pred_fallthru
    _
  // Predicated region
  $region30: #{sparse_sdf_vae_forward.21} parent=0 // pred_check
    _
  $region31: #{sparse_sdf_vae_forward.21} parent=0 // pred_check_branch
    %32 = sbr.rel (0) target = $region33
  $region32: #{sparse_sdf_vae_forward.21} parent=0 // pred_region
    _
  $region33: #{sparse_sdf_vae_forward.21} parent=0 // pred_fallthru
    _
  // Predicated region
  $region34: #{sparse_sdf_vae_forward.21} parent=0 // pred_check
    _
  $region35: #{sparse_sdf_vae_forward.21} parent=0 // pred_check_branch
    %34 = sbr.rel (0) target = $region37
  $region36: #{sparse_sdf_vae_forward.21} parent=0 // pred_region
    _
  $region37: #{sparse_sdf_vae_forward.21} parent=0 // pred_fallthru
    _
  %v36 = vld [vmem:[%s0] sm:$0xf]
  %v37 = vld [vmem:[%s0 + $0x4] sm:$0xf]
  %v38 = vld [vmem:[%s0 + $0x8] sm:$0xf]
  %v39 = vld [vmem:[%s0 + $0xc] sm:$0xf]
  %v40 = vld [vmem:[%s0 + $0x10] sm:$0xf]
  %v41 = vld [vmem:[%s0 + $0x14] sm:$0xf]
  %v42 = vld [vmem:[%s0 + $0x18] sm:$0xf]
  %v43 = vld [vmem:[%s0 + $0x1c] sm:$0xf]
  %v44 = vld [vmem:[%s0 + $0x20] sm:$0xf]
  %v45 = vld [vmem:[%s0 + $0x24] sm:$0xf]
  %v46 = vld [vmem:[%s0 + $0x28] sm:$0xf]
  %v47 = vld [vmem:[%s0 + $0x2c] sm:$0xf]
  %v48 = vld [vmem:[%s0 + $0x30] sm:$0xf]
  %v49 = vld [vmem:[%s0 + $0x34] sm:$0xf]
  %v50 = vld [vmem:[%s0 + $0x38] sm:$0xf]
  %v51 = vld [vmem:[%s0 + $0x3c] sm:$0xf]
  %v52 = vunpack.c.l.bf16 %v36
  %v53 = vunpack.c.l.bf16 %v37
  %v54 = vunpack.c.l.bf16 %v38
  %v55 = vunpack.c.l.bf16 %v39
  %v56 = vunpack.c.l.bf16 %v40
  %v57 = vunpack.c.l.bf16 %v41
  %v58 = vunpack.c.l.bf16 %v42
  %v59 = vunpack.c.l.bf16 %v43
  %v60 = vunpack.c.l.bf16 %v44
  %v61 = vunpack.c.l.bf16 %v45
  %v62 = vunpack.c.l.bf16 %v46
  %v63 = vunpack.c.l.bf16 %v47
  %v64 = vunpack.c.l.bf16 %v48
  %v65 = vunpack.c.l.bf16 %v49
  %v66 = vunpack.c.l.bf16 %v50
  %v67 = vunpack.c.l.bf16 %v51
  %v68 = vld [vmem:[%s1] sm:$0x1]
  %v69 = vld [vmem:[%s2] sm:$0x1]
  %vm70 = vcmask 523264
  %v71 = vsel %vm70, %v52, 0.0
  %72 = vadd.xlane.f32.xlu0 %v71
  %v73 = vpop.xlane.xlu0 %72
  %v74 = vsel %vm70, %v53, 0.0
  %75 = vadd.xlane.f32.xlu0 %v74
  %v76 = vpop.xlane.xlu0 %75
  %v77 = vsel %vm70, %v54, 0.0
  %78 = vadd.xlane.f32.xlu0 %v77
  %v79 = vpop.xlane.xlu0 %78
  %v80 = vsel %vm70, %v55, 0.0
  %81 = vadd.xlane.f32.xlu0 %v80
  %v82 = vpop.xlane.xlu0 %81
  %v83 = vsel %vm70, %v56, 0.0
  %84 = vadd.xlane.f32.xlu0 %v83
  %v85 = vpop.xlane.xlu0 %84
  %v86 = vsel %vm70, %v57, 0.0
  %87 = vadd.xlane.f32.xlu0 %v86
  %v88 = vpop.xlane.xlu0 %87
  %v89 = vsel %vm70, %v58, 0.0
  %90 = vadd.xlane.f32.xlu0 %v89
  %v91 = vpop.xlane.xlu0 %90
  %v92 = vsel %vm70, %v59, 0.0
  %93 = vadd.xlane.f32.xlu0 %v92
  %v94 = vpop.xlane.xlu0 %93
  %v95 = vsel %vm70, %v60, 0.0
  %96 = vadd.xlane.f32.xlu0 %v95
  %v97 = vpop.xlane.xlu0 %96
  %v98 = vsel %vm70, %v61, 0.0
  %99 = vadd.xlane.f32.xlu0 %v98
  %v100 = vpop.xlane.xlu0 %99
  %v101 = vsel %vm70, %v62, 0.0
  %102 = vadd.xlane.f32.xlu0 %v101
  %v103 = vpop.xlane.xlu0 %102
  %v104 = vsel %vm70, %v63, 0.0
  %105 = vadd.xlane.f32.xlu0 %v104
  %v106 = vpop.xlane.xlu0 %105
  %v107 = vsel %vm70, %v64, 0.0
  %108 = vadd.xlane.f32.xlu0 %v107
  %v109 = vpop.xlane.xlu0 %108
  %v110 = vsel %vm70, %v65, 0.0
  %111 = vadd.xlane.f32.xlu0 %v110
  %v112 = vpop.xlane.xlu0 %111
  %v113 = vsel %vm70, %v66, 0.0
  %114 = vadd.xlane.f32.xlu0 %v113
  %v115 = vpop.xlane.xlu0 %114
  %v116 = vsel %vm70, %v67, 0.0
  %117 = vadd.xlane.f32.xlu0 %v116
  %v118 = vpop.xlane.xlu0 %117
  %v119 = vrcp.pop 64.0
  %v120 = vmul.f32 64.0, %v119
  %v121 = vsub.f32 1.0, %v120
  %v122 = vmul.f32 %v119, %v121
  %v123 = vadd.f32 %v119, %v122
  %vm124 = vweird.f32 %v119
  %v125 = vsel %vm124, %v119, %v123
  %v126 = vmul.f32 %v73, %v125
  %v127 = vmul.f32 %v76, %v125
  %v128 = vmul.f32 %v79, %v125
  %v129 = vmul.f32 %v82, %v125
  %v130 = vmul.f32 %v85, %v125
  %v131 = vmul.f32 %v88, %v125
  %v132 = vmul.f32 %v91, %v125
  %v133 = vmul.f32 %v94, %v125
  %v134 = vmul.f32 %v97, %v125
  %v135 = vmul.f32 %v100, %v125
  %v136 = vmul.f32 %v103, %v125
  %v137 = vmul.f32 %v106, %v125
  %v138 = vmul.f32 %v109, %v125
  %v139 = vmul.f32 %v112, %v125
  %v140 = vmul.f32 %v115, %v125
  %v141 = vmul.f32 %v118, %v125
  %v142 = vsub.f32 %v52, %v126
  %v143 = vsub.f32 %v53, %v127
  %v144 = vsub.f32 %v54, %v128
  %v145 = vsub.f32 %v55, %v129
  %v146 = vsub.f32 %v56, %v130
  %v147 = vsub.f32 %v57, %v131
  %v148 = vsub.f32 %v58, %v132
  %v149 = vsub.f32 %v59, %v133
  %v150 = vsub.f32 %v60, %v134
  %v151 = vsub.f32 %v61, %v135
  %v152 = vsub.f32 %v62, %v136
  %v153 = vsub.f32 %v63, %v137
  %v154 = vsub.f32 %v64, %v138
  %v155 = vsub.f32 %v65, %v139
  %v156 = vsub.f32 %v66, %v140
  %v157 = vsub.f32 %v67, %v141
  %v158 = vmul.f32 %v142, %v142
  %v159 = vmul.f32 %v143, %v143
  %v160 = vmul.f32 %v144, %v144
  %v161 = vmul.f32 %v145, %v145
  %v162 = vmul.f32 %v146, %v146
  %v163 = vmul.f32 %v147, %v147
  %v164 = vmul.f32 %v148, %v148
  %v165 = vmul.f32 %v149, %v149
  %v166 = vmul.f32 %v150, %v150
  %v167 = vmul.f32 %v151, %v151
  %v168 = vmul.f32 %v152, %v152
  %v169 = vmul.f32 %v153, %v153
  %v170 = vmul.f32 %v154, %v154
  %v171 = vmul.f32 %v155, %v155
  %v172 = vmul.f32 %v156, %v156
  %v173 = vmul.f32 %v157, %v157
  %v174 = vsel %vm70, %v158, 0.0
  %175 = vadd.xlane.f32.xlu0 %v174
  %v176 = vpop.xlane.xlu0 %175
  %v177 = vsel %vm70, %v159, 0.0
  %178 = vadd.xlane.f32.xlu0 %v177
  %v179 = vpop.xlane.xlu0 %178
  %v180 = vsel %vm70, %v160, 0.0
  %181 = vadd.xlane.f32.xlu0 %v180
  %v182 = vpop.xlane.xlu0 %181
  %v183 = vsel %vm70, %v161, 0.0
  %184 = vadd.xlane.f32.xlu0 %v183
  %v185 = vpop.xlane.xlu0 %184
  %v186 = vsel %vm70, %v162, 0.0
  %187 = vadd.xlane.f32.xlu0 %v186
  %v188 = vpop.xlane.xlu0 %187
  %v189 = vsel %vm70, %v163, 0.0
  %190 = vadd.xlane.f32.xlu0 %v189
  %v191 = vpop.xlane.xlu0 %190
  %v192 = vsel %vm70, %v164, 0.0
  %193 = vadd.xlane.f32.xlu0 %v192
  %v194 = vpop.xlane.xlu0 %193
  %v195 = vsel %vm70, %v165, 0.0
  %196 = vadd.xlane.f32.xlu0 %v195
  %v197 = vpop.xlane.xlu0 %196
  %v198 = vsel %vm70, %v166, 0.0
  %199 = vadd.xlane.f32.xlu0 %v198
  %v200 = vpop.xlane.xlu0 %199
  %v201 = vsel %vm70, %v167, 0.0
  %202 = vadd.xlane.f32.xlu0 %v201
  %v203 = vpop.xlane.xlu0 %202
  %v204 = vsel %vm70, %v168, 0.0
  %205 = vadd.xlane.f32.xlu0 %v204
  %v206 = vpop.xlane.xlu0 %205
  %v207 = vsel %vm70, %v169, 0.0
  %208 = vadd.xlane.f32.xlu0 %v207
  %v209 = vpop.xlane.xlu0 %208
  %v210 = vsel %vm70, %v170, 0.0
  %211 = vadd.xlane.f32.xlu0 %v210
  %v212 = vpop.xlane.xlu0 %211
  %v213 = vsel %vm70, %v171, 0.0
  %214 = vadd.xlane.f32.xlu0 %v213
  %v215 = vpop.xlane.xlu0 %214
  %v216 = vsel %vm70, %v172, 0.0
  %217 = vadd.xlane.f32.xlu0 %v216
  %v218 = vpop.xlane.xlu0 %217
  %v219 = vsel %vm70, %v173, 0.0
  %220 = vadd.xlane.f32.xlu0 %v219
  %v221 = vpop.xlane.xlu0 %220
  %v222 = vmul.f32 %v176, %v125
  %v223 = vmul.f32 %v179, %v125
  %v224 = vmul.f32 %v182, %v125
  %v225 = vmul.f32 %v185, %v125
  %v226 = vmul.f32 %v188, %v125
  %v227 = vmul.f32 %v191, %v125
  %v228 = vmul.f32 %v194, %v125
  %v229 = vmul.f32 %v197, %v125
  %v230 = vmul.f32 %v200, %v125
  %v231 = vmul.f32 %v203, %v125
  %v232 = vmul.f32 %v206, %v125
  %v233 = vmul.f32 %v209, %v125
  %v234 = vmul.f32 %v212, %v125
  %v235 = vmul.f32 %v215, %v125
  %v236 = vmul.f32 %v218, %v125
  %v237 = vmul.f32 %v221, %v125
  %v238 = vadd.f32 %v222, 1e-05
  %v239 = vadd.f32 %v223, 1e-05
  %v240 = vadd.f32 %v224, 1e-05
  %v241 = vadd.f32 %v225, 1e-05
  %v242 = vadd.f32 %v226, 1e-05
  %v243 = vadd.f32 %v227, 1e-05
  %v244 = vadd.f32 %v228, 1e-05
  %v245 = vadd.f32 %v229, 1e-05
  %v246 = vadd.f32 %v230, 1e-05
  %v247 = vadd.f32 %v231, 1e-05
  %v248 = vadd.f32 %v232, 1e-05
  %v249 = vadd.f32 %v233, 1e-05
  %v250 = vadd.f32 %v234, 1e-05
  %v251 = vadd.f32 %v235, 1e-05
  %v252 = vadd.f32 %v236, 1e-05
  %v253 = vadd.f32 %v237, 1e-05
  %v254 = vrsqrt.pop %v238
  %v255 = vmul.f32 %v254, %v238
  %v256 = vmul.f32 %v255, %v254
  %v257 = vmul.f32 0.5, %v256
  %v258 = vsub.f32 1.5, %v257
  %v259 = vmul.f32 %v254, %v258
  %vm260 = vweird.f32 %v238
  %vm261 = vweird.f32 %v254
  %vm262 = vmor %vm260, %vm261
  %v263 = vsel %vm262, %v254, %v259
  %v264 = vrsqrt.pop %v239
  %v265 = vmul.f32 %v264, %v239
  %v266 = vmul.f32 %v265, %v264
  %v267 = vmul.f32 0.5, %v266
  %v268 = vsub.f32 1.5, %v267
  %v269 = vmul.f32 %v264, %v268
  %vm270 = vweird.f32 %v239
  %vm271 = vweird.f32 %v264
  %vm272 = vmor %vm270, %vm271
  %v273 = vsel %vm272, %v264, %v269
  %v274 = vrsqrt.pop %v240
  %v275 = vmul.f32 %v274, %v240
  %v276 = vmul.f32 %v275, %v274
  %v277 = vmul.f32 0.5, %v276
  %v278 = vsub.f32 1.5, %v277
  %v279 = vmul.f32 %v274, %v278
  %vm280 = vweird.f32 %v240
  %vm281 = vweird.f32 %v274
  %vm282 = vmor %vm280, %vm281
  %v283 = vsel %vm282, %v274, %v279
  %v284 = vrsqrt.pop %v241
  %v285 = vmul.f32 %v284, %v241
  %v286 = vmul.f32 %v285, %v284
  %v287 = vmul.f32 0.5, %v286
  %v288 = vsub.f32 1.5, %v287
  %v289 = vmul.f32 %v284, %v288
  %vm290 = vweird.f32 %v241
  %vm291 = vweird.f32 %v284
  %vm292 = vmor %vm290, %vm291
  %v293 = vsel %vm292, %v284, %v289
  %v294 = vrsqrt.pop %v242
  %v295 = vmul.f32 %v294, %v242
  %v296 = vmul.f32 %v295, %v294
  %v297 = vmul.f32 0.5, %v296
  %v298 = vsub.f32 1.5, %v297
  %v299 = vmul.f32 %v294, %v298
  %vm300 = vweird.f32 %v242
  %vm301 = vweird.f32 %v294
  %vm302 = vmor %vm300, %vm301
  %v303 = vsel %vm302, %v294, %v299
  %v304 = vrsqrt.pop %v243
  %v305 = vmul.f32 %v304, %v243
  %v306 = vmul.f32 %v305, %v304
  %v307 = vmul.f32 0.5, %v306
  %v308 = vsub.f32 1.5, %v307
  %v309 = vmul.f32 %v304, %v308
  %vm310 = vweird.f32 %v243
  %vm311 = vweird.f32 %v304
  %vm312 = vmor %vm310, %vm311
  %v313 = vsel %vm312, %v304, %v309
  %v314 = vrsqrt.pop %v244
  %v315 = vmul.f32 %v314, %v244
  %v316 = vmul.f32 %v315, %v314
  %v317 = vmul.f32 0.5, %v316
  %v318 = vsub.f32 1.5, %v317
  %v319 = vmul.f32 %v314, %v318
  %vm320 = vweird.f32 %v244
  %vm321 = vweird.f32 %v314
  %vm322 = vmor %vm320, %vm321
  %v323 = vsel %vm322, %v314, %v319
  %v324 = vrsqrt.pop %v245
  %v325 = vmul.f32 %v324, %v245
  %v326 = vmul.f32 %v325, %v324
  %v327 = vmul.f32 0.5, %v326
  %v328 = vsub.f32 1.5, %v327
  %v329 = vmul.f32 %v324, %v328
  %vm330 = vweird.f32 %v245
  %vm331 = vweird.f32 %v324
  %vm332 = vmor %vm330, %vm331
  %v333 = vsel %vm332, %v324, %v329
  %v334 = vrsqrt.pop %v246
  %v335 = vmul.f32 %v334, %v246
  %v336 = vmul.f32 %v335, %v334
  %v337 = vmul.f32 0.5, %v336
  %v338 = vsub.f32 1.5, %v337
  %v339 = vmul.f32 %v334, %v338
  %vm340 = vweird.f32 %v246
  %vm341 = vweird.f32 %v334
  %vm342 = vmor %vm340, %vm341
  %v343 = vsel %vm342, %v334, %v339
  %v344 = vrsqrt.pop %v247
  %v345 = vmul.f32 %v344, %v247
  %v346 = vmul.f32 %v345, %v344
  %v347 = vmul.f32 0.5, %v346
  %v348 = vsub.f32 1.5, %v347
  %v349 = vmul.f32 %v344, %v348
  %vm350 = vweird.f32 %v247
  %vm351 = vweird.f32 %v344
  %vm352 = vmor %vm350, %vm351
  %v353 = vsel %vm352, %v344, %v349
  %v354 = vrsqrt.pop %v248
  %v355 = vmul.f32 %v354, %v248
  %v356 = vmul.f32 %v355, %v354
  %v357 = vmul.f32 0.5, %v356
  %v358 = vsub.f32 1.5, %v357
  %v359 = vmul.f32 %v354, %v358
  %vm360 = vweird.f32 %v248
  %vm361 = vweird.f32 %v354
  %vm362 = vmor %vm360, %vm361
  %v363 = vsel %vm362, %v354, %v359
  %v364 = vrsqrt.pop %v249
  %v365 = vmul.f32 %v364, %v249
  %v366 = vmul.f32 %v365, %v364
  %v367 = vmul.f32 0.5, %v366
  %v368 = vsub.f32 1.5, %v367
  %v369 = vmul.f32 %v364, %v368
  %vm370 = vweird.f32 %v249
  %vm371 = vweird.f32 %v364
  %vm372 = vmor %vm370, %vm371
  %v373 = vsel %vm372, %v364, %v369
  %v374 = vrsqrt.pop %v250
  %v375 = vmul.f32 %v374, %v250
  %v376 = vmul.f32 %v375, %v374
  %v377 = vmul.f32 0.5, %v376
  %v378 = vsub.f32 1.5, %v377
  %v379 = vmul.f32 %v374, %v378
  %vm380 = vweird.f32 %v250
  %vm381 = vweird.f32 %v374
  %vm382 = vmor %vm380, %vm381
  %v383 = vsel %vm382, %v374, %v379
  %v384 = vrsqrt.pop %v251
  %v385 = vmul.f32 %v384, %v251
  %v386 = vmul.f32 %v385, %v384
  %v387 = vmul.f32 0.5, %v386
  %v388 = vsub.f32 1.5, %v387
  %v389 = vmul.f32 %v384, %v388
  %vm390 = vweird.f32 %v251
  %vm391 = vweird.f32 %v384
  %vm392 = vmor %vm390, %vm391
  %v393 = vsel %vm392, %v384, %v389
  %v394 = vrsqrt.pop %v252
  %v395 = vmul.f32 %v394, %v252
  %v396 = vmul.f32 %v395, %v394
  %v397 = vmul.f32 0.5, %v396
  %v398 = vsub.f32 1.5, %v397
  %v399 = vmul.f32 %v394, %v398
  %vm400 = vweird.f32 %v252
  %vm401 = vweird.f32 %v394
  %vm402 = vmor %vm400, %vm401
  %v403 = vsel %vm402, %v394, %v399
  %v404 = vrsqrt.pop %v253
  %v405 = vmul.f32 %v404, %v253
  %v406 = vmul.f32 %v405, %v404
  %v407 = vmul.f32 0.5, %v406
  %v408 = vsub.f32 1.5, %v407
  %v409 = vmul.f32 %v404, %v408
  %vm410 = vweird.f32 %v253
  %vm411 = vweird.f32 %v404
  %vm412 = vmor %vm410, %vm411
  %v413 = vsel %vm412, %v404, %v409
  %v414 = vmul.f32 %v142, %v263
  %v415 = vmul.f32 %v143, %v273
  %v416 = vmul.f32 %v144, %v283
  %v417 = vmul.f32 %v145, %v293
  %v418 = vmul.f32 %v146, %v303
  %v419 = vmul.f32 %v147, %v313
  %v420 = vmul.f32 %v148, %v323
  %v421 = vmul.f32 %v149, %v333
  %v422 = vmul.f32 %v150, %v343
  %v423 = vmul.f32 %v151, %v353
  %v424 = vmul.f32 %v152, %v363
  %v425 = vmul.f32 %v153, %v373
  %v426 = vmul.f32 %v154, %v383
  %v427 = vmul.f32 %v155, %v393
  %v428 = vmul.f32 %v156, %v403
  %v429 = vmul.f32 %v157, %v413
  %v431 = vperm.slane %v68, 0
  %v433 = vmul.f32 %v414, %v431
  %v434 = vmul.f32 %v415, %v431
  %v435 = vmul.f32 %v416, %v431
  %v436 = vmul.f32 %v417, %v431
  %v437 = vmul.f32 %v418, %v431
  %v438 = vmul.f32 %v419, %v431
  %v439 = vmul.f32 %v420, %v431
  %v440 = vmul.f32 %v421, %v431
  %v441 = vmul.f32 %v422, %v431
  %v442 = vmul.f32 %v423, %v431
  %v443 = vmul.f32 %v424, %v431
  %v444 = vmul.f32 %v425, %v431
  %v445 = vmul.f32 %v426, %v431
  %v446 = vmul.f32 %v427, %v431
  %v447 = vmul.f32 %v428, %v431
  %v448 = vmul.f32 %v429, %v431
  %v450 = vperm.slane %v69, 0
  %v452 = vadd.f32 %v433, %v450
  %v453 = vadd.f32 %v434, %v450
  %v454 = vadd.f32 %v435, %v450
  %v455 = vadd.f32 %v436, %v450
  %v456 = vadd.f32 %v437, %v450
  %v457 = vadd.f32 %v438, %v450
  %v458 = vadd.f32 %v439, %v450
  %v459 = vadd.f32 %v440, %v450
  %v460 = vadd.f32 %v441, %v450
  %v461 = vadd.f32 %v442, %v450
  %v462 = vadd.f32 %v443, %v450
  %v463 = vadd.f32 %v444, %v450
  %v464 = vadd.f32 %v445, %v450
  %v465 = vadd.f32 %v446, %v450
  %v466 = vadd.f32 %v447, %v450
  %v467 = vadd.f32 %v448, %v450
  %v468 = vpack.c.bf16 %v453, %v452
  %v469 = vpack.c.bf16 %v455, %v454
  %v470 = vpack.c.bf16 %v457, %v456
  %v471 = vpack.c.bf16 %v459, %v458
  %v472 = vpack.c.bf16 %v461, %v460
  %v473 = vpack.c.bf16 %v463, %v462
  %v474 = vpack.c.bf16 %v465, %v464
  %v475 = vpack.c.bf16 %v467, %v466
  %v476 = vld [vmem:[%s3] sm:$0xf]
  %v477 = vld [vmem:[%s3 + $0x4] sm:$0xf]
  %v478 = vld [vmem:[%s3 + $0x8] sm:$0xf]
  %v479 = vld [vmem:[%s3 + $0xc] sm:$0xf]
  %v480 = vld [vmem:[%s3 + $0x10] sm:$0xf]
  %v481 = vld [vmem:[%s3 + $0x14] sm:$0xf]
  %v482 = vld [vmem:[%s3 + $0x18] sm:$0xf]
  %v483 = vld [vmem:[%s3 + $0x1c] sm:$0xf]
  %v484 = vld [vmem:[%s4] sm:$0x1]
  %v486 = vperm.slane %v484, 0
  %v496 = vunpack.c.l.b16 %v476
  %v497 = vunpack.c.l.b16 %v477
  %v498 = vunpack.c.l.b16 %v478
  %v499 = vunpack.c.l.b16 %v479
  %v500 = vunpack.c.l.b16 %v480
  %v501 = vunpack.c.l.b16 %v481
  %v502 = vunpack.c.l.b16 %v482
  %v503 = vunpack.c.l.b16 %v483
  %v504 = vpack.c.b16 %v497, %v496
  %v505 = vpack.c.b16 %v499, %v498
  %v506 = vpack.c.b16 %v501, %v500
  %v507 = vpack.c.b16 %v503, %v502
  %v513 = vsel %vm70, %v468, 0
  %v516 = vsel %vm70, %v469, 0
  %v519 = vsel %vm70, %v470, 0
  %v522 = vsel %vm70, %v471, 0
  %v525 = vsel %vm70, %v472, 0
  %v528 = vsel %vm70, %v473, 0
  %v531 = vsel %vm70, %v474, 0
  %v534 = vsel %vm70, %v475, 0
  %536 = vmatpush.bf16.msra.mxu0 0
  %537 = vmatpush.bf16.msra.mxu0 0
  %538 = vmatpush.bf16.msra.mxu0 0
  %539 = vmatpush.bf16.msra.mxu0 0
  %540 = vmatpush.bf16.msra.mxu0 %v507
  %541 = vmatpush.bf16.msra.mxu0 %v506
  %542 = vmatpush.bf16.msra.mxu0 %v505
  %543 = vmatpush.bf16.msra.mxu0 %v504
  %544 = vmatmul.bf16.gmra.mxu0 %v513
  %v545 = vpop.f32.mrf.mxu0
  %v546 = vadd.f32 %v486, %v545
  %v547 = vpop.f32.mrf.mxu0
  %v548 = vadd.f32 %v486, %v547
  %549 = vmatmul.bf16.gmra.mxu0 %v516
  %v550 = vpop.f32.mrf.mxu0
  %v551 = vadd.f32 %v486, %v550
  %v552 = vpop.f32.mrf.mxu0
  %v553 = vadd.f32 %v486, %v552
  %554 = vmatmul.bf16.gmra.mxu0 %v519
  %v555 = vpop.f32.mrf.mxu0
  %v556 = vadd.f32 %v486, %v555
  %v557 = vpop.f32.mrf.mxu0
  %v558 = vadd.f32 %v486, %v557
  %559 = vmatmul.bf16.gmra.mxu0 %v522
  %v560 = vpop.f32.mrf.mxu0
  %v561 = vadd.f32 %v486, %v560
  %v562 = vpop.f32.mrf.mxu0
  %v563 = vadd.f32 %v486, %v562
  %564 = vmatmul.bf16.gmra.mxu0 %v525
  %v565 = vpop.f32.mrf.mxu0
  %v566 = vadd.f32 %v486, %v565
  %v567 = vpop.f32.mrf.mxu0
  %v568 = vadd.f32 %v486, %v567
  %569 = vmatmul.bf16.gmra.mxu0 %v528
  %v570 = vpop.f32.mrf.mxu0
  %v571 = vadd.f32 %v486, %v570
  %v572 = vpop.f32.mrf.mxu0
  %v573 = vadd.f32 %v486, %v572
  %574 = vmatmul.bf16.gmra.mxu0 %v531
  %v575 = vpop.f32.mrf.mxu0
  %v576 = vadd.f32 %v486, %v575
  %v577 = vpop.f32.mrf.mxu0
  %v578 = vadd.f32 %v486, %v577
  %579 = vmatmul.bf16.gmra.mxu0 %v534
  %v580 = vpop.f32.mrf.mxu0
  %v581 = vadd.f32 %v486, %v580
  %v582 = vpop.f32.mrf.mxu0
  %v583 = vadd.f32 %v486, %v582
  %584 = vdwg.mxu0
  %v585 = vpack.c.bf16 %v546, %v546
  %v586 = vpack.c.bf16 %v548, %v548
  %v587 = vpack.c.bf16 %v551, %v551
  %v588 = vpack.c.bf16 %v553, %v553
  %v589 = vpack.c.bf16 %v556, %v556
  %v590 = vpack.c.bf16 %v558, %v558
  %v591 = vpack.c.bf16 %v561, %v561
  %v592 = vpack.c.bf16 %v563, %v563
  %v593 = vpack.c.bf16 %v566, %v566
  %v594 = vpack.c.bf16 %v568, %v568
  %v595 = vpack.c.bf16 %v571, %v571
  %v596 = vpack.c.bf16 %v573, %v573
  %v597 = vpack.c.bf16 %v576, %v576
  %v598 = vpack.c.bf16 %v578, %v578
  %v599 = vpack.c.bf16 %v581, %v581
  %v600 = vpack.c.bf16 %v583, %v583
  %vm601 = vcmask 519168
  %602 = vst.msk [vmem:[%s9] sm:$0xf] %vm601, %v585
  %603 = vst.msk [vmem:[%s9 + $0x4] sm:$0xf] %vm601, %v586
  %604 = vst.msk [vmem:[%s9 + $0x8] sm:$0xf] %vm601, %v587
  %605 = vst.msk [vmem:[%s9 + $0xc] sm:$0xf] %vm601, %v588
  %606 = vst.msk [vmem:[%s9 + $0x10] sm:$0xf] %vm601, %v589
  %607 = vst.msk [vmem:[%s9 + $0x14] sm:$0xf] %vm601, %v590
  %608 = vst.msk [vmem:[%s9 + $0x18] sm:$0xf] %vm601, %v591
  %609 = vst.msk [vmem:[%s9 + $0x1c] sm:$0xf] %vm601, %v592
  %610 = vst.msk [vmem:[%s9 + $0x20] sm:$0xf] %vm601, %v593
  %611 = vst.msk [vmem:[%s9 + $0x24] sm:$0xf] %vm601, %v594
  %612 = vst.msk [vmem:[%s9 + $0x28] sm:$0xf] %vm601, %v595
  %613 = vst.msk [vmem:[%s9 + $0x2c] sm:$0xf] %vm601, %v596
  %614 = vst.msk [vmem:[%s9 + $0x30] sm:$0xf] %vm601, %v597
  %615 = vst.msk [vmem:[%s9 + $0x34] sm:$0xf] %vm601, %v598
  %616 = vst.msk [vmem:[%s9 + $0x38] sm:$0xf] %vm601, %v599
  %617 = vst.msk [vmem:[%s9 + $0x3c] sm:$0xf] %vm601, %v600
  %v618 = vld [vmem:[%s5] sm:$0xf]
  %v619 = vld [vmem:[%s5 + $0x4] sm:$0xf]
  %v620 = vld [vmem:[%s5 + $0x8] sm:$0xf]
  %v621 = vld [vmem:[%s5 + $0xc] sm:$0xf]
  %v622 = vld [vmem:[%s5 + $0x10] sm:$0xf]
  %v623 = vld [vmem:[%s5 + $0x14] sm:$0xf]
  %v624 = vld [vmem:[%s5 + $0x18] sm:$0xf]
  %v625 = vld [vmem:[%s5 + $0x1c] sm:$0xf]
  %v626 = vld [vmem:[%s6] sm:$0x1]
  %v628 = vperm.slane %v626, 0
  %v638 = vunpack.c.l.b16 %v618
  %v639 = vunpack.c.l.b16 %v619
  %v640 = vunpack.c.l.b16 %v620
  %v641 = vunpack.c.l.b16 %v621
  %v642 = vunpack.c.l.b16 %v622
  %v643 = vunpack.c.l.b16 %v623
  %v644 = vunpack.c.l.b16 %v624
  %v645 = vunpack.c.l.b16 %v625
  %v646 = vpack.c.b16 %v639, %v638
  %v647 = vpack.c.b16 %v641, %v640
  %v648 = vpack.c.b16 %v643, %v642
  %v649 = vpack.c.b16 %v645, %v644
  %654 = vmatpush.bf16.msra.mxu0 0
  %655 = vmatpush.bf16.msra.mxu0 0
  %656 = vmatpush.bf16.msra.mxu0 0
  %657 = vmatpush.bf16.msra.mxu0 0
  %658 = vmatpush.bf16.msra.mxu0 %v649
  %659 = vmatpush.bf16.msra.mxu0 %v648
  %660 = vmatpush.bf16.msra.mxu0 %v647
  %661 = vmatpush.bf16.msra.mxu0 %v646
  %662 = vmatmul.bf16.gmra.mxu0 %v513
  %v663 = vpop.f32.mrf.mxu0
  %v664 = vadd.f32 %v628, %v663
  %v665 = vpop.f32.mrf.mxu0
  %v666 = vadd.f32 %v628, %v665
  %667 = vmatmul.bf16.gmra.mxu0 %v516
  %v668 = vpop.f32.mrf.mxu0
  %v669 = vadd.f32 %v628, %v668
  %v670 = vpop.f32.mrf.mxu0
  %v671 = vadd.f32 %v628, %v670
  %672 = vmatmul.bf16.gmra.mxu0 %v519
  %v673 = vpop.f32.mrf.mxu0
  %v674 = vadd.f32 %v628, %v673
  %v675 = vpop.f32.mrf.mxu0
  %v676 = vadd.f32 %v628, %v675
  %677 = vmatmul.bf16.gmra.mxu0 %v522
  %v678 = vpop.f32.mrf.mxu0
  %v679 = vadd.f32 %v628, %v678
  %v680 = vpop.f32.mrf.mxu0
  %v681 = vadd.f32 %v628, %v680
  %682 = vmatmul.bf16.gmra.mxu0 %v525
  %v683 = vpop.f32.mrf.mxu0
  %v684 = vadd.f32 %v628, %v683
  %v685 = vpop.f32.mrf.mxu0
  %v686 = vadd.f32 %v628, %v685
  %687 = vmatmul.bf16.gmra.mxu0 %v528
  %v688 = vpop.f32.mrf.mxu0
  %v689 = vadd.f32 %v628, %v688
  %v690 = vpop.f32.mrf.mxu0
  %v691 = vadd.f32 %v628, %v690
  %692 = vmatmul.bf16.gmra.mxu0 %v531
  %v693 = vpop.f32.mrf.mxu0
  %v694 = vadd.f32 %v628, %v693
  %v695 = vpop.f32.mrf.mxu0
  %v696 = vadd.f32 %v628, %v695
  %697 = vmatmul.bf16.gmra.mxu0 %v534
  %v698 = vpop.f32.mrf.mxu0
  %v699 = vadd.f32 %v628, %v698
  %v700 = vpop.f32.mrf.mxu0
  %v701 = vadd.f32 %v628, %v700
  %702 = vdwg.mxu0
  %v703 = vpack.c.bf16 %v664, %v664
  %v704 = vpack.c.bf16 %v666, %v666
  %v705 = vpack.c.bf16 %v669, %v669
  %v706 = vpack.c.bf16 %v671, %v671
  %v707 = vpack.c.bf16 %v674, %v674
  %v708 = vpack.c.bf16 %v676, %v676
  %v709 = vpack.c.bf16 %v679, %v679
  %v710 = vpack.c.bf16 %v681, %v681
  %v711 = vpack.c.bf16 %v684, %v684
  %v712 = vpack.c.bf16 %v686, %v686
  %v713 = vpack.c.bf16 %v689, %v689
  %v714 = vpack.c.bf16 %v691, %v691
  %v715 = vpack.c.bf16 %v694, %v694
  %v716 = vpack.c.bf16 %v696, %v696
  %v717 = vpack.c.bf16 %v699, %v699
  %v718 = vpack.c.bf16 %v701, %v701
  %719 = vst.msk [vmem:[%s10] sm:$0xf] %vm601, %v703
  %720 = vst.msk [vmem:[%s10 + $0x4] sm:$0xf] %vm601, %v704
  %721 = vst.msk [vmem:[%s10 + $0x8] sm:$0xf] %vm601, %v705
  %722 = vst.msk [vmem:[%s10 + $0xc] sm:$0xf] %vm601, %v706
  %723 = vst.msk [vmem:[%s10 + $0x10] sm:$0xf] %vm601, %v707
  %724 = vst.msk [vmem:[%s10 + $0x14] sm:$0xf] %vm601, %v708
  %725 = vst.msk [vmem:[%s10 + $0x18] sm:$0xf] %vm601, %v709
  %726 = vst.msk [vmem:[%s10 + $0x1c] sm:$0xf] %vm601, %v710
  %727 = vst.msk [vmem:[%s10 + $0x20] sm:$0xf] %vm601, %v711
  %728 = vst.msk [vmem:[%s10 + $0x24] sm:$0xf] %vm601, %v712
  %729 = vst.msk [vmem:[%s10 + $0x28] sm:$0xf] %vm601, %v713
  %730 = vst.msk [vmem:[%s10 + $0x2c] sm:$0xf] %vm601, %v714
  %731 = vst.msk [vmem:[%s10 + $0x30] sm:$0xf] %vm601, %v715
  %732 = vst.msk [vmem:[%s10 + $0x34] sm:$0xf] %vm601, %v716
  %733 = vst.msk [vmem:[%s10 + $0x38] sm:$0xf] %vm601, %v717
  %734 = vst.msk [vmem:[%s10 + $0x3c] sm:$0xf] %vm601, %v718
  %v735 = vld [vmem:[%s7] sm:$0xf]
  %v736 = vld [vmem:[%s7 + $0x4] sm:$0xf]
  %v737 = vld [vmem:[%s7 + $0x8] sm:$0xf]
  %v738 = vld [vmem:[%s7 + $0xc] sm:$0xf]
  %v739 = vld [vmem:[%s7 + $0x10] sm:$0xf]
  %v740 = vld [vmem:[%s7 + $0x14] sm:$0xf]
  %v741 = vld [vmem:[%s7 + $0x18] sm:$0xf]
  %v742 = vld [vmem:[%s7 + $0x1c] sm:$0xf]
  %v743 = vld [vmem:[%s8] sm:$0x1]
  %v745 = vperm.slane %v743, 0
  %v755 = vunpack.c.l.b16 %v735
  %v756 = vunpack.c.l.b16 %v736
  %v757 = vunpack.c.l.b16 %v737
  %v758 = vunpack.c.l.b16 %v738
  %v759 = vunpack.c.l.b16 %v739
  %v760 = vunpack.c.l.b16 %v740
  %v761 = vunpack.c.l.b16 %v741
  %v762 = vunpack.c.l.b16 %v742
  %v763 = vpack.c.b16 %v756, %v755
  %v764 = vpack.c.b16 %v758, %v757
  %v765 = vpack.c.b16 %v760, %v759
  %v766 = vpack.c.b16 %v762, %v761
  %771 = vmatpush.bf16.msra.mxu0 0
  %772 = vmatpush.bf16.msra.mxu0 0
  %773 = vmatpush.bf16.msra.mxu0 0
  %774 = vmatpush.bf16.msra.mxu0 0
  %775 = vmatpush.bf16.msra.mxu0 %v766
  %776 = vmatpush.bf16.msra.mxu0 %v765
  %777 = vmatpush.bf16.msra.mxu0 %v764
  %778 = vmatpush.bf16.msra.mxu0 %v763
  %779 = vmatmul.bf16.gmra.mxu0 %v513
  %v780 = vpop.f32.mrf.mxu0
  %v781 = vadd.f32 %v745, %v780
  %v782 = vpop.f32.mrf.mxu0
  %v783 = vadd.f32 %v745, %v782
  %784 = vmatmul.bf16.gmra.mxu0 %v516
  %v785 = vpop.f32.mrf.mxu0
  %v786 = vadd.f32 %v745, %v785
  %v787 = vpop.f32.mrf.mxu0
  %v788 = vadd.f32 %v745, %v787
  %789 = vmatmul.bf16.gmra.mxu0 %v519
  %v790 = vpop.f32.mrf.mxu0
  %v791 = vadd.f32 %v745, %v790
  %v792 = vpop.f32.mrf.mxu0
  %v793 = vadd.f32 %v745, %v792
  %794 = vmatmul.bf16.gmra.mxu0 %v522
  %v795 = vpop.f32.mrf.mxu0
  %v796 = vadd.f32 %v745, %v795
  %v797 = vpop.f32.mrf.mxu0
  %v798 = vadd.f32 %v745, %v797
  %799 = vmatmul.bf16.gmra.mxu0 %v525
  %v800 = vpop.f32.mrf.mxu0
  %v801 = vadd.f32 %v745, %v800
  %v802 = vpop.f32.mrf.mxu0
  %v803 = vadd.f32 %v745, %v802
  %804 = vmatmul.bf16.gmra.mxu0 %v528
  %v805 = vpop.f32.mrf.mxu0
  %v806 = vadd.f32 %v745, %v805
  %v807 = vpop.f32.mrf.mxu0
  %v808 = vadd.f32 %v745, %v807
  %809 = vmatmul.bf16.gmra.mxu0 %v531
  %v810 = vpop.f32.mrf.mxu0
  %v811 = vadd.f32 %v745, %v810
  %v812 = vpop.f32.mrf.mxu0
  %v813 = vadd.f32 %v745, %v812
  %814 = vmatmul.bf16.gmra.mxu0 %v534
  %v815 = vpop.f32.mrf.mxu0
  %v816 = vadd.f32 %v745, %v815
  %v817 = vpop.f32.mrf.mxu0
  %v818 = vadd.f32 %v745, %v817
  %819 = vdwg.mxu0
  %v820 = vpack.c.bf16 %v781, %v781
  %v821 = vpack.c.bf16 %v783, %v783
  %v822 = vpack.c.bf16 %v786, %v786
  %v823 = vpack.c.bf16 %v788, %v788
  %v824 = vpack.c.bf16 %v791, %v791
  %v825 = vpack.c.bf16 %v793, %v793
  %v826 = vpack.c.bf16 %v796, %v796
  %v827 = vpack.c.bf16 %v798, %v798
  %v828 = vpack.c.bf16 %v801, %v801
  %v829 = vpack.c.bf16 %v803, %v803
  %v830 = vpack.c.bf16 %v806, %v806
  %v831 = vpack.c.bf16 %v808, %v808
  %v832 = vpack.c.bf16 %v811, %v811
  %v833 = vpack.c.bf16 %v813, %v813
  %v834 = vpack.c.bf16 %v816, %v816
  %v835 = vpack.c.bf16 %v818, %v818
  %836 = vst.msk [vmem:[%s11] sm:$0xf] %vm601, %v820
  %837 = vst.msk [vmem:[%s11 + $0x4] sm:$0xf] %vm601, %v821
  %838 = vst.msk [vmem:[%s11 + $0x8] sm:$0xf] %vm601, %v822
  %839 = vst.msk [vmem:[%s11 + $0xc] sm:$0xf] %vm601, %v823
  %840 = vst.msk [vmem:[%s11 + $0x10] sm:$0xf] %vm601, %v824
  %841 = vst.msk [vmem:[%s11 + $0x14] sm:$0xf] %vm601, %v825
  %842 = vst.msk [vmem:[%s11 + $0x18] sm:$0xf] %vm601, %v826
  %843 = vst.msk [vmem:[%s11 + $0x1c] sm:$0xf] %vm601, %v827
  %844 = vst.msk [vmem:[%s11 + $0x20] sm:$0xf] %vm601, %v828
  %845 = vst.msk [vmem:[%s11 + $0x24] sm:$0xf] %vm601, %v829
  %846 = vst.msk [vmem:[%s11 + $0x28] sm:$0xf] %vm601, %v830
  %847 = vst.msk [vmem:[%s11 + $0x2c] sm:$0xf] %vm601, %v831
  %848 = vst.msk [vmem:[%s11 + $0x30] sm:$0xf] %vm601, %v832
  %849 = vst.msk [vmem:[%s11 + $0x34] sm:$0xf] %vm601, %v833
  %850 = vst.msk [vmem:[%s11 + $0x38] sm:$0xf] %vm601, %v834
  %851 = vst.msk [vmem:[%s11 + $0x3c] sm:$0xf] %vm601, %v835
  // Predicated region
  $region38: #{sparse_sdf_vae_forward.21} parent=0 // pred_check
    _
  $region39: #{sparse_sdf_vae_forward.21} parent=0 // pred_check_branch
    %853 = sbr.rel (0) target = $region41
  $region40: #{sparse_sdf_vae_forward.21} parent=0 // pred_region
    _
  $region41: #{sparse_sdf_vae_forward.21} parent=0 // pred_fallthru
    _
  // Predicated region
  $region42: #{sparse_sdf_vae_forward.21} parent=0 // pred_check
    _
  $region43: #{sparse_sdf_vae_forward.21} parent=0 // pred_check_branch
    %855 = sbr.rel (0) target = $region45
  $region44: #{sparse_sdf_vae_forward.21} parent=0 // pred_region
    _
  $region45: #{sparse_sdf_vae_forward.21} parent=0 // pred_fallthru
    _
  // Predicated region
  $region46: #{sparse_sdf_vae_forward.21} parent=0 // pred_check
    _
  $region47: #{sparse_sdf_vae_forward.21} parent=0 // pred_check_branch
    %857 = sbr.rel (0) target = $region49
  $region48: #{sparse_sdf_vae_forward.21} parent=0 // pred_region
    _
  $region49: #{sparse_sdf_vae_forward.21} parent=0 // pred_fallthru
    _
  // Predicated region
  $region50: #{sparse_sdf_vae_forward.21} parent=0 // pred_check
    _
  $region51: #{sparse_sdf_vae_forward.21} parent=0 // pred_check_branch
    %859 = sbr.rel (0) target = $region53
  $region52: #{sparse_sdf_vae_forward.21} parent=0 // pred_region
    _
  $region53: #{sparse_sdf_vae_forward.21} parent=0 // pred_fallthru
    _
  // Predicated region
  $region54: #{sparse_sdf_vae_forward.21} parent=0 // pred_check
    _
  $region55: #{sparse_sdf_vae_forward.21} parent=0 // pred_check_branch
    %861 = sbr.rel (0) target = $region57
  $region56: #{sparse_sdf_vae_forward.21} parent=0 // pred_region
    _
  $region57: #{sparse_sdf_vae_forward.21} parent=0 // pred_fallthru
    _
  // Predicated region
  $region58: #{sparse_sdf_vae_forward.21} parent=0 // pred_check
    _
  $region59: #{sparse_sdf_vae_forward.21} parent=0 // pred_check_branch
    %863 = sbr.rel (0) target = $region61
  $region60: #{sparse_sdf_vae_forward.21} parent=0 // pred_region
    _
  $region61: #{sparse_sdf_vae_forward.21} parent=0 // pred_fallthru
    _

// kernel: sparse_sdf_vae_forward.24
$region0: #{sparse_sdf_vae_forward.24}
  #allocation0 [shape = 'u32[]', space=smem, size = 0x4, offset = 0x4, fixed_abs, tag = 'smem constant byte address 0x4 - core index']
  #allocation1 [shape = 'u32[72,128]{1,0:T(1,128)}', space=vmem, size = 0x9000, scoped, tag = 'internal scratch']
  %s0 = inlined_call_operand.vmem [shape: bf16[128,64], index: 0, kind: input, shape index: {}]
  %s1 = inlined_call_operand.vmem [shape: f32[1,64], index: 1, kind: input, shape index: {}]
  %s2 = inlined_call_operand.vmem [shape: f32[1,64], index: 2, kind: input, shape index: {}]
  %s3 = inlined_call_operand.vmem [shape: bf16[64,256], index: 3, kind: input, shape index: {}]
  %s4 = inlined_call_operand.vmem [shape: f32[1,256], index: 4, kind: input, shape index: {}]
  %s5 = inlined_call_operand.vmem [shape: bf16[256,64], index: 5, kind: input, shape index: {}]
  %s6 = inlined_call_operand.vmem [shape: f32[1,64], index: 6, kind: input, shape index: {}]
  %s7 = inlined_call_operand.vmem [shape: bf16[128,64], index: 7, kind: output, shape index: {}]
  %s8 = sld [smem:[#allocation0]]
  $region38: #{sparse_sdf_vae_forward.24} parent=0
    _
  %s10 = ssub.s32 1, %s8
  %s11 = scalar_select 0, %s10, %s8
  // Predicated region
  $region2: #{sparse_sdf_vae_forward.24} parent=0 // pred_check
    _
  $region3: #{sparse_sdf_vae_forward.24} parent=0 // pred_check_branch
    %13 = sbr.rel (0) target = $region5
  $region4: #{sparse_sdf_vae_forward.24} parent=0 // pred_region
    _
  $region5: #{sparse_sdf_vae_forward.24} parent=0 // pred_fallthru
    _
  // Predicated region
  $region6: #{sparse_sdf_vae_forward.24} parent=0 // pred_check
    _
  $region7: #{sparse_sdf_vae_forward.24} parent=0 // pred_check_branch
    %15 = sbr.rel (0) target = $region9
  $region8: #{sparse_sdf_vae_forward.24} parent=0 // pred_region
    _
  $region9: #{sparse_sdf_vae_forward.24} parent=0 // pred_fallthru
    _
  // Predicated region
  $region10: #{sparse_sdf_vae_forward.24} parent=0 // pred_check
    _
  $region11: #{sparse_sdf_vae_forward.24} parent=0 // pred_check_branch
    %17 = sbr.rel (0) target = $region13
  $region12: #{sparse_sdf_vae_forward.24} parent=0 // pred_region
    _
  $region13: #{sparse_sdf_vae_forward.24} parent=0 // pred_fallthru
    _
  // Predicated region
  $region14: #{sparse_sdf_vae_forward.24} parent=0 // pred_check
    _
  $region15: #{sparse_sdf_vae_forward.24} parent=0 // pred_check_branch
    %19 = sbr.rel (0) target = $region17
  $region16: #{sparse_sdf_vae_forward.24} parent=0 // pred_region
    _
  $region17: #{sparse_sdf_vae_forward.24} parent=0 // pred_fallthru
    _
  // Predicated region
  $region18: #{sparse_sdf_vae_forward.24} parent=0 // pred_check
    _
  $region19: #{sparse_sdf_vae_forward.24} parent=0 // pred_check_branch
    %21 = sbr.rel (0) target = $region21
  $region20: #{sparse_sdf_vae_forward.24} parent=0 // pred_region
    _
  $region21: #{sparse_sdf_vae_forward.24} parent=0 // pred_fallthru
    _
  // Predicated region
  $region22: #{sparse_sdf_vae_forward.24} parent=0 // pred_check
    _
  $region23: #{sparse_sdf_vae_forward.24} parent=0 // pred_check_branch
    %23 = sbr.rel (0) target = $region25
  $region24: #{sparse_sdf_vae_forward.24} parent=0 // pred_region
    _
  $region25: #{sparse_sdf_vae_forward.24} parent=0 // pred_fallthru
    _
  // Predicated region
  $region26: #{sparse_sdf_vae_forward.24} parent=0 // pred_check
    _
  $region27: #{sparse_sdf_vae_forward.24} parent=0 // pred_check_branch
    %25 = sbr.rel (0) target = $region29
  $region28: #{sparse_sdf_vae_forward.24} parent=0 // pred_region
    _
  $region29: #{sparse_sdf_vae_forward.24} parent=0 // pred_fallthru
    _
  %v27 = vld [vmem:[%s0] sm:$0xf]
  %v28 = vld [vmem:[%s0 + $0x4] sm:$0xf]
  %v29 = vld [vmem:[%s0 + $0x8] sm:$0xf]
  %v30 = vld [vmem:[%s0 + $0xc] sm:$0xf]
  %v31 = vld [vmem:[%s0 + $0x10] sm:$0xf]
  %v32 = vld [vmem:[%s0 + $0x14] sm:$0xf]
  %v33 = vld [vmem:[%s0 + $0x18] sm:$0xf]
  %v34 = vld [vmem:[%s0 + $0x1c] sm:$0xf]
  %v35 = vld [vmem:[%s0 + $0x20] sm:$0xf]
  %v36 = vld [vmem:[%s0 + $0x24] sm:$0xf]
  %v37 = vld [vmem:[%s0 + $0x28] sm:$0xf]
  %v38 = vld [vmem:[%s0 + $0x2c] sm:$0xf]
  %v39 = vld [vmem:[%s0 + $0x30] sm:$0xf]
  %v40 = vld [vmem:[%s0 + $0x34] sm:$0xf]
  %v41 = vld [vmem:[%s0 + $0x38] sm:$0xf]
  %v42 = vld [vmem:[%s0 + $0x3c] sm:$0xf]
  %v43 = vunpack.c.l.bf16 %v27
  %v44 = vunpack.c.l.bf16 %v28
  %v45 = vunpack.c.l.bf16 %v29
  %v46 = vunpack.c.l.bf16 %v30
  %v47 = vunpack.c.l.bf16 %v31
  %v48 = vunpack.c.l.bf16 %v32
  %v49 = vunpack.c.l.bf16 %v33
  %v50 = vunpack.c.l.bf16 %v34
  %v51 = vunpack.c.l.bf16 %v35
  %v52 = vunpack.c.l.bf16 %v36
  %v53 = vunpack.c.l.bf16 %v37
  %v54 = vunpack.c.l.bf16 %v38
  %v55 = vunpack.c.l.bf16 %v39
  %v56 = vunpack.c.l.bf16 %v40
  %v57 = vunpack.c.l.bf16 %v41
  %v58 = vunpack.c.l.bf16 %v42
  %v59 = vld [vmem:[%s1] sm:$0x1]
  %v60 = vld [vmem:[%s2] sm:$0x1]
  %vm61 = vcmask 523264
  %v62 = vsel %vm61, %v43, 0.0
  %63 = vadd.xlane.f32.xlu0 %v62
  %v64 = vpop.xlane.xlu0 %63
  %v65 = vsel %vm61, %v44, 0.0
  %66 = vadd.xlane.f32.xlu0 %v65
  %v67 = vpop.xlane.xlu0 %66
  %v68 = vsel %vm61, %v45, 0.0
  %69 = vadd.xlane.f32.xlu0 %v68
  %v70 = vpop.xlane.xlu0 %69
  %v71 = vsel %vm61, %v46, 0.0
  %72 = vadd.xlane.f32.xlu0 %v71
  %v73 = vpop.xlane.xlu0 %72
  %v74 = vsel %vm61, %v47, 0.0
  %75 = vadd.xlane.f32.xlu0 %v74
  %v76 = vpop.xlane.xlu0 %75
  %v77 = vsel %vm61, %v48, 0.0
  %78 = vadd.xlane.f32.xlu0 %v77
  %v79 = vpop.xlane.xlu0 %78
  %v80 = vsel %vm61, %v49, 0.0
  %81 = vadd.xlane.f32.xlu0 %v80
  %v82 = vpop.xlane.xlu0 %81
  %v83 = vsel %vm61, %v50, 0.0
  %84 = vadd.xlane.f32.xlu0 %v83
  %v85 = vpop.xlane.xlu0 %84
  %v86 = vsel %vm61, %v51, 0.0
  %87 = vadd.xlane.f32.xlu0 %v86
  %v88 = vpop.xlane.xlu0 %87
  %v89 = vsel %vm61, %v52, 0.0
  %90 = vadd.xlane.f32.xlu0 %v89
  %v91 = vpop.xlane.xlu0 %90
  %v92 = vsel %vm61, %v53, 0.0
  %93 = vadd.xlane.f32.xlu0 %v92
  %v94 = vpop.xlane.xlu0 %93
  %v95 = vsel %vm61, %v54, 0.0
  %96 = vadd.xlane.f32.xlu0 %v95
  %v97 = vpop.xlane.xlu0 %96
  %v98 = vsel %vm61, %v55, 0.0
  %99 = vadd.xlane.f32.xlu0 %v98
  %v100 = vpop.xlane.xlu0 %99
  %v101 = vsel %vm61, %v56, 0.0
  %102 = vadd.xlane.f32.xlu0 %v101
  %v103 = vpop.xlane.xlu0 %102
  %v104 = vsel %vm61, %v57, 0.0
  %105 = vadd.xlane.f32.xlu0 %v104
  %v106 = vpop.xlane.xlu0 %105
  %v107 = vsel %vm61, %v58, 0.0
  %108 = vadd.xlane.f32.xlu0 %v107
  %v109 = vpop.xlane.xlu0 %108
  %v110 = vrcp.pop 64.0
  %v111 = vmul.f32 64.0, %v110
  %v112 = vsub.f32 1.0, %v111
  %v113 = vmul.f32 %v110, %v112
  %v114 = vadd.f32 %v110, %v113
  %vm115 = vweird.f32 %v110
  %v116 = vsel %vm115, %v110, %v114
  %v117 = vmul.f32 %v64, %v116
  %v118 = vmul.f32 %v67, %v116
  %v119 = vmul.f32 %v70, %v116
  %v120 = vmul.f32 %v73, %v116
  %v121 = vmul.f32 %v76, %v116
  %v122 = vmul.f32 %v79, %v116
  %v123 = vmul.f32 %v82, %v116
  %v124 = vmul.f32 %v85, %v116
  %v125 = vmul.f32 %v88, %v116
  %v126 = vmul.f32 %v91, %v116
  %v127 = vmul.f32 %v94, %v116
  %v128 = vmul.f32 %v97, %v116
  %v129 = vmul.f32 %v100, %v116
  %v130 = vmul.f32 %v103, %v116
  %v131 = vmul.f32 %v106, %v116
  %v132 = vmul.f32 %v109, %v116
  %v133 = vsub.f32 %v43, %v117
  %v134 = vsub.f32 %v44, %v118
  %v135 = vsub.f32 %v45, %v119
  %v136 = vsub.f32 %v46, %v120
  %v137 = vsub.f32 %v47, %v121
  %v138 = vsub.f32 %v48, %v122
  %v139 = vsub.f32 %v49, %v123
  %v140 = vsub.f32 %v50, %v124
  %v141 = vsub.f32 %v51, %v125
  %v142 = vsub.f32 %v52, %v126
  %v143 = vsub.f32 %v53, %v127
  %v144 = vsub.f32 %v54, %v128
  %v145 = vsub.f32 %v55, %v129
  %v146 = vsub.f32 %v56, %v130
  %v147 = vsub.f32 %v57, %v131
  %v148 = vsub.f32 %v58, %v132
  %v149 = vmul.f32 %v133, %v133
  %v150 = vmul.f32 %v134, %v134
  %v151 = vmul.f32 %v135, %v135
  %v152 = vmul.f32 %v136, %v136
  %v153 = vmul.f32 %v137, %v137
  %v154 = vmul.f32 %v138, %v138
  %v155 = vmul.f32 %v139, %v139
  %v156 = vmul.f32 %v140, %v140
  %v157 = vmul.f32 %v141, %v141
  %v158 = vmul.f32 %v142, %v142
  %v159 = vmul.f32 %v143, %v143
  %v160 = vmul.f32 %v144, %v144
  %v161 = vmul.f32 %v145, %v145
  %v162 = vmul.f32 %v146, %v146
  %v163 = vmul.f32 %v147, %v147
  %v164 = vmul.f32 %v148, %v148
  %v165 = vsel %vm61, %v149, 0.0
  %166 = vadd.xlane.f32.xlu0 %v165
  %v167 = vpop.xlane.xlu0 %166
  %v168 = vsel %vm61, %v150, 0.0
  %169 = vadd.xlane.f32.xlu0 %v168
  %v170 = vpop.xlane.xlu0 %169
  %v171 = vsel %vm61, %v151, 0.0
  %172 = vadd.xlane.f32.xlu0 %v171
  %v173 = vpop.xlane.xlu0 %172
  %v174 = vsel %vm61, %v152, 0.0
  %175 = vadd.xlane.f32.xlu0 %v174
  %v176 = vpop.xlane.xlu0 %175
  %v177 = vsel %vm61, %v153, 0.0
  %178 = vadd.xlane.f32.xlu0 %v177
  %v179 = vpop.xlane.xlu0 %178
  %v180 = vsel %vm61, %v154, 0.0
  %181 = vadd.xlane.f32.xlu0 %v180
  %v182 = vpop.xlane.xlu0 %181
  %v183 = vsel %vm61, %v155, 0.0
  %184 = vadd.xlane.f32.xlu0 %v183
  %v185 = vpop.xlane.xlu0 %184
  %v186 = vsel %vm61, %v156, 0.0
  %187 = vadd.xlane.f32.xlu0 %v186
  %v188 = vpop.xlane.xlu0 %187
  %v189 = vsel %vm61, %v157, 0.0
  %190 = vadd.xlane.f32.xlu0 %v189
  %v191 = vpop.xlane.xlu0 %190
  %v192 = vsel %vm61, %v158, 0.0
  %193 = vadd.xlane.f32.xlu0 %v192
  %v194 = vpop.xlane.xlu0 %193
  %v195 = vsel %vm61, %v159, 0.0
  %196 = vadd.xlane.f32.xlu0 %v195
  %v197 = vpop.xlane.xlu0 %196
  %v198 = vsel %vm61, %v160, 0.0
  %199 = vadd.xlane.f32.xlu0 %v198
  %v200 = vpop.xlane.xlu0 %199
  %v201 = vsel %vm61, %v161, 0.0
  %202 = vadd.xlane.f32.xlu0 %v201
  %v203 = vpop.xlane.xlu0 %202
  %v204 = vsel %vm61, %v162, 0.0
  %205 = vadd.xlane.f32.xlu0 %v204
  %v206 = vpop.xlane.xlu0 %205
  %v207 = vsel %vm61, %v163, 0.0
  %208 = vadd.xlane.f32.xlu0 %v207
  %v209 = vpop.xlane.xlu0 %208
  %v210 = vsel %vm61, %v164, 0.0
  %211 = vadd.xlane.f32.xlu0 %v210
  %v212 = vpop.xlane.xlu0 %211
  %v213 = vmul.f32 %v167, %v116
  %v214 = vmul.f32 %v170, %v116
  %v215 = vmul.f32 %v173, %v116
  %v216 = vmul.f32 %v176, %v116
  %v217 = vmul.f32 %v179, %v116
  %v218 = vmul.f32 %v182, %v116
  %v219 = vmul.f32 %v185, %v116
  %v220 = vmul.f32 %v188, %v116
  %v221 = vmul.f32 %v191, %v116
  %v222 = vmul.f32 %v194, %v116
  %v223 = vmul.f32 %v197, %v116
  %v224 = vmul.f32 %v200, %v116
  %v225 = vmul.f32 %v203, %v116
  %v226 = vmul.f32 %v206, %v116
  %v227 = vmul.f32 %v209, %v116
  %v228 = vmul.f32 %v212, %v116
  %v229 = vadd.f32 %v213, 1e-05
  %v230 = vadd.f32 %v214, 1e-05
  %v231 = vadd.f32 %v215, 1e-05
  %v232 = vadd.f32 %v216, 1e-05
  %v233 = vadd.f32 %v217, 1e-05
  %v234 = vadd.f32 %v218, 1e-05
  %v235 = vadd.f32 %v219, 1e-05
  %v236 = vadd.f32 %v220, 1e-05
  %v237 = vadd.f32 %v221, 1e-05
  %v238 = vadd.f32 %v222, 1e-05
  %v239 = vadd.f32 %v223, 1e-05
  %v240 = vadd.f32 %v224, 1e-05
  %v241 = vadd.f32 %v225, 1e-05
  %v242 = vadd.f32 %v226, 1e-05
  %v243 = vadd.f32 %v227, 1e-05
  %v244 = vadd.f32 %v228, 1e-05
  %v245 = vrsqrt.pop %v229
  %v246 = vmul.f32 %v245, %v229
  %v247 = vmul.f32 %v246, %v245
  %v248 = vmul.f32 0.5, %v247
  %v249 = vsub.f32 1.5, %v248
  %v250 = vmul.f32 %v245, %v249
  %vm251 = vweird.f32 %v229
  %vm252 = vweird.f32 %v245
  %vm253 = vmor %vm251, %vm252
  %v254 = vsel %vm253, %v245, %v250
  %v255 = vrsqrt.pop %v230
  %v256 = vmul.f32 %v255, %v230
  %v257 = vmul.f32 %v256, %v255
  %v258 = vmul.f32 0.5, %v257
  %v259 = vsub.f32 1.5, %v258
  %v260 = vmul.f32 %v255, %v259
  %vm261 = vweird.f32 %v230
  %vm262 = vweird.f32 %v255
  %vm263 = vmor %vm261, %vm262
  %v264 = vsel %vm263, %v255, %v260
  %v265 = vrsqrt.pop %v231
  %v266 = vmul.f32 %v265, %v231
  %v267 = vmul.f32 %v266, %v265
  %v268 = vmul.f32 0.5, %v267
  %v269 = vsub.f32 1.5, %v268
  %v270 = vmul.f32 %v265, %v269
  %vm271 = vweird.f32 %v231
  %vm272 = vweird.f32 %v265
  %vm273 = vmor %vm271, %vm272
  %v274 = vsel %vm273, %v265, %v270
  %v275 = vrsqrt.pop %v232
  %v276 = vmul.f32 %v275, %v232
  %v277 = vmul.f32 %v276, %v275
  %v278 = vmul.f32 0.5, %v277
  %v279 = vsub.f32 1.5, %v278
  %v280 = vmul.f32 %v275, %v279
  %vm281 = vweird.f32 %v232
  %vm282 = vweird.f32 %v275
  %vm283 = vmor %vm281, %vm282
  %v284 = vsel %vm283, %v275, %v280
  %v285 = vrsqrt.pop %v233
  %v286 = vmul.f32 %v285, %v233
  %v287 = vmul.f32 %v286, %v285
  %v288 = vmul.f32 0.5, %v287
  %v289 = vsub.f32 1.5, %v288
  %v290 = vmul.f32 %v285, %v289
  %vm291 = vweird.f32 %v233
  %vm292 = vweird.f32 %v285
  %vm293 = vmor %vm291, %vm292
  %v294 = vsel %vm293, %v285, %v290
  %v295 = vrsqrt.pop %v234
  %v296 = vmul.f32 %v295, %v234
  %v297 = vmul.f32 %v296, %v295
  %v298 = vmul.f32 0.5, %v297
  %v299 = vsub.f32 1.5, %v298
  %v300 = vmul.f32 %v295, %v299
  %vm301 = vweird.f32 %v234
  %vm302 = vweird.f32 %v295
  %vm303 = vmor %vm301, %vm302
  %v304 = vsel %vm303, %v295, %v300
  %v305 = vrsqrt.pop %v235
  %v306 = vmul.f32 %v305, %v235
  %v307 = vmul.f32 %v306, %v305
  %v308 = vmul.f32 0.5, %v307
  %v309 = vsub.f32 1.5, %v308
  %v310 = vmul.f32 %v305, %v309
  %vm311 = vweird.f32 %v235
  %vm312 = vweird.f32 %v305
  %vm313 = vmor %vm311, %vm312
  %v314 = vsel %vm313, %v305, %v310
  %v315 = vrsqrt.pop %v236
  %v316 = vmul.f32 %v315, %v236
  %v317 = vmul.f32 %v316, %v315
  %v318 = vmul.f32 0.5, %v317
  %v319 = vsub.f32 1.5, %v318
  %v320 = vmul.f32 %v315, %v319
  %vm321 = vweird.f32 %v236
  %vm322 = vweird.f32 %v315
  %vm323 = vmor %vm321, %vm322
  %v324 = vsel %vm323, %v315, %v320
  %v325 = vrsqrt.pop %v237
  %v326 = vmul.f32 %v325, %v237
  %v327 = vmul.f32 %v326, %v325
  %v328 = vmul.f32 0.5, %v327
  %v329 = vsub.f32 1.5, %v328
  %v330 = vmul.f32 %v325, %v329
  %vm331 = vweird.f32 %v237
  %vm332 = vweird.f32 %v325
  %vm333 = vmor %vm331, %vm332
  %v334 = vsel %vm333, %v325, %v330
  %v335 = vrsqrt.pop %v238
  %v336 = vmul.f32 %v335, %v238
  %v337 = vmul.f32 %v336, %v335
  %v338 = vmul.f32 0.5, %v337
  %v339 = vsub.f32 1.5, %v338
  %v340 = vmul.f32 %v335, %v339
  %vm341 = vweird.f32 %v238
  %vm342 = vweird.f32 %v335
  %vm343 = vmor %vm341, %vm342
  %v344 = vsel %vm343, %v335, %v340
  %v345 = vrsqrt.pop %v239
  %v346 = vmul.f32 %v345, %v239
  %v347 = vmul.f32 %v346, %v345
  %v348 = vmul.f32 0.5, %v347
  %v349 = vsub.f32 1.5, %v348
  %v350 = vmul.f32 %v345, %v349
  %vm351 = vweird.f32 %v239
  %vm352 = vweird.f32 %v345
  %vm353 = vmor %vm351, %vm352
  %v354 = vsel %vm353, %v345, %v350
  %v355 = vrsqrt.pop %v240
  %v356 = vmul.f32 %v355, %v240
  %v357 = vmul.f32 %v356, %v355
  %v358 = vmul.f32 0.5, %v357
  %v359 = vsub.f32 1.5, %v358
  %v360 = vmul.f32 %v355, %v359
  %vm361 = vweird.f32 %v240
  %vm362 = vweird.f32 %v355
  %vm363 = vmor %vm361, %vm362
  %v364 = vsel %vm363, %v355, %v360
  %v365 = vrsqrt.pop %v241
  %v366 = vmul.f32 %v365, %v241
  %v367 = vmul.f32 %v366, %v365
  %v368 = vmul.f32 0.5, %v367
  %v369 = vsub.f32 1.5, %v368
  %v370 = vmul.f32 %v365, %v369
  %vm371 = vweird.f32 %v241
  %vm372 = vweird.f32 %v365
  %vm373 = vmor %vm371, %vm372
  %v374 = vsel %vm373, %v365, %v370
  %v375 = vrsqrt.pop %v242
  %v376 = vmul.f32 %v375, %v242
  %v377 = vmul.f32 %v376, %v375
  %v378 = vmul.f32 0.5, %v377
  %v379 = vsub.f32 1.5, %v378
  %v380 = vmul.f32 %v375, %v379
  %vm381 = vweird.f32 %v242
  %vm382 = vweird.f32 %v375
  %vm383 = vmor %vm381, %vm382
  %v384 = vsel %vm383, %v375, %v380
  %v385 = vrsqrt.pop %v243
  %v386 = vmul.f32 %v385, %v243
  %v387 = vmul.f32 %v386, %v385
  %v388 = vmul.f32 0.5, %v387
  %v389 = vsub.f32 1.5, %v388
  %v390 = vmul.f32 %v385, %v389
  %vm391 = vweird.f32 %v243
  %vm392 = vweird.f32 %v385
  %vm393 = vmor %vm391, %vm392
  %v394 = vsel %vm393, %v385, %v390
  %v395 = vrsqrt.pop %v244
  %v396 = vmul.f32 %v395, %v244
  %v397 = vmul.f32 %v396, %v395
  %v398 = vmul.f32 0.5, %v397
  %v399 = vsub.f32 1.5, %v398
  %v400 = vmul.f32 %v395, %v399
  %vm401 = vweird.f32 %v244
  %vm402 = vweird.f32 %v395
  %vm403 = vmor %vm401, %vm402
  %v404 = vsel %vm403, %v395, %v400
  %v405 = vmul.f32 %v133, %v254
  %v406 = vmul.f32 %v134, %v264
  %v407 = vmul.f32 %v135, %v274
  %v408 = vmul.f32 %v136, %v284
  %v409 = vmul.f32 %v137, %v294
  %v410 = vmul.f32 %v138, %v304
  %v411 = vmul.f32 %v139, %v314
  %v412 = vmul.f32 %v140, %v324
  %v413 = vmul.f32 %v141, %v334
  %v414 = vmul.f32 %v142, %v344
  %v415 = vmul.f32 %v143, %v354
  %v416 = vmul.f32 %v144, %v364
  %v417 = vmul.f32 %v145, %v374
  %v418 = vmul.f32 %v146, %v384
  %v419 = vmul.f32 %v147, %v394
  %v420 = vmul.f32 %v148, %v404
  %v422 = vperm.slane %v59, 0
  %v424 = vmul.f32 %v405, %v422
  %v425 = vmul.f32 %v406, %v422
  %v426 = vmul.f32 %v407, %v422
  %v427 = vmul.f32 %v408, %v422
  %v428 = vmul.f32 %v409, %v422
  %v429 = vmul.f32 %v410, %v422
  %v430 = vmul.f32 %v411, %v422
  %v431 = vmul.f32 %v412, %v422
  %v432 = vmul.f32 %v413, %v422
  %v433 = vmul.f32 %v414, %v422
  %v434 = vmul.f32 %v415, %v422
  %v435 = vmul.f32 %v416, %v422
  %v436 = vmul.f32 %v417, %v422
  %v437 = vmul.f32 %v418, %v422
  %v438 = vmul.f32 %v419, %v422
  %v439 = vmul.f32 %v420, %v422
  %v441 = vperm.slane %v60, 0
  %v443 = vadd.f32 %v424, %v441
  %v444 = vadd.f32 %v425, %v441
  %v445 = vadd.f32 %v426, %v441
  %v446 = vadd.f32 %v427, %v441
  %v447 = vadd.f32 %v428, %v441
  %v448 = vadd.f32 %v429, %v441
  %v449 = vadd.f32 %v430, %v441
  %v450 = vadd.f32 %v431, %v441
  %v451 = vadd.f32 %v432, %v441
  %v452 = vadd.f32 %v433, %v441
  %v453 = vadd.f32 %v434, %v441
  %v454 = vadd.f32 %v435, %v441
  %v455 = vadd.f32 %v436, %v441
  %v456 = vadd.f32 %v437, %v441
  %v457 = vadd.f32 %v438, %v441
  %v458 = vadd.f32 %v439, %v441
  %v459 = vpack.c.bf16 %v444, %v443
  %v460 = vpack.c.bf16 %v446, %v445
  %v461 = vpack.c.bf16 %v448, %v447
  %v462 = vpack.c.bf16 %v450, %v449
  %v463 = vpack.c.bf16 %v452, %v451
  %v464 = vpack.c.bf16 %v454, %v453
  %v465 = vpack.c.bf16 %v456, %v455
  %v466 = vpack.c.bf16 %v458, %v457
  %v467 = vld [vmem:[%s3] sm:$0xff]
  %v468 = vld [vmem:[%s3 + $0x8] sm:$0xff]
  %v469 = vld [vmem:[%s3 + $0x10] sm:$0xff]
  %v470 = vld [vmem:[%s3 + $0x18] sm:$0xff]
  %v471 = vld [vmem:[%s3 + $0x20] sm:$0xff]
  %v472 = vld [vmem:[%s3 + $0x28] sm:$0xff]
  %v473 = vld [vmem:[%s3 + $0x30] sm:$0xff]
  %v474 = vld [vmem:[%s3 + $0x38] sm:$0xff]
  %v475 = vld [vmem:[%s4] sm:$0x3]
  %v477 = vperm.slane %v475, 0
  %v478 = vperm.slane %v475, 1
  %v489 = vunpack.c.l.b16 %v467
  %v490 = vunpack.c.h.b16 %v467
  %v491 = vunpack.c.l.b16 %v468
  %v492 = vunpack.c.h.b16 %v468
  %v493 = vunpack.c.l.b16 %v469
  %v494 = vunpack.c.h.b16 %v469
  %v495 = vunpack.c.l.b16 %v470
  %v496 = vunpack.c.h.b16 %v470
  %v497 = vunpack.c.l.b16 %v471
  %v498 = vunpack.c.h.b16 %v471
  %v499 = vunpack.c.l.b16 %v472
  %v500 = vunpack.c.h.b16 %v472
  %v501 = vunpack.c.l.b16 %v473
  %v502 = vunpack.c.h.b16 %v473
  %v503 = vunpack.c.l.b16 %v474
  %v504 = vunpack.c.h.b16 %v474
  %v505 = vpack.c.b16 %v491, %v489
  %v506 = vpack.c.b16 %v492, %v490
  %v507 = vpack.c.b16 %v495, %v493
  %v508 = vpack.c.b16 %v496, %v494
  %v509 = vpack.c.b16 %v499, %v497
  %v510 = vpack.c.b16 %v500, %v498
  %v511 = vpack.c.b16 %v503, %v501
  %v512 = vpack.c.b16 %v504, %v502
  %v522 = vsel %vm61, %v459, 0
  %v525 = vsel %vm61, %v460, 0
  %v528 = vsel %vm61, %v461, 0
  %v531 = vsel %vm61, %v462, 0
  %v534 = vsel %vm61, %v463, 0
  %v537 = vsel %vm61, %v464, 0
  %v540 = vsel %vm61, %v465, 0
  %v543 = vsel %vm61, %v466, 0
  %545 = vmatpush.bf16.msra.mxu0 0
  %546 = vmatpush.bf16.msra.mxu0 0
  %547 = vmatpush.bf16.msra.mxu0 0
  %548 = vmatpush.bf16.msra.mxu0 0
  %549 = vmatpush.bf16.msra.mxu0 %v511
  %550 = vmatpush.bf16.msra.mxu0 %v509
  %551 = vmatpush.bf16.msra.mxu0 %v507
  %552 = vmatpush.bf16.msra.mxu0 %v505
  %553 = vmatmul.bf16.gmra.mxu0 %v522
  %v554 = vpop.f32.mrf.mxu0
  %v555 = vadd.f32 %v477, %v554
  %v556 = vpop.f32.mrf.mxu0
  %v557 = vadd.f32 %v477, %v556
  %558 = vmatmul.bf16.gmra.mxu0 %v525
  %v559 = vpop.f32.mrf.mxu0
  %v560 = vadd.f32 %v477, %v559
  %v561 = vpop.f32.mrf.mxu0
  %v562 = vadd.f32 %v477, %v561
  %563 = vmatmul.bf16.gmra.mxu0 %v528
  %v564 = vpop.f32.mrf.mxu0
  %v565 = vadd.f32 %v477, %v564
  %v566 = vpop.f32.mrf.mxu0
  %v567 = vadd.f32 %v477, %v566
  %568 = vmatmul.bf16.gmra.mxu0 %v531
  %v569 = vpop.f32.mrf.mxu0
  %v570 = vadd.f32 %v477, %v569
  %v571 = vpop.f32.mrf.mxu0
  %v572 = vadd.f32 %v477, %v571
  %573 = vmatmul.bf16.gmra.mxu0 %v534
  %v574 = vpop.f32.mrf.mxu0
  %v575 = vadd.f32 %v477, %v574
  %v576 = vpop.f32.mrf.mxu0
  %v577 = vadd.f32 %v477, %v576
  %578 = vmatmul.bf16.gmra.mxu0 %v537
  %v579 = vpop.f32.mrf.mxu0
  %v580 = vadd.f32 %v477, %v579
  %v581 = vpop.f32.mrf.mxu0
  %v582 = vadd.f32 %v477, %v581
  %583 = vmatmul.bf16.gmra.mxu0 %v540
  %v584 = vpop.f32.mrf.mxu0
  %v585 = vadd.f32 %v477, %v584
  %v586 = vpop.f32.mrf.mxu0
  %v587 = vadd.f32 %v477, %v586
  %588 = vmatmul.bf16.gmra.mxu0 %v543
  %v589 = vpop.f32.mrf.mxu0
  %v590 = vadd.f32 %v477, %v589
  %v591 = vpop.f32.mrf.mxu0
  %v592 = vadd.f32 %v477, %v591
  %593 = vdwg.mxu0
  %594 = vmatpush.bf16.msra.mxu0 0
  %595 = vmatpush.bf16.msra.mxu0 0
  %596 = vmatpush.bf16.msra.mxu0 0
  %597 = vmatpush.bf16.msra.mxu0 0
  %598 = vmatpush.bf16.msra.mxu0 %v512
  %599 = vmatpush.bf16.msra.mxu0 %v510
  %600 = vmatpush.bf16.msra.mxu0 %v508
  %601 = vmatpush.bf16.msra.mxu0 %v506
  %602 = vmatmul.bf16.gmra.mxu0 %v522
  %v603 = vpop.f32.mrf.mxu0
  %v604 = vadd.f32 %v478, %v603
  %v605 = vpop.f32.mrf.mxu0
  %v606 = vadd.f32 %v478, %v605
  %607 = vmatmul.bf16.gmra.mxu0 %v525
  %v608 = vpop.f32.mrf.mxu0
  %v609 = vadd.f32 %v478, %v608
  %v610 = vpop.f32.mrf.mxu0
  %v611 = vadd.f32 %v478, %v610
  %612 = vmatmul.bf16.gmra.mxu0 %v528
  %v613 = vpop.f32.mrf.mxu0
  %v614 = vadd.f32 %v478, %v613
  %v615 = vpop.f32.mrf.mxu0
  %v616 = vadd.f32 %v478, %v615
  %617 = vmatmul.bf16.gmra.mxu0 %v531
  %v618 = vpop.f32.mrf.mxu0
  %v619 = vadd.f32 %v478, %v618
  %v620 = vpop.f32.mrf.mxu0
  %v621 = vadd.f32 %v478, %v620
  %622 = vmatmul.bf16.gmra.mxu0 %v534
  %v623 = vpop.f32.mrf.mxu0
  %v624 = vadd.f32 %v478, %v623
  %v625 = vpop.f32.mrf.mxu0
  %v626 = vadd.f32 %v478, %v625
  %627 = vmatmul.bf16.gmra.mxu0 %v537
  %v628 = vpop.f32.mrf.mxu0
  %v629 = vadd.f32 %v478, %v628
  %v630 = vpop.f32.mrf.mxu0
  %v631 = vadd.f32 %v478, %v630
  %632 = vmatmul.bf16.gmra.mxu0 %v540
  %v633 = vpop.f32.mrf.mxu0
  %v634 = vadd.f32 %v478, %v633
  %v635 = vpop.f32.mrf.mxu0
  %v636 = vadd.f32 %v478, %v635
  %637 = vmatmul.bf16.gmra.mxu0 %v543
  %v638 = vpop.f32.mrf.mxu0
  %v639 = vadd.f32 %v478, %v638
  %v640 = vpop.f32.mrf.mxu0
  %v641 = vadd.f32 %v478, %v640
  %642 = vdwg.mxu0
  %v643 = vmul.f32 %v555, %v555
  %v644 = vmul.f32 %v604, %v604
  %v645 = vmul.f32 %v557, %v557
  %v646 = vmul.f32 %v606, %v606
  %v647 = vmul.f32 %v560, %v560
  %v648 = vmul.f32 %v609, %v609
  %v649 = vmul.f32 %v562, %v562
  %v650 = vmul.f32 %v611, %v611
  %v651 = vmul.f32 %v565, %v565
  %v652 = vmul.f32 %v614, %v614
  %v653 = vmul.f32 %v567, %v567
  %v654 = vmul.f32 %v616, %v616
  %v655 = vmul.f32 %v570, %v570
  %v656 = vmul.f32 %v619, %v619
  %v657 = vmul.f32 %v572, %v572
  %v658 = vmul.f32 %v621, %v621
  %v659 = vmul.f32 %v575, %v575
  %v660 = vmul.f32 %v624, %v624
  %v661 = vmul.f32 %v577, %v577
  %v662 = vmul.f32 %v626, %v626
  %v663 = vmul.f32 %v580, %v580
  %v664 = vmul.f32 %v629, %v629
  %v665 = vmul.f32 %v582, %v582
  %v666 = vmul.f32 %v631, %v631
  %v667 = vmul.f32 %v585, %v585
  %v668 = vmul.f32 %v634, %v634
  %v669 = vmul.f32 %v587, %v587
  %v670 = vmul.f32 %v636, %v636
  %v671 = vmul.f32 %v590, %v590
  %v672 = vmul.f32 %v639, %v639
  %v673 = vmul.f32 %v592, %v592
  %v674 = vmul.f32 %v641, %v641
  %v675 = vmul.f32 %v555, %v643
  %v676 = vmul.f32 %v604, %v644
  %v677 = vmul.f32 %v557, %v645
  %v678 = vmul.f32 %v606, %v646
  %v679 = vmul.f32 %v560, %v647
  %v680 = vmul.f32 %v609, %v648
  %v681 = vmul.f32 %v562, %v649
  %v682 = vmul.f32 %v611, %v650
  %v683 = vmul.f32 %v565, %v651
  %v684 = vmul.f32 %v614, %v652
  %v685 = vmul.f32 %v567, %v653
  %v686 = vmul.f32 %v616, %v654
  %v687 = vmul.f32 %v570, %v655
  %v688 = vmul.f32 %v619, %v656
  %v689 = vmul.f32 %v572, %v657
  %v690 = vmul.f32 %v621, %v658
  %v691 = vmul.f32 %v575, %v659
  %v692 = vmul.f32 %v624, %v660
  %v693 = vmul.f32 %v577, %v661
  %v694 = vmul.f32 %v626, %v662
  %v695 = vmul.f32 %v580, %v663
  %v696 = vmul.f32 %v629, %v664
  %v697 = vmul.f32 %v582, %v665
  %v698 = vmul.f32 %v631, %v666
  %v699 = vmul.f32 %v585, %v667
  %v700 = vmul.f32 %v634, %v668
  %v701 = vmul.f32 %v587, %v669
  %v702 = vmul.f32 %v636, %v670
  %v703 = vmul.f32 %v590, %v671
  %v704 = vmul.f32 %v639, %v672
  %v705 = vmul.f32 %v592, %v673
  %v706 = vmul.f32 %v641, %v674
  %v707 = vmul.f32 %v675, 0.044715
  %v708 = vmul.f32 %v676, 0.044715
  %v709 = vmul.f32 %v677, 0.044715
  %v710 = vmul.f32 %v678, 0.044715
  %v711 = vmul.f32 %v679, 0.044715
  %v712 = vmul.f32 %v680, 0.044715
  %v713 = vmul.f32 %v681, 0.044715
  %v714 = vmul.f32 %v682, 0.044715
  %v715 = vmul.f32 %v683, 0.044715
  %v716 = vmul.f32 %v684, 0.044715
  %v717 = vmul.f32 %v685, 0.044715
  %v718 = vmul.f32 %v686, 0.044715
  %v719 = vmul.f32 %v687, 0.044715
  %v720 = vmul.f32 %v688, 0.044715
  %v721 = vmul.f32 %v689, 0.044715
  %v722 = vmul.f32 %v690, 0.044715
  %v723 = vmul.f32 %v691, 0.044715
  %v724 = vmul.f32 %v692, 0.044715
  %v725 = vmul.f32 %v693, 0.044715
  %v726 = vmul.f32 %v694, 0.044715
  %v727 = vmul.f32 %v695, 0.044715
  %v728 = vmul.f32 %v696, 0.044715
  %v729 = vmul.f32 %v697, 0.044715
  %v730 = vmul.f32 %v698, 0.044715
  %v731 = vmul.f32 %v699, 0.044715
  %v732 = vmul.f32 %v700, 0.044715
  %v733 = vmul.f32 %v701, 0.044715
  %v734 = vmul.f32 %v702, 0.044715
  %v735 = vmul.f32 %v703, 0.044715
  %v736 = vmul.f32 %v704, 0.044715
  %v737 = vmul.f32 %v705, 0.044715
  %v738 = vmul.f32 %v706, 0.044715
  %v739 = vadd.f32 %v555, %v707
  %v740 = vadd.f32 %v604, %v708
  %v741 = vadd.f32 %v557, %v709
  %v742 = vadd.f32 %v606, %v710
  %v743 = vadd.f32 %v560, %v711
  %v744 = vadd.f32 %v609, %v712
  %v745 = vadd.f32 %v562, %v713
  %v746 = vadd.f32 %v611, %v714
  %v747 = vadd.f32 %v565, %v715
  %v748 = vadd.f32 %v614, %v716
  %v749 = vadd.f32 %v567, %v717
  %v750 = vadd.f32 %v616, %v718
  %v751 = vadd.f32 %v570, %v719
  %v752 = vadd.f32 %v619, %v720
  %v753 = vadd.f32 %v572, %v721
  %v754 = vadd.f32 %v621, %v722
  %v755 = vadd.f32 %v575, %v723
  %v756 = vadd.f32 %v624, %v724
  %v757 = vadd.f32 %v577, %v725
  %v758 = vadd.f32 %v626, %v726
  %v759 = vadd.f32 %v580, %v727
  %v760 = vadd.f32 %v629, %v728
  %v761 = vadd.f32 %v582, %v729
  %v762 = vadd.f32 %v631, %v730
  %v763 = vadd.f32 %v585, %v731
  %v764 = vadd.f32 %v634, %v732
  %v765 = vadd.f32 %v587, %v733
  %v766 = vadd.f32 %v636, %v734
  %v767 = vadd.f32 %v590, %v735
  %v768 = vadd.f32 %v639, %v736
  %v769 = vadd.f32 %v592, %v737
  %v770 = vadd.f32 %v641, %v738
  %v771 = vmul.f32 %v739, 0.7978846
  %v772 = vmul.f32 %v740, 0.7978846
  %v773 = vmul.f32 %v741, 0.7978846
  %v774 = vmul.f32 %v742, 0.7978846
  %v775 = vmul.f32 %v743, 0.7978846
  %v776 = vmul.f32 %v744, 0.7978846
  %v777 = vmul.f32 %v745, 0.7978846
  %v778 = vmul.f32 %v746, 0.7978846
  %v779 = vmul.f32 %v747, 0.7978846
  %v780 = vmul.f32 %v748, 0.7978846
  %v781 = vmul.f32 %v749, 0.7978846
  %v782 = vmul.f32 %v750, 0.7978846
  %v783 = vmul.f32 %v751, 0.7978846
  %v784 = vmul.f32 %v752, 0.7978846
  %v785 = vmul.f32 %v753, 0.7978846
  %v786 = vmul.f32 %v754, 0.7978846
  %v787 = vmul.f32 %v755, 0.7978846
  %v788 = vmul.f32 %v756, 0.7978846
  %v789 = vmul.f32 %v757, 0.7978846
  %v790 = vmul.f32 %v758, 0.7978846
  %v791 = vmul.f32 %v759, 0.7978846
  %v792 = vmul.f32 %v760, 0.7978846
  %v793 = vmul.f32 %v761, 0.7978846
  %v794 = vmul.f32 %v762, 0.7978846
  %v795 = vmul.f32 %v763, 0.7978846
  %v796 = vmul.f32 %v764, 0.7978846
  %v797 = vmul.f32 %v765, 0.7978846
  %v798 = vmul.f32 %v766, 0.7978846
  %v799 = vmul.f32 %v767, 0.7978846
  %v800 = vmul.f32 %v768, 0.7978846
  %v801 = vmul.f32 %v769, 0.7978846
  %v802 = vmul.f32 %v770, 0.7978846
  %v803 = vtanh.pop %v771
  %v804 = vtanh.pop %v772
  %v805 = vtanh.pop %v773
  %v806 = vtanh.pop %v774
  %v807 = vtanh.pop %v775
  %v808 = vtanh.pop %v776
  %v809 = vtanh.pop %v777
  %v810 = vtanh.pop %v778
  %v811 = vtanh.pop %v779
  %v812 = vtanh.pop %v780
  %v813 = vtanh.pop %v781
  %v814 = vtanh.pop %v782
  %v815 = vtanh.pop %v783
  %v816 = vtanh.pop %v784
  %v817 = vtanh.pop %v785
  %v818 = vtanh.pop %v786
  %v819 = vtanh.pop %v787
  %v820 = vtanh.pop %v788
  %v821 = vtanh.pop %v789
  %v822 = vtanh.pop %v790
  %v823 = vtanh.pop %v791
  %v824 = vtanh.pop %v792
  %v825 = vtanh.pop %v793
  %v826 = vtanh.pop %v794
  %v827 = vtanh.pop %v795
  %v828 = vtanh.pop %v796
  %v829 = vtanh.pop %v797
  %v830 = vtanh.pop %v798
  %v831 = vtanh.pop %v799
  %v832 = vtanh.pop %v800
  %v833 = vtanh.pop %v801
  %v834 = vtanh.pop %v802
  %v835 = vadd.f32 %v803, 1.0
  %v836 = vadd.f32 %v804, 1.0
  %v837 = vadd.f32 %v805, 1.0
  %v838 = vadd.f32 %v806, 1.0
  %v839 = vadd.f32 %v807, 1.0
  %v840 = vadd.f32 %v808, 1.0
  %v841 = vadd.f32 %v809, 1.0
  %v842 = vadd.f32 %v810, 1.0
  %v843 = vadd.f32 %v811, 1.0
  %v844 = vadd.f32 %v812, 1.0
  %v845 = vadd.f32 %v813, 1.0
  %v846 = vadd.f32 %v814, 1.0
  %v847 = vadd.f32 %v815, 1.0
  %v848 = vadd.f32 %v816, 1.0
  %v849 = vadd.f32 %v817, 1.0
  %v850 = vadd.f32 %v818, 1.0
  %v851 = vadd.f32 %v819, 1.0
  %v852 = vadd.f32 %v820, 1.0
  %v853 = vadd.f32 %v821, 1.0
  %v854 = vadd.f32 %v822, 1.0
  %v855 = vadd.f32 %v823, 1.0
  %v856 = vadd.f32 %v824, 1.0
  %v857 = vadd.f32 %v825, 1.0
  %v858 = vadd.f32 %v826, 1.0
  %v859 = vadd.f32 %v827, 1.0
  %v860 = vadd.f32 %v828, 1.0
  %v861 = vadd.f32 %v829, 1.0
  %v862 = vadd.f32 %v830, 1.0
  %v863 = vadd.f32 %v831, 1.0
  %v864 = vadd.f32 %v832, 1.0
  %v865 = vadd.f32 %v833, 1.0
  %v866 = vadd.f32 %v834, 1.0
  %v867 = vmul.f32 %v835, 0.5
  %v868 = vmul.f32 %v836, 0.5
  %v869 = vmul.f32 %v837, 0.5
  %v870 = vmul.f32 %v838, 0.5
  %v871 = vmul.f32 %v839, 0.5
  %v872 = vmul.f32 %v840, 0.5
  %v873 = vmul.f32 %v841, 0.5
  %v874 = vmul.f32 %v842, 0.5
  %v875 = vmul.f32 %v843, 0.5
  %v876 = vmul.f32 %v844, 0.5
  %v877 = vmul.f32 %v845, 0.5
  %v878 = vmul.f32 %v846, 0.5
  %v879 = vmul.f32 %v847, 0.5
  %v880 = vmul.f32 %v848, 0.5
  %v881 = vmul.f32 %v849, 0.5
  %v882 = vmul.f32 %v850, 0.5
  %v883 = vmul.f32 %v851, 0.5
  %v884 = vmul.f32 %v852, 0.5
  %v885 = vmul.f32 %v853, 0.5
  %v886 = vmul.f32 %v854, 0.5
  %v887 = vmul.f32 %v855, 0.5
  %v888 = vmul.f32 %v856, 0.5
  %v889 = vmul.f32 %v857, 0.5
  %v890 = vmul.f32 %v858, 0.5
  %v891 = vmul.f32 %v859, 0.5
  %v892 = vmul.f32 %v860, 0.5
  %v893 = vmul.f32 %v861, 0.5
  %v894 = vmul.f32 %v862, 0.5
  %v895 = vmul.f32 %v863, 0.5
  %v896 = vmul.f32 %v864, 0.5
  %v897 = vmul.f32 %v865, 0.5
  %v898 = vmul.f32 %v866, 0.5
  %v899 = vmul.f32 %v555, %v867
  %v900 = vmul.f32 %v604, %v868
  %v901 = vmul.f32 %v557, %v869
  %v902 = vmul.f32 %v606, %v870
  %v903 = vmul.f32 %v560, %v871
  %v904 = vmul.f32 %v609, %v872
  %v905 = vmul.f32 %v562, %v873
  %v906 = vmul.f32 %v611, %v874
  %v907 = vmul.f32 %v565, %v875
  %v908 = vmul.f32 %v614, %v876
  %v909 = vmul.f32 %v567, %v877
  %v910 = vmul.f32 %v616, %v878
  %v911 = vmul.f32 %v570, %v879
  %v912 = vmul.f32 %v619, %v880
  %v913 = vmul.f32 %v572, %v881
  %v914 = vmul.f32 %v621, %v882
  %v915 = vmul.f32 %v575, %v883
  %v916 = vmul.f32 %v624, %v884
  %v917 = vmul.f32 %v577, %v885
  %v918 = vmul.f32 %v626, %v886
  %v919 = vmul.f32 %v580, %v887
  %v920 = vmul.f32 %v629, %v888
  %v921 = vmul.f32 %v582, %v889
  %v922 = vmul.f32 %v631, %v890
  %v923 = vmul.f32 %v585, %v891
  %v924 = vmul.f32 %v634, %v892
  %v925 = vmul.f32 %v587, %v893
  %v926 = vmul.f32 %v636, %v894
  %v927 = vmul.f32 %v590, %v895
  %v928 = vmul.f32 %v639, %v896
  %v929 = vmul.f32 %v592, %v897
  %v930 = vmul.f32 %v641, %v898
  %v931 = vpack.c.bf16 %v901, %v899
  %v932 = vpack.c.bf16 %v902, %v900
  %v933 = vpack.c.bf16 %v905, %v903
  %v934 = vpack.c.bf16 %v906, %v904
  %v935 = vpack.c.bf16 %v909, %v907
  %v936 = vpack.c.bf16 %v910, %v908
  %v937 = vpack.c.bf16 %v913, %v911
  %v938 = vpack.c.bf16 %v914, %v912
  %v939 = vpack.c.bf16 %v917, %v915
  %v940 = vpack.c.bf16 %v918, %v916
  %v941 = vpack.c.bf16 %v921, %v919
  %v942 = vpack.c.bf16 %v922, %v920
  %v943 = vpack.c.bf16 %v925, %v923
  %v944 = vpack.c.bf16 %v926, %v924
  %v945 = vpack.c.bf16 %v929, %v927
  %v946 = vpack.c.bf16 %v930, %v928
  %v947 = vld [vmem:[%s5] sm:$0xf]
  %v948 = vld [vmem:[%s5 + $0x4] sm:$0xf]
  %v949 = vld [vmem:[%s5 + $0x8] sm:$0xf]
  %v950 = vld [vmem:[%s5 + $0xc] sm:$0xf]
  %v951 = vld [vmem:[%s5 + $0x10] sm:$0xf]
  %v952 = vld [vmem:[%s5 + $0x14] sm:$0xf]
  %v953 = vld [vmem:[%s5 + $0x18] sm:$0xf]
  %v954 = vld [vmem:[%s5 + $0x1c] sm:$0xf]
  %v955 = vld [vmem:[%s5 + $0x20] sm:$0xf]
  %v956 = vld [vmem:[%s5 + $0x24] sm:$0xf]
  %v957 = vld [vmem:[%s5 + $0x28] sm:$0xf]
  %v958 = vld [vmem:[%s5 + $0x2c] sm:$0xf]
  %v959 = vld [vmem:[%s5 + $0x30] sm:$0xf]
  %v960 = vld [vmem:[%s5 + $0x34] sm:$0xf]
  %v961 = vld [vmem:[%s5 + $0x38] sm:$0xf]
  %v962 = vld [vmem:[%s5 + $0x3c] sm:$0xf]
  %v963 = vld [vmem:[%s5 + $0x40] sm:$0xf]
  %v964 = vld [vmem:[%s5 + $0x44] sm:$0xf]
  %v965 = vld [vmem:[%s5 + $0x48] sm:$0xf]
  %v966 = vld [vmem:[%s5 + $0x4c] sm:$0xf]
  %v967 = vld [vmem:[%s5 + $0x50] sm:$0xf]
  %v968 = vld [vmem:[%s5 + $0x54] sm:$0xf]
  %v969 = vld [vmem:[%s5 + $0x58] sm:$0xf]
  %v970 = vld [vmem:[%s5 + $0x5c] sm:$0xf]
  %v971 = vld [vmem:[%s5 + $0x60] sm:$0xf]
  %v972 = vld [vmem:[%s5 + $0x64] sm:$0xf]
  %v973 = vld [vmem:[%s5 + $0x68] sm:$0xf]
  %v974 = vld [vmem:[%s5 + $0x6c] sm:$0xf]
  %v975 = vld [vmem:[%s5 + $0x70] sm:$0xf]
  %v976 = vld [vmem:[%s5 + $0x74] sm:$0xf]
  %v977 = vld [vmem:[%s5 + $0x78] sm:$0xf]
  %v978 = vld [vmem:[%s5 + $0x7c] sm:$0xf]
  %v979 = vld [vmem:[%s6] sm:$0x1]
  %v981 = vperm.slane %v979, 0
  %v1015 = vunpack.c.l.b16 %v947
  %v1016 = vunpack.c.l.b16 %v948
  %v1017 = vunpack.c.l.b16 %v949
  %v1018 = vunpack.c.l.b16 %v950
  %v1019 = vunpack.c.l.b16 %v951
  %v1020 = vunpack.c.l.b16 %v952
  %v1021 = vunpack.c.l.b16 %v953
  %v1022 = vunpack.c.l.b16 %v954
  %v1023 = vunpack.c.l.b16 %v955
  %v1024 = vunpack.c.l.b16 %v956
  %v1025 = vunpack.c.l.b16 %v957
  %v1026 = vunpack.c.l.b16 %v958
  %v1027 = vunpack.c.l.b16 %v959
  %v1028 = vunpack.c.l.b16 %v960
  %v1029 = vunpack.c.l.b16 %v961
  %v1030 = vunpack.c.l.b16 %v962
  %v1031 = vunpack.c.l.b16 %v963
  %v1032 = vunpack.c.l.b16 %v964
  %v1033 = vunpack.c.l.b16 %v965
  %v1034 = vunpack.c.l.b16 %v966
  %v1035 = vunpack.c.l.b16 %v967
  %v1036 = vunpack.c.l.b16 %v968
  %v1037 = vunpack.c.l.b16 %v969
  %v1038 = vunpack.c.l.b16 %v970
  %v1039 = vunpack.c.l.b16 %v971
  %v1040 = vunpack.c.l.b16 %v972
  %v1041 = vunpack.c.l.b16 %v973
  %v1042 = vunpack.c.l.b16 %v974
  %v1043 = vunpack.c.l.b16 %v975
  %v1044 = vunpack.c.l.b16 %v976
  %v1045 = vunpack.c.l.b16 %v977
  %v1046 = vunpack.c.l.b16 %v978
  %v1047 = vpack.c.b16 %v1016, %v1015
  %v1048 = vpack.c.b16 %v1018, %v1017
  %v1049 = vpack.c.b16 %v1020, %v1019
  %v1050 = vpack.c.b16 %v1022, %v1021
  %v1051 = vpack.c.b16 %v1024, %v1023
  %v1052 = vpack.c.b16 %v1026, %v1025
  %v1053 = vpack.c.b16 %v1028, %v1027
  %v1054 = vpack.c.b16 %v1030, %v1029
  %v1055 = vpack.c.b16 %v1032, %v1031
  %v1056 = vpack.c.b16 %v1034, %v1033
  %v1057 = vpack.c.b16 %v1036, %v1035
  %v1058 = vpack.c.b16 %v1038, %v1037
  %v1059 = vpack.c.b16 %v1040, %v1039
  %v1060 = vpack.c.b16 %v1042, %v1041
  %v1061 = vpack.c.b16 %v1044, %v1043
  %v1062 = vpack.c.b16 %v1046, %v1045
  %1079 = vmatpush.bf16.msra.mxu0 %v1054
  %1080 = vmatpush.bf16.msra.mxu0 %v1053
  %1081 = vmatpush.bf16.msra.mxu0 %v1052
  %1082 = vmatpush.bf16.msra.mxu0 %v1051
  %1083 = vmatpush.bf16.msra.mxu0 %v1050
  %1084 = vmatpush.bf16.msra.mxu0 %v1049
  %1085 = vmatpush.bf16.msra.mxu0 %v1048
  %1086 = vmatpush.bf16.msra.mxu0 %v1047
  %1087 = vmatmul.bf16.gmra.mxu0 %v931
  %v1088 = vpop.f32.mrf.mxu0
  %v1089 = vadd.f32 %v981, %v1088
  %v1090 = vpop.f32.mrf.mxu0
  %v1091 = vadd.f32 %v981, %v1090
  %1092 = vmatmul.bf16.gmra.mxu0 %v933
  %v1093 = vpop.f32.mrf.mxu0
  %v1094 = vadd.f32 %v981, %v1093
  %v1095 = vpop.f32.mrf.mxu0
  %v1096 = vadd.f32 %v981, %v1095
  %1097 = vmatmul.bf16.gmra.mxu0 %v935
  %v1098 = vpop.f32.mrf.mxu0
  %v1099 = vadd.f32 %v981, %v1098
  %v1100 = vpop.f32.mrf.mxu0
  %v1101 = vadd.f32 %v981, %v1100
  %1102 = vmatmul.bf16.gmra.mxu0 %v937
  %v1103 = vpop.f32.mrf.mxu0
  %v1104 = vadd.f32 %v981, %v1103
  %v1105 = vpop.f32.mrf.mxu0
  %v1106 = vadd.f32 %v981, %v1105
  %1107 = vmatmul.bf16.gmra.mxu0 %v939
  %v1108 = vpop.f32.mrf.mxu0
  %v1109 = vadd.f32 %v981, %v1108
  %v1110 = vpop.f32.mrf.mxu0
  %v1111 = vadd.f32 %v981, %v1110
  %1112 = vmatmul.bf16.gmra.mxu0 %v941
  %v1113 = vpop.f32.mrf.mxu0
  %v1114 = vadd.f32 %v981, %v1113
  %v1115 = vpop.f32.mrf.mxu0
  %v1116 = vadd.f32 %v981, %v1115
  %1117 = vmatmul.bf16.gmra.mxu0 %v943
  %v1118 = vpop.f32.mrf.mxu0
  %v1119 = vadd.f32 %v981, %v1118
  %v1120 = vpop.f32.mrf.mxu0
  %v1121 = vadd.f32 %v981, %v1120
  %1122 = vmatmul.bf16.gmra.mxu0 %v945
  %v1123 = vpop.f32.mrf.mxu0
  %v1124 = vadd.f32 %v981, %v1123
  %v1125 = vpop.f32.mrf.mxu0
  %v1126 = vadd.f32 %v981, %v1125
  %1127 = vdwg.mxu0
  %1128 = vmatpush.bf16.msra.mxu0 %v1062
  %1129 = vmatpush.bf16.msra.mxu0 %v1061
  %1130 = vmatpush.bf16.msra.mxu0 %v1060
  %1131 = vmatpush.bf16.msra.mxu0 %v1059
  %1132 = vmatpush.bf16.msra.mxu0 %v1058
  %1133 = vmatpush.bf16.msra.mxu0 %v1057
  %1134 = vmatpush.bf16.msra.mxu0 %v1056
  %1135 = vmatpush.bf16.msra.mxu0 %v1055
  %1136 = vmatmul.bf16.gmra.mxu0 %v932
  %v1137 = vpop.f32.mrf.mxu0
  %v1138 = vadd.f32 %v1089, %v1137
  %v1139 = vpop.f32.mrf.mxu0
  %v1140 = vadd.f32 %v1091, %v1139
  %1141 = vmatmul.bf16.gmra.mxu0 %v934
  %v1142 = vpop.f32.mrf.mxu0
  %v1143 = vadd.f32 %v1094, %v1142
  %v1144 = vpop.f32.mrf.mxu0
  %v1145 = vadd.f32 %v1096, %v1144
  %1146 = vmatmul.bf16.gmra.mxu0 %v936
  %v1147 = vpop.f32.mrf.mxu0
  %v1148 = vadd.f32 %v1099, %v1147
  %v1149 = vpop.f32.mrf.mxu0
  %v1150 = vadd.f32 %v1101, %v1149
  %1151 = vmatmul.bf16.gmra.mxu0 %v938
  %v1152 = vpop.f32.mrf.mxu0
  %v1153 = vadd.f32 %v1104, %v1152
  %v1154 = vpop.f32.mrf.mxu0
  %v1155 = vadd.f32 %v1106, %v1154
  %1156 = vmatmul.bf16.gmra.mxu0 %v940
  %v1157 = vpop.f32.mrf.mxu0
  %v1158 = vadd.f32 %v1109, %v1157
  %v1159 = vpop.f32.mrf.mxu0
  %v1160 = vadd.f32 %v1111, %v1159
  %1161 = vmatmul.bf16.gmra.mxu0 %v942
  %v1162 = vpop.f32.mrf.mxu0
  %v1163 = vadd.f32 %v1114, %v1162
  %v1164 = vpop.f32.mrf.mxu0
  %v1165 = vadd.f32 %v1116, %v1164
  %1166 = vmatmul.bf16.gmra.mxu0 %v944
  %v1167 = vpop.f32.mrf.mxu0
  %v1168 = vadd.f32 %v1119, %v1167
  %v1169 = vpop.f32.mrf.mxu0
  %v1170 = vadd.f32 %v1121, %v1169
  %1171 = vmatmul.bf16.gmra.mxu0 %v946
  %v1172 = vpop.f32.mrf.mxu0
  %v1173 = vadd.f32 %v1124, %v1172
  %v1174 = vpop.f32.mrf.mxu0
  %v1175 = vadd.f32 %v1126, %v1174
  %1176 = vdwg.mxu0
  %v1177 = vadd.f32 %v43, %v1138
  %v1178 = vadd.f32 %v44, %v1140
  %v1179 = vadd.f32 %v45, %v1143
  %v1180 = vadd.f32 %v46, %v1145
  %v1181 = vadd.f32 %v47, %v1148
  %v1182 = vadd.f32 %v48, %v1150
  %v1183 = vadd.f32 %v49, %v1153
  %v1184 = vadd.f32 %v50, %v1155
  %v1185 = vadd.f32 %v51, %v1158
  %v1186 = vadd.f32 %v52, %v1160
  %v1187 = vadd.f32 %v53, %v1163
  %v1188 = vadd.f32 %v54, %v1165
  %v1189 = vadd.f32 %v55, %v1168
  %v1190 = vadd.f32 %v56, %v1170
  %v1191 = vadd.f32 %v57, %v1173
  %v1192 = vadd.f32 %v58, %v1175
  %v1193 = vpack.c.bf16 %v1177, %v1177
  %v1194 = vpack.c.bf16 %v1178, %v1178
  %v1195 = vpack.c.bf16 %v1179, %v1179
  %v1196 = vpack.c.bf16 %v1180, %v1180
  %v1197 = vpack.c.bf16 %v1181, %v1181
  %v1198 = vpack.c.bf16 %v1182, %v1182
  %v1199 = vpack.c.bf16 %v1183, %v1183
  %v1200 = vpack.c.bf16 %v1184, %v1184
  %v1201 = vpack.c.bf16 %v1185, %v1185
  %v1202 = vpack.c.bf16 %v1186, %v1186
  %v1203 = vpack.c.bf16 %v1187, %v1187
  %v1204 = vpack.c.bf16 %v1188, %v1188
  %v1205 = vpack.c.bf16 %v1189, %v1189
  %v1206 = vpack.c.bf16 %v1190, %v1190
  %v1207 = vpack.c.bf16 %v1191, %v1191
  %v1208 = vpack.c.bf16 %v1192, %v1192
  %vm1209 = vcmask 519168
  %1210 = vst.msk [vmem:[%s7] sm:$0xf] %vm1209, %v1193
  %1211 = vst.msk [vmem:[%s7 + $0x4] sm:$0xf] %vm1209, %v1194
  %1212 = vst.msk [vmem:[%s7 + $0x8] sm:$0xf] %vm1209, %v1195
  %1213 = vst.msk [vmem:[%s7 + $0xc] sm:$0xf] %vm1209, %v1196
  %1214 = vst.msk [vmem:[%s7 + $0x10] sm:$0xf] %vm1209, %v1197
  %1215 = vst.msk [vmem:[%s7 + $0x14] sm:$0xf] %vm1209, %v1198
  %1216 = vst.msk [vmem:[%s7 + $0x18] sm:$0xf] %vm1209, %v1199
  %1217 = vst.msk [vmem:[%s7 + $0x1c] sm:$0xf] %vm1209, %v1200
  %1218 = vst.msk [vmem:[%s7 + $0x20] sm:$0xf] %vm1209, %v1201
  %1219 = vst.msk [vmem:[%s7 + $0x24] sm:$0xf] %vm1209, %v1202
  %1220 = vst.msk [vmem:[%s7 + $0x28] sm:$0xf] %vm1209, %v1203
  %1221 = vst.msk [vmem:[%s7 + $0x2c] sm:$0xf] %vm1209, %v1204
  %1222 = vst.msk [vmem:[%s7 + $0x30] sm:$0xf] %vm1209, %v1205
  %1223 = vst.msk [vmem:[%s7 + $0x34] sm:$0xf] %vm1209, %v1206
  %1224 = vst.msk [vmem:[%s7 + $0x38] sm:$0xf] %vm1209, %v1207
  %1225 = vst.msk [vmem:[%s7 + $0x3c] sm:$0xf] %vm1209, %v1208
  // Predicated region
  $region30: #{sparse_sdf_vae_forward.24} parent=0 // pred_check
    _
  $region31: #{sparse_sdf_vae_forward.24} parent=0 // pred_check_branch
    %1227 = sbr.rel (0) target = $region33
  $region32: #{sparse_sdf_vae_forward.24} parent=0 // pred_region
    _
  $region33: #{sparse_sdf_vae_forward.24} parent=0 // pred_fallthru
    _
  // Predicated region
  $region34: #{sparse_sdf_vae_forward.24} parent=0 // pred_check
    _
  $region35: #{sparse_sdf_vae_forward.24} parent=0 // pred_check_branch
    %1229 = sbr.rel (0) target = $region37
  $region36: #{sparse_sdf_vae_forward.24} parent=0 // pred_region
    _
  $region37: #{sparse_sdf_vae_forward.24} parent=0 // pred_fallthru
    _

// kernel: sparse_sdf_vae_forward.27
$region0: #{sparse_sdf_vae_forward.27}
  #allocation0 [shape = 'u32[]', space=smem, size = 0x4, offset = 0x4, fixed_abs, tag = 'smem constant byte address 0x4 - core index']
  #allocation1 [shape = 'u32[72,128]{1,0:T(1,128)}', space=vmem, size = 0x9000, scoped, tag = 'internal scratch']
  %s0 = inlined_call_operand.vmem [shape: bf16[128,64], index: 0, kind: input, shape index: {}]
  %s1 = inlined_call_operand.vmem [shape: bf16[128,64], index: 1, kind: input, shape index: {}]
  %s2 = inlined_call_operand.hbm [shape: bf16[64,64], index: 2, kind: input, shape index: {}]
  %s3 = inlined_call_operand.vmem [shape: f32[1,64], index: 3, kind: input, shape index: {}]
  %s4 = inlined_call_operand.vmem [shape: bf16[128,64], index: 4, kind: output, shape index: {}]
  %s5 = sld [smem:[#allocation0]]
  $region30: #{sparse_sdf_vae_forward.27} parent=0
    _
  %s7 = ssub.s32 1, %s5
  %s8 = scalar_select 0, %s7, %s5
  $region1: #{sparse_sdf_vae_forward.27} parent=0
    #allocation2 [shape = 'u8[16384]{0}', space=vmem, size = 0x4000, scoped, tag = 'input window, operand 2, single buffered']
    #allocation3 [shape = 's32[1]{0}', space=sflag, size = 0x4, scoped, tag = 'scoped memory for sparse_sdf_vae_forward.27']
    %9 = vsyncpa [#allocation3], 0
    // Predicated region
    $region2: #{sparse_sdf_vae_forward.27} parent=1 // pred_check
      _
    $region3: #{sparse_sdf_vae_forward.27} parent=1 // pred_check_branch
      %11 = sbr.rel (0) target = $region5
    $region4: #{sparse_sdf_vae_forward.27} parent=1 // pred_region
      _
    $region5: #{sparse_sdf_vae_forward.27} parent=1 // pred_fallthru
      _
    // Predicated region
    $region6: #{sparse_sdf_vae_forward.27} parent=1 // pred_check
      _
    $region7: #{sparse_sdf_vae_forward.27} parent=1 // pred_check_branch
      %13 = sbr.rel (0) target = $region9
    $region8: #{sparse_sdf_vae_forward.27} parent=1 // pred_region
      _
    $region9: #{sparse_sdf_vae_forward.27} parent=1 // pred_fallthru
      _
    // Predicated region
    $region10: #{sparse_sdf_vae_forward.27} parent=1 // pred_check
      _
    $region11: #{sparse_sdf_vae_forward.27} parent=1 // pred_check_branch
      %15 = sbr.rel (0) target = $region13
    $region12: #{sparse_sdf_vae_forward.27} parent=1 // pred_region
      %17 = vsyncadd [#allocation3], 0
      %s18 = sshll.u32 %s2, 4
      %s19 = int_to_ptr.hbm [resolvable:$true] %s18
      %s20 = sshll.u32 [#allocation2], 4
      %s21 = int_to_ptr.vmem [resolvable:$true] %s20
      %26 = dma.hbm_to_vmem [thread:$0]  %s19, 512, %s21, [#allocation3], 64, 64, 4
    $region13: #{sparse_sdf_vae_forward.27} parent=1 // pred_fallthru
      _
    // Predicated region
    $region14: #{sparse_sdf_vae_forward.27} parent=1 // pred_check
      _
    $region15: #{sparse_sdf_vae_forward.27} parent=1 // pred_check_branch
      %28 = sbr.rel (0) target = $region17
    $region16: #{sparse_sdf_vae_forward.27} parent=1 // pred_region
      _
    $region17: #{sparse_sdf_vae_forward.27} parent=1 // pred_fallthru
      _
    // Predicated region
    $region18: #{sparse_sdf_vae_forward.27} parent=1 // pred_check
      _
    $region19: #{sparse_sdf_vae_forward.27} parent=1 // pred_check_branch
      %30 = sbr.rel (0) target = $region21
    $region20: #{sparse_sdf_vae_forward.27} parent=1 // pred_region
      %32 = dma.done [#allocation3], 512
    $region21: #{sparse_sdf_vae_forward.27} parent=1 // pred_fallthru
      _
    %v34 = vld [vmem:[%s0] sm:$0xf]
    %v35 = vld [vmem:[%s0 + $0x4] sm:$0xf]
    %v36 = vld [vmem:[%s0 + $0x8] sm:$0xf]
    %v37 = vld [vmem:[%s0 + $0xc] sm:$0xf]
    %v38 = vld [vmem:[%s0 + $0x10] sm:$0xf]
    %v39 = vld [vmem:[%s0 + $0x14] sm:$0xf]
    %v40 = vld [vmem:[%s0 + $0x18] sm:$0xf]
    %v41 = vld [vmem:[%s0 + $0x1c] sm:$0xf]
    %v42 = vld [vmem:[%s0 + $0x20] sm:$0xf]
    %v43 = vld [vmem:[%s0 + $0x24] sm:$0xf]
    %v44 = vld [vmem:[%s0 + $0x28] sm:$0xf]
    %v45 = vld [vmem:[%s0 + $0x2c] sm:$0xf]
    %v46 = vld [vmem:[%s0 + $0x30] sm:$0xf]
    %v47 = vld [vmem:[%s0 + $0x34] sm:$0xf]
    %v48 = vld [vmem:[%s0 + $0x38] sm:$0xf]
    %v49 = vld [vmem:[%s0 + $0x3c] sm:$0xf]
    %v50 = vld [vmem:[#allocation2] sm:$0xf]
    %v51 = vld [vmem:[#allocation2 + $0x4] sm:$0xf]
    %v52 = vld [vmem:[#allocation2 + $0x8] sm:$0xf]
    %v53 = vld [vmem:[#allocation2 + $0xc] sm:$0xf]
    %v54 = vld [vmem:[#allocation2 + $0x10] sm:$0xf]
    %v55 = vld [vmem:[#allocation2 + $0x14] sm:$0xf]
    %v56 = vld [vmem:[#allocation2 + $0x18] sm:$0xf]
    %v57 = vld [vmem:[#allocation2 + $0x1c] sm:$0xf]
    %v58 = vld [vmem:[%s3] sm:$0x1]
    %v60 = vperm.slane %v58, 0
    %v78 = vunpack.c.l.b16 %v34
    %v79 = vunpack.c.l.b16 %v35
    %v80 = vunpack.c.l.b16 %v36
    %v81 = vunpack.c.l.b16 %v37
    %v82 = vunpack.c.l.b16 %v38
    %v83 = vunpack.c.l.b16 %v39
    %v84 = vunpack.c.l.b16 %v40
    %v85 = vunpack.c.l.b16 %v41
    %v86 = vunpack.c.l.b16 %v42
    %v87 = vunpack.c.l.b16 %v43
    %v88 = vunpack.c.l.b16 %v44
    %v89 = vunpack.c.l.b16 %v45
    %v90 = vunpack.c.l.b16 %v46
    %v91 = vunpack.c.l.b16 %v47
    %v92 = vunpack.c.l.b16 %v48
    %v93 = vunpack.c.l.b16 %v49
    %v94 = vpack.c.b16 %v79, %v78
    %v95 = vpack.c.b16 %v81, %v80
    %v96 = vpack.c.b16 %v83, %v82
    %v97 = vpack.c.b16 %v85, %v84
    %v98 = vpack.c.b16 %v87, %v86
    %v99 = vpack.c.b16 %v89, %v88
    %v100 = vpack.c.b16 %v91, %v90
    %v101 = vpack.c.b16 %v93, %v92
    %v110 = vunpack.c.l.b16 %v50
    %v111 = vunpack.c.l.b16 %v51
    %v112 = vunpack.c.l.b16 %v52
    %v113 = vunpack.c.l.b16 %v53
    %v114 = vunpack.c.l.b16 %v54
    %v115 = vunpack.c.l.b16 %v55
    %v116 = vunpack.c.l.b16 %v56
    %v117 = vunpack.c.l.b16 %v57
    %v118 = vpack.c.b16 %v111, %v110
    %v119 = vpack.c.b16 %v113, %v112
    %v120 = vpack.c.b16 %v115, %v114
    %v121 = vpack.c.b16 %v117, %v116
    %vm126 = vcmask 523264
    %v128 = vsel %vm126, %v94, 0
    %v131 = vsel %vm126, %v95, 0
    %v134 = vsel %vm126, %v96, 0
    %v137 = vsel %vm126, %v97, 0
    %v140 = vsel %vm126, %v98, 0
    %v143 = vsel %vm126, %v99, 0
    %v146 = vsel %vm126, %v100, 0
    %v149 = vsel %vm126, %v101, 0
    %151 = vmatpush.bf16.msra.mxu0 0
    %152 = vmatpush.bf16.msra.mxu0 0
    %153 = vmatpush.bf16.msra.mxu0 0
    %154 = vmatpush.bf16.msra.mxu0 0
    %155 = vmatpush.bf16.msra.mxu0 %v121
    %156 = vmatpush.bf16.msra.mxu0 %v120
    %157 = vmatpush.bf16.msra.mxu0 %v119
    %158 = vmatpush.bf16.msra.mxu0 %v118
    %159 = vmatmul.bf16.gmra.mxu0 %v128
    %v160 = vpop.f32.mrf.mxu0
    %v161 = vadd.f32 %v60, %v160
    %v162 = vpop.f32.mrf.mxu0
    %v163 = vadd.f32 %v60, %v162
    %164 = vmatmul.bf16.gmra.mxu0 %v131
    %v165 = vpop.f32.mrf.mxu0
    %v166 = vadd.f32 %v60, %v165
    %v167 = vpop.f32.mrf.mxu0
    %v168 = vadd.f32 %v60, %v167
    %169 = vmatmul.bf16.gmra.mxu0 %v134
    %v170 = vpop.f32.mrf.mxu0
    %v171 = vadd.f32 %v60, %v170
    %v172 = vpop.f32.mrf.mxu0
    %v173 = vadd.f32 %v60, %v172
    %174 = vmatmul.bf16.gmra.mxu0 %v137
    %v175 = vpop.f32.mrf.mxu0
    %v176 = vadd.f32 %v60, %v175
    %v177 = vpop.f32.mrf.mxu0
    %v178 = vadd.f32 %v60, %v177
    %179 = vmatmul.bf16.gmra.mxu0 %v140
    %v180 = vpop.f32.mrf.mxu0
    %v181 = vadd.f32 %v60, %v180
    %v182 = vpop.f32.mrf.mxu0
    %v183 = vadd.f32 %v60, %v182
    %184 = vmatmul.bf16.gmra.mxu0 %v143
    %v185 = vpop.f32.mrf.mxu0
    %v186 = vadd.f32 %v60, %v185
    %v187 = vpop.f32.mrf.mxu0
    %v188 = vadd.f32 %v60, %v187
    %189 = vmatmul.bf16.gmra.mxu0 %v146
    %v190 = vpop.f32.mrf.mxu0
    %v191 = vadd.f32 %v60, %v190
    %v192 = vpop.f32.mrf.mxu0
    %v193 = vadd.f32 %v60, %v192
    %194 = vmatmul.bf16.gmra.mxu0 %v149
    %v195 = vpop.f32.mrf.mxu0
    %v196 = vadd.f32 %v60, %v195
    %v197 = vpop.f32.mrf.mxu0
    %v198 = vadd.f32 %v60, %v197
    %199 = vdwg.mxu0
    %v200 = vld [vmem:[%s1] sm:$0xf]
    %v201 = vld [vmem:[%s1 + $0x4] sm:$0xf]
    %v202 = vld [vmem:[%s1 + $0x8] sm:$0xf]
    %v203 = vld [vmem:[%s1 + $0xc] sm:$0xf]
    %v204 = vld [vmem:[%s1 + $0x10] sm:$0xf]
    %v205 = vld [vmem:[%s1 + $0x14] sm:$0xf]
    %v206 = vld [vmem:[%s1 + $0x18] sm:$0xf]
    %v207 = vld [vmem:[%s1 + $0x1c] sm:$0xf]
    %v208 = vld [vmem:[%s1 + $0x20] sm:$0xf]
    %v209 = vld [vmem:[%s1 + $0x24] sm:$0xf]
    %v210 = vld [vmem:[%s1 + $0x28] sm:$0xf]
    %v211 = vld [vmem:[%s1 + $0x2c] sm:$0xf]
    %v212 = vld [vmem:[%s1 + $0x30] sm:$0xf]
    %v213 = vld [vmem:[%s1 + $0x34] sm:$0xf]
    %v214 = vld [vmem:[%s1 + $0x38] sm:$0xf]
    %v215 = vld [vmem:[%s1 + $0x3c] sm:$0xf]
    %v216 = vunpack.c.l.bf16 %v200
    %v217 = vunpack.c.l.bf16 %v201
    %v218 = vunpack.c.l.bf16 %v202
    %v219 = vunpack.c.l.bf16 %v203
    %v220 = vunpack.c.l.bf16 %v204
    %v221 = vunpack.c.l.bf16 %v205
    %v222 = vunpack.c.l.bf16 %v206
    %v223 = vunpack.c.l.bf16 %v207
    %v224 = vunpack.c.l.bf16 %v208
    %v225 = vunpack.c.l.bf16 %v209
    %v226 = vunpack.c.l.bf16 %v210
    %v227 = vunpack.c.l.bf16 %v211
    %v228 = vunpack.c.l.bf16 %v212
    %v229 = vunpack.c.l.bf16 %v213
    %v230 = vunpack.c.l.bf16 %v214
    %v231 = vunpack.c.l.bf16 %v215
    %v232 = vadd.f32 %v216, %v161
    %v233 = vadd.f32 %v217, %v163
    %v234 = vadd.f32 %v218, %v166
    %v235 = vadd.f32 %v219, %v168
    %v236 = vadd.f32 %v220, %v171
    %v237 = vadd.f32 %v221, %v173
    %v238 = vadd.f32 %v222, %v176
    %v239 = vadd.f32 %v223, %v178
    %v240 = vadd.f32 %v224, %v181
    %v241 = vadd.f32 %v225, %v183
    %v242 = vadd.f32 %v226, %v186
    %v243 = vadd.f32 %v227, %v188
    %v244 = vadd.f32 %v228, %v191
    %v245 = vadd.f32 %v229, %v193
    %v246 = vadd.f32 %v230, %v196
    %v247 = vadd.f32 %v231, %v198
    %v248 = vpack.c.bf16 %v232, %v232
    %v249 = vpack.c.bf16 %v233, %v233
    %v250 = vpack.c.bf16 %v234, %v234
    %v251 = vpack.c.bf16 %v235, %v235
    %v252 = vpack.c.bf16 %v236, %v236
    %v253 = vpack.c.bf16 %v237, %v237
    %v254 = vpack.c.bf16 %v238, %v238
    %v255 = vpack.c.bf16 %v239, %v239
    %v256 = vpack.c.bf16 %v240, %v240
    %v257 = vpack.c.bf16 %v241, %v241
    %v258 = vpack.c.bf16 %v242, %v242
    %v259 = vpack.c.bf16 %v243, %v243
    %v260 = vpack.c.bf16 %v244, %v244
    %v261 = vpack.c.bf16 %v245, %v245
    %v262 = vpack.c.bf16 %v246, %v246
    %v263 = vpack.c.bf16 %v247, %v247
    %vm264 = vcmask 519168
    %265 = vst.msk [vmem:[%s4] sm:$0xf] %vm264, %v248
    %266 = vst.msk [vmem:[%s4 + $0x4] sm:$0xf] %vm264, %v249
    %267 = vst.msk [vmem:[%s4 + $0x8] sm:$0xf] %vm264, %v250
    %268 = vst.msk [vmem:[%s4 + $0xc] sm:$0xf] %vm264, %v251
    %269 = vst.msk [vmem:[%s4 + $0x10] sm:$0xf] %vm264, %v252
    %270 = vst.msk [vmem:[%s4 + $0x14] sm:$0xf] %vm264, %v253
    %271 = vst.msk [vmem:[%s4 + $0x18] sm:$0xf] %vm264, %v254
    %272 = vst.msk [vmem:[%s4 + $0x1c] sm:$0xf] %vm264, %v255
    %273 = vst.msk [vmem:[%s4 + $0x20] sm:$0xf] %vm264, %v256
    %274 = vst.msk [vmem:[%s4 + $0x24] sm:$0xf] %vm264, %v257
    %275 = vst.msk [vmem:[%s4 + $0x28] sm:$0xf] %vm264, %v258
    %276 = vst.msk [vmem:[%s4 + $0x2c] sm:$0xf] %vm264, %v259
    %277 = vst.msk [vmem:[%s4 + $0x30] sm:$0xf] %vm264, %v260
    %278 = vst.msk [vmem:[%s4 + $0x34] sm:$0xf] %vm264, %v261
    %279 = vst.msk [vmem:[%s4 + $0x38] sm:$0xf] %vm264, %v262
    %280 = vst.msk [vmem:[%s4 + $0x3c] sm:$0xf] %vm264, %v263
    // Predicated region
    $region22: #{sparse_sdf_vae_forward.27} parent=1 // pred_check
      _
    $region23: #{sparse_sdf_vae_forward.27} parent=1 // pred_check_branch
      %282 = sbr.rel (0) target = $region25
    $region24: #{sparse_sdf_vae_forward.27} parent=1 // pred_region
      _
    $region25: #{sparse_sdf_vae_forward.27} parent=1 // pred_fallthru
      _
    // Predicated region
    $region26: #{sparse_sdf_vae_forward.27} parent=1 // pred_check
      _
    $region27: #{sparse_sdf_vae_forward.27} parent=1 // pred_check_branch
      %284 = sbr.rel (0) target = $region29
    $region28: #{sparse_sdf_vae_forward.27} parent=1 // pred_region
      _
    $region29: #{sparse_sdf_vae_forward.27} parent=1 // pred_fallthru
      _
    %285 = vsyncpa [#allocation3], 1

// kernel: sparse_sdf_vae_forward.22
$region0: #{sparse_sdf_vae_forward.22}
  #allocation0 [shape = 'u32[]', space=smem, size = 0x4, offset = 0x4, fixed_abs, tag = 'smem constant byte address 0x4 - core index']
  #allocation1 [shape = 'u32[72,128]{1,0:T(1,128)}', space=vmem, size = 0x9000, scoped, tag = 'internal scratch']
  #allocation2 [shape = 'f32[2,128,1]{2,1,0:T(8,128)}', space=vmem, size = 0x20000, scoped, tag = 'scratch operand']
  #allocation3 [shape = 'f32[2,128,1]{2,1,0:T(8,128)}', space=vmem, size = 0x20000, scoped, tag = 'scratch operand']
  #allocation4 [shape = 'f32[128,64]{1,0:T(8,128)}', space=vmem, size = 0x10000, scoped, tag = 'scratch operand']
  %s0 = inlined_call_operand.vmem [shape: f32[128,1], index: 0, kind: input, shape index: {}]
  %s1 = inlined_call_operand.vmem [shape: f32[1,128], index: 1, kind: input, shape index: {}]
  %s2 = inlined_call_operand.vmem [shape: bf16[128,64], index: 2, kind: input, shape index: {}]
  %s3 = inlined_call_operand.vmem [shape: bf16[128,64], index: 3, kind: input, shape index: {}]
  %s4 = inlined_call_operand.vmem [shape: bf16[128,64], index: 4, kind: input, shape index: {}]
  %s5 = inlined_call_operand.vmem [shape: bf16[128,64], index: 5, kind: output, shape index: {}]
  %s6 = sld [smem:[#allocation0]]
  $region38: #{sparse_sdf_vae_forward.22} parent=0
    _
  %s8 = ssub.s32 1, %s6
  %s9 = scalar_select 0, %s8, %s6
  // Predicated region
  $region2: #{sparse_sdf_vae_forward.22} parent=0 // pred_check
    _
  $region3: #{sparse_sdf_vae_forward.22} parent=0 // pred_check_branch
    %11 = sbr.rel (0) target = $region5
  $region4: #{sparse_sdf_vae_forward.22} parent=0 // pred_region
    _
  $region5: #{sparse_sdf_vae_forward.22} parent=0 // pred_fallthru
    _
  // Predicated region
  $region6: #{sparse_sdf_vae_forward.22} parent=0 // pred_check
    _
  $region7: #{sparse_sdf_vae_forward.22} parent=0 // pred_check_branch
    %13 = sbr.rel (0) target = $region9
  $region8: #{sparse_sdf_vae_forward.22} parent=0 // pred_region
    _
  $region9: #{sparse_sdf_vae_forward.22} parent=0 // pred_fallthru
    _
  // Predicated region
  $region10: #{sparse_sdf_vae_forward.22} parent=0 // pred_check
    _
  $region11: #{sparse_sdf_vae_forward.22} parent=0 // pred_check_branch
    %15 = sbr.rel (0) target = $region13
  $region12: #{sparse_sdf_vae_forward.22} parent=0 // pred_region
    _
  $region13: #{sparse_sdf_vae_forward.22} parent=0 // pred_fallthru
    _
  // Predicated region
  $region14: #{sparse_sdf_vae_forward.22} parent=0 // pred_check
    _
  $region15: #{sparse_sdf_vae_forward.22} parent=0 // pred_check_branch
    %17 = sbr.rel (0) target = $region17
  $region16: #{sparse_sdf_vae_forward.22} parent=0 // pred_region
    _
  $region17: #{sparse_sdf_vae_forward.22} parent=0 // pred_fallthru
    _
  // Predicated region
  $region18: #{sparse_sdf_vae_forward.22} parent=0 // pred_check
    _
  $region19: #{sparse_sdf_vae_forward.22} parent=0 // pred_check_branch
    %19 = sbr.rel (0) target = $region21
  $region20: #{sparse_sdf_vae_forward.22} parent=0 // pred_region
    _
  $region21: #{sparse_sdf_vae_forward.22} parent=0 // pred_fallthru
    _
  %p20 = scmp.eq.s32.totalorder 0, 0
  // Predicated region
  $region22: #{sparse_sdf_vae_forward.22} parent=0 // pred_check
    %p21 = pneg %p20
  $region23: #{sparse_sdf_vae_forward.22} parent=0 // pred_check_branch
    %23 = sbr.rel (%p21) target = $region25
  $region24: #{sparse_sdf_vae_forward.22} parent=0 // pred_region
    %vm24 = vcmask 7168
    %25 = vst.msk [vmem:[#allocation2] sm:$0xff] %vm24, -1e+30
    %26 = vst.msk [vmem:[#allocation2 + $0x8] sm:$0xff] %vm24, -1e+30
    %27 = vst.msk [vmem:[#allocation2 + $0x10] sm:$0xff] %vm24, -1e+30
    %28 = vst.msk [vmem:[#allocation2 + $0x18] sm:$0xff] %vm24, -1e+30
    %29 = vst.msk [vmem:[#allocation2 + $0x20] sm:$0xff] %vm24, -1e+30
    %30 = vst.msk [vmem:[#allocation2 + $0x28] sm:$0xff] %vm24, -1e+30
    %31 = vst.msk [vmem:[#allocation2 + $0x30] sm:$0xff] %vm24, -1e+30
    %32 = vst.msk [vmem:[#allocation2 + $0x38] sm:$0xff] %vm24, -1e+30
    %33 = vst.msk [vmem:[#allocation2 + $0x40] sm:$0xff] %vm24, -1e+30
    %34 = vst.msk [vmem:[#allocation2 + $0x48] sm:$0xff] %vm24, -1e+30
    %35 = vst.msk [vmem:[#allocation2 + $0x50] sm:$0xff] %vm24, -1e+30
    %36 = vst.msk [vmem:[#allocation2 + $0x58] sm:$0xff] %vm24, -1e+30
    %37 = vst.msk [vmem:[#allocation2 + $0x60] sm:$0xff] %vm24, -1e+30
    %38 = vst.msk [vmem:[#allocation2 + $0x68] sm:$0xff] %vm24, -1e+30
    %39 = vst.msk [vmem:[#allocation2 + $0x70] sm:$0xff] %vm24, -1e+30
    %40 = vst.msk [vmem:[#allocation2 + $0x78] sm:$0xff] %vm24, -1e+30
    %41 = vst.msk [vmem:[#allocation2 + $0x80] sm:$0xff] %vm24, -1e+30
    %42 = vst.msk [vmem:[#allocation2 + $0x88] sm:$0xff] %vm24, -1e+30
    %43 = vst.msk [vmem:[#allocation2 + $0x90] sm:$0xff] %vm24, -1e+30
    %44 = vst.msk [vmem:[#allocation2 + $0x98] sm:$0xff] %vm24, -1e+30
    %45 = vst.msk [vmem:[#allocation2 + $0xa0] sm:$0xff] %vm24, -1e+30
    %46 = vst.msk [vmem:[#allocation2 + $0xa8] sm:$0xff] %vm24, -1e+30
    %47 = vst.msk [vmem:[#allocation2 + $0xb0] sm:$0xff] %vm24, -1e+30
    %48 = vst.msk [vmem:[#allocation2 + $0xb8] sm:$0xff] %vm24, -1e+30
    %49 = vst.msk [vmem:[#allocation2 + $0xc0] sm:$0xff] %vm24, -1e+30
    %50 = vst.msk [vmem:[#allocation2 + $0xc8] sm:$0xff] %vm24, -1e+30
    %51 = vst.msk [vmem:[#allocation2 + $0xd0] sm:$0xff] %vm24, -1e+30
    %52 = vst.msk [vmem:[#allocation2 + $0xd8] sm:$0xff] %vm24, -1e+30
    %53 = vst.msk [vmem:[#allocation2 + $0xe0] sm:$0xff] %vm24, -1e+30
    %54 = vst.msk [vmem:[#allocation2 + $0xe8] sm:$0xff] %vm24, -1e+30
    %55 = vst.msk [vmem:[#allocation2 + $0xf0] sm:$0xff] %vm24, -1e+30
    %56 = vst.msk [vmem:[#allocation2 + $0xf8] sm:$0xff] %vm24, -1e+30
    %57 = vst.msk [vmem:[#allocation3] sm:$0xff] %vm24, 0.0
    %58 = vst.msk [vmem:[#allocation3 + $0x8] sm:$0xff] %vm24, 0.0
    %59 = vst.msk [vmem:[#allocation3 + $0x10] sm:$0xff] %vm24, 0.0
    %60 = vst.msk [vmem:[#allocation3 + $0x18] sm:$0xff] %vm24, 0.0
    %61 = vst.msk [vmem:[#allocation3 + $0x20] sm:$0xff] %vm24, 0.0
    %62 = vst.msk [vmem:[#allocation3 + $0x28] sm:$0xff] %vm24, 0.0
    %63 = vst.msk [vmem:[#allocation3 + $0x30] sm:$0xff] %vm24, 0.0
    %64 = vst.msk [vmem:[#allocation3 + $0x38] sm:$0xff] %vm24, 0.0
    %65 = vst.msk [vmem:[#allocation3 + $0x40] sm:$0xff] %vm24, 0.0
    %66 = vst.msk [vmem:[#allocation3 + $0x48] sm:$0xff] %vm24, 0.0
    %67 = vst.msk [vmem:[#allocation3 + $0x50] sm:$0xff] %vm24, 0.0
    %68 = vst.msk [vmem:[#allocation3 + $0x58] sm:$0xff] %vm24, 0.0
    %69 = vst.msk [vmem:[#allocation3 + $0x60] sm:$0xff] %vm24, 0.0
    %70 = vst.msk [vmem:[#allocation3 + $0x68] sm:$0xff] %vm24, 0.0
    %71 = vst.msk [vmem:[#allocation3 + $0x70] sm:$0xff] %vm24, 0.0
    %72 = vst.msk [vmem:[#allocation3 + $0x78] sm:$0xff] %vm24, 0.0
    %73 = vst.msk [vmem:[#allocation3 + $0x80] sm:$0xff] %vm24, 0.0
    %74 = vst.msk [vmem:[#allocation3 + $0x88] sm:$0xff] %vm24, 0.0
    %75 = vst.msk [vmem:[#allocation3 + $0x90] sm:$0xff] %vm24, 0.0
    %76 = vst.msk [vmem:[#allocation3 + $0x98] sm:$0xff] %vm24, 0.0
    %77 = vst.msk [vmem:[#allocation3 + $0xa0] sm:$0xff] %vm24, 0.0
    %78 = vst.msk [vmem:[#allocation3 + $0xa8] sm:$0xff] %vm24, 0.0
    %79 = vst.msk [vmem:[#allocation3 + $0xb0] sm:$0xff] %vm24, 0.0
    %80 = vst.msk [vmem:[#allocation3 + $0xb8] sm:$0xff] %vm24, 0.0
    %81 = vst.msk [vmem:[#allocation3 + $0xc0] sm:$0xff] %vm24, 0.0
    %82 = vst.msk [vmem:[#allocation3 + $0xc8] sm:$0xff] %vm24, 0.0
    %83 = vst.msk [vmem:[#allocation3 + $0xd0] sm:$0xff] %vm24, 0.0
    %84 = vst.msk [vmem:[#allocation3 + $0xd8] sm:$0xff] %vm24, 0.0
    %85 = vst.msk [vmem:[#allocation3 + $0xe0] sm:$0xff] %vm24, 0.0
    %86 = vst.msk [vmem:[#allocation3 + $0xe8] sm:$0xff] %vm24, 0.0
    %87 = vst.msk [vmem:[#allocation3 + $0xf0] sm:$0xff] %vm24, 0.0
    %88 = vst.msk [vmem:[#allocation3 + $0xf8] sm:$0xff] %vm24, 0.0
    %vm89 = vcmask 523264
    %90 = vst.msk [vmem:[#allocation4] sm:$0xff] %vm89, 0.0
    %91 = vst.msk [vmem:[#allocation4 + $0x8] sm:$0xff] %vm89, 0.0
    %92 = vst.msk [vmem:[#allocation4 + $0x10] sm:$0xff] %vm89, 0.0
    %93 = vst.msk [vmem:[#allocation4 + $0x18] sm:$0xff] %vm89, 0.0
    %94 = vst.msk [vmem:[#allocation4 + $0x20] sm:$0xff] %vm89, 0.0
    %95 = vst.msk [vmem:[#allocation4 + $0x28] sm:$0xff] %vm89, 0.0
    %96 = vst.msk [vmem:[#allocation4 + $0x30] sm:$0xff] %vm89, 0.0
    %97 = vst.msk [vmem:[#allocation4 + $0x38] sm:$0xff] %vm89, 0.0
    %98 = vst.msk [vmem:[#allocation4 + $0x40] sm:$0xff] %vm89, 0.0
    %99 = vst.msk [vmem:[#allocation4 + $0x48] sm:$0xff] %vm89, 0.0
    %100 = vst.msk [vmem:[#allocation4 + $0x50] sm:$0xff] %vm89, 0.0
    %101 = vst.msk [vmem:[#allocation4 + $0x58] sm:$0xff] %vm89, 0.0
    %102 = vst.msk [vmem:[#allocation4 + $0x60] sm:$0xff] %vm89, 0.0
    %103 = vst.msk [vmem:[#allocation4 + $0x68] sm:$0xff] %vm89, 0.0
    %104 = vst.msk [vmem:[#allocation4 + $0x70] sm:$0xff] %vm89, 0.0
    %105 = vst.msk [vmem:[#allocation4 + $0x78] sm:$0xff] %vm89, 0.0
  $region25: #{sparse_sdf_vae_forward.22} parent=0 // pred_fallthru
    _
  %v106 = vld [vmem:[%s0] sm:$0xff]
  %v107 = vld [vmem:[%s0 + $0x8] sm:$0xff]
  %v108 = vld [vmem:[%s0 + $0x10] sm:$0xff]
  %v109 = vld [vmem:[%s0 + $0x18] sm:$0xff]
  %v110 = vld [vmem:[%s0 + $0x20] sm:$0xff]
  %v111 = vld [vmem:[%s0 + $0x28] sm:$0xff]
  %v112 = vld [vmem:[%s0 + $0x30] sm:$0xff]
  %v113 = vld [vmem:[%s0 + $0x38] sm:$0xff]
  %v114 = vld [vmem:[%s0 + $0x40] sm:$0xff]
  %v115 = vld [vmem:[%s0 + $0x48] sm:$0xff]
  %v116 = vld [vmem:[%s0 + $0x50] sm:$0xff]
  %v117 = vld [vmem:[%s0 + $0x58] sm:$0xff]
  %v118 = vld [vmem:[%s0 + $0x60] sm:$0xff]
  %v119 = vld [vmem:[%s0 + $0x68] sm:$0xff]
  %v120 = vld [vmem:[%s0 + $0x70] sm:$0xff]
  %v121 = vld [vmem:[%s0 + $0x78] sm:$0xff]
  %v122 = vld [vmem:[%s1] sm:$0x1]
  %124 = vset.pattern.permute.xlu0 0
  %125 = vperm.xlu0 %124, %v106
  %v126 = vpop.permute.xlu0 %125
  %129 = vset.pattern.permute.xlu0 0
  %130 = vperm.xlu0 %129, %v107
  %v131 = vpop.permute.xlu0 %130
  %134 = vset.pattern.permute.xlu0 0
  %135 = vperm.xlu0 %134, %v108
  %v136 = vpop.permute.xlu0 %135
  %139 = vset.pattern.permute.xlu0 0
  %140 = vperm.xlu0 %139, %v109
  %v141 = vpop.permute.xlu0 %140
  %144 = vset.pattern.permute.xlu0 0
  %145 = vperm.xlu0 %144, %v110
  %v146 = vpop.permute.xlu0 %145
  %149 = vset.pattern.permute.xlu0 0
  %150 = vperm.xlu0 %149, %v111
  %v151 = vpop.permute.xlu0 %150
  %154 = vset.pattern.permute.xlu0 0
  %155 = vperm.xlu0 %154, %v112
  %v156 = vpop.permute.xlu0 %155
  %159 = vset.pattern.permute.xlu0 0
  %160 = vperm.xlu0 %159, %v113
  %v161 = vpop.permute.xlu0 %160
  %164 = vset.pattern.permute.xlu0 0
  %165 = vperm.xlu0 %164, %v114
  %v166 = vpop.permute.xlu0 %165
  %169 = vset.pattern.permute.xlu0 0
  %170 = vperm.xlu0 %169, %v115
  %v171 = vpop.permute.xlu0 %170
  %174 = vset.pattern.permute.xlu0 0
  %175 = vperm.xlu0 %174, %v116
  %v176 = vpop.permute.xlu0 %175
  %179 = vset.pattern.permute.xlu0 0
  %180 = vperm.xlu0 %179, %v117
  %v181 = vpop.permute.xlu0 %180
  %184 = vset.pattern.permute.xlu0 0
  %185 = vperm.xlu0 %184, %v118
  %v186 = vpop.permute.xlu0 %185
  %189 = vset.pattern.permute.xlu0 0
  %190 = vperm.xlu0 %189, %v119
  %v191 = vpop.permute.xlu0 %190
  %194 = vset.pattern.permute.xlu0 0
  %195 = vperm.xlu0 %194, %v120
  %v196 = vpop.permute.xlu0 %195
  %199 = vset.pattern.permute.xlu0 0
  %200 = vperm.xlu0 %199, %v121
  %v201 = vpop.permute.xlu0 %200
  %v204 = vperm.slane %v122, 0
  %vm206 = vcmp.eq.f32.partialorder %v126, %v204
  %vm207 = vcmp.eq.f32.partialorder %v131, %v204
  %vm208 = vcmp.eq.f32.partialorder %v136, %v204
  %vm209 = vcmp.eq.f32.partialorder %v141, %v204
  %vm210 = vcmp.eq.f32.partialorder %v146, %v204
  %vm211 = vcmp.eq.f32.partialorder %v151, %v204
  %vm212 = vcmp.eq.f32.partialorder %v156, %v204
  %vm213 = vcmp.eq.f32.partialorder %v161, %v204
  %vm214 = vcmp.eq.f32.partialorder %v166, %v204
  %vm215 = vcmp.eq.f32.partialorder %v171, %v204
  %vm216 = vcmp.eq.f32.partialorder %v176, %v204
  %vm217 = vcmp.eq.f32.partialorder %v181, %v204
  %vm218 = vcmp.eq.f32.partialorder %v186, %v204
  %vm219 = vcmp.eq.f32.partialorder %v191, %v204
  %vm220 = vcmp.eq.f32.partialorder %v196, %v204
  %vm221 = vcmp.eq.f32.partialorder %v201, %v204
  %v222 = vsel %vm206, 0.0, -1e+09
  %v223 = vsel %vm207, 0.0, -1e+09
  %v224 = vsel %vm208, 0.0, -1e+09
  %v225 = vsel %vm209, 0.0, -1e+09
  %v226 = vsel %vm210, 0.0, -1e+09
  %v227 = vsel %vm211, 0.0, -1e+09
  %v228 = vsel %vm212, 0.0, -1e+09
  %v229 = vsel %vm213, 0.0, -1e+09
  %v230 = vsel %vm214, 0.0, -1e+09
  %v231 = vsel %vm215, 0.0, -1e+09
  %v232 = vsel %vm216, 0.0, -1e+09
  %v233 = vsel %vm217, 0.0, -1e+09
  %v234 = vsel %vm218, 0.0, -1e+09
  %v235 = vsel %vm219, 0.0, -1e+09
  %v236 = vsel %vm220, 0.0, -1e+09
  %v237 = vsel %vm221, 0.0, -1e+09
  %v238 = vld [vmem:[%s2] sm:$0xf]
  %v239 = vld [vmem:[%s2 + $0x4] sm:$0xf]
  %v240 = vld [vmem:[%s2 + $0x8] sm:$0xf]
  %v241 = vld [vmem:[%s2 + $0xc] sm:$0xf]
  %v242 = vld [vmem:[%s2 + $0x10] sm:$0xf]
  %v243 = vld [vmem:[%s2 + $0x14] sm:$0xf]
  %v244 = vld [vmem:[%s2 + $0x18] sm:$0xf]
  %v245 = vld [vmem:[%s2 + $0x1c] sm:$0xf]
  %v246 = vld [vmem:[%s2 + $0x20] sm:$0xf]
  %v247 = vld [vmem:[%s2 + $0x24] sm:$0xf]
  %v248 = vld [vmem:[%s2 + $0x28] sm:$0xf]
  %v249 = vld [vmem:[%s2 + $0x2c] sm:$0xf]
  %v250 = vld [vmem:[%s2 + $0x30] sm:$0xf]
  %v251 = vld [vmem:[%s2 + $0x34] sm:$0xf]
  %v252 = vld [vmem:[%s2 + $0x38] sm:$0xf]
  %v253 = vld [vmem:[%s2 + $0x3c] sm:$0xf]
  %v254 = vld [vmem:[%s3] sm:$0xf]
  %v255 = vld [vmem:[%s3 + $0x4] sm:$0xf]
  %v256 = vld [vmem:[%s3 + $0x8] sm:$0xf]
  %v257 = vld [vmem:[%s3 + $0xc] sm:$0xf]
  %v258 = vld [vmem:[%s3 + $0x10] sm:$0xf]
  %v259 = vld [vmem:[%s3 + $0x14] sm:$0xf]
  %v260 = vld [vmem:[%s3 + $0x18] sm:$0xf]
  %v261 = vld [vmem:[%s3 + $0x1c] sm:$0xf]
  %v262 = vld [vmem:[%s3 + $0x20] sm:$0xf]
  %v263 = vld [vmem:[%s3 + $0x24] sm:$0xf]
  %v264 = vld [vmem:[%s3 + $0x28] sm:$0xf]
  %v265 = vld [vmem:[%s3 + $0x2c] sm:$0xf]
  %v266 = vld [vmem:[%s3 + $0x30] sm:$0xf]
  %v267 = vld [vmem:[%s3 + $0x34] sm:$0xf]
  %v268 = vld [vmem:[%s3 + $0x38] sm:$0xf]
  %v269 = vld [vmem:[%s3 + $0x3c] sm:$0xf]
  %v270 = vld [vmem:[%s4] sm:$0xf]
  %v271 = vld [vmem:[%s4 + $0x4] sm:$0xf]
  %v272 = vld [vmem:[%s4 + $0x8] sm:$0xf]
  %v273 = vld [vmem:[%s4 + $0xc] sm:$0xf]
  %v274 = vld [vmem:[%s4 + $0x10] sm:$0xf]
  %v275 = vld [vmem:[%s4 + $0x14] sm:$0xf]
  %v276 = vld [vmem:[%s4 + $0x18] sm:$0xf]
  %v277 = vld [vmem:[%s4 + $0x1c] sm:$0xf]
  %v278 = vld [vmem:[%s4 + $0x20] sm:$0xf]
  %v279 = vld [vmem:[%s4 + $0x24] sm:$0xf]
  %v280 = vld [vmem:[%s4 + $0x28] sm:$0xf]
  %v281 = vld [vmem:[%s4 + $0x2c] sm:$0xf]
  %v282 = vld [vmem:[%s4 + $0x30] sm:$0xf]
  %v283 = vld [vmem:[%s4 + $0x34] sm:$0xf]
  %v284 = vld [vmem:[%s4 + $0x38] sm:$0xf]
  %v285 = vld [vmem:[%s4 + $0x3c] sm:$0xf]
  %v302 = vunpack.c.l.b16 %v238
  %v303 = vunpack.c.l.b16 %v239
  %v304 = vunpack.c.l.b16 %v240
  %v305 = vunpack.c.l.b16 %v241
  %v306 = vunpack.c.l.b16 %v242
  %v307 = vunpack.c.l.b16 %v243
  %v308 = vunpack.c.l.b16 %v244
  %v309 = vunpack.c.l.b16 %v245
  %v310 = vunpack.c.l.b16 %v246
  %v311 = vunpack.c.l.b16 %v247
  %v312 = vunpack.c.l.b16 %v248
  %v313 = vunpack.c.l.b16 %v249
  %v314 = vunpack.c.l.b16 %v250
  %v315 = vunpack.c.l.b16 %v251
  %v316 = vunpack.c.l.b16 %v252
  %v317 = vunpack.c.l.b16 %v253
  %v318 = vpack.c.b16 %v303, %v302
  %v319 = vpack.c.b16 %v305, %v304
  %v320 = vpack.c.b16 %v307, %v306
  %v321 = vpack.c.b16 %v309, %v308
  %v322 = vpack.c.b16 %v311, %v310
  %v323 = vpack.c.b16 %v313, %v312
  %v324 = vpack.c.b16 %v315, %v314
  %v325 = vpack.c.b16 %v317, %v316
  %v342 = vunpack.c.l.b16 %v254
  %v343 = vunpack.c.l.b16 %v255
  %v344 = vunpack.c.l.b16 %v256
  %v345 = vunpack.c.l.b16 %v257
  %v346 = vunpack.c.l.b16 %v258
  %v347 = vunpack.c.l.b16 %v259
  %v348 = vunpack.c.l.b16 %v260
  %v349 = vunpack.c.l.b16 %v261
  %v350 = vunpack.c.l.b16 %v262
  %v351 = vunpack.c.l.b16 %v263
  %v352 = vunpack.c.l.b16 %v264
  %v353 = vunpack.c.l.b16 %v265
  %v354 = vunpack.c.l.b16 %v266
  %v355 = vunpack.c.l.b16 %v267
  %v356 = vunpack.c.l.b16 %v268
  %v357 = vunpack.c.l.b16 %v269
  %v358 = vpack.c.b16 %v343, %v342
  %v359 = vpack.c.b16 %v345, %v344
  %v360 = vpack.c.b16 %v347, %v346
  %v361 = vpack.c.b16 %v349, %v348
  %v362 = vpack.c.b16 %v351, %v350
  %v363 = vpack.c.b16 %v353, %v352
  %v364 = vpack.c.b16 %v355, %v354
  %v365 = vpack.c.b16 %v357, %v356
  %vm366 = vcmask 261120
  %v368 = vsel %vm366, %v318, 0
  %v371 = vsel %vm366, %v319, 0
  %v374 = vsel %vm366, %v320, 0
  %v377 = vsel %vm366, %v321, 0
  %v380 = vsel %vm366, %v322, 0
  %v383 = vsel %vm366, %v323, 0
  %v386 = vsel %vm366, %v324, 0
  %v389 = vsel %vm366, %v325, 0
  %v392 = vsel %vm366, %v358, 0
  %v395 = vsel %vm366, %v359, 0
  %v398 = vsel %vm366, %v360, 0
  %v401 = vsel %vm366, %v361, 0
  %v404 = vsel %vm366, %v362, 0
  %v407 = vsel %vm366, %v363, 0
  %v410 = vsel %vm366, %v364, 0
  %v413 = vsel %vm366, %v365, 0
  %415 = vmatpush.bf16.xpose.msra.mxu0 %v413
  %416 = vmatpush.bf16.xpose.msra.mxu0 %v410
  %417 = vmatpush.bf16.xpose.msra.mxu0 %v407
  %418 = vmatpush.bf16.xpose.msra.mxu0 %v404
  %419 = vmatpush.bf16.xpose.msra.mxu0 %v401
  %420 = vmatpush.bf16.xpose.msra.mxu0 %v398
  %421 = vmatpush.bf16.xpose.msra.mxu0 %v395
  %422 = vmatpush.bf16.xpose.msra.mxu0 %v392
  %423 = vmatmul.bf16.gmra.mxu0 %v368
  %v424 = vpop.f32.mrf.mxu0
  %v425 = vadd.f32 0.0, %v424
  %v426 = vpop.f32.mrf.mxu0
  %v427 = vadd.f32 0.0, %v426
  %428 = vmatmul.bf16.gmra.mxu0 %v371
  %v429 = vpop.f32.mrf.mxu0
  %v430 = vadd.f32 0.0, %v429
  %v431 = vpop.f32.mrf.mxu0
  %v432 = vadd.f32 0.0, %v431
  %433 = vmatmul.bf16.gmra.mxu0 %v374
  %v434 = vpop.f32.mrf.mxu0
  %v435 = vadd.f32 0.0, %v434
  %v436 = vpop.f32.mrf.mxu0
  %v437 = vadd.f32 0.0, %v436
  %438 = vmatmul.bf16.gmra.mxu0 %v377
  %v439 = vpop.f32.mrf.mxu0
  %v440 = vadd.f32 0.0, %v439
  %v441 = vpop.f32.mrf.mxu0
  %v442 = vadd.f32 0.0, %v441
  %443 = vmatmul.bf16.gmra.mxu0 %v380
  %v444 = vpop.f32.mrf.mxu0
  %v445 = vadd.f32 0.0, %v444
  %v446 = vpop.f32.mrf.mxu0
  %v447 = vadd.f32 0.0, %v446
  %448 = vmatmul.bf16.gmra.mxu0 %v383
  %v449 = vpop.f32.mrf.mxu0
  %v450 = vadd.f32 0.0, %v449
  %v451 = vpop.f32.mrf.mxu0
  %v452 = vadd.f32 0.0, %v451
  %453 = vmatmul.bf16.gmra.mxu0 %v386
  %v454 = vpop.f32.mrf.mxu0
  %v455 = vadd.f32 0.0, %v454
  %v456 = vpop.f32.mrf.mxu0
  %v457 = vadd.f32 0.0, %v456
  %458 = vmatmul.bf16.gmra.mxu0 %v389
  %v459 = vpop.f32.mrf.mxu0
  %v460 = vadd.f32 0.0, %v459
  %v461 = vpop.f32.mrf.mxu0
  %v462 = vadd.f32 0.0, %v461
  %463 = vdwg.mxu0
  %v464 = vmul.f32 %v425, 0.17677669
  %v465 = vmul.f32 %v427, 0.17677669
  %v466 = vmul.f32 %v430, 0.17677669
  %v467 = vmul.f32 %v432, 0.17677669
  %v468 = vmul.f32 %v435, 0.17677669
  %v469 = vmul.f32 %v437, 0.17677669
  %v470 = vmul.f32 %v440, 0.17677669
  %v471 = vmul.f32 %v442, 0.17677669
  %v472 = vmul.f32 %v445, 0.17677669
  %v473 = vmul.f32 %v447, 0.17677669
  %v474 = vmul.f32 %v450, 0.17677669
  %v475 = vmul.f32 %v452, 0.17677669
  %v476 = vmul.f32 %v455, 0.17677669
  %v477 = vmul.f32 %v457, 0.17677669
  %v478 = vmul.f32 %v460, 0.17677669
  %v479 = vmul.f32 %v462, 0.17677669
  %v480 = vadd.f32 %v464, %v222
  %v481 = vadd.f32 %v465, %v223
  %v482 = vadd.f32 %v466, %v224
  %v483 = vadd.f32 %v467, %v225
  %v484 = vadd.f32 %v468, %v226
  %v485 = vadd.f32 %v469, %v227
  %v486 = vadd.f32 %v470, %v228
  %v487 = vadd.f32 %v471, %v229
  %v488 = vadd.f32 %v472, %v230
  %v489 = vadd.f32 %v473, %v231
  %v490 = vadd.f32 %v474, %v232
  %v491 = vadd.f32 %v475, %v233
  %v492 = vadd.f32 %v476, %v234
  %v493 = vadd.f32 %v477, %v235
  %v494 = vadd.f32 %v478, %v236
  %v495 = vadd.f32 %v479, %v237
  %v496 = vld [vmem:[#allocation2] sm:$0xff]
  %v497 = vld [vmem:[#allocation2 + $0x8] sm:$0xff]
  %v498 = vld [vmem:[#allocation2 + $0x10] sm:$0xff]
  %v499 = vld [vmem:[#allocation2 + $0x18] sm:$0xff]
  %v500 = vld [vmem:[#allocation2 + $0x20] sm:$0xff]
  %v501 = vld [vmem:[#allocation2 + $0x28] sm:$0xff]
  %v502 = vld [vmem:[#allocation2 + $0x30] sm:$0xff]
  %v503 = vld [vmem:[#allocation2 + $0x38] sm:$0xff]
  %v504 = vld [vmem:[#allocation2 + $0x40] sm:$0xff]
  %v505 = vld [vmem:[#allocation2 + $0x48] sm:$0xff]
  %v506 = vld [vmem:[#allocation2 + $0x50] sm:$0xff]
  %v507 = vld [vmem:[#allocation2 + $0x58] sm:$0xff]
  %v508 = vld [vmem:[#allocation2 + $0x60] sm:$0xff]
  %v509 = vld [vmem:[#allocation2 + $0x68] sm:$0xff]
  %v510 = vld [vmem:[#allocation2 + $0x70] sm:$0xff]
  %v511 = vld [vmem:[#allocation2 + $0x78] sm:$0xff]
  %512 = vmax.xlane.f32.xlu0 %v480
  %v513 = vpop.xlane.xlu0 %512
  %514 = vmax.xlane.f32.xlu0 %v481
  %v515 = vpop.xlane.xlu0 %514
  %516 = vmax.xlane.f32.xlu0 %v482
  %v517 = vpop.xlane.xlu0 %516
  %518 = vmax.xlane.f32.xlu0 %v483
  %v519 = vpop.xlane.xlu0 %518
  %520 = vmax.xlane.f32.xlu0 %v484
  %v521 = vpop.xlane.xlu0 %520
  %522 = vmax.xlane.f32.xlu0 %v485
  %v523 = vpop.xlane.xlu0 %522
  %524 = vmax.xlane.f32.xlu0 %v486
  %v525 = vpop.xlane.xlu0 %524
  %526 = vmax.xlane.f32.xlu0 %v487
  %v527 = vpop.xlane.xlu0 %526
  %528 = vmax.xlane.f32.xlu0 %v488
  %v529 = vpop.xlane.xlu0 %528
  %530 = vmax.xlane.f32.xlu0 %v489
  %v531 = vpop.xlane.xlu0 %530
  %532 = vmax.xlane.f32.xlu0 %v490
  %v533 = vpop.xlane.xlu0 %532
  %534 = vmax.xlane.f32.xlu0 %v491
  %v535 = vpop.xlane.xlu0 %534
  %536 = vmax.xlane.f32.xlu0 %v492
  %v537 = vpop.xlane.xlu0 %536
  %538 = vmax.xlane.f32.xlu0 %v493
  %v539 = vpop.xlane.xlu0 %538
  %540 = vmax.xlane.f32.xlu0 %v494
  %v541 = vpop.xlane.xlu0 %540
  %542 = vmax.xlane.f32.xlu0 %v495
  %v543 = vpop.xlane.xlu0 %542
  %v544 = vmax.f32 %v496, %v513
  %v545 = vmax.f32 %v497, %v515
  %v546 = vmax.f32 %v498, %v517
  %v547 = vmax.f32 %v499, %v519
  %v548 = vmax.f32 %v500, %v521
  %v549 = vmax.f32 %v501, %v523
  %v550 = vmax.f32 %v502, %v525
  %v551 = vmax.f32 %v503, %v527
  %v552 = vmax.f32 %v504, %v529
  %v553 = vmax.f32 %v505, %v531
  %v554 = vmax.f32 %v506, %v533
  %v555 = vmax.f32 %v507, %v535
  %v556 = vmax.f32 %v508, %v537
  %v557 = vmax.f32 %v509, %v539
  %v558 = vmax.f32 %v510, %v541
  %v559 = vmax.f32 %v511, %v543
  %v560 = vsub.f32 %v496, %v544
  %v561 = vsub.f32 %v497, %v545
  %v562 = vsub.f32 %v498, %v546
  %v563 = vsub.f32 %v499, %v547
  %v564 = vsub.f32 %v500, %v548
  %v565 = vsub.f32 %v501, %v549
  %v566 = vsub.f32 %v502, %v550
  %v567 = vsub.f32 %v503, %v551
  %v568 = vsub.f32 %v504, %v552
  %v569 = vsub.f32 %v505, %v553
  %v570 = vsub.f32 %v506, %v554
  %v571 = vsub.f32 %v507, %v555
  %v572 = vsub.f32 %v508, %v556
  %v573 = vsub.f32 %v509, %v557
  %v574 = vsub.f32 %v510, %v558
  %v575 = vsub.f32 %v511, %v559
  %v576 = vmul.f32 %v560, 1.442695
  %v577 = vpow.pop %v576
  %v578 = vmul.f32 %v561, 1.442695
  %v579 = vpow.pop %v578
  %v580 = vmul.f32 %v562, 1.442695
  %v581 = vpow.pop %v580
  %v582 = vmul.f32 %v563, 1.442695
  %v583 = vpow.pop %v582
  %v584 = vmul.f32 %v564, 1.442695
  %v585 = vpow.pop %v584
  %v586 = vmul.f32 %v565, 1.442695
  %v587 = vpow.pop %v586
  %v588 = vmul.f32 %v566, 1.442695
  %v589 = vpow.pop %v588
  %v590 = vmul.f32 %v567, 1.442695
  %v591 = vpow.pop %v590
  %v592 = vmul.f32 %v568, 1.442695
  %v593 = vpow.pop %v592
  %v594 = vmul.f32 %v569, 1.442695
  %v595 = vpow.pop %v594
  %v596 = vmul.f32 %v570, 1.442695
  %v597 = vpow.pop %v596
  %v598 = vmul.f32 %v571, 1.442695
  %v599 = vpow.pop %v598
  %v600 = vmul.f32 %v572, 1.442695
  %v601 = vpow.pop %v600
  %v602 = vmul.f32 %v573, 1.442695
  %v603 = vpow.pop %v602
  %v604 = vmul.f32 %v574, 1.442695
  %v605 = vpow.pop %v604
  %v606 = vmul.f32 %v575, 1.442695
  %v607 = vpow.pop %v606
  %609 = vset.pattern.permute.xlu0 0
  %610 = vperm.xlu0 %609, %v544
  %v611 = vpop.permute.xlu0 %610
  %614 = vset.pattern.permute.xlu0 0
  %615 = vperm.xlu0 %614, %v545
  %v616 = vpop.permute.xlu0 %615
  %619 = vset.pattern.permute.xlu0 0
  %620 = vperm.xlu0 %619, %v546
  %v621 = vpop.permute.xlu0 %620
  %624 = vset.pattern.permute.xlu0 0
  %625 = vperm.xlu0 %624, %v547
  %v626 = vpop.permute.xlu0 %625
  %629 = vset.pattern.permute.xlu0 0
  %630 = vperm.xlu0 %629, %v548
  %v631 = vpop.permute.xlu0 %630
  %634 = vset.pattern.permute.xlu0 0
  %635 = vperm.xlu0 %634, %v549
  %v636 = vpop.permute.xlu0 %635
  %639 = vset.pattern.permute.xlu0 0
  %640 = vperm.xlu0 %639, %v550
  %v641 = vpop.permute.xlu0 %640
  %644 = vset.pattern.permute.xlu0 0
  %645 = vperm.xlu0 %644, %v551
  %v646 = vpop.permute.xlu0 %645
  %649 = vset.pattern.permute.xlu0 0
  %650 = vperm.xlu0 %649, %v552
  %v651 = vpop.permute.xlu0 %650
  %654 = vset.pattern.permute.xlu0 0
  %655 = vperm.xlu0 %654, %v553
  %v656 = vpop.permute.xlu0 %655
  %659 = vset.pattern.permute.xlu0 0
  %660 = vperm.xlu0 %659, %v554
  %v661 = vpop.permute.xlu0 %660
  %664 = vset.pattern.permute.xlu0 0
  %665 = vperm.xlu0 %664, %v555
  %v666 = vpop.permute.xlu0 %665
  %669 = vset.pattern.permute.xlu0 0
  %670 = vperm.xlu0 %669, %v556
  %v671 = vpop.permute.xlu0 %670
  %674 = vset.pattern.permute.xlu0 0
  %675 = vperm.xlu0 %674, %v557
  %v676 = vpop.permute.xlu0 %675
  %679 = vset.pattern.permute.xlu0 0
  %680 = vperm.xlu0 %679, %v558
  %v681 = vpop.permute.xlu0 %680
  %684 = vset.pattern.permute.xlu0 0
  %685 = vperm.xlu0 %684, %v559
  %v686 = vpop.permute.xlu0 %685
  %v688 = vsub.f32 %v480, %v611
  %v689 = vsub.f32 %v481, %v616
  %v690 = vsub.f32 %v482, %v621
  %v691 = vsub.f32 %v483, %v626
  %v692 = vsub.f32 %v484, %v631
  %v693 = vsub.f32 %v485, %v636
  %v694 = vsub.f32 %v486, %v641
  %v695 = vsub.f32 %v487, %v646
  %v696 = vsub.f32 %v488, %v651
  %v697 = vsub.f32 %v489, %v656
  %v698 = vsub.f32 %v490, %v661
  %v699 = vsub.f32 %v491, %v666
  %v700 = vsub.f32 %v492, %v671
  %v701 = vsub.f32 %v493, %v676
  %v702 = vsub.f32 %v494, %v681
  %v703 = vsub.f32 %v495, %v686
  %v704 = vmul.f32 %v688, 1.442695
  %v705 = vpow.pop %v704
  %v706 = vmul.f32 %v689, 1.442695
  %v707 = vpow.pop %v706
  %v708 = vmul.f32 %v690, 1.442695
  %v709 = vpow.pop %v708
  %v710 = vmul.f32 %v691, 1.442695
  %v711 = vpow.pop %v710
  %v712 = vmul.f32 %v692, 1.442695
  %v713 = vpow.pop %v712
  %v714 = vmul.f32 %v693, 1.442695
  %v715 = vpow.pop %v714
  %v716 = vmul.f32 %v694, 1.442695
  %v717 = vpow.pop %v716
  %v718 = vmul.f32 %v695, 1.442695
  %v719 = vpow.pop %v718
  %v720 = vmul.f32 %v696, 1.442695
  %v721 = vpow.pop %v720
  %v722 = vmul.f32 %v697, 1.442695
  %v723 = vpow.pop %v722
  %v724 = vmul.f32 %v698, 1.442695
  %v725 = vpow.pop %v724
  %v726 = vmul.f32 %v699, 1.442695
  %v727 = vpow.pop %v726
  %v728 = vmul.f32 %v700, 1.442695
  %v729 = vpow.pop %v728
  %v730 = vmul.f32 %v701, 1.442695
  %v731 = vpow.pop %v730
  %v732 = vmul.f32 %v702, 1.442695
  %v733 = vpow.pop %v732
  %v734 = vmul.f32 %v703, 1.442695
  %v735 = vpow.pop %v734
  %v736 = vld [vmem:[#allocation3] sm:$0xff]
  %v737 = vld [vmem:[#allocation3 + $0x8] sm:$0xff]
  %v738 = vld [vmem:[#allocation3 + $0x10] sm:$0xff]
  %v739 = vld [vmem:[#allocation3 + $0x18] sm:$0xff]
  %v740 = vld [vmem:[#allocation3 + $0x20] sm:$0xff]
  %v741 = vld [vmem:[#allocation3 + $0x28] sm:$0xff]
  %v742 = vld [vmem:[#allocation3 + $0x30] sm:$0xff]
  %v743 = vld [vmem:[#allocation3 + $0x38] sm:$0xff]
  %v744 = vld [vmem:[#allocation3 + $0x40] sm:$0xff]
  %v745 = vld [vmem:[#allocation3 + $0x48] sm:$0xff]
  %v746 = vld [vmem:[#allocation3 + $0x50] sm:$0xff]
  %v747 = vld [vmem:[#allocation3 + $0x58] sm:$0xff]
  %v748 = vld [vmem:[#allocation3 + $0x60] sm:$0xff]
  %v749 = vld [vmem:[#allocation3 + $0x68] sm:$0xff]
  %v750 = vld [vmem:[#allocation3 + $0x70] sm:$0xff]
  %v751 = vld [vmem:[#allocation3 + $0x78] sm:$0xff]
  %v752 = vmul.f32 %v577, %v736
  %v753 = vmul.f32 %v579, %v737
  %v754 = vmul.f32 %v581, %v738
  %v755 = vmul.f32 %v583, %v739
  %v756 = vmul.f32 %v585, %v740
  %v757 = vmul.f32 %v587, %v741
  %v758 = vmul.f32 %v589, %v742
  %v759 = vmul.f32 %v591, %v743
  %v760 = vmul.f32 %v593, %v744
  %v761 = vmul.f32 %v595, %v745
  %v762 = vmul.f32 %v597, %v746
  %v763 = vmul.f32 %v599, %v747
  %v764 = vmul.f32 %v601, %v748
  %v765 = vmul.f32 %v603, %v749
  %v766 = vmul.f32 %v605, %v750
  %v767 = vmul.f32 %v607, %v751
  %768 = vadd.xlane.f32.xlu0 %v705
  %v769 = vpop.xlane.xlu0 %768
  %770 = vadd.xlane.f32.xlu0 %v707
  %v771 = vpop.xlane.xlu0 %770
  %772 = vadd.xlane.f32.xlu0 %v709
  %v773 = vpop.xlane.xlu0 %772
  %774 = vadd.xlane.f32.xlu0 %v711
  %v775 = vpop.xlane.xlu0 %774
  %776 = vadd.xlane.f32.xlu0 %v713
  %v777 = vpop.xlane.xlu0 %776
  %778 = vadd.xlane.f32.xlu0 %v715
  %v779 = vpop.xlane.xlu0 %778
  %780 = vadd.xlane.f32.xlu0 %v717
  %v781 = vpop.xlane.xlu0 %780
  %782 = vadd.xlane.f32.xlu0 %v719
  %v783 = vpop.xlane.xlu0 %782
  %784 = vadd.xlane.f32.xlu0 %v721
  %v785 = vpop.xlane.xlu0 %784
  %786 = vadd.xlane.f32.xlu0 %v723
  %v787 = vpop.xlane.xlu0 %786
  %788 = vadd.xlane.f32.xlu0 %v725
  %v789 = vpop.xlane.xlu0 %788
  %790 = vadd.xlane.f32.xlu0 %v727
  %v791 = vpop.xlane.xlu0 %790
  %792 = vadd.xlane.f32.xlu0 %v729
  %v793 = vpop.xlane.xlu0 %792
  %794 = vadd.xlane.f32.xlu0 %v731
  %v795 = vpop.xlane.xlu0 %794
  %796 = vadd.xlane.f32.xlu0 %v733
  %v797 = vpop.xlane.xlu0 %796
  %798 = vadd.xlane.f32.xlu0 %v735
  %v799 = vpop.xlane.xlu0 %798
  %v800 = vadd.f32 %v752, %v769
  %v801 = vadd.f32 %v753, %v771
  %v802 = vadd.f32 %v754, %v773
  %v803 = vadd.f32 %v755, %v775
  %v804 = vadd.f32 %v756, %v777
  %v805 = vadd.f32 %v757, %v779
  %v806 = vadd.f32 %v758, %v781
  %v807 = vadd.f32 %v759, %v783
  %v808 = vadd.f32 %v760, %v785
  %v809 = vadd.f32 %v761, %v787
  %v810 = vadd.f32 %v762, %v789
  %v811 = vadd.f32 %v763, %v791
  %v812 = vadd.f32 %v764, %v793
  %v813 = vadd.f32 %v765, %v795
  %v814 = vadd.f32 %v766, %v797
  %v815 = vadd.f32 %v767, %v799
  %vm816 = vcmask 7168
  %817 = vst.msk [vmem:[#allocation3] sm:$0xff] %vm816, %v800
  %818 = vst.msk [vmem:[#allocation3 + $0x8] sm:$0xff] %vm816, %v801
  %819 = vst.msk [vmem:[#allocation3 + $0x10] sm:$0xff] %vm816, %v802
  %820 = vst.msk [vmem:[#allocation3 + $0x18] sm:$0xff] %vm816, %v803
  %821 = vst.msk [vmem:[#allocation3 + $0x20] sm:$0xff] %vm816, %v804
  %822 = vst.msk [vmem:[#allocation3 + $0x28] sm:$0xff] %vm816, %v805
  %823 = vst.msk [vmem:[#allocation3 + $0x30] sm:$0xff] %vm816, %v806
  %824 = vst.msk [vmem:[#allocation3 + $0x38] sm:$0xff] %vm816, %v807
  %825 = vst.msk [vmem:[#allocation3 + $0x40] sm:$0xff] %vm816, %v808
  %826 = vst.msk [vmem:[#allocation3 + $0x48] sm:$0xff] %vm816, %v809
  %827 = vst.msk [vmem:[#allocation3 + $0x50] sm:$0xff] %vm816, %v810
  %828 = vst.msk [vmem:[#allocation3 + $0x58] sm:$0xff] %vm816, %v811
  %829 = vst.msk [vmem:[#allocation3 + $0x60] sm:$0xff] %vm816, %v812
  %830 = vst.msk [vmem:[#allocation3 + $0x68] sm:$0xff] %vm816, %v813
  %831 = vst.msk [vmem:[#allocation3 + $0x70] sm:$0xff] %vm816, %v814
  %832 = vst.msk [vmem:[#allocation3 + $0x78] sm:$0xff] %vm816, %v815
  %v833 = vld [vmem:[#allocation4] sm:$0xff]
  %v834 = vld [vmem:[#allocation4 + $0x8] sm:$0xff]
  %v835 = vld [vmem:[#allocation4 + $0x10] sm:$0xff]
  %v836 = vld [vmem:[#allocation4 + $0x18] sm:$0xff]
  %v837 = vld [vmem:[#allocation4 + $0x20] sm:$0xff]
  %v838 = vld [vmem:[#allocation4 + $0x28] sm:$0xff]
  %v839 = vld [vmem:[#allocation4 + $0x30] sm:$0xff]
  %v840 = vld [vmem:[#allocation4 + $0x38] sm:$0xff]
  %v841 = vld [vmem:[#allocation4 + $0x40] sm:$0xff]
  %v842 = vld [vmem:[#allocation4 + $0x48] sm:$0xff]
  %v843 = vld [vmem:[#allocation4 + $0x50] sm:$0xff]
  %v844 = vld [vmem:[#allocation4 + $0x58] sm:$0xff]
  %v845 = vld [vmem:[#allocation4 + $0x60] sm:$0xff]
  %v846 = vld [vmem:[#allocation4 + $0x68] sm:$0xff]
  %v847 = vld [vmem:[#allocation4 + $0x70] sm:$0xff]
  %v848 = vld [vmem:[#allocation4 + $0x78] sm:$0xff]
  %850 = vset.pattern.permute.xlu0 0
  %851 = vperm.xlu0 %850, %v577
  %v852 = vpop.permute.xlu0 %851
  %855 = vset.pattern.permute.xlu0 0
  %856 = vperm.xlu0 %855, %v579
  %v857 = vpop.permute.xlu0 %856
  %860 = vset.pattern.permute.xlu0 0
  %861 = vperm.xlu0 %860, %v581
  %v862 = vpop.permute.xlu0 %861
  %865 = vset.pattern.permute.xlu0 0
  %866 = vperm.xlu0 %865, %v583
  %v867 = vpop.permute.xlu0 %866
  %870 = vset.pattern.permute.xlu0 0
  %871 = vperm.xlu0 %870, %v585
  %v872 = vpop.permute.xlu0 %871
  %875 = vset.pattern.permute.xlu0 0
  %876 = vperm.xlu0 %875, %v587
  %v877 = vpop.permute.xlu0 %876
  %880 = vset.pattern.permute.xlu0 0
  %881 = vperm.xlu0 %880, %v589
  %v882 = vpop.permute.xlu0 %881
  %885 = vset.pattern.permute.xlu0 0
  %886 = vperm.xlu0 %885, %v591
  %v887 = vpop.permute.xlu0 %886
  %890 = vset.pattern.permute.xlu0 0
  %891 = vperm.xlu0 %890, %v593
  %v892 = vpop.permute.xlu0 %891
  %895 = vset.pattern.permute.xlu0 0
  %896 = vperm.xlu0 %895, %v595
  %v897 = vpop.permute.xlu0 %896
  %900 = vset.pattern.permute.xlu0 0
  %901 = vperm.xlu0 %900, %v597
  %v902 = vpop.permute.xlu0 %901
  %905 = vset.pattern.permute.xlu0 0
  %906 = vperm.xlu0 %905, %v599
  %v907 = vpop.permute.xlu0 %906
  %910 = vset.pattern.permute.xlu0 0
  %911 = vperm.xlu0 %910, %v601
  %v912 = vpop.permute.xlu0 %911
  %915 = vset.pattern.permute.xlu0 0
  %916 = vperm.xlu0 %915, %v603
  %v917 = vpop.permute.xlu0 %916
  %920 = vset.pattern.permute.xlu0 0
  %921 = vperm.xlu0 %920, %v605
  %v922 = vpop.permute.xlu0 %921
  %925 = vset.pattern.permute.xlu0 0
  %926 = vperm.xlu0 %925, %v607
  %v927 = vpop.permute.xlu0 %926
  %v929 = vmul.f32 %v852, %v833
  %v930 = vmul.f32 %v857, %v834
  %v931 = vmul.f32 %v862, %v835
  %v932 = vmul.f32 %v867, %v836
  %v933 = vmul.f32 %v872, %v837
  %v934 = vmul.f32 %v877, %v838
  %v935 = vmul.f32 %v882, %v839
  %v936 = vmul.f32 %v887, %v840
  %v937 = vmul.f32 %v892, %v841
  %v938 = vmul.f32 %v897, %v842
  %v939 = vmul.f32 %v902, %v843
  %v940 = vmul.f32 %v907, %v844
  %v941 = vmul.f32 %v912, %v845
  %v942 = vmul.f32 %v917, %v846
  %v943 = vmul.f32 %v922, %v847
  %v944 = vmul.f32 %v927, %v848
  %v945 = vpack.c.bf16 %v707, %v705
  %v946 = vpack.c.bf16 %v711, %v709
  %v947 = vpack.c.bf16 %v715, %v713
  %v948 = vpack.c.bf16 %v719, %v717
  %v949 = vpack.c.bf16 %v723, %v721
  %v950 = vpack.c.bf16 %v727, %v725
  %v951 = vpack.c.bf16 %v731, %v729
  %v952 = vpack.c.bf16 %v735, %v733
  %v969 = vunpack.c.l.b16 %v270
  %v970 = vunpack.c.l.b16 %v271
  %v971 = vunpack.c.l.b16 %v272
  %v972 = vunpack.c.l.b16 %v273
  %v973 = vunpack.c.l.b16 %v274
  %v974 = vunpack.c.l.b16 %v275
  %v975 = vunpack.c.l.b16 %v276
  %v976 = vunpack.c.l.b16 %v277
  %v977 = vunpack.c.l.b16 %v278
  %v978 = vunpack.c.l.b16 %v279
  %v979 = vunpack.c.l.b16 %v280
  %v980 = vunpack.c.l.b16 %v281
  %v981 = vunpack.c.l.b16 %v282
  %v982 = vunpack.c.l.b16 %v283
  %v983 = vunpack.c.l.b16 %v284
  %v984 = vunpack.c.l.b16 %v285
  %v985 = vpack.c.b16 %v970, %v969
  %v986 = vpack.c.b16 %v972, %v971
  %v987 = vpack.c.b16 %v974, %v973
  %v988 = vpack.c.b16 %v976, %v975
  %v989 = vpack.c.b16 %v978, %v977
  %v990 = vpack.c.b16 %v980, %v979
  %v991 = vpack.c.b16 %v982, %v981
  %v992 = vpack.c.b16 %v984, %v983
  %1001 = vmatpush.bf16.msra.mxu0 %v992
  %1002 = vmatpush.bf16.msra.mxu0 %v991
  %1003 = vmatpush.bf16.msra.mxu0 %v990
  %1004 = vmatpush.bf16.msra.mxu0 %v989
  %1005 = vmatpush.bf16.msra.mxu0 %v988
  %1006 = vmatpush.bf16.msra.mxu0 %v987
  %1007 = vmatpush.bf16.msra.mxu0 %v986
  %1008 = vmatpush.bf16.msra.mxu0 %v985
  %1009 = vmatmul.bf16.gmra.mxu0 %v945
  %v1010 = vpop.f32.mrf.mxu0
  %v1011 = vadd.f32 0.0, %v1010
  %v1012 = vpop.f32.mrf.mxu0
  %v1013 = vadd.f32 0.0, %v1012
  %1014 = vmatmul.bf16.gmra.mxu0 %v946
  %v1015 = vpop.f32.mrf.mxu0
  %v1016 = vadd.f32 0.0, %v1015
  %v1017 = vpop.f32.mrf.mxu0
  %v1018 = vadd.f32 0.0, %v1017
  %1019 = vmatmul.bf16.gmra.mxu0 %v947
  %v1020 = vpop.f32.mrf.mxu0
  %v1021 = vadd.f32 0.0, %v1020
  %v1022 = vpop.f32.mrf.mxu0
  %v1023 = vadd.f32 0.0, %v1022
  %1024 = vmatmul.bf16.gmra.mxu0 %v948
  %v1025 = vpop.f32.mrf.mxu0
  %v1026 = vadd.f32 0.0, %v1025
  %v1027 = vpop.f32.mrf.mxu0
  %v1028 = vadd.f32 0.0, %v1027
  %1029 = vmatmul.bf16.gmra.mxu0 %v949
  %v1030 = vpop.f32.mrf.mxu0
  %v1031 = vadd.f32 0.0, %v1030
  %v1032 = vpop.f32.mrf.mxu0
  %v1033 = vadd.f32 0.0, %v1032
  %1034 = vmatmul.bf16.gmra.mxu0 %v950
  %v1035 = vpop.f32.mrf.mxu0
  %v1036 = vadd.f32 0.0, %v1035
  %v1037 = vpop.f32.mrf.mxu0
  %v1038 = vadd.f32 0.0, %v1037
  %1039 = vmatmul.bf16.gmra.mxu0 %v951
  %v1040 = vpop.f32.mrf.mxu0
  %v1041 = vadd.f32 0.0, %v1040
  %v1042 = vpop.f32.mrf.mxu0
  %v1043 = vadd.f32 0.0, %v1042
  %1044 = vmatmul.bf16.gmra.mxu0 %v952
  %v1045 = vpop.f32.mrf.mxu0
  %v1046 = vadd.f32 0.0, %v1045
  %v1047 = vpop.f32.mrf.mxu0
  %v1048 = vadd.f32 0.0, %v1047
  %1049 = vdwg.mxu0
  %v1050 = vadd.f32 %v929, %v1011
  %v1051 = vadd.f32 %v930, %v1013
  %v1052 = vadd.f32 %v931, %v1016
  %v1053 = vadd.f32 %v932, %v1018
  %v1054 = vadd.f32 %v933, %v1021
  %v1055 = vadd.f32 %v934, %v1023
  %v1056 = vadd.f32 %v935, %v1026
  %v1057 = vadd.f32 %v936, %v1028
  %v1058 = vadd.f32 %v937, %v1031
  %v1059 = vadd.f32 %v938, %v1033
  %v1060 = vadd.f32 %v939, %v1036
  %v1061 = vadd.f32 %v940, %v1038
  %v1062 = vadd.f32 %v941, %v1041
  %v1063 = vadd.f32 %v942, %v1043
  %v1064 = vadd.f32 %v943, %v1046
  %v1065 = vadd.f32 %v944, %v1048
  %1066 = vst.msk [vmem:[#allocation4] sm:$0xff] %vm366, %v1050
  %1067 = vst.msk [vmem:[#allocation4 + $0x8] sm:$0xff] %vm366, %v1051
  %1068 = vst.msk [vmem:[#allocation4 + $0x10] sm:$0xff] %vm366, %v1052
  %1069 = vst.msk [vmem:[#allocation4 + $0x18] sm:$0xff] %vm366, %v1053
  %1070 = vst.msk [vmem:[#allocation4 + $0x20] sm:$0xff] %vm366, %v1054
  %1071 = vst.msk [vmem:[#allocation4 + $0x28] sm:$0xff] %vm366, %v1055
  %1072 = vst.msk [vmem:[#allocation4 + $0x30] sm:$0xff] %vm366, %v1056
  %1073 = vst.msk [vmem:[#allocation4 + $0x38] sm:$0xff] %vm366, %v1057
  %1074 = vst.msk [vmem:[#allocation4 + $0x40] sm:$0xff] %vm366, %v1058
  %1075 = vst.msk [vmem:[#allocation4 + $0x48] sm:$0xff] %vm366, %v1059
  %1076 = vst.msk [vmem:[#allocation4 + $0x50] sm:$0xff] %vm366, %v1060
  %1077 = vst.msk [vmem:[#allocation4 + $0x58] sm:$0xff] %vm366, %v1061
  %1078 = vst.msk [vmem:[#allocation4 + $0x60] sm:$0xff] %vm366, %v1062
  %1079 = vst.msk [vmem:[#allocation4 + $0x68] sm:$0xff] %vm366, %v1063
  %1080 = vst.msk [vmem:[#allocation4 + $0x70] sm:$0xff] %vm366, %v1064
  %1081 = vst.msk [vmem:[#allocation4 + $0x78] sm:$0xff] %vm366, %v1065
  %1082 = vst.msk [vmem:[#allocation2] sm:$0xff] %vm816, %v544
  %1083 = vst.msk [vmem:[#allocation2 + $0x8] sm:$0xff] %vm816, %v545
  %1084 = vst.msk [vmem:[#allocation2 + $0x10] sm:$0xff] %vm816, %v546
  %1085 = vst.msk [vmem:[#allocation2 + $0x18] sm:$0xff] %vm816, %v547
  %1086 = vst.msk [vmem:[#allocation2 + $0x20] sm:$0xff] %vm816, %v548
  %1087 = vst.msk [vmem:[#allocation2 + $0x28] sm:$0xff] %vm816, %v549
  %1088 = vst.msk [vmem:[#allocation2 + $0x30] sm:$0xff] %vm816, %v550
  %1089 = vst.msk [vmem:[#allocation2 + $0x38] sm:$0xff] %vm816, %v551
  %1090 = vst.msk [vmem:[#allocation2 + $0x40] sm:$0xff] %vm816, %v552
  %1091 = vst.msk [vmem:[#allocation2 + $0x48] sm:$0xff] %vm816, %v553
  %1092 = vst.msk [vmem:[#allocation2 + $0x50] sm:$0xff] %vm816, %v554
  %1093 = vst.msk [vmem:[#allocation2 + $0x58] sm:$0xff] %vm816, %v555
  %1094 = vst.msk [vmem:[#allocation2 + $0x60] sm:$0xff] %vm816, %v556
  %1095 = vst.msk [vmem:[#allocation2 + $0x68] sm:$0xff] %vm816, %v557
  %1096 = vst.msk [vmem:[#allocation2 + $0x70] sm:$0xff] %vm816, %v558
  %1097 = vst.msk [vmem:[#allocation2 + $0x78] sm:$0xff] %vm816, %v559
  %v1098 = vld [vmem:[%s2] sm:$0xf]
  %v1099 = vld [vmem:[%s2 + $0x4] sm:$0xf]
  %v1100 = vld [vmem:[%s2 + $0x8] sm:$0xf]
  %v1101 = vld [vmem:[%s2 + $0xc] sm:$0xf]
  %v1102 = vld [vmem:[%s2 + $0x10] sm:$0xf]
  %v1103 = vld [vmem:[%s2 + $0x14] sm:$0xf]
  %v1104 = vld [vmem:[%s2 + $0x18] sm:$0xf]
  %v1105 = vld [vmem:[%s2 + $0x1c] sm:$0xf]
  %v1106 = vld [vmem:[%s2 + $0x20] sm:$0xf]
  %v1107 = vld [vmem:[%s2 + $0x24] sm:$0xf]
  %v1108 = vld [vmem:[%s2 + $0x28] sm:$0xf]
  %v1109 = vld [vmem:[%s2 + $0x2c] sm:$0xf]
  %v1110 = vld [vmem:[%s2 + $0x30] sm:$0xf]
  %v1111 = vld [vmem:[%s2 + $0x34] sm:$0xf]
  %v1112 = vld [vmem:[%s2 + $0x38] sm:$0xf]
  %v1113 = vld [vmem:[%s2 + $0x3c] sm:$0xf]
  %v1114 = vld [vmem:[%s3] sm:$0xf]
  %v1115 = vld [vmem:[%s3 + $0x4] sm:$0xf]
  %v1116 = vld [vmem:[%s3 + $0x8] sm:$0xf]
  %v1117 = vld [vmem:[%s3 + $0xc] sm:$0xf]
  %v1118 = vld [vmem:[%s3 + $0x10] sm:$0xf]
  %v1119 = vld [vmem:[%s3 + $0x14] sm:$0xf]
  %v1120 = vld [vmem:[%s3 + $0x18] sm:$0xf]
  %v1121 = vld [vmem:[%s3 + $0x1c] sm:$0xf]
  %v1122 = vld [vmem:[%s3 + $0x20] sm:$0xf]
  %v1123 = vld [vmem:[%s3 + $0x24] sm:$0xf]
  %v1124 = vld [vmem:[%s3 + $0x28] sm:$0xf]
  %v1125 = vld [vmem:[%s3 + $0x2c] sm:$0xf]
  %v1126 = vld [vmem:[%s3 + $0x30] sm:$0xf]
  %v1127 = vld [vmem:[%s3 + $0x34] sm:$0xf]
  %v1128 = vld [vmem:[%s3 + $0x38] sm:$0xf]
  %v1129 = vld [vmem:[%s3 + $0x3c] sm:$0xf]
  %v1130 = vld [vmem:[%s4] sm:$0xf]
  %v1131 = vld [vmem:[%s4 + $0x4] sm:$0xf]
  %v1132 = vld [vmem:[%s4 + $0x8] sm:$0xf]
  %v1133 = vld [vmem:[%s4 + $0xc] sm:$0xf]
  %v1134 = vld [vmem:[%s4 + $0x10] sm:$0xf]
  %v1135 = vld [vmem:[%s4 + $0x14] sm:$0xf]
  %v1136 = vld [vmem:[%s4 + $0x18] sm:$0xf]
  %v1137 = vld [vmem:[%s4 + $0x1c] sm:$0xf]
  %v1138 = vld [vmem:[%s4 + $0x20] sm:$0xf]
  %v1139 = vld [vmem:[%s4 + $0x24] sm:$0xf]
  %v1140 = vld [vmem:[%s4 + $0x28] sm:$0xf]
  %v1141 = vld [vmem:[%s4 + $0x2c] sm:$0xf]
  %v1142 = vld [vmem:[%s4 + $0x30] sm:$0xf]
  %v1143 = vld [vmem:[%s4 + $0x34] sm:$0xf]
  %v1144 = vld [vmem:[%s4 + $0x38] sm:$0xf]
  %v1145 = vld [vmem:[%s4 + $0x3c] sm:$0xf]
  %v1162 = vunpack.c.l.b16 %v1098
  %v1163 = vunpack.c.l.b16 %v1099
  %v1164 = vunpack.c.l.b16 %v1100
  %v1165 = vunpack.c.l.b16 %v1101
  %v1166 = vunpack.c.l.b16 %v1102
  %v1167 = vunpack.c.l.b16 %v1103
  %v1168 = vunpack.c.l.b16 %v1104
  %v1169 = vunpack.c.l.b16 %v1105
  %v1170 = vunpack.c.l.b16 %v1106
  %v1171 = vunpack.c.l.b16 %v1107
  %v1172 = vunpack.c.l.b16 %v1108
  %v1173 = vunpack.c.l.b16 %v1109
  %v1174 = vunpack.c.l.b16 %v1110
  %v1175 = vunpack.c.l.b16 %v1111
  %v1176 = vunpack.c.l.b16 %v1112
  %v1177 = vunpack.c.l.b16 %v1113
  %v1178 = vpack.c.b16 %v1163, %v1162
  %v1179 = vpack.c.b16 %v1165, %v1164
  %v1180 = vpack.c.b16 %v1167, %v1166
  %v1181 = vpack.c.b16 %v1169, %v1168
  %v1182 = vpack.c.b16 %v1171, %v1170
  %v1183 = vpack.c.b16 %v1173, %v1172
  %v1184 = vpack.c.b16 %v1175, %v1174
  %v1185 = vpack.c.b16 %v1177, %v1176
  %1186 = vrot.lane.b32.xlu0 %v1178, 96
  %v1187 = vpop.permute.xlu0 %1186
  %1188 = vrot.lane.b32.xlu0 %v1179, 96
  %v1189 = vpop.permute.xlu0 %1188
  %1190 = vrot.lane.b32.xlu0 %v1180, 96
  %v1191 = vpop.permute.xlu0 %1190
  %1192 = vrot.lane.b32.xlu0 %v1181, 96
  %v1193 = vpop.permute.xlu0 %1192
  %1194 = vrot.lane.b32.xlu0 %v1182, 96
  %v1195 = vpop.permute.xlu0 %1194
  %1196 = vrot.lane.b32.xlu0 %v1183, 96
  %v1197 = vpop.permute.xlu0 %1196
  %1198 = vrot.lane.b32.xlu0 %v1184, 96
  %v1199 = vpop.permute.xlu0 %1198
  %1200 = vrot.lane.b32.xlu0 %v1185, 96
  %v1201 = vpop.permute.xlu0 %1200
  %v1218 = vunpack.c.l.b16 %v1114
  %v1219 = vunpack.c.l.b16 %v1115
  %v1220 = vunpack.c.l.b16 %v1116
  %v1221 = vunpack.c.l.b16 %v1117
  %v1222 = vunpack.c.l.b16 %v1118
  %v1223 = vunpack.c.l.b16 %v1119
  %v1224 = vunpack.c.l.b16 %v1120
  %v1225 = vunpack.c.l.b16 %v1121
  %v1226 = vunpack.c.l.b16 %v1122
  %v1227 = vunpack.c.l.b16 %v1123
  %v1228 = vunpack.c.l.b16 %v1124
  %v1229 = vunpack.c.l.b16 %v1125
  %v1230 = vunpack.c.l.b16 %v1126
  %v1231 = vunpack.c.l.b16 %v1127
  %v1232 = vunpack.c.l.b16 %v1128
  %v1233 = vunpack.c.l.b16 %v1129
  %v1234 = vpack.c.b16 %v1219, %v1218
  %v1235 = vpack.c.b16 %v1221, %v1220
  %v1236 = vpack.c.b16 %v1223, %v1222
  %v1237 = vpack.c.b16 %v1225, %v1224
  %v1238 = vpack.c.b16 %v1227, %v1226
  %v1239 = vpack.c.b16 %v1229, %v1228
  %v1240 = vpack.c.b16 %v1231, %v1230
  %v1241 = vpack.c.b16 %v1233, %v1232
  %1242 = vrot.lane.b32.xlu0 %v1234, 96
  %v1243 = vpop.permute.xlu0 %1242
  %1244 = vrot.lane.b32.xlu0 %v1235, 96
  %v1245 = vpop.permute.xlu0 %1244
  %1246 = vrot.lane.b32.xlu0 %v1236, 96
  %v1247 = vpop.permute.xlu0 %1246
  %1248 = vrot.lane.b32.xlu0 %v1237, 96
  %v1249 = vpop.permute.xlu0 %1248
  %1250 = vrot.lane.b32.xlu0 %v1238, 96
  %v1251 = vpop.permute.xlu0 %1250
  %1252 = vrot.lane.b32.xlu0 %v1239, 96
  %v1253 = vpop.permute.xlu0 %1252
  %1254 = vrot.lane.b32.xlu0 %v1240, 96
  %v1255 = vpop.permute.xlu0 %1254
  %1256 = vrot.lane.b32.xlu0 %v1241, 96
  %v1257 = vpop.permute.xlu0 %1256
  %v1259 = vsel %vm366, %v1187, 0
  %v1262 = vsel %vm366, %v1189, 0
  %v1265 = vsel %vm366, %v1191, 0
  %v1268 = vsel %vm366, %v1193, 0
  %v1271 = vsel %vm366, %v1195, 0
  %v1274 = vsel %vm366, %v1197, 0
  %v1277 = vsel %vm366, %v1199, 0
  %v1280 = vsel %vm366, %v1201, 0
  %v1283 = vsel %vm366, %v1243, 0
  %v1286 = vsel %vm366, %v1245, 0
  %v1289 = vsel %vm366, %v1247, 0
  %v1292 = vsel %vm366, %v1249, 0
  %v1295 = vsel %vm366, %v1251, 0
  %v1298 = vsel %vm366, %v1253, 0
  %v1301 = vsel %vm366, %v1255, 0
  %v1304 = vsel %vm366, %v1257, 0
  %1306 = vmatpush.bf16.xpose.msra.mxu0 %v1304
  %1307 = vmatpush.bf16.xpose.msra.mxu0 %v1301
  %1308 = vmatpush.bf16.xpose.msra.mxu0 %v1298
  %1309 = vmatpush.bf16.xpose.msra.mxu0 %v1295
  %1310 = vmatpush.bf16.xpose.msra.mxu0 %v1292
  %1311 = vmatpush.bf16.xpose.msra.mxu0 %v1289
  %1312 = vmatpush.bf16.xpose.msra.mxu0 %v1286
  %1313 = vmatpush.bf16.xpose.msra.mxu0 %v1283
  %1314 = vmatmul.bf16.gmra.mxu0 %v1259
  %v1315 = vpop.f32.mrf.mxu0
  %v1316 = vadd.f32 0.0, %v1315
  %v1317 = vpop.f32.mrf.mxu0
  %v1318 = vadd.f32 0.0, %v1317
  %1319 = vmatmul.bf16.gmra.mxu0 %v1262
  %v1320 = vpop.f32.mrf.mxu0
  %v1321 = vadd.f32 0.0, %v1320
  %v1322 = vpop.f32.mrf.mxu0
  %v1323 = vadd.f32 0.0, %v1322
  %1324 = vmatmul.bf16.gmra.mxu0 %v1265
  %v1325 = vpop.f32.mrf.mxu0
  %v1326 = vadd.f32 0.0, %v1325
  %v1327 = vpop.f32.mrf.mxu0
  %v1328 = vadd.f32 0.0, %v1327
  %1329 = vmatmul.bf16.gmra.mxu0 %v1268
  %v1330 = vpop.f32.mrf.mxu0
  %v1331 = vadd.f32 0.0, %v1330
  %v1332 = vpop.f32.mrf.mxu0
  %v1333 = vadd.f32 0.0, %v1332
  %1334 = vmatmul.bf16.gmra.mxu0 %v1271
  %v1335 = vpop.f32.mrf.mxu0
  %v1336 = vadd.f32 0.0, %v1335
  %v1337 = vpop.f32.mrf.mxu0
  %v1338 = vadd.f32 0.0, %v1337
  %1339 = vmatmul.bf16.gmra.mxu0 %v1274
  %v1340 = vpop.f32.mrf.mxu0
  %v1341 = vadd.f32 0.0, %v1340
  %v1342 = vpop.f32.mrf.mxu0
  %v1343 = vadd.f32 0.0, %v1342
  %1344 = vmatmul.bf16.gmra.mxu0 %v1277
  %v1345 = vpop.f32.mrf.mxu0
  %v1346 = vadd.f32 0.0, %v1345
  %v1347 = vpop.f32.mrf.mxu0
  %v1348 = vadd.f32 0.0, %v1347
  %1349 = vmatmul.bf16.gmra.mxu0 %v1280
  %v1350 = vpop.f32.mrf.mxu0
  %v1351 = vadd.f32 0.0, %v1350
  %v1352 = vpop.f32.mrf.mxu0
  %v1353 = vadd.f32 0.0, %v1352
  %1354 = vdwg.mxu0
  %v1355 = vmul.f32 %v1316, 0.17677669
  %v1356 = vmul.f32 %v1318, 0.17677669
  %v1357 = vmul.f32 %v1321, 0.17677669
  %v1358 = vmul.f32 %v1323, 0.17677669
  %v1359 = vmul.f32 %v1326, 0.17677669
  %v1360 = vmul.f32 %v1328, 0.17677669
  %v1361 = vmul.f32 %v1331, 0.17677669
  %v1362 = vmul.f32 %v1333, 0.17677669
  %v1363 = vmul.f32 %v1336, 0.17677669
  %v1364 = vmul.f32 %v1338, 0.17677669
  %v1365 = vmul.f32 %v1341, 0.17677669
  %v1366 = vmul.f32 %v1343, 0.17677669
  %v1367 = vmul.f32 %v1346, 0.17677669
  %v1368 = vmul.f32 %v1348, 0.17677669
  %v1369 = vmul.f32 %v1351, 0.17677669
  %v1370 = vmul.f32 %v1353, 0.17677669
  %v1371 = vadd.f32 %v1355, %v222
  %v1372 = vadd.f32 %v1356, %v223
  %v1373 = vadd.f32 %v1357, %v224
  %v1374 = vadd.f32 %v1358, %v225
  %v1375 = vadd.f32 %v1359, %v226
  %v1376 = vadd.f32 %v1360, %v227
  %v1377 = vadd.f32 %v1361, %v228
  %v1378 = vadd.f32 %v1362, %v229
  %v1379 = vadd.f32 %v1363, %v230
  %v1380 = vadd.f32 %v1364, %v231
  %v1381 = vadd.f32 %v1365, %v232
  %v1382 = vadd.f32 %v1366, %v233
  %v1383 = vadd.f32 %v1367, %v234
  %v1384 = vadd.f32 %v1368, %v235
  %v1385 = vadd.f32 %v1369, %v236
  %v1386 = vadd.f32 %v1370, %v237
  %s1387 = scalar_lea.vmem [#allocation2], 128
  %v1388 = vld [vmem:[%s1387] sm:$0xff]
  %v1389 = vld [vmem:[%s1387 + $0x8] sm:$0xff]
  %v1390 = vld [vmem:[%s1387 + $0x10] sm:$0xff]
  %v1391 = vld [vmem:[%s1387 + $0x18] sm:$0xff]
  %v1392 = vld [vmem:[%s1387 + $0x20] sm:$0xff]
  %v1393 = vld [vmem:[%s1387 + $0x28] sm:$0xff]
  %v1394 = vld [vmem:[%s1387 + $0x30] sm:$0xff]
  %v1395 = vld [vmem:[%s1387 + $0x38] sm:$0xff]
  %v1396 = vld [vmem:[%s1387 + $0x40] sm:$0xff]
  %v1397 = vld [vmem:[%s1387 + $0x48] sm:$0xff]
  %v1398 = vld [vmem:[%s1387 + $0x50] sm:$0xff]
  %v1399 = vld [vmem:[%s1387 + $0x58] sm:$0xff]
  %v1400 = vld [vmem:[%s1387 + $0x60] sm:$0xff]
  %v1401 = vld [vmem:[%s1387 + $0x68] sm:$0xff]
  %v1402 = vld [vmem:[%s1387 + $0x70] sm:$0xff]
  %v1403 = vld [vmem:[%s1387 + $0x78] sm:$0xff]
  %1404 = vmax.xlane.f32.xlu0 %v1371
  %v1405 = vpop.xlane.xlu0 %1404
  %1406 = vmax.xlane.f32.xlu0 %v1372
  %v1407 = vpop.xlane.xlu0 %1406
  %1408 = vmax.xlane.f32.xlu0 %v1373
  %v1409 = vpop.xlane.xlu0 %1408
  %1410 = vmax.xlane.f32.xlu0 %v1374
  %v1411 = vpop.xlane.xlu0 %1410
  %1412 = vmax.xlane.f32.xlu0 %v1375
  %v1413 = vpop.xlane.xlu0 %1412
  %1414 = vmax.xlane.f32.xlu0 %v1376
  %v1415 = vpop.xlane.xlu0 %1414
  %1416 = vmax.xlane.f32.xlu0 %v1377
  %v1417 = vpop.xlane.xlu0 %1416
  %1418 = vmax.xlane.f32.xlu0 %v1378
  %v1419 = vpop.xlane.xlu0 %1418
  %1420 = vmax.xlane.f32.xlu0 %v1379
  %v1421 = vpop.xlane.xlu0 %1420
  %1422 = vmax.xlane.f32.xlu0 %v1380
  %v1423 = vpop.xlane.xlu0 %1422
  %1424 = vmax.xlane.f32.xlu0 %v1381
  %v1425 = vpop.xlane.xlu0 %1424
  %1426 = vmax.xlane.f32.xlu0 %v1382
  %v1427 = vpop.xlane.xlu0 %1426
  %1428 = vmax.xlane.f32.xlu0 %v1383
  %v1429 = vpop.xlane.xlu0 %1428
  %1430 = vmax.xlane.f32.xlu0 %v1384
  %v1431 = vpop.xlane.xlu0 %1430
  %1432 = vmax.xlane.f32.xlu0 %v1385
  %v1433 = vpop.xlane.xlu0 %1432
  %1434 = vmax.xlane.f32.xlu0 %v1386
  %v1435 = vpop.xlane.xlu0 %1434
  %v1436 = vmax.f32 %v1388, %v1405
  %v1437 = vmax.f32 %v1389, %v1407
  %v1438 = vmax.f32 %v1390, %v1409
  %v1439 = vmax.f32 %v1391, %v1411
  %v1440 = vmax.f32 %v1392, %v1413
  %v1441 = vmax.f32 %v1393, %v1415
  %v1442 = vmax.f32 %v1394, %v1417
  %v1443 = vmax.f32 %v1395, %v1419
  %v1444 = vmax.f32 %v1396, %v1421
  %v1445 = vmax.f32 %v1397, %v1423
  %v1446 = vmax.f32 %v1398, %v1425
  %v1447 = vmax.f32 %v1399, %v1427
  %v1448 = vmax.f32 %v1400, %v1429
  %v1449 = vmax.f32 %v1401, %v1431
  %v1450 = vmax.f32 %v1402, %v1433
  %v1451 = vmax.f32 %v1403, %v1435
  %v1452 = vsub.f32 %v1388, %v1436
  %v1453 = vsub.f32 %v1389, %v1437
  %v1454 = vsub.f32 %v1390, %v1438
  %v1455 = vsub.f32 %v1391, %v1439
  %v1456 = vsub.f32 %v1392, %v1440
  %v1457 = vsub.f32 %v1393, %v1441
  %v1458 = vsub.f32 %v1394, %v1442
  %v1459 = vsub.f32 %v1395, %v1443
  %v1460 = vsub.f32 %v1396, %v1444
  %v1461 = vsub.f32 %v1397, %v1445
  %v1462 = vsub.f32 %v1398, %v1446
  %v1463 = vsub.f32 %v1399, %v1447
  %v1464 = vsub.f32 %v1400, %v1448
  %v1465 = vsub.f32 %v1401, %v1449
  %v1466 = vsub.f32 %v1402, %v1450
  %v1467 = vsub.f32 %v1403, %v1451
  %v1468 = vmul.f32 %v1452, 1.442695
  %v1469 = vpow.pop %v1468
  %v1470 = vmul.f32 %v1453, 1.442695
  %v1471 = vpow.pop %v1470
  %v1472 = vmul.f32 %v1454, 1.442695
  %v1473 = vpow.pop %v1472
  %v1474 = vmul.f32 %v1455, 1.442695
  %v1475 = vpow.pop %v1474
  %v1476 = vmul.f32 %v1456, 1.442695
  %v1477 = vpow.pop %v1476
  %v1478 = vmul.f32 %v1457, 1.442695
  %v1479 = vpow.pop %v1478
  %v1480 = vmul.f32 %v1458, 1.442695
  %v1481 = vpow.pop %v1480
  %v1482 = vmul.f32 %v1459, 1.442695
  %v1483 = vpow.pop %v1482
  %v1484 = vmul.f32 %v1460, 1.442695
  %v1485 = vpow.pop %v1484
  %v1486 = vmul.f32 %v1461, 1.442695
  %v1487 = vpow.pop %v1486
  %v1488 = vmul.f32 %v1462, 1.442695
  %v1489 = vpow.pop %v1488
  %v1490 = vmul.f32 %v1463, 1.442695
  %v1491 = vpow.pop %v1490
  %v1492 = vmul.f32 %v1464, 1.442695
  %v1493 = vpow.pop %v1492
  %v1494 = vmul.f32 %v1465, 1.442695
  %v1495 = vpow.pop %v1494
  %v1496 = vmul.f32 %v1466, 1.442695
  %v1497 = vpow.pop %v1496
  %v1498 = vmul.f32 %v1467, 1.442695
  %v1499 = vpow.pop %v1498
  %1501 = vset.pattern.permute.xlu0 0
  %1502 = vperm.xlu0 %1501, %v1436
  %v1503 = vpop.permute.xlu0 %1502
  %1506 = vset.pattern.permute.xlu0 0
  %1507 = vperm.xlu0 %1506, %v1437
  %v1508 = vpop.permute.xlu0 %1507
  %1511 = vset.pattern.permute.xlu0 0
  %1512 = vperm.xlu0 %1511, %v1438
  %v1513 = vpop.permute.xlu0 %1512
  %1516 = vset.pattern.permute.xlu0 0
  %1517 = vperm.xlu0 %1516, %v1439
  %v1518 = vpop.permute.xlu0 %1517
  %1521 = vset.pattern.permute.xlu0 0
  %1522 = vperm.xlu0 %1521, %v1440
  %v1523 = vpop.permute.xlu0 %1522
  %1526 = vset.pattern.permute.xlu0 0
  %1527 = vperm.xlu0 %1526, %v1441
  %v1528 = vpop.permute.xlu0 %1527
  %1531 = vset.pattern.permute.xlu0 0
  %1532 = vperm.xlu0 %1531, %v1442
  %v1533 = vpop.permute.xlu0 %1532
  %1536 = vset.pattern.permute.xlu0 0
  %1537 = vperm.xlu0 %1536, %v1443
  %v1538 = vpop.permute.xlu0 %1537
  %1541 = vset.pattern.permute.xlu0 0
  %1542 = vperm.xlu0 %1541, %v1444
  %v1543 = vpop.permute.xlu0 %1542
  %1546 = vset.pattern.permute.xlu0 0
  %1547 = vperm.xlu0 %1546, %v1445
  %v1548 = vpop.permute.xlu0 %1547
  %1551 = vset.pattern.permute.xlu0 0
  %1552 = vperm.xlu0 %1551, %v1446
  %v1553 = vpop.permute.xlu0 %1552
  %1556 = vset.pattern.permute.xlu0 0
  %1557 = vperm.xlu0 %1556, %v1447
  %v1558 = vpop.permute.xlu0 %1557
  %1561 = vset.pattern.permute.xlu0 0
  %1562 = vperm.xlu0 %1561, %v1448
  %v1563 = vpop.permute.xlu0 %1562
  %1566 = vset.pattern.permute.xlu0 0
  %1567 = vperm.xlu0 %1566, %v1449
  %v1568 = vpop.permute.xlu0 %1567
  %1571 = vset.pattern.permute.xlu0 0
  %1572 = vperm.xlu0 %1571, %v1450
  %v1573 = vpop.permute.xlu0 %1572
  %1576 = vset.pattern.permute.xlu0 0
  %1577 = vperm.xlu0 %1576, %v1451
  %v1578 = vpop.permute.xlu0 %1577
  %v1580 = vsub.f32 %v1371, %v1503
  %v1581 = vsub.f32 %v1372, %v1508
  %v1582 = vsub.f32 %v1373, %v1513
  %v1583 = vsub.f32 %v1374, %v1518
  %v1584 = vsub.f32 %v1375, %v1523
  %v1585 = vsub.f32 %v1376, %v1528
  %v1586 = vsub.f32 %v1377, %v1533
  %v1587 = vsub.f32 %v1378, %v1538
  %v1588 = vsub.f32 %v1379, %v1543
  %v1589 = vsub.f32 %v1380, %v1548
  %v1590 = vsub.f32 %v1381, %v1553
  %v1591 = vsub.f32 %v1382, %v1558
  %v1592 = vsub.f32 %v1383, %v1563
  %v1593 = vsub.f32 %v1384, %v1568
  %v1594 = vsub.f32 %v1385, %v1573
  %v1595 = vsub.f32 %v1386, %v1578
  %v1596 = vmul.f32 %v1580, 1.442695
  %v1597 = vpow.pop %v1596
  %v1598 = vmul.f32 %v1581, 1.442695
  %v1599 = vpow.pop %v1598
  %v1600 = vmul.f32 %v1582, 1.442695
  %v1601 = vpow.pop %v1600
  %v1602 = vmul.f32 %v1583, 1.442695
  %v1603 = vpow.pop %v1602
  %v1604 = vmul.f32 %v1584, 1.442695
  %v1605 = vpow.pop %v1604
  %v1606 = vmul.f32 %v1585, 1.442695
  %v1607 = vpow.pop %v1606
  %v1608 = vmul.f32 %v1586, 1.442695
  %v1609 = vpow.pop %v1608
  %v1610 = vmul.f32 %v1587, 1.442695
  %v1611 = vpow.pop %v1610
  %v1612 = vmul.f32 %v1588, 1.442695
  %v1613 = vpow.pop %v1612
  %v1614 = vmul.f32 %v1589, 1.442695
  %v1615 = vpow.pop %v1614
  %v1616 = vmul.f32 %v1590, 1.442695
  %v1617 = vpow.pop %v1616
  %v1618 = vmul.f32 %v1591, 1.442695
  %v1619 = vpow.pop %v1618
  %v1620 = vmul.f32 %v1592, 1.442695
  %v1621 = vpow.pop %v1620
  %v1622 = vmul.f32 %v1593, 1.442695
  %v1623 = vpow.pop %v1622
  %v1624 = vmul.f32 %v1594, 1.442695
  %v1625 = vpow.pop %v1624
  %v1626 = vmul.f32 %v1595, 1.442695
  %v1627 = vpow.pop %v1626
  %s1628 = scalar_lea.vmem [#allocation3], 128
  %v1629 = vld [vmem:[%s1628] sm:$0xff]
  %v1630 = vld [vmem:[%s1628 + $0x8] sm:$0xff]
  %v1631 = vld [vmem:[%s1628 + $0x10] sm:$0xff]
  %v1632 = vld [vmem:[%s1628 + $0x18] sm:$0xff]
  %v1633 = vld [vmem:[%s1628 + $0x20] sm:$0xff]
  %v1634 = vld [vmem:[%s1628 + $0x28] sm:$0xff]
  %v1635 = vld [vmem:[%s1628 + $0x30] sm:$0xff]
  %v1636 = vld [vmem:[%s1628 + $0x38] sm:$0xff]
  %v1637 = vld [vmem:[%s1628 + $0x40] sm:$0xff]
  %v1638 = vld [vmem:[%s1628 + $0x48] sm:$0xff]
  %v1639 = vld [vmem:[%s1628 + $0x50] sm:$0xff]
  %v1640 = vld [vmem:[%s1628 + $0x58] sm:$0xff]
  %v1641 = vld [vmem:[%s1628 + $0x60] sm:$0xff]
  %v1642 = vld [vmem:[%s1628 + $0x68] sm:$0xff]
  %v1643 = vld [vmem:[%s1628 + $0x70] sm:$0xff]
  %v1644 = vld [vmem:[%s1628 + $0x78] sm:$0xff]
  %v1645 = vmul.f32 %v1469, %v1629
  %v1646 = vmul.f32 %v1471, %v1630
  %v1647 = vmul.f32 %v1473, %v1631
  %v1648 = vmul.f32 %v1475, %v1632
  %v1649 = vmul.f32 %v1477, %v1633
  %v1650 = vmul.f32 %v1479, %v1634
  %v1651 = vmul.f32 %v1481, %v1635
  %v1652 = vmul.f32 %v1483, %v1636
  %v1653 = vmul.f32 %v1485, %v1637
  %v1654 = vmul.f32 %v1487, %v1638
  %v1655 = vmul.f32 %v1489, %v1639
  %v1656 = vmul.f32 %v1491, %v1640
  %v1657 = vmul.f32 %v1493, %v1641
  %v1658 = vmul.f32 %v1495, %v1642
  %v1659 = vmul.f32 %v1497, %v1643
  %v1660 = vmul.f32 %v1499, %v1644
  %1661 = vadd.xlane.f32.xlu0 %v1597
  %v1662 = vpop.xlane.xlu0 %1661
  %1663 = vadd.xlane.f32.xlu0 %v1599
  %v1664 = vpop.xlane.xlu0 %1663
  %1665 = vadd.xlane.f32.xlu0 %v1601
  %v1666 = vpop.xlane.xlu0 %1665
  %1667 = vadd.xlane.f32.xlu0 %v1603
  %v1668 = vpop.xlane.xlu0 %1667
  %1669 = vadd.xlane.f32.xlu0 %v1605
  %v1670 = vpop.xlane.xlu0 %1669
  %1671 = vadd.xlane.f32.xlu0 %v1607
  %v1672 = vpop.xlane.xlu0 %1671
  %1673 = vadd.xlane.f32.xlu0 %v1609
  %v1674 = vpop.xlane.xlu0 %1673
  %1675 = vadd.xlane.f32.xlu0 %v1611
  %v1676 = vpop.xlane.xlu0 %1675
  %1677 = vadd.xlane.f32.xlu0 %v1613
  %v1678 = vpop.xlane.xlu0 %1677
  %1679 = vadd.xlane.f32.xlu0 %v1615
  %v1680 = vpop.xlane.xlu0 %1679
  %1681 = vadd.xlane.f32.xlu0 %v1617
  %v1682 = vpop.xlane.xlu0 %1681
  %1683 = vadd.xlane.f32.xlu0 %v1619
  %v1684 = vpop.xlane.xlu0 %1683
  %1685 = vadd.xlane.f32.xlu0 %v1621
  %v1686 = vpop.xlane.xlu0 %1685
  %1687 = vadd.xlane.f32.xlu0 %v1623
  %v1688 = vpop.xlane.xlu0 %1687
  %1689 = vadd.xlane.f32.xlu0 %v1625
  %v1690 = vpop.xlane.xlu0 %1689
  %1691 = vadd.xlane.f32.xlu0 %v1627
  %v1692 = vpop.xlane.xlu0 %1691
  %v1693 = vadd.f32 %v1645, %v1662
  %v1694 = vadd.f32 %v1646, %v1664
  %v1695 = vadd.f32 %v1647, %v1666
  %v1696 = vadd.f32 %v1648, %v1668
  %v1697 = vadd.f32 %v1649, %v1670
  %v1698 = vadd.f32 %v1650, %v1672
  %v1699 = vadd.f32 %v1651, %v1674
  %v1700 = vadd.f32 %v1652, %v1676
  %v1701 = vadd.f32 %v1653, %v1678
  %v1702 = vadd.f32 %v1654, %v1680
  %v1703 = vadd.f32 %v1655, %v1682
  %v1704 = vadd.f32 %v1656, %v1684
  %v1705 = vadd.f32 %v1657, %v1686
  %v1706 = vadd.f32 %v1658, %v1688
  %v1707 = vadd.f32 %v1659, %v1690
  %v1708 = vadd.f32 %v1660, %v1692
  %1709 = vst.msk [vmem:[%s1628] sm:$0xff] %vm816, %v1693
  %1710 = vst.msk [vmem:[%s1628 + $0x8] sm:$0xff] %vm816, %v1694
  %1711 = vst.msk [vmem:[%s1628 + $0x10] sm:$0xff] %vm816, %v1695
  %1712 = vst.msk [vmem:[%s1628 + $0x18] sm:$0xff] %vm816, %v1696
  %1713 = vst.msk [vmem:[%s1628 + $0x20] sm:$0xff] %vm816, %v1697
  %1714 = vst.msk [vmem:[%s1628 + $0x28] sm:$0xff] %vm816, %v1698
  %1715 = vst.msk [vmem:[%s1628 + $0x30] sm:$0xff] %vm816, %v1699
  %1716 = vst.msk [vmem:[%s1628 + $0x38] sm:$0xff] %vm816, %v1700
  %1717 = vst.msk [vmem:[%s1628 + $0x40] sm:$0xff] %vm816, %v1701
  %1718 = vst.msk [vmem:[%s1628 + $0x48] sm:$0xff] %vm816, %v1702
  %1719 = vst.msk [vmem:[%s1628 + $0x50] sm:$0xff] %vm816, %v1703
  %1720 = vst.msk [vmem:[%s1628 + $0x58] sm:$0xff] %vm816, %v1704
  %1721 = vst.msk [vmem:[%s1628 + $0x60] sm:$0xff] %vm816, %v1705
  %1722 = vst.msk [vmem:[%s1628 + $0x68] sm:$0xff] %vm816, %v1706
  %1723 = vst.msk [vmem:[%s1628 + $0x70] sm:$0xff] %vm816, %v1707
  %1724 = vst.msk [vmem:[%s1628 + $0x78] sm:$0xff] %vm816, %v1708
  %v1725 = vld [vmem:[#allocation4] sm:$0xff]
  %v1726 = vld [vmem:[#allocation4 + $0x8] sm:$0xff]
  %v1727 = vld [vmem:[#allocation4 + $0x10] sm:$0xff]
  %v1728 = vld [vmem:[#allocation4 + $0x18] sm:$0xff]
  %v1729 = vld [vmem:[#allocation4 + $0x20] sm:$0xff]
  %v1730 = vld [vmem:[#allocation4 + $0x28] sm:$0xff]
  %v1731 = vld [vmem:[#allocation4 + $0x30] sm:$0xff]
  %v1732 = vld [vmem:[#allocation4 + $0x38] sm:$0xff]
  %v1733 = vld [vmem:[#allocation4 + $0x40] sm:$0xff]
  %v1734 = vld [vmem:[#allocation4 + $0x48] sm:$0xff]
  %v1735 = vld [vmem:[#allocation4 + $0x50] sm:$0xff]
  %v1736 = vld [vmem:[#allocation4 + $0x58] sm:$0xff]
  %v1737 = vld [vmem:[#allocation4 + $0x60] sm:$0xff]
  %v1738 = vld [vmem:[#allocation4 + $0x68] sm:$0xff]
  %v1739 = vld [vmem:[#allocation4 + $0x70] sm:$0xff]
  %v1740 = vld [vmem:[#allocation4 + $0x78] sm:$0xff]
  %1742 = vset.pattern.permute.xlu0 0
  %1743 = vperm.xlu0 %1742, %v1469
  %v1744 = vpop.permute.xlu0 %1743
  %1747 = vset.pattern.permute.xlu0 0
  %1748 = vperm.xlu0 %1747, %v1471
  %v1749 = vpop.permute.xlu0 %1748
  %1752 = vset.pattern.permute.xlu0 0
  %1753 = vperm.xlu0 %1752, %v1473
  %v1754 = vpop.permute.xlu0 %1753
  %1757 = vset.pattern.permute.xlu0 0
  %1758 = vperm.xlu0 %1757, %v1475
  %v1759 = vpop.permute.xlu0 %1758
  %1762 = vset.pattern.permute.xlu0 0
  %1763 = vperm.xlu0 %1762, %v1477
  %v1764 = vpop.permute.xlu0 %1763
  %1767 = vset.pattern.permute.xlu0 0
  %1768 = vperm.xlu0 %1767, %v1479
  %v1769 = vpop.permute.xlu0 %1768
  %1772 = vset.pattern.permute.xlu0 0
  %1773 = vperm.xlu0 %1772, %v1481
  %v1774 = vpop.permute.xlu0 %1773
  %1777 = vset.pattern.permute.xlu0 0
  %1778 = vperm.xlu0 %1777, %v1483
  %v1779 = vpop.permute.xlu0 %1778
  %1782 = vset.pattern.permute.xlu0 0
  %1783 = vperm.xlu0 %1782, %v1485
  %v1784 = vpop.permute.xlu0 %1783
  %1787 = vset.pattern.permute.xlu0 0
  %1788 = vperm.xlu0 %1787, %v1487
  %v1789 = vpop.permute.xlu0 %1788
  %1792 = vset.pattern.permute.xlu0 0
  %1793 = vperm.xlu0 %1792, %v1489
  %v1794 = vpop.permute.xlu0 %1793
  %1797 = vset.pattern.permute.xlu0 0
  %1798 = vperm.xlu0 %1797, %v1491
  %v1799 = vpop.permute.xlu0 %1798
  %1802 = vset.pattern.permute.xlu0 0
  %1803 = vperm.xlu0 %1802, %v1493
  %v1804 = vpop.permute.xlu0 %1803
  %1807 = vset.pattern.permute.xlu0 0
  %1808 = vperm.xlu0 %1807, %v1495
  %v1809 = vpop.permute.xlu0 %1808
  %1812 = vset.pattern.permute.xlu0 0
  %1813 = vperm.xlu0 %1812, %v1497
  %v1814 = vpop.permute.xlu0 %1813
  %1817 = vset.pattern.permute.xlu0 0
  %1818 = vperm.xlu0 %1817, %v1499
  %v1819 = vpop.permute.xlu0 %1818
  %v1821 = vmul.f32 %v1744, %v1725
  %v1822 = vmul.f32 %v1749, %v1726
  %v1823 = vmul.f32 %v1754, %v1727
  %v1824 = vmul.f32 %v1759, %v1728
  %v1825 = vmul.f32 %v1764, %v1729
  %v1826 = vmul.f32 %v1769, %v1730
  %v1827 = vmul.f32 %v1774, %v1731
  %v1828 = vmul.f32 %v1779, %v1732
  %v1829 = vmul.f32 %v1784, %v1733
  %v1830 = vmul.f32 %v1789, %v1734
  %v1831 = vmul.f32 %v1794, %v1735
  %v1832 = vmul.f32 %v1799, %v1736
  %v1833 = vmul.f32 %v1804, %v1737
  %v1834 = vmul.f32 %v1809, %v1738
  %v1835 = vmul.f32 %v1814, %v1739
  %v1836 = vmul.f32 %v1819, %v1740
  %v1837 = vpack.c.bf16 %v1599, %v1597
  %v1838 = vpack.c.bf16 %v1603, %v1601
  %v1839 = vpack.c.bf16 %v1607, %v1605
  %v1840 = vpack.c.bf16 %v1611, %v1609
  %v1841 = vpack.c.bf16 %v1615, %v1613
  %v1842 = vpack.c.bf16 %v1619, %v1617
  %v1843 = vpack.c.bf16 %v1623, %v1621
  %v1844 = vpack.c.bf16 %v1627, %v1625
  %v1861 = vunpack.c.l.b16 %v1130
  %v1862 = vunpack.c.l.b16 %v1131
  %v1863 = vunpack.c.l.b16 %v1132
  %v1864 = vunpack.c.l.b16 %v1133
  %v1865 = vunpack.c.l.b16 %v1134
  %v1866 = vunpack.c.l.b16 %v1135
  %v1867 = vunpack.c.l.b16 %v1136
  %v1868 = vunpack.c.l.b16 %v1137
  %v1869 = vunpack.c.l.b16 %v1138
  %v1870 = vunpack.c.l.b16 %v1139
  %v1871 = vunpack.c.l.b16 %v1140
  %v1872 = vunpack.c.l.b16 %v1141
  %v1873 = vunpack.c.l.b16 %v1142
  %v1874 = vunpack.c.l.b16 %v1143
  %v1875 = vunpack.c.l.b16 %v1144
  %v1876 = vunpack.c.l.b16 %v1145
  %v1877 = vpack.c.b16 %v1862, %v1861
  %v1878 = vpack.c.b16 %v1864, %v1863
  %v1879 = vpack.c.b16 %v1866, %v1865
  %v1880 = vpack.c.b16 %v1868, %v1867
  %v1881 = vpack.c.b16 %v1870, %v1869
  %v1882 = vpack.c.b16 %v1872, %v1871
  %v1883 = vpack.c.b16 %v1874, %v1873
  %v1884 = vpack.c.b16 %v1876, %v1875
  %1885 = vrot.lane.b32.xlu0 %v1877, 96
  %v1886 = vpop.permute.xlu0 %1885
  %1887 = vrot.lane.b32.xlu0 %v1878, 96
  %v1888 = vpop.permute.xlu0 %1887
  %1889 = vrot.lane.b32.xlu0 %v1879, 96
  %v1890 = vpop.permute.xlu0 %1889
  %1891 = vrot.lane.b32.xlu0 %v1880, 96
  %v1892 = vpop.permute.xlu0 %1891
  %1893 = vrot.lane.b32.xlu0 %v1881, 96
  %v1894 = vpop.permute.xlu0 %1893
  %1895 = vrot.lane.b32.xlu0 %v1882, 96
  %v1896 = vpop.permute.xlu0 %1895
  %1897 = vrot.lane.b32.xlu0 %v1883, 96
  %v1898 = vpop.permute.xlu0 %1897
  %1899 = vrot.lane.b32.xlu0 %v1884, 96
  %v1900 = vpop.permute.xlu0 %1899
  %1909 = vmatpush.bf16.msra.mxu0 %v1900
  %1910 = vmatpush.bf16.msra.mxu0 %v1898
  %1911 = vmatpush.bf16.msra.mxu0 %v1896
  %1912 = vmatpush.bf16.msra.mxu0 %v1894
  %1913 = vmatpush.bf16.msra.mxu0 %v1892
  %1914 = vmatpush.bf16.msra.mxu0 %v1890
  %1915 = vmatpush.bf16.msra.mxu0 %v1888
  %1916 = vmatpush.bf16.msra.mxu0 %v1886
  %1917 = vmatmul.bf16.gmra.mxu0 %v1837
  %v1918 = vpop.f32.mrf.mxu0
  %v1919 = vadd.f32 0.0, %v1918
  %v1920 = vpop.f32.mrf.mxu0
  %v1921 = vadd.f32 0.0, %v1920
  %1922 = vmatmul.bf16.gmra.mxu0 %v1838
  %v1923 = vpop.f32.mrf.mxu0
  %v1924 = vadd.f32 0.0, %v1923
  %v1925 = vpop.f32.mrf.mxu0
  %v1926 = vadd.f32 0.0, %v1925
  %1927 = vmatmul.bf16.gmra.mxu0 %v1839
  %v1928 = vpop.f32.mrf.mxu0
  %v1929 = vadd.f32 0.0, %v1928
  %v1930 = vpop.f32.mrf.mxu0
  %v1931 = vadd.f32 0.0, %v1930
  %1932 = vmatmul.bf16.gmra.mxu0 %v1840
  %v1933 = vpop.f32.mrf.mxu0
  %v1934 = vadd.f32 0.0, %v1933
  %v1935 = vpop.f32.mrf.mxu0
  %v1936 = vadd.f32 0.0, %v1935
  %1937 = vmatmul.bf16.gmra.mxu0 %v1841
  %v1938 = vpop.f32.mrf.mxu0
  %v1939 = vadd.f32 0.0, %v1938
  %v1940 = vpop.f32.mrf.mxu0
  %v1941 = vadd.f32 0.0, %v1940
  %1942 = vmatmul.bf16.gmra.mxu0 %v1842
  %v1943 = vpop.f32.mrf.mxu0
  %v1944 = vadd.f32 0.0, %v1943
  %v1945 = vpop.f32.mrf.mxu0
  %v1946 = vadd.f32 0.0, %v1945
  %1947 = vmatmul.bf16.gmra.mxu0 %v1843
  %v1948 = vpop.f32.mrf.mxu0
  %v1949 = vadd.f32 0.0, %v1948
  %v1950 = vpop.f32.mrf.mxu0
  %v1951 = vadd.f32 0.0, %v1950
  %1952 = vmatmul.bf16.gmra.mxu0 %v1844
  %v1953 = vpop.f32.mrf.mxu0
  %v1954 = vadd.f32 0.0, %v1953
  %v1955 = vpop.f32.mrf.mxu0
  %v1956 = vadd.f32 0.0, %v1955
  %1957 = vdwg.mxu0
  %1974 = vrot.lane.b32.xlu0 %v1919, 32
  %v1975 = vpop.permute.xlu0 %1974
  %1976 = vrot.lane.b32.xlu0 %v1921, 32
  %v1977 = vpop.permute.xlu0 %1976
  %1978 = vrot.lane.b32.xlu0 %v1924, 32
  %v1979 = vpop.permute.xlu0 %1978
  %1980 = vrot.lane.b32.xlu0 %v1926, 32
  %v1981 = vpop.permute.xlu0 %1980
  %1982 = vrot.lane.b32.xlu0 %v1929, 32
  %v1983 = vpop.permute.xlu0 %1982
  %1984 = vrot.lane.b32.xlu0 %v1931, 32
  %v1985 = vpop.permute.xlu0 %1984
  %1986 = vrot.lane.b32.xlu0 %v1934, 32
  %v1987 = vpop.permute.xlu0 %1986
  %1988 = vrot.lane.b32.xlu0 %v1936, 32
  %v1989 = vpop.permute.xlu0 %1988
  %1990 = vrot.lane.b32.xlu0 %v1939, 32
  %v1991 = vpop.permute.xlu0 %1990
  %1992 = vrot.lane.b32.xlu0 %v1941, 32
  %v1993 = vpop.permute.xlu0 %1992
  %1994 = vrot.lane.b32.xlu0 %v1944, 32
  %v1995 = vpop.permute.xlu0 %1994
  %1996 = vrot.lane.b32.xlu0 %v1946, 32
  %v1997 = vpop.permute.xlu0 %1996
  %1998 = vrot.lane.b32.xlu0 %v1949, 32
  %v1999 = vpop.permute.xlu0 %1998
  %2000 = vrot.lane.b32.xlu0 %v1951, 32
  %v2001 = vpop.permute.xlu0 %2000
  %2002 = vrot.lane.b32.xlu0 %v1954, 32
  %v2003 = vpop.permute.xlu0 %2002
  %2004 = vrot.lane.b32.xlu0 %v1956, 32
  %v2005 = vpop.permute.xlu0 %2004
  %v2022 = vadd.f32 %v1821, %v1975
  %v2023 = vadd.f32 %v1822, %v1977
  %v2024 = vadd.f32 %v1823, %v1979
  %v2025 = vadd.f32 %v1824, %v1981
  %v2026 = vadd.f32 %v1825, %v1983
  %v2027 = vadd.f32 %v1826, %v1985
  %v2028 = vadd.f32 %v1827, %v1987
  %v2029 = vadd.f32 %v1828, %v1989
  %v2030 = vadd.f32 %v1829, %v1991
  %v2031 = vadd.f32 %v1830, %v1993
  %v2032 = vadd.f32 %v1831, %v1995
  %v2033 = vadd.f32 %v1832, %v1997
  %v2034 = vadd.f32 %v1833, %v1999
  %v2035 = vadd.f32 %v1834, %v2001
  %v2036 = vadd.f32 %v1835, %v2003
  %v2037 = vadd.f32 %v1836, %v2005
  %vm2038 = vcmask 523520
  %2039 = vst.msk [vmem:[#allocation4] sm:$0xff] %vm2038, %v2022
  %2040 = vst.msk [vmem:[#allocation4 + $0x8] sm:$0xff] %vm2038, %v2023
  %2041 = vst.msk [vmem:[#allocation4 + $0x10] sm:$0xff] %vm2038, %v2024
  %2042 = vst.msk [vmem:[#allocation4 + $0x18] sm:$0xff] %vm2038, %v2025
  %2043 = vst.msk [vmem:[#allocation4 + $0x20] sm:$0xff] %vm2038, %v2026
  %2044 = vst.msk [vmem:[#allocation4 + $0x28] sm:$0xff] %vm2038, %v2027
  %2045 = vst.msk [vmem:[#allocation4 + $0x30] sm:$0xff] %vm2038, %v2028
  %2046 = vst.msk [vmem:[#allocation4 + $0x38] sm:$0xff] %vm2038, %v2029
  %2047 = vst.msk [vmem:[#allocation4 + $0x40] sm:$0xff] %vm2038, %v2030
  %2048 = vst.msk [vmem:[#allocation4 + $0x48] sm:$0xff] %vm2038, %v2031
  %2049 = vst.msk [vmem:[#allocation4 + $0x50] sm:$0xff] %vm2038, %v2032
  %2050 = vst.msk [vmem:[#allocation4 + $0x58] sm:$0xff] %vm2038, %v2033
  %2051 = vst.msk [vmem:[#allocation4 + $0x60] sm:$0xff] %vm2038, %v2034
  %2052 = vst.msk [vmem:[#allocation4 + $0x68] sm:$0xff] %vm2038, %v2035
  %2053 = vst.msk [vmem:[#allocation4 + $0x70] sm:$0xff] %vm2038, %v2036
  %2054 = vst.msk [vmem:[#allocation4 + $0x78] sm:$0xff] %vm2038, %v2037
  %2055 = vst.msk [vmem:[%s1387] sm:$0xff] %vm816, %v1436
  %2056 = vst.msk [vmem:[%s1387 + $0x8] sm:$0xff] %vm816, %v1437
  %2057 = vst.msk [vmem:[%s1387 + $0x10] sm:$0xff] %vm816, %v1438
  %2058 = vst.msk [vmem:[%s1387 + $0x18] sm:$0xff] %vm816, %v1439
  %2059 = vst.msk [vmem:[%s1387 + $0x20] sm:$0xff] %vm816, %v1440
  %2060 = vst.msk [vmem:[%s1387 + $0x28] sm:$0xff] %vm816, %v1441
  %2061 = vst.msk [vmem:[%s1387 + $0x30] sm:$0xff] %vm816, %v1442
  %2062 = vst.msk [vmem:[%s1387 + $0x38] sm:$0xff] %vm816, %v1443
  %2063 = vst.msk [vmem:[%s1387 + $0x40] sm:$0xff] %vm816, %v1444
  %2064 = vst.msk [vmem:[%s1387 + $0x48] sm:$0xff] %vm816, %v1445
  %2065 = vst.msk [vmem:[%s1387 + $0x50] sm:$0xff] %vm816, %v1446
  %2066 = vst.msk [vmem:[%s1387 + $0x58] sm:$0xff] %vm816, %v1447
  %2067 = vst.msk [vmem:[%s1387 + $0x60] sm:$0xff] %vm816, %v1448
  %2068 = vst.msk [vmem:[%s1387 + $0x68] sm:$0xff] %vm816, %v1449
  %2069 = vst.msk [vmem:[%s1387 + $0x70] sm:$0xff] %vm816, %v1450
  %2070 = vst.msk [vmem:[%s1387 + $0x78] sm:$0xff] %vm816, %v1451
  // Predicated region
  $region26: #{sparse_sdf_vae_forward.22} parent=0 // pred_check
    %p2071 = pneg %p20
  $region27: #{sparse_sdf_vae_forward.22} parent=0 // pred_check_branch
    %2073 = sbr.rel (%p2071) target = $region29
  $region28: #{sparse_sdf_vae_forward.22} parent=0 // pred_region
    %v2074 = vld [vmem:[#allocation4] sm:$0xff]
    %v2075 = vld [vmem:[#allocation4 + $0x8] sm:$0xff]
    %v2076 = vld [vmem:[#allocation4 + $0x10] sm:$0xff]
    %v2077 = vld [vmem:[#allocation4 + $0x18] sm:$0xff]
    %v2078 = vld [vmem:[#allocation4 + $0x20] sm:$0xff]
    %v2079 = vld [vmem:[#allocation4 + $0x28] sm:$0xff]
    %v2080 = vld [vmem:[#allocation4 + $0x30] sm:$0xff]
    %v2081 = vld [vmem:[#allocation4 + $0x38] sm:$0xff]
    %v2082 = vld [vmem:[#allocation4 + $0x40] sm:$0xff]
    %v2083 = vld [vmem:[#allocation4 + $0x48] sm:$0xff]
    %v2084 = vld [vmem:[#allocation4 + $0x50] sm:$0xff]
    %v2085 = vld [vmem:[#allocation4 + $0x58] sm:$0xff]
    %v2086 = vld [vmem:[#allocation4 + $0x60] sm:$0xff]
    %v2087 = vld [vmem:[#allocation4 + $0x68] sm:$0xff]
    %v2088 = vld [vmem:[#allocation4 + $0x70] sm:$0xff]
    %v2089 = vld [vmem:[#allocation4 + $0x78] sm:$0xff]
    %v2090 = vld [vmem:[#allocation3] sm:$0xff]
    %v2091 = vld [vmem:[#allocation3 + $0x8] sm:$0xff]
    %v2092 = vld [vmem:[#allocation3 + $0x10] sm:$0xff]
    %v2093 = vld [vmem:[#allocation3 + $0x18] sm:$0xff]
    %v2094 = vld [vmem:[#allocation3 + $0x20] sm:$0xff]
    %v2095 = vld [vmem:[#allocation3 + $0x28] sm:$0xff]
    %v2096 = vld [vmem:[#allocation3 + $0x30] sm:$0xff]
    %v2097 = vld [vmem:[#allocation3 + $0x38] sm:$0xff]
    %v2098 = vld [vmem:[#allocation3 + $0x40] sm:$0xff]
    %v2099 = vld [vmem:[#allocation3 + $0x48] sm:$0xff]
    %v2100 = vld [vmem:[#allocation3 + $0x50] sm:$0xff]
    %v2101 = vld [vmem:[#allocation3 + $0x58] sm:$0xff]
    %v2102 = vld [vmem:[#allocation3 + $0x60] sm:$0xff]
    %v2103 = vld [vmem:[#allocation3 + $0x68] sm:$0xff]
    %v2104 = vld [vmem:[#allocation3 + $0x70] sm:$0xff]
    %v2105 = vld [vmem:[#allocation3 + $0x78] sm:$0xff]
    %v2106 = vrcp.pop %v2090
    %v2107 = vrcp.pop %v2091
    %v2108 = vrcp.pop %v2092
    %v2109 = vrcp.pop %v2093
    %v2110 = vrcp.pop %v2094
    %v2111 = vrcp.pop %v2095
    %v2112 = vrcp.pop %v2096
    %v2113 = vrcp.pop %v2097
    %v2114 = vrcp.pop %v2098
    %v2115 = vrcp.pop %v2099
    %v2116 = vrcp.pop %v2100
    %v2117 = vrcp.pop %v2101
    %v2118 = vrcp.pop %v2102
    %v2119 = vrcp.pop %v2103
    %v2120 = vrcp.pop %v2104
    %v2121 = vrcp.pop %v2105
    %2123 = vset.pattern.permute.xlu0 0
    %2124 = vperm.xlu0 %2123, %v2106
    %v2125 = vpop.permute.xlu0 %2124
    %2128 = vset.pattern.permute.xlu0 0
    %2129 = vperm.xlu0 %2128, %v2107
    %v2130 = vpop.permute.xlu0 %2129
    %2133 = vset.pattern.permute.xlu0 0
    %2134 = vperm.xlu0 %2133, %v2108
    %v2135 = vpop.permute.xlu0 %2134
    %2138 = vset.pattern.permute.xlu0 0
    %2139 = vperm.xlu0 %2138, %v2109
    %v2140 = vpop.permute.xlu0 %2139
    %2143 = vset.pattern.permute.xlu0 0
    %2144 = vperm.xlu0 %2143, %v2110
    %v2145 = vpop.permute.xlu0 %2144
    %2148 = vset.pattern.permute.xlu0 0
    %2149 = vperm.xlu0 %2148, %v2111
    %v2150 = vpop.permute.xlu0 %2149
    %2153 = vset.pattern.permute.xlu0 0
    %2154 = vperm.xlu0 %2153, %v2112
    %v2155 = vpop.permute.xlu0 %2154
    %2158 = vset.pattern.permute.xlu0 0
    %2159 = vperm.xlu0 %2158, %v2113
    %v2160 = vpop.permute.xlu0 %2159
    %2163 = vset.pattern.permute.xlu0 0
    %2164 = vperm.xlu0 %2163, %v2114
    %v2165 = vpop.permute.xlu0 %2164
    %2168 = vset.pattern.permute.xlu0 0
    %2169 = vperm.xlu0 %2168, %v2115
    %v2170 = vpop.permute.xlu0 %2169
    %2173 = vset.pattern.permute.xlu0 0
    %2174 = vperm.xlu0 %2173, %v2116
    %v2175 = vpop.permute.xlu0 %2174
    %2178 = vset.pattern.permute.xlu0 0
    %2179 = vperm.xlu0 %2178, %v2117
    %v2180 = vpop.permute.xlu0 %2179
    %2183 = vset.pattern.permute.xlu0 0
    %2184 = vperm.xlu0 %2183, %v2118
    %v2185 = vpop.permute.xlu0 %2184
    %2188 = vset.pattern.permute.xlu0 0
    %2189 = vperm.xlu0 %2188, %v2119
    %v2190 = vpop.permute.xlu0 %2189
    %2193 = vset.pattern.permute.xlu0 0
    %2194 = vperm.xlu0 %2193, %v2120
    %v2195 = vpop.permute.xlu0 %2194
    %2198 = vset.pattern.permute.xlu0 0
    %2199 = vperm.xlu0 %2198, %v2121
    %v2200 = vpop.permute.xlu0 %2199
    %v2202 = vmul.f32 %v2074, %v2125
    %v2203 = vmul.f32 %v2075, %v2130
    %v2204 = vmul.f32 %v2076, %v2135
    %v2205 = vmul.f32 %v2077, %v2140
    %v2206 = vmul.f32 %v2078, %v2145
    %v2207 = vmul.f32 %v2079, %v2150
    %v2208 = vmul.f32 %v2080, %v2155
    %v2209 = vmul.f32 %v2081, %v2160
    %v2210 = vmul.f32 %v2082, %v2165
    %v2211 = vmul.f32 %v2083, %v2170
    %v2212 = vmul.f32 %v2084, %v2175
    %v2213 = vmul.f32 %v2085, %v2180
    %v2214 = vmul.f32 %v2086, %v2185
    %v2215 = vmul.f32 %v2087, %v2190
    %v2216 = vmul.f32 %v2088, %v2195
    %v2217 = vmul.f32 %v2089, %v2200
    %2218 = vst.msk [vmem:[#allocation4] sm:$0xff] %vm366, %v2202
    %2219 = vst.msk [vmem:[#allocation4 + $0x8] sm:$0xff] %vm366, %v2203
    %2220 = vst.msk [vmem:[#allocation4 + $0x10] sm:$0xff] %vm366, %v2204
    %2221 = vst.msk [vmem:[#allocation4 + $0x18] sm:$0xff] %vm366, %v2205
    %2222 = vst.msk [vmem:[#allocation4 + $0x20] sm:$0xff] %vm366, %v2206
    %2223 = vst.msk [vmem:[#allocation4 + $0x28] sm:$0xff] %vm366, %v2207
    %2224 = vst.msk [vmem:[#allocation4 + $0x30] sm:$0xff] %vm366, %v2208
    %2225 = vst.msk [vmem:[#allocation4 + $0x38] sm:$0xff] %vm366, %v2209
    %2226 = vst.msk [vmem:[#allocation4 + $0x40] sm:$0xff] %vm366, %v2210
    %2227 = vst.msk [vmem:[#allocation4 + $0x48] sm:$0xff] %vm366, %v2211
    %2228 = vst.msk [vmem:[#allocation4 + $0x50] sm:$0xff] %vm366, %v2212
    %2229 = vst.msk [vmem:[#allocation4 + $0x58] sm:$0xff] %vm366, %v2213
    %2230 = vst.msk [vmem:[#allocation4 + $0x60] sm:$0xff] %vm366, %v2214
    %2231 = vst.msk [vmem:[#allocation4 + $0x68] sm:$0xff] %vm366, %v2215
    %2232 = vst.msk [vmem:[#allocation4 + $0x70] sm:$0xff] %vm366, %v2216
    %2233 = vst.msk [vmem:[#allocation4 + $0x78] sm:$0xff] %vm366, %v2217
    %v2234 = vld [vmem:[#allocation4] sm:$0xff]
    %v2235 = vld [vmem:[#allocation4 + $0x8] sm:$0xff]
    %v2236 = vld [vmem:[#allocation4 + $0x10] sm:$0xff]
    %v2237 = vld [vmem:[#allocation4 + $0x18] sm:$0xff]
    %v2238 = vld [vmem:[#allocation4 + $0x20] sm:$0xff]
    %v2239 = vld [vmem:[#allocation4 + $0x28] sm:$0xff]
    %v2240 = vld [vmem:[#allocation4 + $0x30] sm:$0xff]
    %v2241 = vld [vmem:[#allocation4 + $0x38] sm:$0xff]
    %v2242 = vld [vmem:[#allocation4 + $0x40] sm:$0xff]
    %v2243 = vld [vmem:[#allocation4 + $0x48] sm:$0xff]
    %v2244 = vld [vmem:[#allocation4 + $0x50] sm:$0xff]
    %v2245 = vld [vmem:[#allocation4 + $0x58] sm:$0xff]
    %v2246 = vld [vmem:[#allocation4 + $0x60] sm:$0xff]
    %v2247 = vld [vmem:[#allocation4 + $0x68] sm:$0xff]
    %v2248 = vld [vmem:[#allocation4 + $0x70] sm:$0xff]
    %v2249 = vld [vmem:[#allocation4 + $0x78] sm:$0xff]
    %v2250 = vld [vmem:[%s1628] sm:$0xff]
    %v2251 = vld [vmem:[%s1628 + $0x8] sm:$0xff]
    %v2252 = vld [vmem:[%s1628 + $0x10] sm:$0xff]
    %v2253 = vld [vmem:[%s1628 + $0x18] sm:$0xff]
    %v2254 = vld [vmem:[%s1628 + $0x20] sm:$0xff]
    %v2255 = vld [vmem:[%s1628 + $0x28] sm:$0xff]
    %v2256 = vld [vmem:[%s1628 + $0x30] sm:$0xff]
    %v2257 = vld [vmem:[%s1628 + $0x38] sm:$0xff]
    %v2258 = vld [vmem:[%s1628 + $0x40] sm:$0xff]
    %v2259 = vld [vmem:[%s1628 + $0x48] sm:$0xff]
    %v2260 = vld [vmem:[%s1628 + $0x50] sm:$0xff]
    %v2261 = vld [vmem:[%s1628 + $0x58] sm:$0xff]
    %v2262 = vld [vmem:[%s1628 + $0x60] sm:$0xff]
    %v2263 = vld [vmem:[%s1628 + $0x68] sm:$0xff]
    %v2264 = vld [vmem:[%s1628 + $0x70] sm:$0xff]
    %v2265 = vld [vmem:[%s1628 + $0x78] sm:$0xff]
    %v2266 = vrcp.pop %v2250
    %v2267 = vrcp.pop %v2251
    %v2268 = vrcp.pop %v2252
    %v2269 = vrcp.pop %v2253
    %v2270 = vrcp.pop %v2254
    %v2271 = vrcp.pop %v2255
    %v2272 = vrcp.pop %v2256
    %v2273 = vrcp.pop %v2257
    %v2274 = vrcp.pop %v2258
    %v2275 = vrcp.pop %v2259
    %v2276 = vrcp.pop %v2260
    %v2277 = vrcp.pop %v2261
    %v2278 = vrcp.pop %v2262
    %v2279 = vrcp.pop %v2263
    %v2280 = vrcp.pop %v2264
    %v2281 = vrcp.pop %v2265
    %2283 = vset.pattern.permute.xlu0 0
    %2284 = vperm.xlu0 %2283, %v2266
    %v2285 = vpop.permute.xlu0 %2284
    %2288 = vset.pattern.permute.xlu0 0
    %2289 = vperm.xlu0 %2288, %v2267
    %v2290 = vpop.permute.xlu0 %2289
    %2293 = vset.pattern.permute.xlu0 0
    %2294 = vperm.xlu0 %2293, %v2268
    %v2295 = vpop.permute.xlu0 %2294
    %2298 = vset.pattern.permute.xlu0 0
    %2299 = vperm.xlu0 %2298, %v2269
    %v2300 = vpop.permute.xlu0 %2299
    %2303 = vset.pattern.permute.xlu0 0
    %2304 = vperm.xlu0 %2303, %v2270
    %v2305 = vpop.permute.xlu0 %2304
    %2308 = vset.pattern.permute.xlu0 0
    %2309 = vperm.xlu0 %2308, %v2271
    %v2310 = vpop.permute.xlu0 %2309
    %2313 = vset.pattern.permute.xlu0 0
    %2314 = vperm.xlu0 %2313, %v2272
    %v2315 = vpop.permute.xlu0 %2314
    %2318 = vset.pattern.permute.xlu0 0
    %2319 = vperm.xlu0 %2318, %v2273
    %v2320 = vpop.permute.xlu0 %2319
    %2323 = vset.pattern.permute.xlu0 0
    %2324 = vperm.xlu0 %2323, %v2274
    %v2325 = vpop.permute.xlu0 %2324
    %2328 = vset.pattern.permute.xlu0 0
    %2329 = vperm.xlu0 %2328, %v2275
    %v2330 = vpop.permute.xlu0 %2329
    %2333 = vset.pattern.permute.xlu0 0
    %2334 = vperm.xlu0 %2333, %v2276
    %v2335 = vpop.permute.xlu0 %2334
    %2338 = vset.pattern.permute.xlu0 0
    %2339 = vperm.xlu0 %2338, %v2277
    %v2340 = vpop.permute.xlu0 %2339
    %2343 = vset.pattern.permute.xlu0 0
    %2344 = vperm.xlu0 %2343, %v2278
    %v2345 = vpop.permute.xlu0 %2344
    %2348 = vset.pattern.permute.xlu0 0
    %2349 = vperm.xlu0 %2348, %v2279
    %v2350 = vpop.permute.xlu0 %2349
    %2353 = vset.pattern.permute.xlu0 0
    %2354 = vperm.xlu0 %2353, %v2280
    %v2355 = vpop.permute.xlu0 %2354
    %2358 = vset.pattern.permute.xlu0 0
    %2359 = vperm.xlu0 %2358, %v2281
    %v2360 = vpop.permute.xlu0 %2359
    %v2362 = vmul.f32 %v2234, %v2285
    %v2363 = vmul.f32 %v2235, %v2290
    %v2364 = vmul.f32 %v2236, %v2295
    %v2365 = vmul.f32 %v2237, %v2300
    %v2366 = vmul.f32 %v2238, %v2305
    %v2367 = vmul.f32 %v2239, %v2310
    %v2368 = vmul.f32 %v2240, %v2315
    %v2369 = vmul.f32 %v2241, %v2320
    %v2370 = vmul.f32 %v2242, %v2325
    %v2371 = vmul.f32 %v2243, %v2330
    %v2372 = vmul.f32 %v2244, %v2335
    %v2373 = vmul.f32 %v2245, %v2340
    %v2374 = vmul.f32 %v2246, %v2345
    %v2375 = vmul.f32 %v2247, %v2350
    %v2376 = vmul.f32 %v2248, %v2355
    %v2377 = vmul.f32 %v2249, %v2360
    %2378 = vst.msk [vmem:[#allocation4] sm:$0xff] %vm2038, %v2362
    %2379 = vst.msk [vmem:[#allocation4 + $0x8] sm:$0xff] %vm2038, %v2363
    %2380 = vst.msk [vmem:[#allocation4 + $0x10] sm:$0xff] %vm2038, %v2364
    %2381 = vst.msk [vmem:[#allocation4 + $0x18] sm:$0xff] %vm2038, %v2365
    %2382 = vst.msk [vmem:[#allocation4 + $0x20] sm:$0xff] %vm2038, %v2366
    %2383 = vst.msk [vmem:[#allocation4 + $0x28] sm:$0xff] %vm2038, %v2367
    %2384 = vst.msk [vmem:[#allocation4 + $0x30] sm:$0xff] %vm2038, %v2368
    %2385 = vst.msk [vmem:[#allocation4 + $0x38] sm:$0xff] %vm2038, %v2369
    %2386 = vst.msk [vmem:[#allocation4 + $0x40] sm:$0xff] %vm2038, %v2370
    %2387 = vst.msk [vmem:[#allocation4 + $0x48] sm:$0xff] %vm2038, %v2371
    %2388 = vst.msk [vmem:[#allocation4 + $0x50] sm:$0xff] %vm2038, %v2372
    %2389 = vst.msk [vmem:[#allocation4 + $0x58] sm:$0xff] %vm2038, %v2373
    %2390 = vst.msk [vmem:[#allocation4 + $0x60] sm:$0xff] %vm2038, %v2374
    %2391 = vst.msk [vmem:[#allocation4 + $0x68] sm:$0xff] %vm2038, %v2375
    %2392 = vst.msk [vmem:[#allocation4 + $0x70] sm:$0xff] %vm2038, %v2376
    %2393 = vst.msk [vmem:[#allocation4 + $0x78] sm:$0xff] %vm2038, %v2377
    %v2394 = vld [vmem:[#allocation4] sm:$0xff]
    %v2395 = vld [vmem:[#allocation4 + $0x8] sm:$0xff]
    %v2396 = vld [vmem:[#allocation4 + $0x10] sm:$0xff]
    %v2397 = vld [vmem:[#allocation4 + $0x18] sm:$0xff]
    %v2398 = vld [vmem:[#allocation4 + $0x20] sm:$0xff]
    %v2399 = vld [vmem:[#allocation4 + $0x28] sm:$0xff]
    %v2400 = vld [vmem:[#allocation4 + $0x30] sm:$0xff]
    %v2401 = vld [vmem:[#allocation4 + $0x38] sm:$0xff]
    %v2402 = vld [vmem:[#allocation4 + $0x40] sm:$0xff]
    %v2403 = vld [vmem:[#allocation4 + $0x48] sm:$0xff]
    %v2404 = vld [vmem:[#allocation4 + $0x50] sm:$0xff]
    %v2405 = vld [vmem:[#allocation4 + $0x58] sm:$0xff]
    %v2406 = vld [vmem:[#allocation4 + $0x60] sm:$0xff]
    %v2407 = vld [vmem:[#allocation4 + $0x68] sm:$0xff]
    %v2408 = vld [vmem:[#allocation4 + $0x70] sm:$0xff]
    %v2409 = vld [vmem:[#allocation4 + $0x78] sm:$0xff]
    %v2410 = vpack.c.bf16 %v2394, %v2394
    %v2411 = vpack.c.bf16 %v2395, %v2395
    %v2412 = vpack.c.bf16 %v2396, %v2396
    %v2413 = vpack.c.bf16 %v2397, %v2397
    %v2414 = vpack.c.bf16 %v2398, %v2398
    %v2415 = vpack.c.bf16 %v2399, %v2399
    %v2416 = vpack.c.bf16 %v2400, %v2400
    %v2417 = vpack.c.bf16 %v2401, %v2401
    %v2418 = vpack.c.bf16 %v2402, %v2402
    %v2419 = vpack.c.bf16 %v2403, %v2403
    %v2420 = vpack.c.bf16 %v2404, %v2404
    %v2421 = vpack.c.bf16 %v2405, %v2405
    %v2422 = vpack.c.bf16 %v2406, %v2406
    %v2423 = vpack.c.bf16 %v2407, %v2407
    %v2424 = vpack.c.bf16 %v2408, %v2408
    %v2425 = vpack.c.bf16 %v2409, %v2409
    %vm2426 = vcmask 519168
    %2427 = vst.msk [vmem:[%s5] sm:$0xf] %vm2426, %v2410
    %2428 = vst.msk [vmem:[%s5 + $0x4] sm:$0xf] %vm2426, %v2411
    %2429 = vst.msk [vmem:[%s5 + $0x8] sm:$0xf] %vm2426, %v2412
    %2430 = vst.msk [vmem:[%s5 + $0xc] sm:$0xf] %vm2426, %v2413
    %2431 = vst.msk [vmem:[%s5 + $0x10] sm:$0xf] %vm2426, %v2414
    %2432 = vst.msk [vmem:[%s5 + $0x14] sm:$0xf] %vm2426, %v2415
    %2433 = vst.msk [vmem:[%s5 + $0x18] sm:$0xf] %vm2426, %v2416
    %2434 = vst.msk [vmem:[%s5 + $0x1c] sm:$0xf] %vm2426, %v2417
    %2435 = vst.msk [vmem:[%s5 + $0x20] sm:$0xf] %vm2426, %v2418
    %2436 = vst.msk [vmem:[%s5 + $0x24] sm:$0xf] %vm2426, %v2419
    %2437 = vst.msk [vmem:[%s5 + $0x28] sm:$0xf] %vm2426, %v2420
    %2438 = vst.msk [vmem:[%s5 + $0x2c] sm:$0xf] %vm2426, %v2421
    %2439 = vst.msk [vmem:[%s5 + $0x30] sm:$0xf] %vm2426, %v2422
    %2440 = vst.msk [vmem:[%s5 + $0x34] sm:$0xf] %vm2426, %v2423
    %2441 = vst.msk [vmem:[%s5 + $0x38] sm:$0xf] %vm2426, %v2424
    %2442 = vst.msk [vmem:[%s5 + $0x3c] sm:$0xf] %vm2426, %v2425
  $region29: #{sparse_sdf_vae_forward.22} parent=0 // pred_fallthru
    _
  // Predicated region
  $region30: #{sparse_sdf_vae_forward.22} parent=0 // pred_check
    _
  $region31: #{sparse_sdf_vae_forward.22} parent=0 // pred_check_branch
    %2444 = sbr.rel (0) target = $region33
  $region32: #{sparse_sdf_vae_forward.22} parent=0 // pred_region
    _
  $region33: #{sparse_sdf_vae_forward.22} parent=0 // pred_fallthru
    _
  // Predicated region
  $region34: #{sparse_sdf_vae_forward.22} parent=0 // pred_check
    _
  $region35: #{sparse_sdf_vae_forward.22} parent=0 // pred_check_branch
    %2446 = sbr.rel (0) target = $region37
  $region36: #{sparse_sdf_vae_forward.22} parent=0 // pred_region
    _
  $region37: #{sparse_sdf_vae_forward.22} parent=0 // pred_fallthru
    _

// kernel: sparse_sdf_vae_forward.29
$region0: #{sparse_sdf_vae_forward.29}
  #allocation0 [shape = 'u32[]', space=smem, size = 0x4, offset = 0x4, fixed_abs, tag = 'smem constant byte address 0x4 - core index']
  #allocation1 [shape = 'u32[72,128]{1,0:T(1,128)}', space=vmem, size = 0x9000, scoped, tag = 'internal scratch']
  %s0 = inlined_call_operand.vmem [shape: bf16[128,64], index: 0, kind: input, shape index: {}]
  %s1 = inlined_call_operand.vmem [shape: f32[1,64], index: 1, kind: input, shape index: {}]
  %s2 = inlined_call_operand.vmem [shape: f32[1,64], index: 2, kind: input, shape index: {}]
  %s3 = inlined_call_operand.vmem [shape: bf16[64,16], index: 3, kind: input, shape index: {}]
  %s4 = inlined_call_operand.vmem [shape: f32[1,16], index: 4, kind: input, shape index: {}]
  %s5 = inlined_call_operand.vmem [shape: f32[128,8], index: 5, kind: input, shape index: {}]
  %s6 = inlined_call_operand.vmem [shape: f32[128,8], index: 6, kind: output, shape index: {0}]
  %s7 = inlined_call_operand.vmem [shape: f32[128,8], index: 7, kind: output, shape index: {1}]
  %s8 = inlined_call_operand.vmem [shape: bf16[128,8], index: 8, kind: output, shape index: {2}]
  %9 = xla_tuple %s6, %s7, %s8
  %s10 = sld [smem:[#allocation0]]
  $region50: #{sparse_sdf_vae_forward.29} parent=0
    _
  %s12 = ssub.s32 1, %s10
  %s13 = scalar_select 0, %s12, %s10
  // Predicated region
  $region2: #{sparse_sdf_vae_forward.29} parent=0 // pred_check
    _
  $region3: #{sparse_sdf_vae_forward.29} parent=0 // pred_check_branch
    %15 = sbr.rel (0) target = $region5
  $region4: #{sparse_sdf_vae_forward.29} parent=0 // pred_region
    _
  $region5: #{sparse_sdf_vae_forward.29} parent=0 // pred_fallthru
    _
  // Predicated region
  $region6: #{sparse_sdf_vae_forward.29} parent=0 // pred_check
    _
  $region7: #{sparse_sdf_vae_forward.29} parent=0 // pred_check_branch
    %17 = sbr.rel (0) target = $region9
  $region8: #{sparse_sdf_vae_forward.29} parent=0 // pred_region
    _
  $region9: #{sparse_sdf_vae_forward.29} parent=0 // pred_fallthru
    _
  // Predicated region
  $region10: #{sparse_sdf_vae_forward.29} parent=0 // pred_check
    _
  $region11: #{sparse_sdf_vae_forward.29} parent=0 // pred_check_branch
    %19 = sbr.rel (0) target = $region13
  $region12: #{sparse_sdf_vae_forward.29} parent=0 // pred_region
    _
  $region13: #{sparse_sdf_vae_forward.29} parent=0 // pred_fallthru
    _
  // Predicated region
  $region14: #{sparse_sdf_vae_forward.29} parent=0 // pred_check
    _
  $region15: #{sparse_sdf_vae_forward.29} parent=0 // pred_check_branch
    %21 = sbr.rel (0) target = $region17
  $region16: #{sparse_sdf_vae_forward.29} parent=0 // pred_region
    _
  $region17: #{sparse_sdf_vae_forward.29} parent=0 // pred_fallthru
    _
  // Predicated region
  $region18: #{sparse_sdf_vae_forward.29} parent=0 // pred_check
    _
  $region19: #{sparse_sdf_vae_forward.29} parent=0 // pred_check_branch
    %23 = sbr.rel (0) target = $region21
  $region20: #{sparse_sdf_vae_forward.29} parent=0 // pred_region
    _
  $region21: #{sparse_sdf_vae_forward.29} parent=0 // pred_fallthru
    _
  // Predicated region
  $region22: #{sparse_sdf_vae_forward.29} parent=0 // pred_check
    _
  $region23: #{sparse_sdf_vae_forward.29} parent=0 // pred_check_branch
    %25 = sbr.rel (0) target = $region25
  $region24: #{sparse_sdf_vae_forward.29} parent=0 // pred_region
    _
  $region25: #{sparse_sdf_vae_forward.29} parent=0 // pred_fallthru
    _
  %v27 = vld [vmem:[%s0] sm:$0xf]
  %v28 = vld [vmem:[%s0 + $0x4] sm:$0xf]
  %v29 = vld [vmem:[%s0 + $0x8] sm:$0xf]
  %v30 = vld [vmem:[%s0 + $0xc] sm:$0xf]
  %v31 = vld [vmem:[%s0 + $0x10] sm:$0xf]
  %v32 = vld [vmem:[%s0 + $0x14] sm:$0xf]
  %v33 = vld [vmem:[%s0 + $0x18] sm:$0xf]
  %v34 = vld [vmem:[%s0 + $0x1c] sm:$0xf]
  %v35 = vld [vmem:[%s0 + $0x20] sm:$0xf]
  %v36 = vld [vmem:[%s0 + $0x24] sm:$0xf]
  %v37 = vld [vmem:[%s0 + $0x28] sm:$0xf]
  %v38 = vld [vmem:[%s0 + $0x2c] sm:$0xf]
  %v39 = vld [vmem:[%s0 + $0x30] sm:$0xf]
  %v40 = vld [vmem:[%s0 + $0x34] sm:$0xf]
  %v41 = vld [vmem:[%s0 + $0x38] sm:$0xf]
  %v42 = vld [vmem:[%s0 + $0x3c] sm:$0xf]
  %v43 = vunpack.c.l.bf16 %v27
  %v44 = vunpack.c.l.bf16 %v28
  %v45 = vunpack.c.l.bf16 %v29
  %v46 = vunpack.c.l.bf16 %v30
  %v47 = vunpack.c.l.bf16 %v31
  %v48 = vunpack.c.l.bf16 %v32
  %v49 = vunpack.c.l.bf16 %v33
  %v50 = vunpack.c.l.bf16 %v34
  %v51 = vunpack.c.l.bf16 %v35
  %v52 = vunpack.c.l.bf16 %v36
  %v53 = vunpack.c.l.bf16 %v37
  %v54 = vunpack.c.l.bf16 %v38
  %v55 = vunpack.c.l.bf16 %v39
  %v56 = vunpack.c.l.bf16 %v40
  %v57 = vunpack.c.l.bf16 %v41
  %v58 = vunpack.c.l.bf16 %v42
  %v59 = vld [vmem:[%s1] sm:$0x1]
  %v60 = vld [vmem:[%s2] sm:$0x1]
  %vm61 = vcmask 523264
  %v62 = vsel %vm61, %v43, 0.0
  %63 = vadd.xlane.f32.xlu0 %v62
  %v64 = vpop.xlane.xlu0 %63
  %v65 = vsel %vm61, %v44, 0.0
  %66 = vadd.xlane.f32.xlu0 %v65
  %v67 = vpop.xlane.xlu0 %66
  %v68 = vsel %vm61, %v45, 0.0
  %69 = vadd.xlane.f32.xlu0 %v68
  %v70 = vpop.xlane.xlu0 %69
  %v71 = vsel %vm61, %v46, 0.0
  %72 = vadd.xlane.f32.xlu0 %v71
  %v73 = vpop.xlane.xlu0 %72
  %v74 = vsel %vm61, %v47, 0.0
  %75 = vadd.xlane.f32.xlu0 %v74
  %v76 = vpop.xlane.xlu0 %75
  %v77 = vsel %vm61, %v48, 0.0
  %78 = vadd.xlane.f32.xlu0 %v77
  %v79 = vpop.xlane.xlu0 %78
  %v80 = vsel %vm61, %v49, 0.0
  %81 = vadd.xlane.f32.xlu0 %v80
  %v82 = vpop.xlane.xlu0 %81
  %v83 = vsel %vm61, %v50, 0.0
  %84 = vadd.xlane.f32.xlu0 %v83
  %v85 = vpop.xlane.xlu0 %84
  %v86 = vsel %vm61, %v51, 0.0
  %87 = vadd.xlane.f32.xlu0 %v86
  %v88 = vpop.xlane.xlu0 %87
  %v89 = vsel %vm61, %v52, 0.0
  %90 = vadd.xlane.f32.xlu0 %v89
  %v91 = vpop.xlane.xlu0 %90
  %v92 = vsel %vm61, %v53, 0.0
  %93 = vadd.xlane.f32.xlu0 %v92
  %v94 = vpop.xlane.xlu0 %93
  %v95 = vsel %vm61, %v54, 0.0
  %96 = vadd.xlane.f32.xlu0 %v95
  %v97 = vpop.xlane.xlu0 %96
  %v98 = vsel %vm61, %v55, 0.0
  %99 = vadd.xlane.f32.xlu0 %v98
  %v100 = vpop.xlane.xlu0 %99
  %v101 = vsel %vm61, %v56, 0.0
  %102 = vadd.xlane.f32.xlu0 %v101
  %v103 = vpop.xlane.xlu0 %102
  %v104 = vsel %vm61, %v57, 0.0
  %105 = vadd.xlane.f32.xlu0 %v104
  %v106 = vpop.xlane.xlu0 %105
  %v107 = vsel %vm61, %v58, 0.0
  %108 = vadd.xlane.f32.xlu0 %v107
  %v109 = vpop.xlane.xlu0 %108
  %v110 = vrcp.pop 64.0
  %v111 = vmul.f32 64.0, %v110
  %v112 = vsub.f32 1.0, %v111
  %v113 = vmul.f32 %v110, %v112
  %v114 = vadd.f32 %v110, %v113
  %vm115 = vweird.f32 %v110
  %v116 = vsel %vm115, %v110, %v114
  %v117 = vmul.f32 %v64, %v116
  %v118 = vmul.f32 %v67, %v116
  %v119 = vmul.f32 %v70, %v116
  %v120 = vmul.f32 %v73, %v116
  %v121 = vmul.f32 %v76, %v116
  %v122 = vmul.f32 %v79, %v116
  %v123 = vmul.f32 %v82, %v116
  %v124 = vmul.f32 %v85, %v116
  %v125 = vmul.f32 %v88, %v116
  %v126 = vmul.f32 %v91, %v116
  %v127 = vmul.f32 %v94, %v116
  %v128 = vmul.f32 %v97, %v116
  %v129 = vmul.f32 %v100, %v116
  %v130 = vmul.f32 %v103, %v116
  %v131 = vmul.f32 %v106, %v116
  %v132 = vmul.f32 %v109, %v116
  %v133 = vsub.f32 %v43, %v117
  %v134 = vsub.f32 %v44, %v118
  %v135 = vsub.f32 %v45, %v119
  %v136 = vsub.f32 %v46, %v120
  %v137 = vsub.f32 %v47, %v121
  %v138 = vsub.f32 %v48, %v122
  %v139 = vsub.f32 %v49, %v123
  %v140 = vsub.f32 %v50, %v124
  %v141 = vsub.f32 %v51, %v125
  %v142 = vsub.f32 %v52, %v126
  %v143 = vsub.f32 %v53, %v127
  %v144 = vsub.f32 %v54, %v128
  %v145 = vsub.f32 %v55, %v129
  %v146 = vsub.f32 %v56, %v130
  %v147 = vsub.f32 %v57, %v131
  %v148 = vsub.f32 %v58, %v132
  %v149 = vmul.f32 %v133, %v133
  %v150 = vmul.f32 %v134, %v134
  %v151 = vmul.f32 %v135, %v135
  %v152 = vmul.f32 %v136, %v136
  %v153 = vmul.f32 %v137, %v137
  %v154 = vmul.f32 %v138, %v138
  %v155 = vmul.f32 %v139, %v139
  %v156 = vmul.f32 %v140, %v140
  %v157 = vmul.f32 %v141, %v141
  %v158 = vmul.f32 %v142, %v142
  %v159 = vmul.f32 %v143, %v143
  %v160 = vmul.f32 %v144, %v144
  %v161 = vmul.f32 %v145, %v145
  %v162 = vmul.f32 %v146, %v146
  %v163 = vmul.f32 %v147, %v147
  %v164 = vmul.f32 %v148, %v148
  %v165 = vsel %vm61, %v149, 0.0
  %166 = vadd.xlane.f32.xlu0 %v165
  %v167 = vpop.xlane.xlu0 %166
  %v168 = vsel %vm61, %v150, 0.0
  %169 = vadd.xlane.f32.xlu0 %v168
  %v170 = vpop.xlane.xlu0 %169
  %v171 = vsel %vm61, %v151, 0.0
  %172 = vadd.xlane.f32.xlu0 %v171
  %v173 = vpop.xlane.xlu0 %172
  %v174 = vsel %vm61, %v152, 0.0
  %175 = vadd.xlane.f32.xlu0 %v174
  %v176 = vpop.xlane.xlu0 %175
  %v177 = vsel %vm61, %v153, 0.0
  %178 = vadd.xlane.f32.xlu0 %v177
  %v179 = vpop.xlane.xlu0 %178
  %v180 = vsel %vm61, %v154, 0.0
  %181 = vadd.xlane.f32.xlu0 %v180
  %v182 = vpop.xlane.xlu0 %181
  %v183 = vsel %vm61, %v155, 0.0
  %184 = vadd.xlane.f32.xlu0 %v183
  %v185 = vpop.xlane.xlu0 %184
  %v186 = vsel %vm61, %v156, 0.0
  %187 = vadd.xlane.f32.xlu0 %v186
  %v188 = vpop.xlane.xlu0 %187
  %v189 = vsel %vm61, %v157, 0.0
  %190 = vadd.xlane.f32.xlu0 %v189
  %v191 = vpop.xlane.xlu0 %190
  %v192 = vsel %vm61, %v158, 0.0
  %193 = vadd.xlane.f32.xlu0 %v192
  %v194 = vpop.xlane.xlu0 %193
  %v195 = vsel %vm61, %v159, 0.0
  %196 = vadd.xlane.f32.xlu0 %v195
  %v197 = vpop.xlane.xlu0 %196
  %v198 = vsel %vm61, %v160, 0.0
  %199 = vadd.xlane.f32.xlu0 %v198
  %v200 = vpop.xlane.xlu0 %199
  %v201 = vsel %vm61, %v161, 0.0
  %202 = vadd.xlane.f32.xlu0 %v201
  %v203 = vpop.xlane.xlu0 %202
  %v204 = vsel %vm61, %v162, 0.0
  %205 = vadd.xlane.f32.xlu0 %v204
  %v206 = vpop.xlane.xlu0 %205
  %v207 = vsel %vm61, %v163, 0.0
  %208 = vadd.xlane.f32.xlu0 %v207
  %v209 = vpop.xlane.xlu0 %208
  %v210 = vsel %vm61, %v164, 0.0
  %211 = vadd.xlane.f32.xlu0 %v210
  %v212 = vpop.xlane.xlu0 %211
  %v213 = vmul.f32 %v167, %v116
  %v214 = vmul.f32 %v170, %v116
  %v215 = vmul.f32 %v173, %v116
  %v216 = vmul.f32 %v176, %v116
  %v217 = vmul.f32 %v179, %v116
  %v218 = vmul.f32 %v182, %v116
  %v219 = vmul.f32 %v185, %v116
  %v220 = vmul.f32 %v188, %v116
  %v221 = vmul.f32 %v191, %v116
  %v222 = vmul.f32 %v194, %v116
  %v223 = vmul.f32 %v197, %v116
  %v224 = vmul.f32 %v200, %v116
  %v225 = vmul.f32 %v203, %v116
  %v226 = vmul.f32 %v206, %v116
  %v227 = vmul.f32 %v209, %v116
  %v228 = vmul.f32 %v212, %v116
  %v229 = vadd.f32 %v213, 1e-05
  %v230 = vadd.f32 %v214, 1e-05
  %v231 = vadd.f32 %v215, 1e-05
  %v232 = vadd.f32 %v216, 1e-05
  %v233 = vadd.f32 %v217, 1e-05
  %v234 = vadd.f32 %v218, 1e-05
  %v235 = vadd.f32 %v219, 1e-05
  %v236 = vadd.f32 %v220, 1e-05
  %v237 = vadd.f32 %v221, 1e-05
  %v238 = vadd.f32 %v222, 1e-05
  %v239 = vadd.f32 %v223, 1e-05
  %v240 = vadd.f32 %v224, 1e-05
  %v241 = vadd.f32 %v225, 1e-05
  %v242 = vadd.f32 %v226, 1e-05
  %v243 = vadd.f32 %v227, 1e-05
  %v244 = vadd.f32 %v228, 1e-05
  %v245 = vrsqrt.pop %v229
  %v246 = vmul.f32 %v245, %v229
  %v247 = vmul.f32 %v246, %v245
  %v248 = vmul.f32 0.5, %v247
  %v249 = vsub.f32 1.5, %v248
  %v250 = vmul.f32 %v245, %v249
  %vm251 = vweird.f32 %v229
  %vm252 = vweird.f32 %v245
  %vm253 = vmor %vm251, %vm252
  %v254 = vsel %vm253, %v245, %v250
  %v255 = vrsqrt.pop %v230
  %v256 = vmul.f32 %v255, %v230
  %v257 = vmul.f32 %v256, %v255
  %v258 = vmul.f32 0.5, %v257
  %v259 = vsub.f32 1.5, %v258
  %v260 = vmul.f32 %v255, %v259
  %vm261 = vweird.f32 %v230
  %vm262 = vweird.f32 %v255
  %vm263 = vmor %vm261, %vm262
  %v264 = vsel %vm263, %v255, %v260
  %v265 = vrsqrt.pop %v231
  %v266 = vmul.f32 %v265, %v231
  %v267 = vmul.f32 %v266, %v265
  %v268 = vmul.f32 0.5, %v267
  %v269 = vsub.f32 1.5, %v268
  %v270 = vmul.f32 %v265, %v269
  %vm271 = vweird.f32 %v231
  %vm272 = vweird.f32 %v265
  %vm273 = vmor %vm271, %vm272
  %v274 = vsel %vm273, %v265, %v270
  %v275 = vrsqrt.pop %v232
  %v276 = vmul.f32 %v275, %v232
  %v277 = vmul.f32 %v276, %v275
  %v278 = vmul.f32 0.5, %v277
  %v279 = vsub.f32 1.5, %v278
  %v280 = vmul.f32 %v275, %v279
  %vm281 = vweird.f32 %v232
  %vm282 = vweird.f32 %v275
  %vm283 = vmor %vm281, %vm282
  %v284 = vsel %vm283, %v275, %v280
  %v285 = vrsqrt.pop %v233
  %v286 = vmul.f32 %v285, %v233
  %v287 = vmul.f32 %v286, %v285
  %v288 = vmul.f32 0.5, %v287
  %v289 = vsub.f32 1.5, %v288
  %v290 = vmul.f32 %v285, %v289
  %vm291 = vweird.f32 %v233
  %vm292 = vweird.f32 %v285
  %vm293 = vmor %vm291, %vm292
  %v294 = vsel %vm293, %v285, %v290
  %v295 = vrsqrt.pop %v234
  %v296 = vmul.f32 %v295, %v234
  %v297 = vmul.f32 %v296, %v295
  %v298 = vmul.f32 0.5, %v297
  %v299 = vsub.f32 1.5, %v298
  %v300 = vmul.f32 %v295, %v299
  %vm301 = vweird.f32 %v234
  %vm302 = vweird.f32 %v295
  %vm303 = vmor %vm301, %vm302
  %v304 = vsel %vm303, %v295, %v300
  %v305 = vrsqrt.pop %v235
  %v306 = vmul.f32 %v305, %v235
  %v307 = vmul.f32 %v306, %v305
  %v308 = vmul.f32 0.5, %v307
  %v309 = vsub.f32 1.5, %v308
  %v310 = vmul.f32 %v305, %v309
  %vm311 = vweird.f32 %v235
  %vm312 = vweird.f32 %v305
  %vm313 = vmor %vm311, %vm312
  %v314 = vsel %vm313, %v305, %v310
  %v315 = vrsqrt.pop %v236
  %v316 = vmul.f32 %v315, %v236
  %v317 = vmul.f32 %v316, %v315
  %v318 = vmul.f32 0.5, %v317
  %v319 = vsub.f32 1.5, %v318
  %v320 = vmul.f32 %v315, %v319
  %vm321 = vweird.f32 %v236
  %vm322 = vweird.f32 %v315
  %vm323 = vmor %vm321, %vm322
  %v324 = vsel %vm323, %v315, %v320
  %v325 = vrsqrt.pop %v237
  %v326 = vmul.f32 %v325, %v237
  %v327 = vmul.f32 %v326, %v325
  %v328 = vmul.f32 0.5, %v327
  %v329 = vsub.f32 1.5, %v328
  %v330 = vmul.f32 %v325, %v329
  %vm331 = vweird.f32 %v237
  %vm332 = vweird.f32 %v325
  %vm333 = vmor %vm331, %vm332
  %v334 = vsel %vm333, %v325, %v330
  %v335 = vrsqrt.pop %v238
  %v336 = vmul.f32 %v335, %v238
  %v337 = vmul.f32 %v336, %v335
  %v338 = vmul.f32 0.5, %v337
  %v339 = vsub.f32 1.5, %v338
  %v340 = vmul.f32 %v335, %v339
  %vm341 = vweird.f32 %v238
  %vm342 = vweird.f32 %v335
  %vm343 = vmor %vm341, %vm342
  %v344 = vsel %vm343, %v335, %v340
  %v345 = vrsqrt.pop %v239
  %v346 = vmul.f32 %v345, %v239
  %v347 = vmul.f32 %v346, %v345
  %v348 = vmul.f32 0.5, %v347
  %v349 = vsub.f32 1.5, %v348
  %v350 = vmul.f32 %v345, %v349
  %vm351 = vweird.f32 %v239
  %vm352 = vweird.f32 %v345
  %vm353 = vmor %vm351, %vm352
  %v354 = vsel %vm353, %v345, %v350
  %v355 = vrsqrt.pop %v240
  %v356 = vmul.f32 %v355, %v240
  %v357 = vmul.f32 %v356, %v355
  %v358 = vmul.f32 0.5, %v357
  %v359 = vsub.f32 1.5, %v358
  %v360 = vmul.f32 %v355, %v359
  %vm361 = vweird.f32 %v240
  %vm362 = vweird.f32 %v355
  %vm363 = vmor %vm361, %vm362
  %v364 = vsel %vm363, %v355, %v360
  %v365 = vrsqrt.pop %v241
  %v366 = vmul.f32 %v365, %v241
  %v367 = vmul.f32 %v366, %v365
  %v368 = vmul.f32 0.5, %v367
  %v369 = vsub.f32 1.5, %v368
  %v370 = vmul.f32 %v365, %v369
  %vm371 = vweird.f32 %v241
  %vm372 = vweird.f32 %v365
  %vm373 = vmor %vm371, %vm372
  %v374 = vsel %vm373, %v365, %v370
  %v375 = vrsqrt.pop %v242
  %v376 = vmul.f32 %v375, %v242
  %v377 = vmul.f32 %v376, %v375
  %v378 = vmul.f32 0.5, %v377
  %v379 = vsub.f32 1.5, %v378
  %v380 = vmul.f32 %v375, %v379
  %vm381 = vweird.f32 %v242
  %vm382 = vweird.f32 %v375
  %vm383 = vmor %vm381, %vm382
  %v384 = vsel %vm383, %v375, %v380
  %v385 = vrsqrt.pop %v243
  %v386 = vmul.f32 %v385, %v243
  %v387 = vmul.f32 %v386, %v385
  %v388 = vmul.f32 0.5, %v387
  %v389 = vsub.f32 1.5, %v388
  %v390 = vmul.f32 %v385, %v389
  %vm391 = vweird.f32 %v243
  %vm392 = vweird.f32 %v385
  %vm393 = vmor %vm391, %vm392
  %v394 = vsel %vm393, %v385, %v390
  %v395 = vrsqrt.pop %v244
  %v396 = vmul.f32 %v395, %v244
  %v397 = vmul.f32 %v396, %v395
  %v398 = vmul.f32 0.5, %v397
  %v399 = vsub.f32 1.5, %v398
  %v400 = vmul.f32 %v395, %v399
  %vm401 = vweird.f32 %v244
  %vm402 = vweird.f32 %v395
  %vm403 = vmor %vm401, %vm402
  %v404 = vsel %vm403, %v395, %v400
  %v405 = vmul.f32 %v133, %v254
  %v406 = vmul.f32 %v134, %v264
  %v407 = vmul.f32 %v135, %v274
  %v408 = vmul.f32 %v136, %v284
  %v409 = vmul.f32 %v137, %v294
  %v410 = vmul.f32 %v138, %v304
  %v411 = vmul.f32 %v139, %v314
  %v412 = vmul.f32 %v140, %v324
  %v413 = vmul.f32 %v141, %v334
  %v414 = vmul.f32 %v142, %v344
  %v415 = vmul.f32 %v143, %v354
  %v416 = vmul.f32 %v144, %v364
  %v417 = vmul.f32 %v145, %v374
  %v418 = vmul.f32 %v146, %v384
  %v419 = vmul.f32 %v147, %v394
  %v420 = vmul.f32 %v148, %v404
  %v422 = vperm.slane %v59, 0
  %v424 = vmul.f32 %v405, %v422
  %v425 = vmul.f32 %v406, %v422
  %v426 = vmul.f32 %v407, %v422
  %v427 = vmul.f32 %v408, %v422
  %v428 = vmul.f32 %v409, %v422
  %v429 = vmul.f32 %v410, %v422
  %v430 = vmul.f32 %v411, %v422
  %v431 = vmul.f32 %v412, %v422
  %v432 = vmul.f32 %v413, %v422
  %v433 = vmul.f32 %v414, %v422
  %v434 = vmul.f32 %v415, %v422
  %v435 = vmul.f32 %v416, %v422
  %v436 = vmul.f32 %v417, %v422
  %v437 = vmul.f32 %v418, %v422
  %v438 = vmul.f32 %v419, %v422
  %v439 = vmul.f32 %v420, %v422
  %v441 = vperm.slane %v60, 0
  %v443 = vadd.f32 %v424, %v441
  %v444 = vadd.f32 %v425, %v441
  %v445 = vadd.f32 %v426, %v441
  %v446 = vadd.f32 %v427, %v441
  %v447 = vadd.f32 %v428, %v441
  %v448 = vadd.f32 %v429, %v441
  %v449 = vadd.f32 %v430, %v441
  %v450 = vadd.f32 %v431, %v441
  %v451 = vadd.f32 %v432, %v441
  %v452 = vadd.f32 %v433, %v441
  %v453 = vadd.f32 %v434, %v441
  %v454 = vadd.f32 %v435, %v441
  %v455 = vadd.f32 %v436, %v441
  %v456 = vadd.f32 %v437, %v441
  %v457 = vadd.f32 %v438, %v441
  %v458 = vadd.f32 %v439, %v441
  %v459 = vpack.c.bf16 %v444, %v443
  %v460 = vpack.c.bf16 %v446, %v445
  %v461 = vpack.c.bf16 %v448, %v447
  %v462 = vpack.c.bf16 %v450, %v449
  %v463 = vpack.c.bf16 %v452, %v451
  %v464 = vpack.c.bf16 %v454, %v453
  %v465 = vpack.c.bf16 %v456, %v455
  %v466 = vpack.c.bf16 %v458, %v457
  %v467 = vld [vmem:[%s3] sm:$0xf]
  %v468 = vld [vmem:[%s3 + $0x4] sm:$0xf]
  %v469 = vld [vmem:[%s3 + $0x8] sm:$0xf]
  %v470 = vld [vmem:[%s3 + $0xc] sm:$0xf]
  %v471 = vld [vmem:[%s3 + $0x10] sm:$0xf]
  %v472 = vld [vmem:[%s3 + $0x14] sm:$0xf]
  %v473 = vld [vmem:[%s3 + $0x18] sm:$0xf]
  %v474 = vld [vmem:[%s3 + $0x1c] sm:$0xf]
  %v475 = vld [vmem:[%s4] sm:$0x1]
  %v477 = vperm.slane %v475, 0
  %v487 = vunpack.c.l.b16 %v467
  %v488 = vunpack.c.l.b16 %v468
  %v489 = vunpack.c.l.b16 %v469
  %v490 = vunpack.c.l.b16 %v470
  %v491 = vunpack.c.l.b16 %v471
  %v492 = vunpack.c.l.b16 %v472
  %v493 = vunpack.c.l.b16 %v473
  %v494 = vunpack.c.l.b16 %v474
  %v495 = vpack.c.b16 %v488, %v487
  %v496 = vpack.c.b16 %v490, %v489
  %v497 = vpack.c.b16 %v492, %v491
  %v498 = vpack.c.b16 %v494, %v493
  %v504 = vsel %vm61, %v459, 0
  %v507 = vsel %vm61, %v460, 0
  %v510 = vsel %vm61, %v461, 0
  %v513 = vsel %vm61, %v462, 0
  %v516 = vsel %vm61, %v463, 0
  %v519 = vsel %vm61, %v464, 0
  %v522 = vsel %vm61, %v465, 0
  %v525 = vsel %vm61, %v466, 0
  %527 = vmatpush.bf16.msra.mxu0 0
  %528 = vmatpush.bf16.msra.mxu0 0
  %529 = vmatpush.bf16.msra.mxu0 0
  %530 = vmatpush.bf16.msra.mxu0 0
  %531 = vmatpush.bf16.msra.mxu0 %v498
  %532 = vmatpush.bf16.msra.mxu0 %v497
  %533 = vmatpush.bf16.msra.mxu0 %v496
  %534 = vmatpush.bf16.msra.mxu0 %v495
  %535 = vmatmul.bf16.gmra.mxu0 %v504
  %v536 = vpop.f32.mrf.mxu0
  %v537 = vadd.f32 %v477, %v536
  %v538 = vpop.f32.mrf.mxu0
  %v539 = vadd.f32 %v477, %v538
  %540 = vmatmul.bf16.gmra.mxu0 %v507
  %v541 = vpop.f32.mrf.mxu0
  %v542 = vadd.f32 %v477, %v541
  %v543 = vpop.f32.mrf.mxu0
  %v544 = vadd.f32 %v477, %v543
  %545 = vmatmul.bf16.gmra.mxu0 %v510
  %v546 = vpop.f32.mrf.mxu0
  %v547 = vadd.f32 %v477, %v546
  %v548 = vpop.f32.mrf.mxu0
  %v549 = vadd.f32 %v477, %v548
  %550 = vmatmul.bf16.gmra.mxu0 %v513
  %v551 = vpop.f32.mrf.mxu0
  %v552 = vadd.f32 %v477, %v551
  %v553 = vpop.f32.mrf.mxu0
  %v554 = vadd.f32 %v477, %v553
  %555 = vmatmul.bf16.gmra.mxu0 %v516
  %v556 = vpop.f32.mrf.mxu0
  %v557 = vadd.f32 %v477, %v556
  %v558 = vpop.f32.mrf.mxu0
  %v559 = vadd.f32 %v477, %v558
  %560 = vmatmul.bf16.gmra.mxu0 %v519
  %v561 = vpop.f32.mrf.mxu0
  %v562 = vadd.f32 %v477, %v561
  %v563 = vpop.f32.mrf.mxu0
  %v564 = vadd.f32 %v477, %v563
  %565 = vmatmul.bf16.gmra.mxu0 %v522
  %v566 = vpop.f32.mrf.mxu0
  %v567 = vadd.f32 %v477, %v566
  %v568 = vpop.f32.mrf.mxu0
  %v569 = vadd.f32 %v477, %v568
  %570 = vmatmul.bf16.gmra.mxu0 %v525
  %v571 = vpop.f32.mrf.mxu0
  %v572 = vadd.f32 %v477, %v571
  %v573 = vpop.f32.mrf.mxu0
  %v574 = vadd.f32 %v477, %v573
  %575 = vdwg.mxu0
  %v576 = vmax.f32 %v537, -30.0
  %v577 = vmax.f32 %v539, -30.0
  %v578 = vmax.f32 %v542, -30.0
  %v579 = vmax.f32 %v544, -30.0
  %v580 = vmax.f32 %v547, -30.0
  %v581 = vmax.f32 %v549, -30.0
  %v582 = vmax.f32 %v552, -30.0
  %v583 = vmax.f32 %v554, -30.0
  %v584 = vmax.f32 %v557, -30.0
  %v585 = vmax.f32 %v559, -30.0
  %v586 = vmax.f32 %v562, -30.0
  %v587 = vmax.f32 %v564, -30.0
  %v588 = vmax.f32 %v567, -30.0
  %v589 = vmax.f32 %v569, -30.0
  %v590 = vmax.f32 %v572, -30.0
  %v591 = vmax.f32 %v574, -30.0
  %v592 = vmin.f32 %v576, 20.0
  %v593 = vmin.f32 %v577, 20.0
  %v594 = vmin.f32 %v578, 20.0
  %v595 = vmin.f32 %v579, 20.0
  %v596 = vmin.f32 %v580, 20.0
  %v597 = vmin.f32 %v581, 20.0
  %v598 = vmin.f32 %v582, 20.0
  %v599 = vmin.f32 %v583, 20.0
  %v600 = vmin.f32 %v584, 20.0
  %v601 = vmin.f32 %v585, 20.0
  %v602 = vmin.f32 %v586, 20.0
  %v603 = vmin.f32 %v587, 20.0
  %v604 = vmin.f32 %v588, 20.0
  %v605 = vmin.f32 %v589, 20.0
  %v606 = vmin.f32 %v590, 20.0
  %v607 = vmin.f32 %v591, 20.0
  %v608 = vmul.f32 %v592, 0.5
  %v609 = vmul.f32 %v593, 0.5
  %v610 = vmul.f32 %v594, 0.5
  %v611 = vmul.f32 %v595, 0.5
  %v612 = vmul.f32 %v596, 0.5
  %v613 = vmul.f32 %v597, 0.5
  %v614 = vmul.f32 %v598, 0.5
  %v615 = vmul.f32 %v599, 0.5
  %v616 = vmul.f32 %v600, 0.5
  %v617 = vmul.f32 %v601, 0.5
  %v618 = vmul.f32 %v602, 0.5
  %v619 = vmul.f32 %v603, 0.5
  %v620 = vmul.f32 %v604, 0.5
  %v621 = vmul.f32 %v605, 0.5
  %v622 = vmul.f32 %v606, 0.5
  %v623 = vmul.f32 %v607, 0.5
  %v624 = vmul.f32 %v608, 1.442695
  %v625 = vpow.pop %v624
  %v626 = vmul.f32 %v609, 1.442695
  %v627 = vpow.pop %v626
  %v628 = vmul.f32 %v610, 1.442695
  %v629 = vpow.pop %v628
  %v630 = vmul.f32 %v611, 1.442695
  %v631 = vpow.pop %v630
  %v632 = vmul.f32 %v612, 1.442695
  %v633 = vpow.pop %v632
  %v634 = vmul.f32 %v613, 1.442695
  %v635 = vpow.pop %v634
  %v636 = vmul.f32 %v614, 1.442695
  %v637 = vpow.pop %v636
  %v638 = vmul.f32 %v615, 1.442695
  %v639 = vpow.pop %v638
  %v640 = vmul.f32 %v616, 1.442695
  %v641 = vpow.pop %v640
  %v642 = vmul.f32 %v617, 1.442695
  %v643 = vpow.pop %v642
  %v644 = vmul.f32 %v618, 1.442695
  %v645 = vpow.pop %v644
  %v646 = vmul.f32 %v619, 1.442695
  %v647 = vpow.pop %v646
  %v648 = vmul.f32 %v620, 1.442695
  %v649 = vpow.pop %v648
  %v650 = vmul.f32 %v621, 1.442695
  %v651 = vpow.pop %v650
  %v652 = vmul.f32 %v622, 1.442695
  %v653 = vpow.pop %v652
  %v654 = vmul.f32 %v623, 1.442695
  %v655 = vpow.pop %v654
  %v656 = vld [vmem:[%s5] sm:$0xff]
  %v657 = vld [vmem:[%s5 + $0x8] sm:$0xff]
  %v658 = vld [vmem:[%s5 + $0x10] sm:$0xff]
  %v659 = vld [vmem:[%s5 + $0x18] sm:$0xff]
  %v660 = vld [vmem:[%s5 + $0x20] sm:$0xff]
  %v661 = vld [vmem:[%s5 + $0x28] sm:$0xff]
  %v662 = vld [vmem:[%s5 + $0x30] sm:$0xff]
  %v663 = vld [vmem:[%s5 + $0x38] sm:$0xff]
  %v664 = vld [vmem:[%s5 + $0x40] sm:$0xff]
  %v665 = vld [vmem:[%s5 + $0x48] sm:$0xff]
  %v666 = vld [vmem:[%s5 + $0x50] sm:$0xff]
  %v667 = vld [vmem:[%s5 + $0x58] sm:$0xff]
  %v668 = vld [vmem:[%s5 + $0x60] sm:$0xff]
  %v669 = vld [vmem:[%s5 + $0x68] sm:$0xff]
  %v670 = vld [vmem:[%s5 + $0x70] sm:$0xff]
  %v671 = vld [vmem:[%s5 + $0x78] sm:$0xff]
  %688 = vrot.lane.b32.xlu0 %v656, 8
  %v689 = vpop.permute.xlu0 %688
  %690 = vrot.lane.b32.xlu0 %v657, 8
  %v691 = vpop.permute.xlu0 %690
  %692 = vrot.lane.b32.xlu0 %v658, 8
  %v693 = vpop.permute.xlu0 %692
  %694 = vrot.lane.b32.xlu0 %v659, 8
  %v695 = vpop.permute.xlu0 %694
  %696 = vrot.lane.b32.xlu0 %v660, 8
  %v697 = vpop.permute.xlu0 %696
  %698 = vrot.lane.b32.xlu0 %v661, 8
  %v699 = vpop.permute.xlu0 %698
  %700 = vrot.lane.b32.xlu0 %v662, 8
  %v701 = vpop.permute.xlu0 %700
  %702 = vrot.lane.b32.xlu0 %v663, 8
  %v703 = vpop.permute.xlu0 %702
  %704 = vrot.lane.b32.xlu0 %v664, 8
  %v705 = vpop.permute.xlu0 %704
  %706 = vrot.lane.b32.xlu0 %v665, 8
  %v707 = vpop.permute.xlu0 %706
  %708 = vrot.lane.b32.xlu0 %v666, 8
  %v709 = vpop.permute.xlu0 %708
  %710 = vrot.lane.b32.xlu0 %v667, 8
  %v711 = vpop.permute.xlu0 %710
  %712 = vrot.lane.b32.xlu0 %v668, 8
  %v713 = vpop.permute.xlu0 %712
  %714 = vrot.lane.b32.xlu0 %v669, 8
  %v715 = vpop.permute.xlu0 %714
  %716 = vrot.lane.b32.xlu0 %v670, 8
  %v717 = vpop.permute.xlu0 %716
  %718 = vrot.lane.b32.xlu0 %v671, 8
  %v719 = vpop.permute.xlu0 %718
  %v736 = vmul.f32 %v625, %v689
  %v737 = vmul.f32 %v627, %v691
  %v738 = vmul.f32 %v629, %v693
  %v739 = vmul.f32 %v631, %v695
  %v740 = vmul.f32 %v633, %v697
  %v741 = vmul.f32 %v635, %v699
  %v742 = vmul.f32 %v637, %v701
  %v743 = vmul.f32 %v639, %v703
  %v744 = vmul.f32 %v641, %v705
  %v745 = vmul.f32 %v643, %v707
  %v746 = vmul.f32 %v645, %v709
  %v747 = vmul.f32 %v647, %v711
  %v748 = vmul.f32 %v649, %v713
  %v749 = vmul.f32 %v651, %v715
  %v750 = vmul.f32 %v653, %v717
  %v751 = vmul.f32 %v655, %v719
  %768 = vrot.lane.b32.xlu0 %v736, 120
  %v769 = vpop.permute.xlu0 %768
  %770 = vrot.lane.b32.xlu0 %v737, 120
  %v771 = vpop.permute.xlu0 %770
  %772 = vrot.lane.b32.xlu0 %v738, 120
  %v773 = vpop.permute.xlu0 %772
  %774 = vrot.lane.b32.xlu0 %v739, 120
  %v775 = vpop.permute.xlu0 %774
  %776 = vrot.lane.b32.xlu0 %v740, 120
  %v777 = vpop.permute.xlu0 %776
  %778 = vrot.lane.b32.xlu0 %v741, 120
  %v779 = vpop.permute.xlu0 %778
  %780 = vrot.lane.b32.xlu0 %v742, 120
  %v781 = vpop.permute.xlu0 %780
  %782 = vrot.lane.b32.xlu0 %v743, 120
  %v783 = vpop.permute.xlu0 %782
  %784 = vrot.lane.b32.xlu0 %v744, 120
  %v785 = vpop.permute.xlu0 %784
  %786 = vrot.lane.b32.xlu0 %v745, 120
  %v787 = vpop.permute.xlu0 %786
  %788 = vrot.lane.b32.xlu0 %v746, 120
  %v789 = vpop.permute.xlu0 %788
  %790 = vrot.lane.b32.xlu0 %v747, 120
  %v791 = vpop.permute.xlu0 %790
  %792 = vrot.lane.b32.xlu0 %v748, 120
  %v793 = vpop.permute.xlu0 %792
  %794 = vrot.lane.b32.xlu0 %v749, 120
  %v795 = vpop.permute.xlu0 %794
  %796 = vrot.lane.b32.xlu0 %v750, 120
  %v797 = vpop.permute.xlu0 %796
  %798 = vrot.lane.b32.xlu0 %v751, 120
  %v799 = vpop.permute.xlu0 %798
  %v816 = vadd.f32 %v537, %v769
  %v817 = vadd.f32 %v539, %v771
  %v818 = vadd.f32 %v542, %v773
  %v819 = vadd.f32 %v544, %v775
  %v820 = vadd.f32 %v547, %v777
  %v821 = vadd.f32 %v549, %v779
  %v822 = vadd.f32 %v552, %v781
  %v823 = vadd.f32 %v554, %v783
  %v824 = vadd.f32 %v557, %v785
  %v825 = vadd.f32 %v559, %v787
  %v826 = vadd.f32 %v562, %v789
  %v827 = vadd.f32 %v564, %v791
  %v828 = vadd.f32 %v567, %v793
  %v829 = vadd.f32 %v569, %v795
  %v830 = vadd.f32 %v572, %v797
  %v831 = vadd.f32 %v574, %v799
  %vm832 = vcmask 64512
  %833 = vst.msk [vmem:[%s6] sm:$0xff] %vm832, %v537
  %834 = vst.msk [vmem:[%s6 + $0x8] sm:$0xff] %vm832, %v539
  %835 = vst.msk [vmem:[%s6 + $0x10] sm:$0xff] %vm832, %v542
  %836 = vst.msk [vmem:[%s6 + $0x18] sm:$0xff] %vm832, %v544
  %837 = vst.msk [vmem:[%s6 + $0x20] sm:$0xff] %vm832, %v547
  %838 = vst.msk [vmem:[%s6 + $0x28] sm:$0xff] %vm832, %v549
  %839 = vst.msk [vmem:[%s6 + $0x30] sm:$0xff] %vm832, %v552
  %840 = vst.msk [vmem:[%s6 + $0x38] sm:$0xff] %vm832, %v554
  %841 = vst.msk [vmem:[%s6 + $0x40] sm:$0xff] %vm832, %v557
  %842 = vst.msk [vmem:[%s6 + $0x48] sm:$0xff] %vm832, %v559
  %843 = vst.msk [vmem:[%s6 + $0x50] sm:$0xff] %vm832, %v562
  %844 = vst.msk [vmem:[%s6 + $0x58] sm:$0xff] %vm832, %v564
  %845 = vst.msk [vmem:[%s6 + $0x60] sm:$0xff] %vm832, %v567
  %846 = vst.msk [vmem:[%s6 + $0x68] sm:$0xff] %vm832, %v569
  %847 = vst.msk [vmem:[%s6 + $0x70] sm:$0xff] %vm832, %v572
  %848 = vst.msk [vmem:[%s6 + $0x78] sm:$0xff] %vm832, %v574
  %865 = vrot.lane.b32.xlu0 %v592, 120
  %v866 = vpop.permute.xlu0 %865
  %867 = vrot.lane.b32.xlu0 %v593, 120
  %v868 = vpop.permute.xlu0 %867
  %869 = vrot.lane.b32.xlu0 %v594, 120
  %v870 = vpop.permute.xlu0 %869
  %871 = vrot.lane.b32.xlu0 %v595, 120
  %v872 = vpop.permute.xlu0 %871
  %873 = vrot.lane.b32.xlu0 %v596, 120
  %v874 = vpop.permute.xlu0 %873
  %875 = vrot.lane.b32.xlu0 %v597, 120
  %v876 = vpop.permute.xlu0 %875
  %877 = vrot.lane.b32.xlu0 %v598, 120
  %v878 = vpop.permute.xlu0 %877
  %879 = vrot.lane.b32.xlu0 %v599, 120
  %v880 = vpop.permute.xlu0 %879
  %881 = vrot.lane.b32.xlu0 %v600, 120
  %v882 = vpop.permute.xlu0 %881
  %883 = vrot.lane.b32.xlu0 %v601, 120
  %v884 = vpop.permute.xlu0 %883
  %885 = vrot.lane.b32.xlu0 %v602, 120
  %v886 = vpop.permute.xlu0 %885
  %887 = vrot.lane.b32.xlu0 %v603, 120
  %v888 = vpop.permute.xlu0 %887
  %889 = vrot.lane.b32.xlu0 %v604, 120
  %v890 = vpop.permute.xlu0 %889
  %891 = vrot.lane.b32.xlu0 %v605, 120
  %v892 = vpop.permute.xlu0 %891
  %893 = vrot.lane.b32.xlu0 %v606, 120
  %v894 = vpop.permute.xlu0 %893
  %895 = vrot.lane.b32.xlu0 %v607, 120
  %v896 = vpop.permute.xlu0 %895
  %913 = vst.msk [vmem:[%s7] sm:$0xff] %vm832, %v866
  %914 = vst.msk [vmem:[%s7 + $0x8] sm:$0xff] %vm832, %v868
  %915 = vst.msk [vmem:[%s7 + $0x10] sm:$0xff] %vm832, %v870
  %916 = vst.msk [vmem:[%s7 + $0x18] sm:$0xff] %vm832, %v872
  %917 = vst.msk [vmem:[%s7 + $0x20] sm:$0xff] %vm832, %v874
  %918 = vst.msk [vmem:[%s7 + $0x28] sm:$0xff] %vm832, %v876
  %919 = vst.msk [vmem:[%s7 + $0x30] sm:$0xff] %vm832, %v878
  %920 = vst.msk [vmem:[%s7 + $0x38] sm:$0xff] %vm832, %v880
  %921 = vst.msk [vmem:[%s7 + $0x40] sm:$0xff] %vm832, %v882
  %922 = vst.msk [vmem:[%s7 + $0x48] sm:$0xff] %vm832, %v884
  %923 = vst.msk [vmem:[%s7 + $0x50] sm:$0xff] %vm832, %v886
  %924 = vst.msk [vmem:[%s7 + $0x58] sm:$0xff] %vm832, %v888
  %925 = vst.msk [vmem:[%s7 + $0x60] sm:$0xff] %vm832, %v890
  %926 = vst.msk [vmem:[%s7 + $0x68] sm:$0xff] %vm832, %v892
  %927 = vst.msk [vmem:[%s7 + $0x70] sm:$0xff] %vm832, %v894
  %928 = vst.msk [vmem:[%s7 + $0x78] sm:$0xff] %vm832, %v896
  %v929 = vpack.c.bf16 %v816, %v816
  %v930 = vpack.c.bf16 %v817, %v817
  %v931 = vpack.c.bf16 %v818, %v818
  %v932 = vpack.c.bf16 %v819, %v819
  %v933 = vpack.c.bf16 %v820, %v820
  %v934 = vpack.c.bf16 %v821, %v821
  %v935 = vpack.c.bf16 %v822, %v822
  %v936 = vpack.c.bf16 %v823, %v823
  %v937 = vpack.c.bf16 %v824, %v824
  %v938 = vpack.c.bf16 %v825, %v825
  %v939 = vpack.c.bf16 %v826, %v826
  %v940 = vpack.c.bf16 %v827, %v827
  %v941 = vpack.c.bf16 %v828, %v828
  %v942 = vpack.c.bf16 %v829, %v829
  %v943 = vpack.c.bf16 %v830, %v830
  %v944 = vpack.c.bf16 %v831, %v831
  %vm945 = vcmask 60416
  %946 = vst.msk [vmem:[%s8] sm:$0xf] %vm945, %v929
  %947 = vst.msk [vmem:[%s8 + $0x4] sm:$0xf] %vm945, %v930
  %948 = vst.msk [vmem:[%s8 + $0x8] sm:$0xf] %vm945, %v931
  %949 = vst.msk [vmem:[%s8 + $0xc] sm:$0xf] %vm945, %v932
  %950 = vst.msk [vmem:[%s8 + $0x10] sm:$0xf] %vm945, %v933
  %951 = vst.msk [vmem:[%s8 + $0x14] sm:$0xf] %vm945, %v934
  %952 = vst.msk [vmem:[%s8 + $0x18] sm:$0xf] %vm945, %v935
  %953 = vst.msk [vmem:[%s8 + $0x1c] sm:$0xf] %vm945, %v936
  %954 = vst.msk [vmem:[%s8 + $0x20] sm:$0xf] %vm945, %v937
  %955 = vst.msk [vmem:[%s8 + $0x24] sm:$0xf] %vm945, %v938
  %956 = vst.msk [vmem:[%s8 + $0x28] sm:$0xf] %vm945, %v939
  %957 = vst.msk [vmem:[%s8 + $0x2c] sm:$0xf] %vm945, %v940
  %958 = vst.msk [vmem:[%s8 + $0x30] sm:$0xf] %vm945, %v941
  %959 = vst.msk [vmem:[%s8 + $0x34] sm:$0xf] %vm945, %v942
  %960 = vst.msk [vmem:[%s8 + $0x38] sm:$0xf] %vm945, %v943
  %961 = vst.msk [vmem:[%s8 + $0x3c] sm:$0xf] %vm945, %v944
  // Predicated region
  $region26: #{sparse_sdf_vae_forward.29} parent=0 // pred_check
    _
  $region27: #{sparse_sdf_vae_forward.29} parent=0 // pred_check_branch
    %963 = sbr.rel (0) target = $region29
  $region28: #{sparse_sdf_vae_forward.29} parent=0 // pred_region
    _
  $region29: #{sparse_sdf_vae_forward.29} parent=0 // pred_fallthru
    _
  // Predicated region
  $region30: #{sparse_sdf_vae_forward.29} parent=0 // pred_check
    _
  $region31: #{sparse_sdf_vae_forward.29} parent=0 // pred_check_branch
    %965 = sbr.rel (0) target = $region33
  $region32: #{sparse_sdf_vae_forward.29} parent=0 // pred_region
    _
  $region33: #{sparse_sdf_vae_forward.29} parent=0 // pred_fallthru
    _
  // Predicated region
  $region34: #{sparse_sdf_vae_forward.29} parent=0 // pred_check
    _
  $region35: #{sparse_sdf_vae_forward.29} parent=0 // pred_check_branch
    %967 = sbr.rel (0) target = $region37
  $region36: #{sparse_sdf_vae_forward.29} parent=0 // pred_region
    _
  $region37: #{sparse_sdf_vae_forward.29} parent=0 // pred_fallthru
    _
  // Predicated region
  $region38: #{sparse_sdf_vae_forward.29} parent=0 // pred_check
    _
  $region39: #{sparse_sdf_vae_forward.29} parent=0 // pred_check_branch
    %969 = sbr.rel (0) target = $region41
  $region40: #{sparse_sdf_vae_forward.29} parent=0 // pred_region
    _
  $region41: #{sparse_sdf_vae_forward.29} parent=0 // pred_fallthru
    _
  // Predicated region
  $region42: #{sparse_sdf_vae_forward.29} parent=0 // pred_check
    _
  $region43: #{sparse_sdf_vae_forward.29} parent=0 // pred_check_branch
    %971 = sbr.rel (0) target = $region45
  $region44: #{sparse_sdf_vae_forward.29} parent=0 // pred_region
    _
  $region45: #{sparse_sdf_vae_forward.29} parent=0 // pred_fallthru
    _
  // Predicated region
  $region46: #{sparse_sdf_vae_forward.29} parent=0 // pred_check
    _
  $region47: #{sparse_sdf_vae_forward.29} parent=0 // pred_check_branch
    %973 = sbr.rel (0) target = $region49
  $region48: #{sparse_sdf_vae_forward.29} parent=0 // pred_region
    _
  $region49: #{sparse_sdf_vae_forward.29} parent=0 // pred_fallthru
    _

// kernel: sparse_sdf_vae_forward.30
$region0: #{sparse_sdf_vae_forward.30}
  #allocation0 [shape = 'u32[]', space=smem, size = 0x4, offset = 0x4, fixed_abs, tag = 'smem constant byte address 0x4 - core index']
  #allocation1 [shape = 'u32[72,128]{1,0:T(1,128)}', space=vmem, size = 0x9000, scoped, tag = 'internal scratch']
  %s0 = inlined_call_operand.vmem [shape: bf16[128,8], index: 0, kind: input, shape index: {}]
  %s1 = inlined_call_operand.vmem [shape: bf16[8,64], index: 1, kind: input, shape index: {}]
  %s2 = inlined_call_operand.vmem [shape: f32[1,64], index: 2, kind: input, shape index: {}]
  %s3 = inlined_call_operand.vmem [shape: bf16[128,64], index: 3, kind: output, shape index: {}]
  %s4 = sld [smem:[#allocation0]]
  $region22: #{sparse_sdf_vae_forward.30} parent=0
    _
  %s6 = ssub.s32 1, %s4
  %s7 = scalar_select 0, %s6, %s4
  // Predicated region
  $region2: #{sparse_sdf_vae_forward.30} parent=0 // pred_check
    _
  $region3: #{sparse_sdf_vae_forward.30} parent=0 // pred_check_branch
    %9 = sbr.rel (0) target = $region5
  $region4: #{sparse_sdf_vae_forward.30} parent=0 // pred_region
    _
  $region5: #{sparse_sdf_vae_forward.30} parent=0 // pred_fallthru
    _
  // Predicated region
  $region6: #{sparse_sdf_vae_forward.30} parent=0 // pred_check
    _
  $region7: #{sparse_sdf_vae_forward.30} parent=0 // pred_check_branch
    %11 = sbr.rel (0) target = $region9
  $region8: #{sparse_sdf_vae_forward.30} parent=0 // pred_region
    _
  $region9: #{sparse_sdf_vae_forward.30} parent=0 // pred_fallthru
    _
  // Predicated region
  $region10: #{sparse_sdf_vae_forward.30} parent=0 // pred_check
    _
  $region11: #{sparse_sdf_vae_forward.30} parent=0 // pred_check_branch
    %13 = sbr.rel (0) target = $region13
  $region12: #{sparse_sdf_vae_forward.30} parent=0 // pred_region
    _
  $region13: #{sparse_sdf_vae_forward.30} parent=0 // pred_fallthru
    _
  %v15 = vld [vmem:[%s0] sm:$0xf]
  %v16 = vld [vmem:[%s0 + $0x4] sm:$0xf]
  %v17 = vld [vmem:[%s0 + $0x8] sm:$0xf]
  %v18 = vld [vmem:[%s0 + $0xc] sm:$0xf]
  %v19 = vld [vmem:[%s0 + $0x10] sm:$0xf]
  %v20 = vld [vmem:[%s0 + $0x14] sm:$0xf]
  %v21 = vld [vmem:[%s0 + $0x18] sm:$0xf]
  %v22 = vld [vmem:[%s0 + $0x1c] sm:$0xf]
  %v23 = vld [vmem:[%s0 + $0x20] sm:$0xf]
  %v24 = vld [vmem:[%s0 + $0x24] sm:$0xf]
  %v25 = vld [vmem:[%s0 + $0x28] sm:$0xf]
  %v26 = vld [vmem:[%s0 + $0x2c] sm:$0xf]
  %v27 = vld [vmem:[%s0 + $0x30] sm:$0xf]
  %v28 = vld [vmem:[%s0 + $0x34] sm:$0xf]
  %v29 = vld [vmem:[%s0 + $0x38] sm:$0xf]
  %v30 = vld [vmem:[%s0 + $0x3c] sm:$0xf]
  %v31 = vld [vmem:[%s1] sm:$0xf]
  %v32 = vld [vmem:[%s2] sm:$0x1]
  %v34 = vperm.slane %v32, 0
  %v52 = vunpack.c.l.b16 %v15
  %v53 = vunpack.c.l.b16 %v16
  %v54 = vunpack.c.l.b16 %v17
  %v55 = vunpack.c.l.b16 %v18
  %v56 = vunpack.c.l.b16 %v19
  %v57 = vunpack.c.l.b16 %v20
  %v58 = vunpack.c.l.b16 %v21
  %v59 = vunpack.c.l.b16 %v22
  %v60 = vunpack.c.l.b16 %v23
  %v61 = vunpack.c.l.b16 %v24
  %v62 = vunpack.c.l.b16 %v25
  %v63 = vunpack.c.l.b16 %v26
  %v64 = vunpack.c.l.b16 %v27
  %v65 = vunpack.c.l.b16 %v28
  %v66 = vunpack.c.l.b16 %v29
  %v67 = vunpack.c.l.b16 %v30
  %v68 = vpack.c.b16 %v53, %v52
  %v69 = vpack.c.b16 %v55, %v54
  %v70 = vpack.c.b16 %v57, %v56
  %v71 = vpack.c.b16 %v59, %v58
  %v72 = vpack.c.b16 %v61, %v60
  %v73 = vpack.c.b16 %v63, %v62
  %v74 = vpack.c.b16 %v65, %v64
  %v75 = vpack.c.b16 %v67, %v66
  %vm76 = vcmask 64512
  %v78 = vsel %vm76, %v68, 0
  %v81 = vsel %vm76, %v69, 0
  %v84 = vsel %vm76, %v70, 0
  %v87 = vsel %vm76, %v71, 0
  %v90 = vsel %vm76, %v72, 0
  %v93 = vsel %vm76, %v73, 0
  %v96 = vsel %vm76, %v74, 0
  %v99 = vsel %vm76, %v75, 0
  %vm101 = vcmask 1043456
  %v103 = vsel %vm101, %v31, 0
  %105 = vmatpush.bf16.msra.mxu0 0
  %106 = vmatpush.bf16.msra.mxu0 0
  %107 = vmatpush.bf16.msra.mxu0 0
  %108 = vmatpush.bf16.msra.mxu0 0
  %109 = vmatpush.bf16.msra.mxu0 0
  %110 = vmatpush.bf16.msra.mxu0 0
  %111 = vmatpush.bf16.msra.mxu0 0
  %112 = vmatpush.bf16.msra.mxu0 %v103
  %113 = vmatmul.bf16.gmra.mxu0 %v78
  %v114 = vpop.f32.mrf.mxu0
  %v115 = vadd.f32 %v34, %v114
  %v116 = vpop.f32.mrf.mxu0
  %v117 = vadd.f32 %v34, %v116
  %118 = vmatmul.bf16.gmra.mxu0 %v81
  %v119 = vpop.f32.mrf.mxu0
  %v120 = vadd.f32 %v34, %v119
  %v121 = vpop.f32.mrf.mxu0
  %v122 = vadd.f32 %v34, %v121
  %123 = vmatmul.bf16.gmra.mxu0 %v84
  %v124 = vpop.f32.mrf.mxu0
  %v125 = vadd.f32 %v34, %v124
  %v126 = vpop.f32.mrf.mxu0
  %v127 = vadd.f32 %v34, %v126
  %128 = vmatmul.bf16.gmra.mxu0 %v87
  %v129 = vpop.f32.mrf.mxu0
  %v130 = vadd.f32 %v34, %v129
  %v131 = vpop.f32.mrf.mxu0
  %v132 = vadd.f32 %v34, %v131
  %133 = vmatmul.bf16.gmra.mxu0 %v90
  %v134 = vpop.f32.mrf.mxu0
  %v135 = vadd.f32 %v34, %v134
  %v136 = vpop.f32.mrf.mxu0
  %v137 = vadd.f32 %v34, %v136
  %138 = vmatmul.bf16.gmra.mxu0 %v93
  %v139 = vpop.f32.mrf.mxu0
  %v140 = vadd.f32 %v34, %v139
  %v141 = vpop.f32.mrf.mxu0
  %v142 = vadd.f32 %v34, %v141
  %143 = vmatmul.bf16.gmra.mxu0 %v96
  %v144 = vpop.f32.mrf.mxu0
  %v145 = vadd.f32 %v34, %v144
  %v146 = vpop.f32.mrf.mxu0
  %v147 = vadd.f32 %v34, %v146
  %148 = vmatmul.bf16.gmra.mxu0 %v99
  %v149 = vpop.f32.mrf.mxu0
  %v150 = vadd.f32 %v34, %v149
  %v151 = vpop.f32.mrf.mxu0
  %v152 = vadd.f32 %v34, %v151
  %153 = vdwg.mxu0
  %v154 = vpack.c.bf16 %v115, %v115
  %v155 = vpack.c.bf16 %v117, %v117
  %v156 = vpack.c.bf16 %v120, %v120
  %v157 = vpack.c.bf16 %v122, %v122
  %v158 = vpack.c.bf16 %v125, %v125
  %v159 = vpack.c.bf16 %v127, %v127
  %v160 = vpack.c.bf16 %v130, %v130
  %v161 = vpack.c.bf16 %v132, %v132
  %v162 = vpack.c.bf16 %v135, %v135
  %v163 = vpack.c.bf16 %v137, %v137
  %v164 = vpack.c.bf16 %v140, %v140
  %v165 = vpack.c.bf16 %v142, %v142
  %v166 = vpack.c.bf16 %v145, %v145
  %v167 = vpack.c.bf16 %v147, %v147
  %v168 = vpack.c.bf16 %v150, %v150
  %v169 = vpack.c.bf16 %v152, %v152
  %vm170 = vcmask 519168
  %171 = vst.msk [vmem:[%s3] sm:$0xf] %vm170, %v154
  %172 = vst.msk [vmem:[%s3 + $0x4] sm:$0xf] %vm170, %v155
  %173 = vst.msk [vmem:[%s3 + $0x8] sm:$0xf] %vm170, %v156
  %174 = vst.msk [vmem:[%s3 + $0xc] sm:$0xf] %vm170, %v157
  %175 = vst.msk [vmem:[%s3 + $0x10] sm:$0xf] %vm170, %v158
  %176 = vst.msk [vmem:[%s3 + $0x14] sm:$0xf] %vm170, %v159
  %177 = vst.msk [vmem:[%s3 + $0x18] sm:$0xf] %vm170, %v160
  %178 = vst.msk [vmem:[%s3 + $0x1c] sm:$0xf] %vm170, %v161
  %179 = vst.msk [vmem:[%s3 + $0x20] sm:$0xf] %vm170, %v162
  %180 = vst.msk [vmem:[%s3 + $0x24] sm:$0xf] %vm170, %v163
  %181 = vst.msk [vmem:[%s3 + $0x28] sm:$0xf] %vm170, %v164
  %182 = vst.msk [vmem:[%s3 + $0x2c] sm:$0xf] %vm170, %v165
  %183 = vst.msk [vmem:[%s3 + $0x30] sm:$0xf] %vm170, %v166
  %184 = vst.msk [vmem:[%s3 + $0x34] sm:$0xf] %vm170, %v167
  %185 = vst.msk [vmem:[%s3 + $0x38] sm:$0xf] %vm170, %v168
  %186 = vst.msk [vmem:[%s3 + $0x3c] sm:$0xf] %vm170, %v169
  // Predicated region
  $region14: #{sparse_sdf_vae_forward.30} parent=0 // pred_check
    _
  $region15: #{sparse_sdf_vae_forward.30} parent=0 // pred_check_branch
    %188 = sbr.rel (0) target = $region17
  $region16: #{sparse_sdf_vae_forward.30} parent=0 // pred_region
    _
  $region17: #{sparse_sdf_vae_forward.30} parent=0 // pred_fallthru
    _
  // Predicated region
  $region18: #{sparse_sdf_vae_forward.30} parent=0 // pred_check
    _
  $region19: #{sparse_sdf_vae_forward.30} parent=0 // pred_check_branch
    %190 = sbr.rel (0) target = $region21
  $region20: #{sparse_sdf_vae_forward.30} parent=0 // pred_region
    _
  $region21: #{sparse_sdf_vae_forward.30} parent=0 // pred_fallthru
    _

// kernel: sparse_sdf_vae_forward.39
$region0: #{sparse_sdf_vae_forward.39}
  #allocation0 [shape = 'u32[]', space=smem, size = 0x4, offset = 0x4, fixed_abs, tag = 'smem constant byte address 0x4 - core index']
  #allocation1 [shape = 'u32[72,128]{1,0:T(1,128)}', space=vmem, size = 0x9000, scoped, tag = 'internal scratch']
  #allocation2 [shape = 'f32[1,1]{1,0:T(1,128)S(1)}', space=vmem, size = 0x200, scoped, tag = 'scoped memory for sparse_sdf_vae_forward.39']
  %s0 = inlined_call_operand.vmem [shape: bf16[128,64], index: 0, kind: input, shape index: {}]
  %s1 = inlined_call_operand.vmem [shape: f32[1,64], index: 1, kind: input, shape index: {}]
  %s2 = inlined_call_operand.vmem [shape: f32[1,64], index: 2, kind: input, shape index: {}]
  %s3 = inlined_call_operand.vmem [shape: bf16[64,1], index: 3, kind: input, shape index: {}]
  %s4 = inlined_call_operand.<no memory space> [shape: f32[1,1], index: 4, kind: input, shape index: {}]
  %s5 = inlined_call_operand.vmem [shape: f32[128,1], index: 5, kind: output, shape index: {}]
  %s6 = sld [smem:[#allocation0]]
  $region30: #{sparse_sdf_vae_forward.39} parent=0
    _
  %s8 = ssub.s32 1, %s6
  %s9 = scalar_select 0, %s8, %s6
  %v10 = vstv %s4
  %11 = vst [vmem:[#allocation2] sm:$0x1] %v10
  // Predicated region
  $region2: #{sparse_sdf_vae_forward.39} parent=0 // pred_check
    _
  $region3: #{sparse_sdf_vae_forward.39} parent=0 // pred_check_branch
    %13 = sbr.rel (0) target = $region5
  $region4: #{sparse_sdf_vae_forward.39} parent=0 // pred_region
    _
  $region5: #{sparse_sdf_vae_forward.39} parent=0 // pred_fallthru
    _
  // Predicated region
  $region6: #{sparse_sdf_vae_forward.39} parent=0 // pred_check
    _
  $region7: #{sparse_sdf_vae_forward.39} parent=0 // pred_check_branch
    %15 = sbr.rel (0) target = $region9
  $region8: #{sparse_sdf_vae_forward.39} parent=0 // pred_region
    _
  $region9: #{sparse_sdf_vae_forward.39} parent=0 // pred_fallthru
    _
  // Predicated region
  $region10: #{sparse_sdf_vae_forward.39} parent=0 // pred_check
    _
  $region11: #{sparse_sdf_vae_forward.39} parent=0 // pred_check_branch
    %17 = sbr.rel (0) target = $region13
  $region12: #{sparse_sdf_vae_forward.39} parent=0 // pred_region
    _
  $region13: #{sparse_sdf_vae_forward.39} parent=0 // pred_fallthru
    _
  // Predicated region
  $region14: #{sparse_sdf_vae_forward.39} parent=0 // pred_check
    _
  $region15: #{sparse_sdf_vae_forward.39} parent=0 // pred_check_branch
    %19 = sbr.rel (0) target = $region17
  $region16: #{sparse_sdf_vae_forward.39} parent=0 // pred_region
    _
  $region17: #{sparse_sdf_vae_forward.39} parent=0 // pred_fallthru
    _
  // Predicated region
  $region18: #{sparse_sdf_vae_forward.39} parent=0 // pred_check
    _
  $region19: #{sparse_sdf_vae_forward.39} parent=0 // pred_check_branch
    %21 = sbr.rel (0) target = $region21
  $region20: #{sparse_sdf_vae_forward.39} parent=0 // pred_region
    _
  $region21: #{sparse_sdf_vae_forward.39} parent=0 // pred_fallthru
    _
  %v23 = vld [vmem:[%s0] sm:$0xf]
  %v24 = vld [vmem:[%s0 + $0x4] sm:$0xf]
  %v25 = vld [vmem:[%s0 + $0x8] sm:$0xf]
  %v26 = vld [vmem:[%s0 + $0xc] sm:$0xf]
  %v27 = vld [vmem:[%s0 + $0x10] sm:$0xf]
  %v28 = vld [vmem:[%s0 + $0x14] sm:$0xf]
  %v29 = vld [vmem:[%s0 + $0x18] sm:$0xf]
  %v30 = vld [vmem:[%s0 + $0x1c] sm:$0xf]
  %v31 = vld [vmem:[%s0 + $0x20] sm:$0xf]
  %v32 = vld [vmem:[%s0 + $0x24] sm:$0xf]
  %v33 = vld [vmem:[%s0 + $0x28] sm:$0xf]
  %v34 = vld [vmem:[%s0 + $0x2c] sm:$0xf]
  %v35 = vld [vmem:[%s0 + $0x30] sm:$0xf]
  %v36 = vld [vmem:[%s0 + $0x34] sm:$0xf]
  %v37 = vld [vmem:[%s0 + $0x38] sm:$0xf]
  %v38 = vld [vmem:[%s0 + $0x3c] sm:$0xf]
  %v39 = vunpack.c.l.bf16 %v23
  %v40 = vunpack.c.l.bf16 %v24
  %v41 = vunpack.c.l.bf16 %v25
  %v42 = vunpack.c.l.bf16 %v26
  %v43 = vunpack.c.l.bf16 %v27
  %v44 = vunpack.c.l.bf16 %v28
  %v45 = vunpack.c.l.bf16 %v29
  %v46 = vunpack.c.l.bf16 %v30
  %v47 = vunpack.c.l.bf16 %v31
  %v48 = vunpack.c.l.bf16 %v32
  %v49 = vunpack.c.l.bf16 %v33
  %v50 = vunpack.c.l.bf16 %v34
  %v51 = vunpack.c.l.bf16 %v35
  %v52 = vunpack.c.l.bf16 %v36
  %v53 = vunpack.c.l.bf16 %v37
  %v54 = vunpack.c.l.bf16 %v38
  %v55 = vld [vmem:[%s1] sm:$0x1]
  %v56 = vld [vmem:[%s2] sm:$0x1]
  %vm57 = vcmask 523264
  %v58 = vsel %vm57, %v39, 0.0
  %59 = vadd.xlane.f32.xlu0 %v58
  %v60 = vpop.xlane.xlu0 %59
  %v61 = vsel %vm57, %v40, 0.0
  %62 = vadd.xlane.f32.xlu0 %v61
  %v63 = vpop.xlane.xlu0 %62
  %v64 = vsel %vm57, %v41, 0.0
  %65 = vadd.xlane.f32.xlu0 %v64
  %v66 = vpop.xlane.xlu0 %65
  %v67 = vsel %vm57, %v42, 0.0
  %68 = vadd.xlane.f32.xlu0 %v67
  %v69 = vpop.xlane.xlu0 %68
  %v70 = vsel %vm57, %v43, 0.0
  %71 = vadd.xlane.f32.xlu0 %v70
  %v72 = vpop.xlane.xlu0 %71
  %v73 = vsel %vm57, %v44, 0.0
  %74 = vadd.xlane.f32.xlu0 %v73
  %v75 = vpop.xlane.xlu0 %74
  %v76 = vsel %vm57, %v45, 0.0
  %77 = vadd.xlane.f32.xlu0 %v76
  %v78 = vpop.xlane.xlu0 %77
  %v79 = vsel %vm57, %v46, 0.0
  %80 = vadd.xlane.f32.xlu0 %v79
  %v81 = vpop.xlane.xlu0 %80
  %v82 = vsel %vm57, %v47, 0.0
  %83 = vadd.xlane.f32.xlu0 %v82
  %v84 = vpop.xlane.xlu0 %83
  %v85 = vsel %vm57, %v48, 0.0
  %86 = vadd.xlane.f32.xlu0 %v85
  %v87 = vpop.xlane.xlu0 %86
  %v88 = vsel %vm57, %v49, 0.0
  %89 = vadd.xlane.f32.xlu0 %v88
  %v90 = vpop.xlane.xlu0 %89
  %v91 = vsel %vm57, %v50, 0.0
  %92 = vadd.xlane.f32.xlu0 %v91
  %v93 = vpop.xlane.xlu0 %92
  %v94 = vsel %vm57, %v51, 0.0
  %95 = vadd.xlane.f32.xlu0 %v94
  %v96 = vpop.xlane.xlu0 %95
  %v97 = vsel %vm57, %v52, 0.0
  %98 = vadd.xlane.f32.xlu0 %v97
  %v99 = vpop.xlane.xlu0 %98
  %v100 = vsel %vm57, %v53, 0.0
  %101 = vadd.xlane.f32.xlu0 %v100
  %v102 = vpop.xlane.xlu0 %101
  %v103 = vsel %vm57, %v54, 0.0
  %104 = vadd.xlane.f32.xlu0 %v103
  %v105 = vpop.xlane.xlu0 %104
  %v106 = vrcp.pop 64.0
  %v107 = vmul.f32 64.0, %v106
  %v108 = vsub.f32 1.0, %v107
  %v109 = vmul.f32 %v106, %v108
  %v110 = vadd.f32 %v106, %v109
  %vm111 = vweird.f32 %v106
  %v112 = vsel %vm111, %v106, %v110
  %v113 = vmul.f32 %v60, %v112
  %v114 = vmul.f32 %v63, %v112
  %v115 = vmul.f32 %v66, %v112
  %v116 = vmul.f32 %v69, %v112
  %v117 = vmul.f32 %v72, %v112
  %v118 = vmul.f32 %v75, %v112
  %v119 = vmul.f32 %v78, %v112
  %v120 = vmul.f32 %v81, %v112
  %v121 = vmul.f32 %v84, %v112
  %v122 = vmul.f32 %v87, %v112
  %v123 = vmul.f32 %v90, %v112
  %v124 = vmul.f32 %v93, %v112
  %v125 = vmul.f32 %v96, %v112
  %v126 = vmul.f32 %v99, %v112
  %v127 = vmul.f32 %v102, %v112
  %v128 = vmul.f32 %v105, %v112
  %v129 = vsub.f32 %v39, %v113
  %v130 = vsub.f32 %v40, %v114
  %v131 = vsub.f32 %v41, %v115
  %v132 = vsub.f32 %v42, %v116
  %v133 = vsub.f32 %v43, %v117
  %v134 = vsub.f32 %v44, %v118
  %v135 = vsub.f32 %v45, %v119
  %v136 = vsub.f32 %v46, %v120
  %v137 = vsub.f32 %v47, %v121
  %v138 = vsub.f32 %v48, %v122
  %v139 = vsub.f32 %v49, %v123
  %v140 = vsub.f32 %v50, %v124
  %v141 = vsub.f32 %v51, %v125
  %v142 = vsub.f32 %v52, %v126
  %v143 = vsub.f32 %v53, %v127
  %v144 = vsub.f32 %v54, %v128
  %v145 = vmul.f32 %v129, %v129
  %v146 = vmul.f32 %v130, %v130
  %v147 = vmul.f32 %v131, %v131
  %v148 = vmul.f32 %v132, %v132
  %v149 = vmul.f32 %v133, %v133
  %v150 = vmul.f32 %v134, %v134
  %v151 = vmul.f32 %v135, %v135
  %v152 = vmul.f32 %v136, %v136
  %v153 = vmul.f32 %v137, %v137
  %v154 = vmul.f32 %v138, %v138
  %v155 = vmul.f32 %v139, %v139
  %v156 = vmul.f32 %v140, %v140
  %v157 = vmul.f32 %v141, %v141
  %v158 = vmul.f32 %v142, %v142
  %v159 = vmul.f32 %v143, %v143
  %v160 = vmul.f32 %v144, %v144
  %v161 = vsel %vm57, %v145, 0.0
  %162 = vadd.xlane.f32.xlu0 %v161
  %v163 = vpop.xlane.xlu0 %162
  %v164 = vsel %vm57, %v146, 0.0
  %165 = vadd.xlane.f32.xlu0 %v164
  %v166 = vpop.xlane.xlu0 %165
  %v167 = vsel %vm57, %v147, 0.0
  %168 = vadd.xlane.f32.xlu0 %v167
  %v169 = vpop.xlane.xlu0 %168
  %v170 = vsel %vm57, %v148, 0.0
  %171 = vadd.xlane.f32.xlu0 %v170
  %v172 = vpop.xlane.xlu0 %171
  %v173 = vsel %vm57, %v149, 0.0
  %174 = vadd.xlane.f32.xlu0 %v173
  %v175 = vpop.xlane.xlu0 %174
  %v176 = vsel %vm57, %v150, 0.0
  %177 = vadd.xlane.f32.xlu0 %v176
  %v178 = vpop.xlane.xlu0 %177
  %v179 = vsel %vm57, %v151, 0.0
  %180 = vadd.xlane.f32.xlu0 %v179
  %v181 = vpop.xlane.xlu0 %180
  %v182 = vsel %vm57, %v152, 0.0
  %183 = vadd.xlane.f32.xlu0 %v182
  %v184 = vpop.xlane.xlu0 %183
  %v185 = vsel %vm57, %v153, 0.0
  %186 = vadd.xlane.f32.xlu0 %v185
  %v187 = vpop.xlane.xlu0 %186
  %v188 = vsel %vm57, %v154, 0.0
  %189 = vadd.xlane.f32.xlu0 %v188
  %v190 = vpop.xlane.xlu0 %189
  %v191 = vsel %vm57, %v155, 0.0
  %192 = vadd.xlane.f32.xlu0 %v191
  %v193 = vpop.xlane.xlu0 %192
  %v194 = vsel %vm57, %v156, 0.0
  %195 = vadd.xlane.f32.xlu0 %v194
  %v196 = vpop.xlane.xlu0 %195
  %v197 = vsel %vm57, %v157, 0.0
  %198 = vadd.xlane.f32.xlu0 %v197
  %v199 = vpop.xlane.xlu0 %198
  %v200 = vsel %vm57, %v158, 0.0
  %201 = vadd.xlane.f32.xlu0 %v200
  %v202 = vpop.xlane.xlu0 %201
  %v203 = vsel %vm57, %v159, 0.0
  %204 = vadd.xlane.f32.xlu0 %v203
  %v205 = vpop.xlane.xlu0 %204
  %v206 = vsel %vm57, %v160, 0.0
  %207 = vadd.xlane.f32.xlu0 %v206
  %v208 = vpop.xlane.xlu0 %207
  %v209 = vmul.f32 %v163, %v112
  %v210 = vmul.f32 %v166, %v112
  %v211 = vmul.f32 %v169, %v112
  %v212 = vmul.f32 %v172, %v112
  %v213 = vmul.f32 %v175, %v112
  %v214 = vmul.f32 %v178, %v112
  %v215 = vmul.f32 %v181, %v112
  %v216 = vmul.f32 %v184, %v112
  %v217 = vmul.f32 %v187, %v112
  %v218 = vmul.f32 %v190, %v112
  %v219 = vmul.f32 %v193, %v112
  %v220 = vmul.f32 %v196, %v112
  %v221 = vmul.f32 %v199, %v112
  %v222 = vmul.f32 %v202, %v112
  %v223 = vmul.f32 %v205, %v112
  %v224 = vmul.f32 %v208, %v112
  %v225 = vadd.f32 %v209, 1e-05
  %v226 = vadd.f32 %v210, 1e-05
  %v227 = vadd.f32 %v211, 1e-05
  %v228 = vadd.f32 %v212, 1e-05
  %v229 = vadd.f32 %v213, 1e-05
  %v230 = vadd.f32 %v214, 1e-05
  %v231 = vadd.f32 %v215, 1e-05
  %v232 = vadd.f32 %v216, 1e-05
  %v233 = vadd.f32 %v217, 1e-05
  %v234 = vadd.f32 %v218, 1e-05
  %v235 = vadd.f32 %v219, 1e-05
  %v236 = vadd.f32 %v220, 1e-05
  %v237 = vadd.f32 %v221, 1e-05
  %v238 = vadd.f32 %v222, 1e-05
  %v239 = vadd.f32 %v223, 1e-05
  %v240 = vadd.f32 %v224, 1e-05
  %v241 = vrsqrt.pop %v225
  %v242 = vmul.f32 %v241, %v225
  %v243 = vmul.f32 %v242, %v241
  %v244 = vmul.f32 0.5, %v243
  %v245 = vsub.f32 1.5, %v244
  %v246 = vmul.f32 %v241, %v245
  %vm247 = vweird.f32 %v225
  %vm248 = vweird.f32 %v241
  %vm249 = vmor %vm247, %vm248
  %v250 = vsel %vm249, %v241, %v246
  %v251 = vrsqrt.pop %v226
  %v252 = vmul.f32 %v251, %v226
  %v253 = vmul.f32 %v252, %v251
  %v254 = vmul.f32 0.5, %v253
  %v255 = vsub.f32 1.5, %v254
  %v256 = vmul.f32 %v251, %v255
  %vm257 = vweird.f32 %v226
  %vm258 = vweird.f32 %v251
  %vm259 = vmor %vm257, %vm258
  %v260 = vsel %vm259, %v251, %v256
  %v261 = vrsqrt.pop %v227
  %v262 = vmul.f32 %v261, %v227
  %v263 = vmul.f32 %v262, %v261
  %v264 = vmul.f32 0.5, %v263
  %v265 = vsub.f32 1.5, %v264
  %v266 = vmul.f32 %v261, %v265
  %vm267 = vweird.f32 %v227
  %vm268 = vweird.f32 %v261
  %vm269 = vmor %vm267, %vm268
  %v270 = vsel %vm269, %v261, %v266
  %v271 = vrsqrt.pop %v228
  %v272 = vmul.f32 %v271, %v228
  %v273 = vmul.f32 %v272, %v271
  %v274 = vmul.f32 0.5, %v273
  %v275 = vsub.f32 1.5, %v274
  %v276 = vmul.f32 %v271, %v275
  %vm277 = vweird.f32 %v228
  %vm278 = vweird.f32 %v271
  %vm279 = vmor %vm277, %vm278
  %v280 = vsel %vm279, %v271, %v276
  %v281 = vrsqrt.pop %v229
  %v282 = vmul.f32 %v281, %v229
  %v283 = vmul.f32 %v282, %v281
  %v284 = vmul.f32 0.5, %v283
  %v285 = vsub.f32 1.5, %v284
  %v286 = vmul.f32 %v281, %v285
  %vm287 = vweird.f32 %v229
  %vm288 = vweird.f32 %v281
  %vm289 = vmor %vm287, %vm288
  %v290 = vsel %vm289, %v281, %v286
  %v291 = vrsqrt.pop %v230
  %v292 = vmul.f32 %v291, %v230
  %v293 = vmul.f32 %v292, %v291
  %v294 = vmul.f32 0.5, %v293
  %v295 = vsub.f32 1.5, %v294
  %v296 = vmul.f32 %v291, %v295
  %vm297 = vweird.f32 %v230
  %vm298 = vweird.f32 %v291
  %vm299 = vmor %vm297, %vm298
  %v300 = vsel %vm299, %v291, %v296
  %v301 = vrsqrt.pop %v231
  %v302 = vmul.f32 %v301, %v231
  %v303 = vmul.f32 %v302, %v301
  %v304 = vmul.f32 0.5, %v303
  %v305 = vsub.f32 1.5, %v304
  %v306 = vmul.f32 %v301, %v305
  %vm307 = vweird.f32 %v231
  %vm308 = vweird.f32 %v301
  %vm309 = vmor %vm307, %vm308
  %v310 = vsel %vm309, %v301, %v306
  %v311 = vrsqrt.pop %v232
  %v312 = vmul.f32 %v311, %v232
  %v313 = vmul.f32 %v312, %v311
  %v314 = vmul.f32 0.5, %v313
  %v315 = vsub.f32 1.5, %v314
  %v316 = vmul.f32 %v311, %v315
  %vm317 = vweird.f32 %v232
  %vm318 = vweird.f32 %v311
  %vm319 = vmor %vm317, %vm318
  %v320 = vsel %vm319, %v311, %v316
  %v321 = vrsqrt.pop %v233
  %v322 = vmul.f32 %v321, %v233
  %v323 = vmul.f32 %v322, %v321
  %v324 = vmul.f32 0.5, %v323
  %v325 = vsub.f32 1.5, %v324
  %v326 = vmul.f32 %v321, %v325
  %vm327 = vweird.f32 %v233
  %vm328 = vweird.f32 %v321
  %vm329 = vmor %vm327, %vm328
  %v330 = vsel %vm329, %v321, %v326
  %v331 = vrsqrt.pop %v234
  %v332 = vmul.f32 %v331, %v234
  %v333 = vmul.f32 %v332, %v331
  %v334 = vmul.f32 0.5, %v333
  %v335 = vsub.f32 1.5, %v334
  %v336 = vmul.f32 %v331, %v335
  %vm337 = vweird.f32 %v234
  %vm338 = vweird.f32 %v331
  %vm339 = vmor %vm337, %vm338
  %v340 = vsel %vm339, %v331, %v336
  %v341 = vrsqrt.pop %v235
  %v342 = vmul.f32 %v341, %v235
  %v343 = vmul.f32 %v342, %v341
  %v344 = vmul.f32 0.5, %v343
  %v345 = vsub.f32 1.5, %v344
  %v346 = vmul.f32 %v341, %v345
  %vm347 = vweird.f32 %v235
  %vm348 = vweird.f32 %v341
  %vm349 = vmor %vm347, %vm348
  %v350 = vsel %vm349, %v341, %v346
  %v351 = vrsqrt.pop %v236
  %v352 = vmul.f32 %v351, %v236
  %v353 = vmul.f32 %v352, %v351
  %v354 = vmul.f32 0.5, %v353
  %v355 = vsub.f32 1.5, %v354
  %v356 = vmul.f32 %v351, %v355
  %vm357 = vweird.f32 %v236
  %vm358 = vweird.f32 %v351
  %vm359 = vmor %vm357, %vm358
  %v360 = vsel %vm359, %v351, %v356
  %v361 = vrsqrt.pop %v237
  %v362 = vmul.f32 %v361, %v237
  %v363 = vmul.f32 %v362, %v361
  %v364 = vmul.f32 0.5, %v363
  %v365 = vsub.f32 1.5, %v364
  %v366 = vmul.f32 %v361, %v365
  %vm367 = vweird.f32 %v237
  %vm368 = vweird.f32 %v361
  %vm369 = vmor %vm367, %vm368
  %v370 = vsel %vm369, %v361, %v366
  %v371 = vrsqrt.pop %v238
  %v372 = vmul.f32 %v371, %v238
  %v373 = vmul.f32 %v372, %v371
  %v374 = vmul.f32 0.5, %v373
  %v375 = vsub.f32 1.5, %v374
  %v376 = vmul.f32 %v371, %v375
  %vm377 = vweird.f32 %v238
  %vm378 = vweird.f32 %v371
  %vm379 = vmor %vm377, %vm378
  %v380 = vsel %vm379, %v371, %v376
  %v381 = vrsqrt.pop %v239
  %v382 = vmul.f32 %v381, %v239
  %v383 = vmul.f32 %v382, %v381
  %v384 = vmul.f32 0.5, %v383
  %v385 = vsub.f32 1.5, %v384
  %v386 = vmul.f32 %v381, %v385
  %vm387 = vweird.f32 %v239
  %vm388 = vweird.f32 %v381
  %vm389 = vmor %vm387, %vm388
  %v390 = vsel %vm389, %v381, %v386
  %v391 = vrsqrt.pop %v240
  %v392 = vmul.f32 %v391, %v240
  %v393 = vmul.f32 %v392, %v391
  %v394 = vmul.f32 0.5, %v393
  %v395 = vsub.f32 1.5, %v394
  %v396 = vmul.f32 %v391, %v395
  %vm397 = vweird.f32 %v240
  %vm398 = vweird.f32 %v391
  %vm399 = vmor %vm397, %vm398
  %v400 = vsel %vm399, %v391, %v396
  %v401 = vmul.f32 %v129, %v250
  %v402 = vmul.f32 %v130, %v260
  %v403 = vmul.f32 %v131, %v270
  %v404 = vmul.f32 %v132, %v280
  %v405 = vmul.f32 %v133, %v290
  %v406 = vmul.f32 %v134, %v300
  %v407 = vmul.f32 %v135, %v310
  %v408 = vmul.f32 %v136, %v320
  %v409 = vmul.f32 %v137, %v330
  %v410 = vmul.f32 %v138, %v340
  %v411 = vmul.f32 %v139, %v350
  %v412 = vmul.f32 %v140, %v360
  %v413 = vmul.f32 %v141, %v370
  %v414 = vmul.f32 %v142, %v380
  %v415 = vmul.f32 %v143, %v390
  %v416 = vmul.f32 %v144, %v400
  %v418 = vperm.slane %v55, 0
  %v420 = vmul.f32 %v401, %v418
  %v421 = vmul.f32 %v402, %v418
  %v422 = vmul.f32 %v403, %v418
  %v423 = vmul.f32 %v404, %v418
  %v424 = vmul.f32 %v405, %v418
  %v425 = vmul.f32 %v406, %v418
  %v426 = vmul.f32 %v407, %v418
  %v427 = vmul.f32 %v408, %v418
  %v428 = vmul.f32 %v409, %v418
  %v429 = vmul.f32 %v410, %v418
  %v430 = vmul.f32 %v411, %v418
  %v431 = vmul.f32 %v412, %v418
  %v432 = vmul.f32 %v413, %v418
  %v433 = vmul.f32 %v414, %v418
  %v434 = vmul.f32 %v415, %v418
  %v435 = vmul.f32 %v416, %v418
  %v437 = vperm.slane %v56, 0
  %v439 = vadd.f32 %v420, %v437
  %v440 = vadd.f32 %v421, %v437
  %v441 = vadd.f32 %v422, %v437
  %v442 = vadd.f32 %v423, %v437
  %v443 = vadd.f32 %v424, %v437
  %v444 = vadd.f32 %v425, %v437
  %v445 = vadd.f32 %v426, %v437
  %v446 = vadd.f32 %v427, %v437
  %v447 = vadd.f32 %v428, %v437
  %v448 = vadd.f32 %v429, %v437
  %v449 = vadd.f32 %v430, %v437
  %v450 = vadd.f32 %v431, %v437
  %v451 = vadd.f32 %v432, %v437
  %v452 = vadd.f32 %v433, %v437
  %v453 = vadd.f32 %v434, %v437
  %v454 = vadd.f32 %v435, %v437
  %v455 = vpack.c.bf16 %v440, %v439
  %v456 = vpack.c.bf16 %v442, %v441
  %v457 = vpack.c.bf16 %v444, %v443
  %v458 = vpack.c.bf16 %v446, %v445
  %v459 = vpack.c.bf16 %v448, %v447
  %v460 = vpack.c.bf16 %v450, %v449
  %v461 = vpack.c.bf16 %v452, %v451
  %v462 = vpack.c.bf16 %v454, %v453
  %v463 = vld [vmem:[%s3] sm:$0xf]
  %v464 = vld [vmem:[%s3 + $0x4] sm:$0xf]
  %v465 = vld [vmem:[%s3 + $0x8] sm:$0xf]
  %v466 = vld [vmem:[%s3 + $0xc] sm:$0xf]
  %v467 = vld [vmem:[%s3 + $0x10] sm:$0xf]
  %v468 = vld [vmem:[%s3 + $0x14] sm:$0xf]
  %v469 = vld [vmem:[%s3 + $0x18] sm:$0xf]
  %v470 = vld [vmem:[%s3 + $0x1c] sm:$0xf]
  %v471 = vld [vmem:[#allocation2] sm:$0x1]
  %v473 = vperm.slane %v471, 0
  %v483 = vunpack.c.l.b16 %v463
  %v484 = vunpack.c.l.b16 %v464
  %v485 = vunpack.c.l.b16 %v465
  %v486 = vunpack.c.l.b16 %v466
  %v487 = vunpack.c.l.b16 %v467
  %v488 = vunpack.c.l.b16 %v468
  %v489 = vunpack.c.l.b16 %v469
  %v490 = vunpack.c.l.b16 %v470
  %v491 = vpack.c.b16 %v484, %v483
  %v492 = vpack.c.b16 %v486, %v485
  %v493 = vpack.c.b16 %v488, %v487
  %v494 = vpack.c.b16 %v490, %v489
  %v500 = vsel %vm57, %v455, 0
  %v503 = vsel %vm57, %v456, 0
  %v506 = vsel %vm57, %v457, 0
  %v509 = vsel %vm57, %v458, 0
  %v512 = vsel %vm57, %v459, 0
  %v515 = vsel %vm57, %v460, 0
  %v518 = vsel %vm57, %v461, 0
  %v521 = vsel %vm57, %v462, 0
  %523 = vmatpush.bf16.msra.mxu0 0
  %524 = vmatpush.bf16.msra.mxu0 0
  %525 = vmatpush.bf16.msra.mxu0 0
  %526 = vmatpush.bf16.msra.mxu0 0
  %527 = vmatpush.bf16.msra.mxu0 %v494
  %528 = vmatpush.bf16.msra.mxu0 %v493
  %529 = vmatpush.bf16.msra.mxu0 %v492
  %530 = vmatpush.bf16.msra.mxu0 %v491
  %531 = vmatmul.bf16.gmra.mxu0 %v500
  %v532 = vpop.f32.mrf.mxu0
  %v533 = vadd.f32 %v473, %v532
  %v534 = vpop.f32.mrf.mxu0
  %v535 = vadd.f32 %v473, %v534
  %536 = vmatmul.bf16.gmra.mxu0 %v503
  %v537 = vpop.f32.mrf.mxu0
  %v538 = vadd.f32 %v473, %v537
  %v539 = vpop.f32.mrf.mxu0
  %v540 = vadd.f32 %v473, %v539
  %541 = vmatmul.bf16.gmra.mxu0 %v506
  %v542 = vpop.f32.mrf.mxu0
  %v543 = vadd.f32 %v473, %v542
  %v544 = vpop.f32.mrf.mxu0
  %v545 = vadd.f32 %v473, %v544
  %546 = vmatmul.bf16.gmra.mxu0 %v509
  %v547 = vpop.f32.mrf.mxu0
  %v548 = vadd.f32 %v473, %v547
  %v549 = vpop.f32.mrf.mxu0
  %v550 = vadd.f32 %v473, %v549
  %551 = vmatmul.bf16.gmra.mxu0 %v512
  %v552 = vpop.f32.mrf.mxu0
  %v553 = vadd.f32 %v473, %v552
  %v554 = vpop.f32.mrf.mxu0
  %v555 = vadd.f32 %v473, %v554
  %556 = vmatmul.bf16.gmra.mxu0 %v515
  %v557 = vpop.f32.mrf.mxu0
  %v558 = vadd.f32 %v473, %v557
  %v559 = vpop.f32.mrf.mxu0
  %v560 = vadd.f32 %v473, %v559
  %561 = vmatmul.bf16.gmra.mxu0 %v518
  %v562 = vpop.f32.mrf.mxu0
  %v563 = vadd.f32 %v473, %v562
  %v564 = vpop.f32.mrf.mxu0
  %v565 = vadd.f32 %v473, %v564
  %566 = vmatmul.bf16.gmra.mxu0 %v521
  %v567 = vpop.f32.mrf.mxu0
  %v568 = vadd.f32 %v473, %v567
  %v569 = vpop.f32.mrf.mxu0
  %v570 = vadd.f32 %v473, %v569
  %571 = vdwg.mxu0
  %vm572 = vcmask 7168
  %573 = vst.msk [vmem:[%s5] sm:$0xff] %vm572, %v533
  %574 = vst.msk [vmem:[%s5 + $0x8] sm:$0xff] %vm572, %v535
  %575 = vst.msk [vmem:[%s5 + $0x10] sm:$0xff] %vm572, %v538
  %576 = vst.msk [vmem:[%s5 + $0x18] sm:$0xff] %vm572, %v540
  %577 = vst.msk [vmem:[%s5 + $0x20] sm:$0xff] %vm572, %v543
  %578 = vst.msk [vmem:[%s5 + $0x28] sm:$0xff] %vm572, %v545
  %579 = vst.msk [vmem:[%s5 + $0x30] sm:$0xff] %vm572, %v548
  %580 = vst.msk [vmem:[%s5 + $0x38] sm:$0xff] %vm572, %v550
  %581 = vst.msk [vmem:[%s5 + $0x40] sm:$0xff] %vm572, %v553
  %582 = vst.msk [vmem:[%s5 + $0x48] sm:$0xff] %vm572, %v555
  %583 = vst.msk [vmem:[%s5 + $0x50] sm:$0xff] %vm572, %v558
  %584 = vst.msk [vmem:[%s5 + $0x58] sm:$0xff] %vm572, %v560
  %585 = vst.msk [vmem:[%s5 + $0x60] sm:$0xff] %vm572, %v563
  %586 = vst.msk [vmem:[%s5 + $0x68] sm:$0xff] %vm572, %v565
  %587 = vst.msk [vmem:[%s5 + $0x70] sm:$0xff] %vm572, %v568
  %588 = vst.msk [vmem:[%s5 + $0x78] sm:$0xff] %vm572, %v570
  // Predicated region
  $region22: #{sparse_sdf_vae_forward.39} parent=0 // pred_check
    _
  $region23: #{sparse_sdf_vae_forward.39} parent=0 // pred_check_branch
    %590 = sbr.rel (0) target = $region25
  $region24: #{sparse_sdf_vae_forward.39} parent=0 // pred_region
    _
  $region25: #{sparse_sdf_vae_forward.39} parent=0 // pred_fallthru
    _
  // Predicated region
  $region26: #{sparse_sdf_vae_forward.39} parent=0 // pred_check
    _
  $region27: #{sparse_sdf_vae_forward.39} parent=0 // pred_check_branch
    %592 = sbr.rel (0) target = $region29
  $region28: #{sparse_sdf_vae_forward.39} parent=0 // pred_region
    _
  $region29: #{sparse_sdf_vae_forward.39} parent=0 // pred_fallthru
    _

</llo_original>
